<compile_context>
chip_gen: v7x
topology: tpu7x:2x2x1
jax: 0.10.0
libtpu: 0.0.40
codegen_flags: <defaults>
</compile_context>

<pallas_src>
import functools

import numpy as np
import jax
import jax.numpy as jnp
from jax.experimental import pallas as pl
from jax.experimental.pallas import tpu as pltpu


# ----------------------------------------------------------------------------
# Fused kernel: one batch element per grid step, token layout (N, C).
# ----------------------------------------------------------------------------
def _hdb_kernel(x_ref, mask_ref, cw_ref, cb_ref, ln1g_ref, ln1b_ref,
                qkvw_ref, qkvb_ref, pw_ref, pb_ref, g1_ref,
                ln2g_ref, ln2b_ref, f1w_ref, f1b_ref, f2w_ref, f2b_ref,
                g2_ref, *rest, num_heads, scale, mxu_dtype, ws, has_reduction):
    if has_reduction:
        rw_ref, rb_ref, o_ref = rest
    else:
        (o_ref,) = rest

    f32 = jnp.float32

    def mm(a, b, dn=(((1,), (0,)), ((), ()))):
        # MXU matmul: weights are already stored in mxu_dtype (bf16 on the
        # perf path); only the activation operand needs a cast.  f32 accum.
        return jax.lax.dot_general(a.astype(mxu_dtype), b.astype(mxu_dtype),
                                   dimension_numbers=dn,
                                   preferred_element_type=f32)

    def layer_norm(v, g, b):
        mu = jnp.mean(v, axis=-1, keepdims=True)
        d = v - mu
        var = jnp.mean(d * d, axis=-1, keepdims=True)
        return d * jax.lax.rsqrt(var + 1e-5) * g + b

    def erf(v):
        # Abramowitz & Stegun 7.1.26 (max abs err ~1.5e-7): EUP exp/recip +
        # VPU poly, matches PyTorch's exact-erf GELU to fp32 tolerance.
        a1, a2, a3 = 0.254829592, -0.284496736, 1.421413741
        a4, a5, pc = -1.453152027, 1.061405429, 0.3275911
        av = jnp.abs(v)
        t = pl.reciprocal(1.0 + pc * av, approx=True)      # EUP slot
        poly = ((((a5 * t + a4) * t + a3) * t + a2) * t + a1) * t
        y = 1.0 - poly * jnp.exp(-av * av)
        return jnp.where(v < 0, -y, y)

    x = x_ref[0].astype(f32)                    # (N, C) tokens
    N, C = x.shape
    D = C // num_heads

    # ---- pos_embed: depthwise 3x3 conv (padding=1) + bias, residual add.
    # 9 shifted-read taps along the flattened token axis with precomputed
    # boundary masks: O(9*N*C) VPU work, no (9,N,N) tensor, no MXU matmuls.
    cw = cw_ref[...]                            # (9, C)   per-tap channel weights
    mask = mask_ref[...]                        # (9, N, 1) per-tap validity masks
    conv = x * mask[4] * cw[4:5, :]             # centre tap (shift 0)
    for t in range(9):
        if t == 4:
            continue
        di, dj = t // 3 - 1, t % 3 - 1
        sh = (di * ws + dj) % N
        if sh == 0:
            shifted = x
        else:
            # shifted[n] = x[(n + di*ws + dj) % N]; rows that wrap across an
            # image boundary are zeroed by mask[t].
            # TODO(synk): use pltpu.roll (single XLU vrot) per tap at large N.
            shifted = jnp.concatenate([x[sh:, :], x[:sh, :]], axis=0)
        conv = conv + shifted * mask[t] * cw[t:t + 1, :]
    x = x + conv + cb_ref[...]

    # ---- attention branch: x + gamma_1 * proj(MHSA(LN1(x)))
    xn = layer_norm(x, ln1g_ref[...], ln1b_ref[...])
    qkv = mm(xn, qkvw_ref[...]) + qkvb_ref[...]            # (N, 3C) lane-dense
    heads = []
    # TODO(synk): lane-align head slices / pack multiple heads per q.k^T
    # contraction and switch to a lax.fori_loop once D is production-sized.
    for h in range(num_heads):
        q = qkv[:, h * D:(h + 1) * D]
        k = qkv[:, C + h * D:C + (h + 1) * D]
        v = qkv[:, 2 * C + h * D:2 * C + (h + 1) * D]
        s = mm(q, k, dn=(((1,), (1,)), ((), ()))) * scale  # (N, N), no k.T
        s = s - jnp.max(s, axis=-1, keepdims=True)
        p = jnp.exp(s)
        p = p * pl.reciprocal(jnp.sum(p, axis=-1, keepdims=True), approx=True)
        heads.append(mm(p, v))                             # (N, D)
    o = jnp.concatenate(heads, axis=-1)                    # (N, C) head merge
    x = x + g1_ref[...] * (mm(o, pw_ref[...]) + pb_ref[...])  # one C-contraction

    # ---- MLP branch: x + gamma_2 * fc2(GELU(fc1(LN2(x))))
    xn2 = layer_norm(x, ln2g_ref[...], ln2b_ref[...])
    hdn = mm(xn2, f1w_ref[...]) + f1b_ref[...]             # (N, Chid)
    hdn = 0.5 * hdn * (1.0 + erf(hdn * 0.7071067811865476))   # exact GELU
    mlp = mm(hdn, f2w_ref[...]) + f2b_ref[...]             # (N, C)
    x = x + g2_ref[...] * mlp

    # ---- optional 1x1 reduction conv == channel matmul (in != out channels)
    if has_reduction:
        x = mm(x, rw_ref[...]) + rb_ref[...]

    o_ref[0] = x.astype(o_ref.dtype)


# ----------------------------------------------------------------------------
# One-time parameter preparation (hoisted out of the per-call path).
# ----------------------------------------------------------------------------
def _tap_masks(Hs, Ws):
    """mask[t, n, 0] = 1 iff token n's (di,dj)=(t//3-1, t%3-1) neighbour lies
    inside the (Hs, Ws) image (zero padding handled by the mask)."""
    N = Hs * Ws
    m = np.zeros((9, N, 1), dtype=np.float32)
    for t in range(9):
        di, dj = t // 3 - 1, t % 3 - 1
        for i in range(Hs):
            if not 0 <= i + di < Hs:
                continue
            for j in range(Ws):
                if 0 <= j + dj < Ws:
                    m[t, i * Ws + j, 0] = 1.0
    return jnp.asarray(m)


def prepare_params(p, Hs, Ws, num_heads, mxu_dtype=jnp.bfloat16):
    """Transpose / reshape / pre-cast PyTorch-layout weights once."""
    C = p["ln1_w"].shape[0]
    md = mxu_dtype
    prep = {
        "tap_mask": _tap_masks(Hs, Ws),                    # (9, N, 1)
        "conv_w": p["pos_w"].reshape(C, 9).T,              # (9, C)
        "conv_b": p["pos_b"].reshape(1, C),
        "ln1_w": p["ln1_w"].reshape(1, C),
        "ln1_b": p["ln1_b"].reshape(1, C),
        "qkv_w": p["qkv_w"].T.astype(md),                  # (C, 3C)  pre-cast
        "qkv_b": p["qkv_b"].reshape(1, 3 * C),
        "proj_w": p["proj_w"].T.astype(md),                # (C, C)   pre-cast
        "proj_b": p["proj_b"].reshape(1, C),
        "gamma_1": p["gamma_1"].reshape(1, C),
        "ln2_w": p["ln2_w"].reshape(1, C),
        "ln2_b": p["ln2_b"].reshape(1, C),
        "fc1_w": p["fc1_w"].T.astype(md),                  # (C, Chid) pre-cast
        "fc1_b": p["fc1_b"].reshape(1, -1),
        "fc2_w": p["fc2_w"].T.astype(md),                  # (Chid, C) pre-cast
        "fc2_b": p["fc2_b"].reshape(1, C),
        "gamma_2": p["gamma_2"].reshape(1, C),
    }
    if "red_w" in p:
        Cout = p["red_w"].shape[0]
        prep["red_w"] = p["red_w"].reshape(Cout, C).T.astype(md)   # (C, Cout)
        prep["red_b"] = p["red_b"].reshape(1, Cout)
    return prep


# ----------------------------------------------------------------------------
# Forward wrapper (NCHW in / NCHW out, matching the PyTorch module).
# ----------------------------------------------------------------------------
def hierarchical_dynamics_block(x_nchw, prep, *, num_heads=8):
    B, C, Hs, Ws = x_nchw.shape
    N = Hs * Ws
    D = C // num_heads
    scale = float(D) ** -0.5
    mxu_dtype = prep["qkv_w"].dtype            # inferred from prepared weights

    # x.flatten(2).transpose(1,2) equivalent -> channels-last tokens.
    # TODO(synk): fold this transpose (and the return-path one) into the
    # kernel once production H*W makes the HBM round trip significant.
    x_tok = jnp.transpose(x_nchw, (0, 2, 3, 1)).reshape(B, N, C)

    has_red = "red_w" in prep
    Cout = prep["red_w"].shape[1] if has_red else C
    Chid = prep["fc1_w"].shape[1]

    weight_names = ["tap_mask", "conv_w", "conv_b", "ln1_w", "ln1_b",
                    "qkv_w", "qkv_b", "proj_w", "proj_b", "gamma_1",
                    "ln2_w", "ln2_b", "fc1_w", "fc1_b", "fc2_w", "fc2_b",
                    "gamma_2"]
    if has_red:
        weight_names += ["red_w", "red_b"]
    weights = [prep[n] for n in weight_names]

    # Explicit VMEM budget (default scoped limit is only 16 MiB on v5e /
    # 32 MiB on v6e+): weights + double-buffered x/out blocks + f32 activation
    # temps, with 2x headroom for compiler scratch / relayouts.
    weight_bytes = sum(int(w.size) * w.dtype.itemsize for w in weights)
    io_bytes = 2 * N * (C + Cout) * x_tok.dtype.itemsize
    act_bytes = 4 * N * (6 * C + Chid + N + Cout)
    vmem_limit = int(min(100 * 2 ** 20,
                         max(32 * 2 ** 20, 2 * (weight_bytes + io_bytes + act_bytes))))

    kern = functools.partial(_hdb_kernel, num_heads=num_heads, scale=scale,
                             mxu_dtype=mxu_dtype, ws=Ws, has_reduction=has_red)

    def make_call(single_buffer_weights):
        def bcast_spec(arr):
            rank = arr.ndim
            idx = lambda b, _r=rank: (0,) * _r
            if single_buffer_weights:
                # Constant index_map -> no need to double-buffer the weights;
                # halves resident weight VMEM (matters on v7x's 64 MiB).
                return pl.BlockSpec(arr.shape, idx, pipeline_mode=pl.Buffered(1))
            return pl.BlockSpec(arr.shape, idx)

        in_specs = ([pl.BlockSpec((1, N, C), lambda b: (b, 0, 0))]
                    + [bcast_spec(w) for w in weights])
        out_spec = pl.BlockSpec((1, N, Cout), lambda b: (b, 0, 0))
        return pl.pallas_call(
            kern,
            out_shape=jax.ShapeDtypeStruct((B, N, Cout), x_nchw.dtype),
            grid_spec=pltpu.PrefetchScalarGridSpec(
                num_scalar_prefetch=0,
                grid=(B,),
                in_specs=in_specs,
                out_specs=out_spec),
            compiler_params=pltpu.CompilerParams(
                dimension_semantics=("parallel",),
                vmem_limit_bytes=vmem_limit),
        )

    out_tok = None
    if hasattr(pl, "Buffered"):
        try:
            out_tok = make_call(True)(x_tok, *weights)
        except Exception:
            # Portability guard: older JAX builds may not accept
            # pipeline_mode=Buffered(1); fall back to default double-buffering.
            out_tok = None
    if out_tok is None:
        out_tok = make_call(False)(x_tok, *weights)

    return jnp.transpose(out_tok.reshape(B, Hs, Ws, Cout), (0, 3, 1, 2))


# ----------------------------------------------------------------------------
# Pure-JAX reference (mirrors the PyTorch forward exactly).
# ----------------------------------------------------------------------------
def reference(x, p, num_heads):
    B, C, Hs, Ws = x.shape
    y = jax.lax.conv_general_dilated(
        x, p["pos_w"], (1, 1), ((1, 1), (1, 1)),
        dimension_numbers=("NCHW", "OIHW", "NCHW"), feature_group_count=C)
    x = x + y + p["pos_b"].reshape(1, C, 1, 1)

    t = jnp.transpose(x.reshape(B, C, Hs * Ws), (0, 2, 1))     # (B, N, C)

    def ln(v, w, b):
        mu = v.mean(-1, keepdims=True)
        var = ((v - mu) ** 2).mean(-1, keepdims=True)
        return (v - mu) / jnp.sqrt(var + 1e-5) * w + b

    H = num_heads
    D = C // H
    scale = D ** -0.5
    xn = ln(t, p["ln1_w"], p["ln1_b"])
    qkv = xn @ p["qkv_w"].T + p["qkv_b"]
    qkv = qkv.reshape(B, -1, 3, H, D).transpose(2, 0, 3, 1, 4)
    q, k, v = qkv[0], qkv[1], qkv[2]
    attn = jnp.einsum("bhnd,bhmd->bhnm", q, k) * scale
    attn = jax.nn.softmax(attn, axis=-1)
    o = jnp.einsum("bhnm,bhmd->bhnd", attn, v)
    o = o.transpose(0, 2, 1, 3).reshape(B, -1, C)
    o = o @ p["proj_w"].T + p["proj_b"]
    t = t + p["gamma_1"] * o

    xn2 = ln(t, p["ln2_w"], p["ln2_b"])
    m = xn2 @ p["fc1_w"].T + p["fc1_b"]
    m = jax.nn.gelu(m, approximate=False)
    m = m @ p["fc2_w"].T + p["fc2_b"]
    t = t + p["gamma_2"] * m

    z = jnp.transpose(t, (0, 2, 1)).reshape(B, C, Hs, Ws)
    if "red_w" in p:
        Cout = p["red_w"].shape[0]
        z = (jnp.einsum("bchw,oc->bohw", z, p["red_w"].reshape(Cout, C))
             + p["red_b"].reshape(1, Cout, 1, 1))
    return z


# ----------------------------------------------------------------------------
# Test
# ----------------------------------------------------------------------------
def _make_params(key, C, Cout, Chid):
    ks = jax.random.split(key, 18)
    p = {
        "pos_w": 0.2 * jax.random.normal(ks[0], (C, 1, 3, 3), jnp.float32),
        "pos_b": 0.1 * jax.random.normal(ks[1], (C,), jnp.float32),
        "ln1_w": 1.0 + 0.1 * jax.random.normal(ks[2], (C,), jnp.float32),
        "ln1_b": 0.1 * jax.random.normal(ks[3], (C,), jnp.float32),
        "qkv_w": 0.1 * jax.random.normal(ks[4], (3 * C, C), jnp.float32),
        "qkv_b": 0.05 * jax.random.normal(ks[5], (3 * C,), jnp.float32),
        "proj_w": 0.1 * jax.random.normal(ks[6], (C, C), jnp.float32),
        "proj_b": 0.05 * jax.random.normal(ks[7], (C,), jnp.float32),
        "gamma_1": 0.5 + 0.1 * jax.random.normal(ks[8], (C,), jnp.float32),
        "ln2_w": 1.0 + 0.1 * jax.random.normal(ks[9], (C,), jnp.float32),
        "ln2_b": 0.1 * jax.random.normal(ks[10], (C,), jnp.float32),
        "fc1_w": 0.1 * jax.random.normal(ks[11], (Chid, C), jnp.float32),
        "fc1_b": 0.05 * jax.random.normal(ks[12], (Chid,), jnp.float32),
        "fc2_w": 0.05 * jax.random.normal(ks[13], (C, Chid), jnp.float32),
        "fc2_b": 0.05 * jax.random.normal(ks[14], (C,), jnp.float32),
        "gamma_2": 0.5 + 0.1 * jax.random.normal(ks[15], (C,), jnp.float32),
    }
    if Cout != C:
        p["red_w"] = 0.1 * jax.random.normal(ks[16], (Cout, C, 1, 1), jnp.float32)
        p["red_b"] = 0.05 * jax.random.normal(ks[17], (Cout,), jnp.float32)
    return p


if __name__ == "__main__":
    B, C, Hs, Ws = 2, 32, 4, 4          # N = 16 tokens, num_heads = 8, D = 4
    num_heads = 8
    mlp_ratio = 8.0                      # HierarchicalDynamicsBlock default
    Chid = int(C * mlp_ratio)

    key = jax.random.PRNGKey(0)
    k_x, k_p1, k_p2, k_x2 = jax.random.split(key, 4)

    # ---- case 1: in_channels == out_channels (MHSA path, no reduction) ----
    x = jax.random.normal(k_x, (B, C, Hs, Ws), dtype=jnp.float32)
    params = _make_params(k_p1, C, C, Chid)
    ref = reference(x, params, num_heads)

    # f32 MXU operands: tight numerics check (approx-EUP reciprocals in the
    # softmax denominator and erf() set the ~1e-4 error floor).
    prep32 = prepare_params(params, Hs, Ws, num_heads, mxu_dtype=jnp.float32)
    out32 = jax.block_until_ready(
        hierarchical_dynamics_block(x, prep32, num_heads=num_heads))
    assert out32.shape == ref.shape
    assert jnp.allclose(out32, ref, atol=3e-3, rtol=3e-3), "f32 mismatch"

    # bf16 pre-cast weights (perf path on v5e/v6e/v7x): looser tolerance.
    prepbf = prepare_params(params, Hs, Ws, num_heads, mxu_dtype=jnp.bfloat16)
    outbf = jax.block_until_ready(
        hierarchical_dynamics_block(x, prepbf, num_heads=num_heads))
    assert jnp.allclose(outbf, ref, atol=5e-2, rtol=5e-2), "bf16 mismatch"

    # ---- case 2: in_channels != out_channels (1x1 reduction conv path) ----
    Cout = 16
    x2 = jax.random.normal(k_x2, (B, C, Hs, Ws), dtype=jnp.float32)
    params2 = _make_params(k_p2, C, Cout, Chid)
    prep2 = prepare_params(params2, Hs, Ws, num_heads, mxu_dtype=jnp.float32)
    ref2 = reference(x2, params2, num_heads)
    out2 = jax.block_until_ready(
        hierarchical_dynamics_block(x2, prep2, num_heads=num_heads))
    assert out2.shape == (B, Cout, Hs, Ws)
    assert jnp.allclose(out2, ref2, atol=3e-3, rtol=3e-3), "reduction mismatch"

    print("KERNEL_OK")
</pallas_src>

<mosaic_0001>
module attributes {stable_mosaic.version = 11 : i64} {
  func.func @_hdb_kernel(%arg0: i32, %arg1: memref<1x16x32xf32, #tpu.memory_space<vmem>>, %arg2: memref<9x16x1xf32, #tpu.memory_space<vmem>>, %arg3: memref<9x32xf32, #tpu.memory_space<vmem>>, %arg4: memref<1x32xf32, #tpu.memory_space<vmem>>, %arg5: memref<1x32xf32, #tpu.memory_space<vmem>>, %arg6: memref<1x32xf32, #tpu.memory_space<vmem>>, %arg7: memref<32x96xf32, #tpu.memory_space<vmem>>, %arg8: memref<1x96xf32, #tpu.memory_space<vmem>>, %arg9: memref<32x32xf32, #tpu.memory_space<vmem>>, %arg10: memref<1x32xf32, #tpu.memory_space<vmem>>, %arg11: memref<1x32xf32, #tpu.memory_space<vmem>>, %arg12: memref<1x32xf32, #tpu.memory_space<vmem>>, %arg13: memref<1x32xf32, #tpu.memory_space<vmem>>, %arg14: memref<32x256xf32, #tpu.memory_space<vmem>>, %arg15: memref<1x256xf32, #tpu.memory_space<vmem>>, %arg16: memref<256x32xf32, #tpu.memory_space<vmem>>, %arg17: memref<1x32xf32, #tpu.memory_space<vmem>>, %arg18: memref<1x32xf32, #tpu.memory_space<vmem>>, %arg19: memref<1x16x32xf32, #tpu.memory_space<vmem>>) attributes {dimension_semantics = [#tpu.dimension_semantics<parallel>], iteration_bounds = array<i64: 2>, scalar_prefetch = 0 : i64, scratch_operands = 0 : i64, tpu.core_type = #tpu.core_type<tc>, window_params = [{transform_indices = @transform_0, window_bounds = array<i64: 1, 16, 32>}, {pipeline_mode = #tpu.pipeline_mode<synchronous>, transform_indices = @transform_1, window_bounds = array<i64: 9, 16, 1>}, {pipeline_mode = #tpu.pipeline_mode<synchronous>, transform_indices = @transform_2, window_bounds = array<i64: 9, 32>}, {pipeline_mode = #tpu.pipeline_mode<synchronous>, transform_indices = @transform_3, window_bounds = array<i64: 1, 32>}, {pipeline_mode = #tpu.pipeline_mode<synchronous>, transform_indices = @transform_4, window_bounds = array<i64: 1, 32>}, {pipeline_mode = #tpu.pipeline_mode<synchronous>, transform_indices = @transform_5, window_bounds = array<i64: 1, 32>}, {pipeline_mode = #tpu.pipeline_mode<synchronous>, transform_indices = @transform_6, window_bounds = array<i64: 32, 96>}, {pipeline_mode = #tpu.pipeline_mode<synchronous>, transform_indices = @transform_7, window_bounds = array<i64: 1, 96>}, {pipeline_mode = #tpu.pipeline_mode<synchronous>, transform_indices = @transform_8, window_bounds = array<i64: 32, 32>}, {pipeline_mode = #tpu.pipeline_mode<synchronous>, transform_indices = @transform_9, window_bounds = array<i64: 1, 32>}, {pipeline_mode = #tpu.pipeline_mode<synchronous>, transform_indices = @transform_10, window_bounds = array<i64: 1, 32>}, {pipeline_mode = #tpu.pipeline_mode<synchronous>, transform_indices = @transform_11, window_bounds = array<i64: 1, 32>}, {pipeline_mode = #tpu.pipeline_mode<synchronous>, transform_indices = @transform_12, window_bounds = array<i64: 1, 32>}, {pipeline_mode = #tpu.pipeline_mode<synchronous>, transform_indices = @transform_13, window_bounds = array<i64: 32, 256>}, {pipeline_mode = #tpu.pipeline_mode<synchronous>, transform_indices = @transform_14, window_bounds = array<i64: 1, 256>}, {pipeline_mode = #tpu.pipeline_mode<synchronous>, transform_indices = @transform_15, window_bounds = array<i64: 256, 32>}, {pipeline_mode = #tpu.pipeline_mode<synchronous>, transform_indices = @transform_16, window_bounds = array<i64: 1, 32>}, {pipeline_mode = #tpu.pipeline_mode<synchronous>, transform_indices = @transform_17, window_bounds = array<i64: 1, 32>}, {transform_indices = @transform_18, window_bounds = array<i64: 1, 16, 32>}]} {
    %c0 = arith.constant 0 : index
    %c0_0 = arith.constant 0 : index
    %c0_1 = arith.constant 0 : index
    %0 = vector.load %arg1[%c0, %c0_0, %c0_1] : memref<1x16x32xf32, #tpu.memory_space<vmem>>, vector<1x16x32xf32>
    %1 = vector.shape_cast %0 : vector<1x16x32xf32> to vector<16x32xf32>
    %c0_2 = arith.constant 0 : index
    %c0_3 = arith.constant 0 : index
    %2 = vector.load %arg3[%c0_2, %c0_3] : memref<9x32xf32, #tpu.memory_space<vmem>>, vector<9x32xf32>
    %c0_4 = arith.constant 0 : index
    %c0_5 = arith.constant 0 : index
    %c0_6 = arith.constant 0 : index
    %3 = vector.load %arg2[%c0_4, %c0_5, %c0_6] : memref<9x16x1xf32, #tpu.memory_space<vmem>>, vector<9x16x1xf32>
    %4 = vector.extract_strided_slice %3 {offsets = [4, 0, 0], sizes = [1, 16, 1], strides = [1, 1, 1]} : vector<9x16x1xf32> to vector<1x16x1xf32>
    %5 = vector.shape_cast %4 : vector<1x16x1xf32> to vector<16x1xf32>
    %6 = vector.broadcast %5 : vector<16x1xf32> to vector<16x32xf32>
    %7 = arith.mulf %1, %6 : vector<16x32xf32>
    %8 = vector.extract_strided_slice %2 {offsets = [4, 0], sizes = [1, 32], strides = [1, 1]} : vector<9x32xf32> to vector<1x32xf32>
    %9 = vector.broadcast %8 : vector<1x32xf32> to vector<16x32xf32>
    %10 = arith.mulf %7, %9 : vector<16x32xf32>
    %11 = vector.extract_strided_slice %1 {offsets = [11, 0], sizes = [5, 32], strides = [1, 1]} : vector<16x32xf32> to vector<5x32xf32>
    %12 = vector.extract_strided_slice %1 {offsets = [0, 0], sizes = [11, 32], strides = [1, 1]} : vector<16x32xf32> to vector<11x32xf32>
    %13 = tpu.concatenate %11, %12 in 0 : vector<5x32xf32>, vector<11x32xf32> -> vector<16x32xf32>
    %14 = vector.extract_strided_slice %3 {offsets = [0, 0, 0], sizes = [1, 16, 1], strides = [1, 1, 1]} : vector<9x16x1xf32> to vector<1x16x1xf32>
    %15 = vector.shape_cast %14 : vector<1x16x1xf32> to vector<16x1xf32>
    %16 = vector.broadcast %15 : vector<16x1xf32> to vector<16x32xf32>
    %17 = arith.mulf %13, %16 : vector<16x32xf32>
    %18 = vector.extract_strided_slice %2 {offsets = [0, 0], sizes = [1, 32], strides = [1, 1]} : vector<9x32xf32> to vector<1x32xf32>
    %19 = vector.broadcast %18 : vector<1x32xf32> to vector<16x32xf32>
    %20 = arith.mulf %17, %19 : vector<16x32xf32>
    %21 = arith.addf %10, %20 : vector<16x32xf32>
    %22 = vector.extract_strided_slice %1 {offsets = [12, 0], sizes = [4, 32], strides = [1, 1]} : vector<16x32xf32> to vector<4x32xf32>
    %23 = vector.extract_strided_slice %1 {offsets = [0, 0], sizes = [12, 32], strides = [1, 1]} : vector<16x32xf32> to vector<12x32xf32>
    %24 = tpu.concatenate %22, %23 in 0 : vector<4x32xf32>, vector<12x32xf32> -> vector<16x32xf32>
    %25 = vector.extract_strided_slice %3 {offsets = [1, 0, 0], sizes = [1, 16, 1], strides = [1, 1, 1]} : vector<9x16x1xf32> to vector<1x16x1xf32>
    %26 = vector.shape_cast %25 : vector<1x16x1xf32> to vector<16x1xf32>
    %27 = vector.broadcast %26 : vector<16x1xf32> to vector<16x32xf32>
    %28 = arith.mulf %24, %27 : vector<16x32xf32>
    %29 = vector.extract_strided_slice %2 {offsets = [1, 0], sizes = [1, 32], strides = [1, 1]} : vector<9x32xf32> to vector<1x32xf32>
    %30 = vector.broadcast %29 : vector<1x32xf32> to vector<16x32xf32>
    %31 = arith.mulf %28, %30 : vector<16x32xf32>
    %32 = arith.addf %21, %31 : vector<16x32xf32>
    %33 = vector.extract_strided_slice %1 {offsets = [13, 0], sizes = [3, 32], strides = [1, 1]} : vector<16x32xf32> to vector<3x32xf32>
    %34 = vector.extract_strided_slice %1 {offsets = [0, 0], sizes = [13, 32], strides = [1, 1]} : vector<16x32xf32> to vector<13x32xf32>
    %35 = tpu.concatenate %33, %34 in 0 : vector<3x32xf32>, vector<13x32xf32> -> vector<16x32xf32>
    %36 = vector.extract_strided_slice %3 {offsets = [2, 0, 0], sizes = [1, 16, 1], strides = [1, 1, 1]} : vector<9x16x1xf32> to vector<1x16x1xf32>
    %37 = vector.shape_cast %36 : vector<1x16x1xf32> to vector<16x1xf32>
    %38 = vector.broadcast %37 : vector<16x1xf32> to vector<16x32xf32>
    %39 = arith.mulf %35, %38 : vector<16x32xf32>
    %40 = vector.extract_strided_slice %2 {offsets = [2, 0], sizes = [1, 32], strides = [1, 1]} : vector<9x32xf32> to vector<1x32xf32>
    %41 = vector.broadcast %40 : vector<1x32xf32> to vector<16x32xf32>
    %42 = arith.mulf %39, %41 : vector<16x32xf32>
    %43 = arith.addf %32, %42 : vector<16x32xf32>
    %44 = vector.extract_strided_slice %1 {offsets = [15, 0], sizes = [1, 32], strides = [1, 1]} : vector<16x32xf32> to vector<1x32xf32>
    %45 = vector.extract_strided_slice %1 {offsets = [0, 0], sizes = [15, 32], strides = [1, 1]} : vector<16x32xf32> to vector<15x32xf32>
    %46 = tpu.concatenate %44, %45 in 0 : vector<1x32xf32>, vector<15x32xf32> -> vector<16x32xf32>
    %47 = vector.extract_strided_slice %3 {offsets = [3, 0, 0], sizes = [1, 16, 1], strides = [1, 1, 1]} : vector<9x16x1xf32> to vector<1x16x1xf32>
    %48 = vector.shape_cast %47 : vector<1x16x1xf32> to vector<16x1xf32>
    %49 = vector.broadcast %48 : vector<16x1xf32> to vector<16x32xf32>
    %50 = arith.mulf %46, %49 : vector<16x32xf32>
    %51 = vector.extract_strided_slice %2 {offsets = [3, 0], sizes = [1, 32], strides = [1, 1]} : vector<9x32xf32> to vector<1x32xf32>
    %52 = vector.broadcast %51 : vector<1x32xf32> to vector<16x32xf32>
    %53 = arith.mulf %50, %52 : vector<16x32xf32>
    %54 = arith.addf %43, %53 : vector<16x32xf32>
    %55 = vector.extract_strided_slice %1 {offsets = [1, 0], sizes = [15, 32], strides = [1, 1]} : vector<16x32xf32> to vector<15x32xf32>
    %56 = vector.extract_strided_slice %1 {offsets = [0, 0], sizes = [1, 32], strides = [1, 1]} : vector<16x32xf32> to vector<1x32xf32>
    %57 = tpu.concatenate %55, %56 in 0 : vector<15x32xf32>, vector<1x32xf32> -> vector<16x32xf32>
    %58 = vector.extract_strided_slice %3 {offsets = [5, 0, 0], sizes = [1, 16, 1], strides = [1, 1, 1]} : vector<9x16x1xf32> to vector<1x16x1xf32>
    %59 = vector.shape_cast %58 : vector<1x16x1xf32> to vector<16x1xf32>
    %60 = vector.broadcast %59 : vector<16x1xf32> to vector<16x32xf32>
    %61 = arith.mulf %57, %60 : vector<16x32xf32>
    %62 = vector.extract_strided_slice %2 {offsets = [5, 0], sizes = [1, 32], strides = [1, 1]} : vector<9x32xf32> to vector<1x32xf32>
    %63 = vector.broadcast %62 : vector<1x32xf32> to vector<16x32xf32>
    %64 = arith.mulf %61, %63 : vector<16x32xf32>
    %65 = arith.addf %54, %64 : vector<16x32xf32>
    %66 = vector.extract_strided_slice %1 {offsets = [3, 0], sizes = [13, 32], strides = [1, 1]} : vector<16x32xf32> to vector<13x32xf32>
    %67 = vector.extract_strided_slice %1 {offsets = [0, 0], sizes = [3, 32], strides = [1, 1]} : vector<16x32xf32> to vector<3x32xf32>
    %68 = tpu.concatenate %66, %67 in 0 : vector<13x32xf32>, vector<3x32xf32> -> vector<16x32xf32>
    %69 = vector.extract_strided_slice %3 {offsets = [6, 0, 0], sizes = [1, 16, 1], strides = [1, 1, 1]} : vector<9x16x1xf32> to vector<1x16x1xf32>
    %70 = vector.shape_cast %69 : vector<1x16x1xf32> to vector<16x1xf32>
    %71 = vector.broadcast %70 : vector<16x1xf32> to vector<16x32xf32>
    %72 = arith.mulf %68, %71 : vector<16x32xf32>
    %73 = vector.extract_strided_slice %2 {offsets = [6, 0], sizes = [1, 32], strides = [1, 1]} : vector<9x32xf32> to vector<1x32xf32>
    %74 = vector.broadcast %73 : vector<1x32xf32> to vector<16x32xf32>
    %75 = arith.mulf %72, %74 : vector<16x32xf32>
    %76 = arith.addf %65, %75 : vector<16x32xf32>
    %77 = vector.extract_strided_slice %1 {offsets = [4, 0], sizes = [12, 32], strides = [1, 1]} : vector<16x32xf32> to vector<12x32xf32>
    %78 = vector.extract_strided_slice %1 {offsets = [0, 0], sizes = [4, 32], strides = [1, 1]} : vector<16x32xf32> to vector<4x32xf32>
    %79 = tpu.concatenate %77, %78 in 0 : vector<12x32xf32>, vector<4x32xf32> -> vector<16x32xf32>
    %80 = vector.extract_strided_slice %3 {offsets = [7, 0, 0], sizes = [1, 16, 1], strides = [1, 1, 1]} : vector<9x16x1xf32> to vector<1x16x1xf32>
    %81 = vector.shape_cast %80 : vector<1x16x1xf32> to vector<16x1xf32>
    %82 = vector.broadcast %81 : vector<16x1xf32> to vector<16x32xf32>
    %83 = arith.mulf %79, %82 : vector<16x32xf32>
    %84 = vector.extract_strided_slice %2 {offsets = [7, 0], sizes = [1, 32], strides = [1, 1]} : vector<9x32xf32> to vector<1x32xf32>
    %85 = vector.broadcast %84 : vector<1x32xf32> to vector<16x32xf32>
    %86 = arith.mulf %83, %85 : vector<16x32xf32>
    %87 = arith.addf %76, %86 : vector<16x32xf32>
    %88 = vector.extract_strided_slice %1 {offsets = [5, 0], sizes = [11, 32], strides = [1, 1]} : vector<16x32xf32> to vector<11x32xf32>
    %89 = vector.extract_strided_slice %1 {offsets = [0, 0], sizes = [5, 32], strides = [1, 1]} : vector<16x32xf32> to vector<5x32xf32>
    %90 = tpu.concatenate %88, %89 in 0 : vector<11x32xf32>, vector<5x32xf32> -> vector<16x32xf32>
    %91 = vector.extract_strided_slice %3 {offsets = [8, 0, 0], sizes = [1, 16, 1], strides = [1, 1, 1]} : vector<9x16x1xf32> to vector<1x16x1xf32>
    %92 = vector.shape_cast %91 : vector<1x16x1xf32> to vector<16x1xf32>
    %93 = vector.broadcast %92 : vector<16x1xf32> to vector<16x32xf32>
    %94 = arith.mulf %90, %93 : vector<16x32xf32>
    %95 = vector.extract_strided_slice %2 {offsets = [8, 0], sizes = [1, 32], strides = [1, 1]} : vector<9x32xf32> to vector<1x32xf32>
    %96 = vector.broadcast %95 : vector<1x32xf32> to vector<16x32xf32>
    %97 = arith.mulf %94, %96 : vector<16x32xf32>
    %98 = arith.addf %87, %97 : vector<16x32xf32>
    %99 = arith.addf %1, %98 : vector<16x32xf32>
    %c0_7 = arith.constant 0 : index
    %c0_8 = arith.constant 0 : index
    %100 = vector.load %arg4[%c0_7, %c0_8] : memref<1x32xf32, #tpu.memory_space<vmem>>, vector<1x32xf32>
    %101 = vector.broadcast %100 : vector<1x32xf32> to vector<16x32xf32>
    %102 = arith.addf %99, %101 : vector<16x32xf32>
    %c0_9 = arith.constant 0 : index
    %c0_10 = arith.constant 0 : index
    %103 = vector.load %arg5[%c0_9, %c0_10] : memref<1x32xf32, #tpu.memory_space<vmem>>, vector<1x32xf32>
    %c0_11 = arith.constant 0 : index
    %c0_12 = arith.constant 0 : index
    %104 = vector.load %arg6[%c0_11, %c0_12] : memref<1x32xf32, #tpu.memory_space<vmem>>, vector<1x32xf32>
    %cst = arith.constant dense<0.000000e+00> : vector<16xf32>
    %105 = vector.multi_reduction <add>, %102, %cst [1] : vector<16x32xf32> to vector<16xf32>
    %106 = vector.shape_cast %105 : vector<16xf32> to vector<16x1xf32>
    %cst_13 = arith.constant 3.200000e+01 : f32
    %107 = vector.broadcast %cst_13 : f32 to vector<16x1xf32>
    %108 = arith.divf %106, %107 : vector<16x1xf32>
    %109 = vector.broadcast %108 : vector<16x1xf32> to vector<16x32xf32>
    %110 = arith.subf %102, %109 : vector<16x32xf32>
    %111 = arith.mulf %110, %110 : vector<16x32xf32>
    %cst_14 = arith.constant dense<0.000000e+00> : vector<16xf32>
    %112 = vector.multi_reduction <add>, %111, %cst_14 [1] : vector<16x32xf32> to vector<16xf32>
    %113 = vector.shape_cast %112 : vector<16xf32> to vector<16x1xf32>
    %cst_15 = arith.constant 3.200000e+01 : f32
    %114 = vector.broadcast %cst_15 : f32 to vector<16x1xf32>
    %115 = arith.divf %113, %114 : vector<16x1xf32>
    %cst_16 = arith.constant 9.99999974E-6 : f32
    %116 = vector.broadcast %cst_16 : f32 to vector<16x1xf32>
    %117 = arith.addf %115, %116 : vector<16x1xf32>
    %118 = math.rsqrt %117 : vector<16x1xf32>
    %119 = vector.broadcast %118 : vector<16x1xf32> to vector<16x32xf32>
    %120 = arith.mulf %110, %119 : vector<16x32xf32>
    %121 = vector.broadcast %103 : vector<1x32xf32> to vector<16x32xf32>
    %122 = arith.mulf %120, %121 : vector<16x32xf32>
    %123 = vector.broadcast %104 : vector<1x32xf32> to vector<16x32xf32>
    %124 = arith.addf %122, %123 : vector<16x32xf32>
    %c0_17 = arith.constant 0 : index
    %c0_18 = arith.constant 0 : index
    %125 = vector.load %arg7[%c0_17, %c0_18] : memref<32x96xf32, #tpu.memory_space<vmem>>, vector<32x96xf32>
    %cst_19 = arith.constant dense<0.000000e+00> : vector<16x96xf32>
    %126 = tpu.matmul %124, %125, %cst_19 {dimension_numbers = #tpu.dot_dimension_numbers<[1], [0], [0], [1], [0, 0, 1, 1], [], []>} : vector<16x32xf32>, vector<32x96xf32>, vector<16x96xf32> -> vector<16x96xf32>
    %c0_20 = arith.constant 0 : index
    %c0_21 = arith.constant 0 : index
    %127 = vector.load %arg8[%c0_20, %c0_21] : memref<1x96xf32, #tpu.memory_space<vmem>>, vector<1x96xf32>
    %128 = vector.broadcast %127 : vector<1x96xf32> to vector<16x96xf32>
    %129 = arith.addf %126, %128 : vector<16x96xf32>
    %130 = vector.extract_strided_slice %129 {offsets = [0, 0], sizes = [16, 4], strides = [1, 1]} : vector<16x96xf32> to vector<16x4xf32>
    %131 = vector.extract_strided_slice %129 {offsets = [0, 32], sizes = [16, 4], strides = [1, 1]} : vector<16x96xf32> to vector<16x4xf32>
    %132 = vector.extract_strided_slice %129 {offsets = [0, 64], sizes = [16, 4], strides = [1, 1]} : vector<16x96xf32> to vector<16x4xf32>
    %cst_22 = arith.constant dense<0.000000e+00> : vector<16x16xf32>
    %133 = tpu.matmul %130, %131, %cst_22 {dimension_numbers = #tpu.dot_dimension_numbers<[1], [1], [0], [0], [0, 0, 1, 0], [], []>} : vector<16x4xf32>, vector<16x4xf32>, vector<16x16xf32> -> vector<16x16xf32>
    %cst_23 = arith.constant 5.000000e-01 : f32
    %134 = vector.broadcast %cst_23 : f32 to vector<16x16xf32>
    %135 = arith.mulf %133, %134 : vector<16x16xf32>
    %cst_24 = arith.constant dense<0xFF800000> : vector<16xf32>
    %136 = vector.multi_reduction <maximumf>, %135, %cst_24 [1] : vector<16x16xf32> to vector<16xf32>
    %137 = vector.shape_cast %136 : vector<16xf32> to vector<16x1xf32>
    %138 = vector.broadcast %137 : vector<16x1xf32> to vector<16x16xf32>
    %139 = arith.subf %135, %138 : vector<16x16xf32>
    %140 = math.exp %139 : vector<16x16xf32>
    %cst_25 = arith.constant dense<0.000000e+00> : vector<16xf32>
    %141 = vector.multi_reduction <add>, %140, %cst_25 [1] : vector<16x16xf32> to vector<16xf32>
    %142 = vector.shape_cast %141 : vector<16xf32> to vector<16x1xf32>
    %143 = tpu.reciprocal %142 {approx = true} : vector<16x1xf32> -> vector<16x1xf32>
    %144 = vector.broadcast %143 : vector<16x1xf32> to vector<16x16xf32>
    %145 = arith.mulf %140, %144 : vector<16x16xf32>
    %cst_26 = arith.constant dense<0.000000e+00> : vector<16x4xf32>
    %146 = tpu.matmul %145, %132, %cst_26 {dimension_numbers = #tpu.dot_dimension_numbers<[1], [0], [0], [1], [0, 0, 1, 1], [], []>} : vector<16x16xf32>, vector<16x4xf32>, vector<16x4xf32> -> vector<16x4xf32>
    %147 = vector.extract_strided_slice %129 {offsets = [0, 4], sizes = [16, 4], strides = [1, 1]} : vector<16x96xf32> to vector<16x4xf32>
    %148 = vector.extract_strided_slice %129 {offsets = [0, 36], sizes = [16, 4], strides = [1, 1]} : vector<16x96xf32> to vector<16x4xf32>
    %149 = vector.extract_strided_slice %129 {offsets = [0, 68], sizes = [16, 4], strides = [1, 1]} : vector<16x96xf32> to vector<16x4xf32>
    %cst_27 = arith.constant dense<0.000000e+00> : vector<16x16xf32>
    %150 = tpu.matmul %147, %148, %cst_27 {dimension_numbers = #tpu.dot_dimension_numbers<[1], [1], [0], [0], [0, 0, 1, 0], [], []>} : vector<16x4xf32>, vector<16x4xf32>, vector<16x16xf32> -> vector<16x16xf32>
    %cst_28 = arith.constant 5.000000e-01 : f32
    %151 = vector.broadcast %cst_28 : f32 to vector<16x16xf32>
    %152 = arith.mulf %150, %151 : vector<16x16xf32>
    %cst_29 = arith.constant dense<0xFF800000> : vector<16xf32>
    %153 = vector.multi_reduction <maximumf>, %152, %cst_29 [1] : vector<16x16xf32> to vector<16xf32>
    %154 = vector.shape_cast %153 : vector<16xf32> to vector<16x1xf32>
    %155 = vector.broadcast %154 : vector<16x1xf32> to vector<16x16xf32>
    %156 = arith.subf %152, %155 : vector<16x16xf32>
    %157 = math.exp %156 : vector<16x16xf32>
    %cst_30 = arith.constant dense<0.000000e+00> : vector<16xf32>
    %158 = vector.multi_reduction <add>, %157, %cst_30 [1] : vector<16x16xf32> to vector<16xf32>
    %159 = vector.shape_cast %158 : vector<16xf32> to vector<16x1xf32>
    %160 = tpu.reciprocal %159 {approx = true} : vector<16x1xf32> -> vector<16x1xf32>
    %161 = vector.broadcast %160 : vector<16x1xf32> to vector<16x16xf32>
    %162 = arith.mulf %157, %161 : vector<16x16xf32>
    %cst_31 = arith.constant dense<0.000000e+00> : vector<16x4xf32>
    %163 = tpu.matmul %162, %149, %cst_31 {dimension_numbers = #tpu.dot_dimension_numbers<[1], [0], [0], [1], [0, 0, 1, 1], [], []>} : vector<16x16xf32>, vector<16x4xf32>, vector<16x4xf32> -> vector<16x4xf32>
    %164 = vector.extract_strided_slice %129 {offsets = [0, 8], sizes = [16, 4], strides = [1, 1]} : vector<16x96xf32> to vector<16x4xf32>
    %165 = vector.extract_strided_slice %129 {offsets = [0, 40], sizes = [16, 4], strides = [1, 1]} : vector<16x96xf32> to vector<16x4xf32>
    %166 = vector.extract_strided_slice %129 {offsets = [0, 72], sizes = [16, 4], strides = [1, 1]} : vector<16x96xf32> to vector<16x4xf32>
    %cst_32 = arith.constant dense<0.000000e+00> : vector<16x16xf32>
    %167 = tpu.matmul %164, %165, %cst_32 {dimension_numbers = #tpu.dot_dimension_numbers<[1], [1], [0], [0], [0, 0, 1, 0], [], []>} : vector<16x4xf32>, vector<16x4xf32>, vector<16x16xf32> -> vector<16x16xf32>
    %cst_33 = arith.constant 5.000000e-01 : f32
    %168 = vector.broadcast %cst_33 : f32 to vector<16x16xf32>
    %169 = arith.mulf %167, %168 : vector<16x16xf32>
    %cst_34 = arith.constant dense<0xFF800000> : vector<16xf32>
    %170 = vector.multi_reduction <maximumf>, %169, %cst_34 [1] : vector<16x16xf32> to vector<16xf32>
    %171 = vector.shape_cast %170 : vector<16xf32> to vector<16x1xf32>
    %172 = vector.broadcast %171 : vector<16x1xf32> to vector<16x16xf32>
    %173 = arith.subf %169, %172 : vector<16x16xf32>
    %174 = math.exp %173 : vector<16x16xf32>
    %cst_35 = arith.constant dense<0.000000e+00> : vector<16xf32>
    %175 = vector.multi_reduction <add>, %174, %cst_35 [1] : vector<16x16xf32> to vector<16xf32>
    %176 = vector.shape_cast %175 : vector<16xf32> to vector<16x1xf32>
    %177 = tpu.reciprocal %176 {approx = true} : vector<16x1xf32> -> vector<16x1xf32>
    %178 = vector.broadcast %177 : vector<16x1xf32> to vector<16x16xf32>
    %179 = arith.mulf %174, %178 : vector<16x16xf32>
    %cst_36 = arith.constant dense<0.000000e+00> : vector<16x4xf32>
    %180 = tpu.matmul %179, %166, %cst_36 {dimension_numbers = #tpu.dot_dimension_numbers<[1], [0], [0], [1], [0, 0, 1, 1], [], []>} : vector<16x16xf32>, vector<16x4xf32>, vector<16x4xf32> -> vector<16x4xf32>
    %181 = vector.extract_strided_slice %129 {offsets = [0, 12], sizes = [16, 4], strides = [1, 1]} : vector<16x96xf32> to vector<16x4xf32>
    %182 = vector.extract_strided_slice %129 {offsets = [0, 44], sizes = [16, 4], strides = [1, 1]} : vector<16x96xf32> to vector<16x4xf32>
    %183 = vector.extract_strided_slice %129 {offsets = [0, 76], sizes = [16, 4], strides = [1, 1]} : vector<16x96xf32> to vector<16x4xf32>
    %cst_37 = arith.constant dense<0.000000e+00> : vector<16x16xf32>
    %184 = tpu.matmul %181, %182, %cst_37 {dimension_numbers = #tpu.dot_dimension_numbers<[1], [1], [0], [0], [0, 0, 1, 0], [], []>} : vector<16x4xf32>, vector<16x4xf32>, vector<16x16xf32> -> vector<16x16xf32>
    %cst_38 = arith.constant 5.000000e-01 : f32
    %185 = vector.broadcast %cst_38 : f32 to vector<16x16xf32>
    %186 = arith.mulf %184, %185 : vector<16x16xf32>
    %cst_39 = arith.constant dense<0xFF800000> : vector<16xf32>
    %187 = vector.multi_reduction <maximumf>, %186, %cst_39 [1] : vector<16x16xf32> to vector<16xf32>
    %188 = vector.shape_cast %187 : vector<16xf32> to vector<16x1xf32>
    %189 = vector.broadcast %188 : vector<16x1xf32> to vector<16x16xf32>
    %190 = arith.subf %186, %189 : vector<16x16xf32>
    %191 = math.exp %190 : vector<16x16xf32>
    %cst_40 = arith.constant dense<0.000000e+00> : vector<16xf32>
    %192 = vector.multi_reduction <add>, %191, %cst_40 [1] : vector<16x16xf32> to vector<16xf32>
    %193 = vector.shape_cast %192 : vector<16xf32> to vector<16x1xf32>
    %194 = tpu.reciprocal %193 {approx = true} : vector<16x1xf32> -> vector<16x1xf32>
    %195 = vector.broadcast %194 : vector<16x1xf32> to vector<16x16xf32>
    %196 = arith.mulf %191, %195 : vector<16x16xf32>
    %cst_41 = arith.constant dense<0.000000e+00> : vector<16x4xf32>
    %197 = tpu.matmul %196, %183, %cst_41 {dimension_numbers = #tpu.dot_dimension_numbers<[1], [0], [0], [1], [0, 0, 1, 1], [], []>} : vector<16x16xf32>, vector<16x4xf32>, vector<16x4xf32> -> vector<16x4xf32>
    %198 = vector.extract_strided_slice %129 {offsets = [0, 16], sizes = [16, 4], strides = [1, 1]} : vector<16x96xf32> to vector<16x4xf32>
    %199 = vector.extract_strided_slice %129 {offsets = [0, 48], sizes = [16, 4], strides = [1, 1]} : vector<16x96xf32> to vector<16x4xf32>
    %200 = vector.extract_strided_slice %129 {offsets = [0, 80], sizes = [16, 4], strides = [1, 1]} : vector<16x96xf32> to vector<16x4xf32>
    %cst_42 = arith.constant dense<0.000000e+00> : vector<16x16xf32>
    %201 = tpu.matmul %198, %199, %cst_42 {dimension_numbers = #tpu.dot_dimension_numbers<[1], [1], [0], [0], [0, 0, 1, 0], [], []>} : vector<16x4xf32>, vector<16x4xf32>, vector<16x16xf32> -> vector<16x16xf32>
    %cst_43 = arith.constant 5.000000e-01 : f32
    %202 = vector.broadcast %cst_43 : f32 to vector<16x16xf32>
    %203 = arith.mulf %201, %202 : vector<16x16xf32>
    %cst_44 = arith.constant dense<0xFF800000> : vector<16xf32>
    %204 = vector.multi_reduction <maximumf>, %203, %cst_44 [1] : vector<16x16xf32> to vector<16xf32>
    %205 = vector.shape_cast %204 : vector<16xf32> to vector<16x1xf32>
    %206 = vector.broadcast %205 : vector<16x1xf32> to vector<16x16xf32>
    %207 = arith.subf %203, %206 : vector<16x16xf32>
    %208 = math.exp %207 : vector<16x16xf32>
    %cst_45 = arith.constant dense<0.000000e+00> : vector<16xf32>
    %209 = vector.multi_reduction <add>, %208, %cst_45 [1] : vector<16x16xf32> to vector<16xf32>
    %210 = vector.shape_cast %209 : vector<16xf32> to vector<16x1xf32>
    %211 = tpu.reciprocal %210 {approx = true} : vector<16x1xf32> -> vector<16x1xf32>
    %212 = vector.broadcast %211 : vector<16x1xf32> to vector<16x16xf32>
    %213 = arith.mulf %208, %212 : vector<16x16xf32>
    %cst_46 = arith.constant dense<0.000000e+00> : vector<16x4xf32>
    %214 = tpu.matmul %213, %200, %cst_46 {dimension_numbers = #tpu.dot_dimension_numbers<[1], [0], [0], [1], [0, 0, 1, 1], [], []>} : vector<16x16xf32>, vector<16x4xf32>, vector<16x4xf32> -> vector<16x4xf32>
    %215 = vector.extract_strided_slice %129 {offsets = [0, 20], sizes = [16, 4], strides = [1, 1]} : vector<16x96xf32> to vector<16x4xf32>
    %216 = vector.extract_strided_slice %129 {offsets = [0, 52], sizes = [16, 4], strides = [1, 1]} : vector<16x96xf32> to vector<16x4xf32>
    %217 = vector.extract_strided_slice %129 {offsets = [0, 84], sizes = [16, 4], strides = [1, 1]} : vector<16x96xf32> to vector<16x4xf32>
    %cst_47 = arith.constant dense<0.000000e+00> : vector<16x16xf32>
    %218 = tpu.matmul %215, %216, %cst_47 {dimension_numbers = #tpu.dot_dimension_numbers<[1], [1], [0], [0], [0, 0, 1, 0], [], []>} : vector<16x4xf32>, vector<16x4xf32>, vector<16x16xf32> -> vector<16x16xf32>
    %cst_48 = arith.constant 5.000000e-01 : f32
    %219 = vector.broadcast %cst_48 : f32 to vector<16x16xf32>
    %220 = arith.mulf %218, %219 : vector<16x16xf32>
    %cst_49 = arith.constant dense<0xFF800000> : vector<16xf32>
    %221 = vector.multi_reduction <maximumf>, %220, %cst_49 [1] : vector<16x16xf32> to vector<16xf32>
    %222 = vector.shape_cast %221 : vector<16xf32> to vector<16x1xf32>
    %223 = vector.broadcast %222 : vector<16x1xf32> to vector<16x16xf32>
    %224 = arith.subf %220, %223 : vector<16x16xf32>
    %225 = math.exp %224 : vector<16x16xf32>
    %cst_50 = arith.constant dense<0.000000e+00> : vector<16xf32>
    %226 = vector.multi_reduction <add>, %225, %cst_50 [1] : vector<16x16xf32> to vector<16xf32>
    %227 = vector.shape_cast %226 : vector<16xf32> to vector<16x1xf32>
    %228 = tpu.reciprocal %227 {approx = true} : vector<16x1xf32> -> vector<16x1xf32>
    %229 = vector.broadcast %228 : vector<16x1xf32> to vector<16x16xf32>
    %230 = arith.mulf %225, %229 : vector<16x16xf32>
    %cst_51 = arith.constant dense<0.000000e+00> : vector<16x4xf32>
    %231 = tpu.matmul %230, %217, %cst_51 {dimension_numbers = #tpu.dot_dimension_numbers<[1], [0], [0], [1], [0, 0, 1, 1], [], []>} : vector<16x16xf32>, vector<16x4xf32>, vector<16x4xf32> -> vector<16x4xf32>
    %232 = vector.extract_strided_slice %129 {offsets = [0, 24], sizes = [16, 4], strides = [1, 1]} : vector<16x96xf32> to vector<16x4xf32>
    %233 = vector.extract_strided_slice %129 {offsets = [0, 56], sizes = [16, 4], strides = [1, 1]} : vector<16x96xf32> to vector<16x4xf32>
    %234 = vector.extract_strided_slice %129 {offsets = [0, 88], sizes = [16, 4], strides = [1, 1]} : vector<16x96xf32> to vector<16x4xf32>
    %cst_52 = arith.constant dense<0.000000e+00> : vector<16x16xf32>
    %235 = tpu.matmul %232, %233, %cst_52 {dimension_numbers = #tpu.dot_dimension_numbers<[1], [1], [0], [0], [0, 0, 1, 0], [], []>} : vector<16x4xf32>, vector<16x4xf32>, vector<16x16xf32> -> vector<16x16xf32>
    %cst_53 = arith.constant 5.000000e-01 : f32
    %236 = vector.broadcast %cst_53 : f32 to vector<16x16xf32>
    %237 = arith.mulf %235, %236 : vector<16x16xf32>
    %cst_54 = arith.constant dense<0xFF800000> : vector<16xf32>
    %238 = vector.multi_reduction <maximumf>, %237, %cst_54 [1] : vector<16x16xf32> to vector<16xf32>
    %239 = vector.shape_cast %238 : vector<16xf32> to vector<16x1xf32>
    %240 = vector.broadcast %239 : vector<16x1xf32> to vector<16x16xf32>
    %241 = arith.subf %237, %240 : vector<16x16xf32>
    %242 = math.exp %241 : vector<16x16xf32>
    %cst_55 = arith.constant dense<0.000000e+00> : vector<16xf32>
    %243 = vector.multi_reduction <add>, %242, %cst_55 [1] : vector<16x16xf32> to vector<16xf32>
    %244 = vector.shape_cast %243 : vector<16xf32> to vector<16x1xf32>
    %245 = tpu.reciprocal %244 {approx = true} : vector<16x1xf32> -> vector<16x1xf32>
    %246 = vector.broadcast %245 : vector<16x1xf32> to vector<16x16xf32>
    %247 = arith.mulf %242, %246 : vector<16x16xf32>
    %cst_56 = arith.constant dense<0.000000e+00> : vector<16x4xf32>
    %248 = tpu.matmul %247, %234, %cst_56 {dimension_numbers = #tpu.dot_dimension_numbers<[1], [0], [0], [1], [0, 0, 1, 1], [], []>} : vector<16x16xf32>, vector<16x4xf32>, vector<16x4xf32> -> vector<16x4xf32>
    %249 = vector.extract_strided_slice %129 {offsets = [0, 28], sizes = [16, 4], strides = [1, 1]} : vector<16x96xf32> to vector<16x4xf32>
    %250 = vector.extract_strided_slice %129 {offsets = [0, 60], sizes = [16, 4], strides = [1, 1]} : vector<16x96xf32> to vector<16x4xf32>
    %251 = vector.extract_strided_slice %129 {offsets = [0, 92], sizes = [16, 4], strides = [1, 1]} : vector<16x96xf32> to vector<16x4xf32>
    %cst_57 = arith.constant dense<0.000000e+00> : vector<16x16xf32>
    %252 = tpu.matmul %249, %250, %cst_57 {dimension_numbers = #tpu.dot_dimension_numbers<[1], [1], [0], [0], [0, 0, 1, 0], [], []>} : vector<16x4xf32>, vector<16x4xf32>, vector<16x16xf32> -> vector<16x16xf32>
    %cst_58 = arith.constant 5.000000e-01 : f32
    %253 = vector.broadcast %cst_58 : f32 to vector<16x16xf32>
    %254 = arith.mulf %252, %253 : vector<16x16xf32>
    %cst_59 = arith.constant dense<0xFF800000> : vector<16xf32>
    %255 = vector.multi_reduction <maximumf>, %254, %cst_59 [1] : vector<16x16xf32> to vector<16xf32>
    %256 = vector.shape_cast %255 : vector<16xf32> to vector<16x1xf32>
    %257 = vector.broadcast %256 : vector<16x1xf32> to vector<16x16xf32>
    %258 = arith.subf %254, %257 : vector<16x16xf32>
    %259 = math.exp %258 : vector<16x16xf32>
    %cst_60 = arith.constant dense<0.000000e+00> : vector<16xf32>
    %260 = vector.multi_reduction <add>, %259, %cst_60 [1] : vector<16x16xf32> to vector<16xf32>
    %261 = vector.shape_cast %260 : vector<16xf32> to vector<16x1xf32>
    %262 = tpu.reciprocal %261 {approx = true} : vector<16x1xf32> -> vector<16x1xf32>
    %263 = vector.broadcast %262 : vector<16x1xf32> to vector<16x16xf32>
    %264 = arith.mulf %259, %263 : vector<16x16xf32>
    %cst_61 = arith.constant dense<0.000000e+00> : vector<16x4xf32>
    %265 = tpu.matmul %264, %251, %cst_61 {dimension_numbers = #tpu.dot_dimension_numbers<[1], [0], [0], [1], [0, 0, 1, 1], [], []>} : vector<16x16xf32>, vector<16x4xf32>, vector<16x4xf32> -> vector<16x4xf32>
    %266 = tpu.concatenate %146, %163, %180, %197, %214, %231, %248, %265 in 1 : vector<16x4xf32>, vector<16x4xf32>, vector<16x4xf32>, vector<16x4xf32>, vector<16x4xf32>, vector<16x4xf32>, vector<16x4xf32>, vector<16x4xf32> -> vector<16x32xf32>
    %c0_62 = arith.constant 0 : index
    %c0_63 = arith.constant 0 : index
    %267 = vector.load %arg11[%c0_62, %c0_63] : memref<1x32xf32, #tpu.memory_space<vmem>>, vector<1x32xf32>
    %c0_64 = arith.constant 0 : index
    %c0_65 = arith.constant 0 : index
    %268 = vector.load %arg9[%c0_64, %c0_65] : memref<32x32xf32, #tpu.memory_space<vmem>>, vector<32x32xf32>
    %cst_66 = arith.constant dense<0.000000e+00> : vector<16x32xf32>
    %269 = tpu.matmul %266, %268, %cst_66 {dimension_numbers = #tpu.dot_dimension_numbers<[1], [0], [0], [1], [0, 0, 1, 1], [], []>} : vector<16x32xf32>, vector<32x32xf32>, vector<16x32xf32> -> vector<16x32xf32>
    %c0_67 = arith.constant 0 : index
    %c0_68 = arith.constant 0 : index
    %270 = vector.load %arg10[%c0_67, %c0_68] : memref<1x32xf32, #tpu.memory_space<vmem>>, vector<1x32xf32>
    %271 = vector.broadcast %270 : vector<1x32xf32> to vector<16x32xf32>
    %272 = arith.addf %269, %271 : vector<16x32xf32>
    %273 = vector.broadcast %267 : vector<1x32xf32> to vector<16x32xf32>
    %274 = arith.mulf %273, %272 : vector<16x32xf32>
    %275 = arith.addf %102, %274 : vector<16x32xf32>
    %c0_69 = arith.constant 0 : index
    %c0_70 = arith.constant 0 : index
    %276 = vector.load %arg12[%c0_69, %c0_70] : memref<1x32xf32, #tpu.memory_space<vmem>>, vector<1x32xf32>
    %c0_71 = arith.constant 0 : index
    %c0_72 = arith.constant 0 : index
    %277 = vector.load %arg13[%c0_71, %c0_72] : memref<1x32xf32, #tpu.memory_space<vmem>>, vector<1x32xf32>
    %cst_73 = arith.constant dense<0.000000e+00> : vector<16xf32>
    %278 = vector.multi_reduction <add>, %275, %cst_73 [1] : vector<16x32xf32> to vector<16xf32>
    %279 = vector.shape_cast %278 : vector<16xf32> to vector<16x1xf32>
    %cst_74 = arith.constant 3.200000e+01 : f32
    %280 = vector.broadcast %cst_74 : f32 to vector<16x1xf32>
    %281 = arith.divf %279, %280 : vector<16x1xf32>
    %282 = vector.broadcast %281 : vector<16x1xf32> to vector<16x32xf32>
    %283 = arith.subf %275, %282 : vector<16x32xf32>
    %284 = arith.mulf %283, %283 : vector<16x32xf32>
    %cst_75 = arith.constant dense<0.000000e+00> : vector<16xf32>
    %285 = vector.multi_reduction <add>, %284, %cst_75 [1] : vector<16x32xf32> to vector<16xf32>
    %286 = vector.shape_cast %285 : vector<16xf32> to vector<16x1xf32>
    %cst_76 = arith.constant 3.200000e+01 : f32
    %287 = vector.broadcast %cst_76 : f32 to vector<16x1xf32>
    %288 = arith.divf %286, %287 : vector<16x1xf32>
    %cst_77 = arith.constant 9.99999974E-6 : f32
    %289 = vector.broadcast %cst_77 : f32 to vector<16x1xf32>
    %290 = arith.addf %288, %289 : vector<16x1xf32>
    %291 = math.rsqrt %290 : vector<16x1xf32>
    %292 = vector.broadcast %291 : vector<16x1xf32> to vector<16x32xf32>
    %293 = arith.mulf %283, %292 : vector<16x32xf32>
    %294 = vector.broadcast %276 : vector<1x32xf32> to vector<16x32xf32>
    %295 = arith.mulf %293, %294 : vector<16x32xf32>
    %296 = vector.broadcast %277 : vector<1x32xf32> to vector<16x32xf32>
    %297 = arith.addf %295, %296 : vector<16x32xf32>
    %c0_78 = arith.constant 0 : index
    %c0_79 = arith.constant 0 : index
    %298 = vector.load %arg14[%c0_78, %c0_79] : memref<32x256xf32, #tpu.memory_space<vmem>>, vector<32x256xf32>
    %cst_80 = arith.constant dense<0.000000e+00> : vector<16x256xf32>
    %299 = tpu.matmul %297, %298, %cst_80 {dimension_numbers = #tpu.dot_dimension_numbers<[1], [0], [0], [1], [0, 0, 1, 1], [], []>} : vector<16x32xf32>, vector<32x256xf32>, vector<16x256xf32> -> vector<16x256xf32>
    %c0_81 = arith.constant 0 : index
    %c0_82 = arith.constant 0 : index
    %300 = vector.load %arg15[%c0_81, %c0_82] : memref<1x256xf32, #tpu.memory_space<vmem>>, vector<1x256xf32>
    %301 = vector.broadcast %300 : vector<1x256xf32> to vector<16x256xf32>
    %302 = arith.addf %299, %301 : vector<16x256xf32>
    %cst_83 = arith.constant 5.000000e-01 : f32
    %303 = vector.broadcast %cst_83 : f32 to vector<16x256xf32>
    %304 = arith.mulf %303, %302 : vector<16x256xf32>
    %cst_84 = arith.constant 0.707106769 : f32
    %305 = vector.broadcast %cst_84 : f32 to vector<16x256xf32>
    %306 = arith.mulf %302, %305 : vector<16x256xf32>
    %307 = math.absf %306 : vector<16x256xf32>
    %cst_85 = arith.constant 0.327591091 : f32
    %308 = vector.broadcast %cst_85 : f32 to vector<16x256xf32>
    %309 = arith.mulf %308, %307 : vector<16x256xf32>
    %cst_86 = arith.constant 1.000000e+00 : f32
    %310 = vector.broadcast %cst_86 : f32 to vector<16x256xf32>
    %311 = arith.addf %310, %309 : vector<16x256xf32>
    %312 = tpu.reciprocal %311 {approx = true} : vector<16x256xf32> -> vector<16x256xf32>
    %cst_87 = arith.constant 1.06140542 : f32
    %313 = vector.broadcast %cst_87 : f32 to vector<16x256xf32>
    %314 = arith.mulf %313, %312 : vector<16x256xf32>
    %cst_88 = arith.constant -1.45315206 : f32
    %315 = vector.broadcast %cst_88 : f32 to vector<16x256xf32>
    %316 = arith.addf %314, %315 : vector<16x256xf32>
    %317 = arith.mulf %316, %312 : vector<16x256xf32>
    %cst_89 = arith.constant 1.42141378 : f32
    %318 = vector.broadcast %cst_89 : f32 to vector<16x256xf32>
    %319 = arith.addf %317, %318 : vector<16x256xf32>
    %320 = arith.mulf %319, %312 : vector<16x256xf32>
    %cst_90 = arith.constant -0.284496725 : f32
    %321 = vector.broadcast %cst_90 : f32 to vector<16x256xf32>
    %322 = arith.addf %320, %321 : vector<16x256xf32>
    %323 = arith.mulf %322, %312 : vector<16x256xf32>
    %cst_91 = arith.constant 0.254829586 : f32
    %324 = vector.broadcast %cst_91 : f32 to vector<16x256xf32>
    %325 = arith.addf %323, %324 : vector<16x256xf32>
    %326 = arith.mulf %325, %312 : vector<16x256xf32>
    %cst_92 = arith.constant 0.000000e+00 : f32
    %327 = vector.broadcast %cst_92 : f32 to vector<16x256xf32>
    %328 = arith.subf %327, %307 : vector<16x256xf32>
    %329 = arith.mulf %328, %307 : vector<16x256xf32>
    %330 = math.exp %329 : vector<16x256xf32>
    %331 = arith.mulf %326, %330 : vector<16x256xf32>
    %cst_93 = arith.constant 1.000000e+00 : f32
    %332 = vector.broadcast %cst_93 : f32 to vector<16x256xf32>
    %333 = arith.subf %332, %331 : vector<16x256xf32>
    %cst_94 = arith.constant 0.000000e+00 : f32
    %334 = vector.broadcast %cst_94 : f32 to vector<16x256xf32>
    %335 = arith.cmpf olt, %306, %334 : vector<16x256xf32>
    %cst_95 = arith.constant 0.000000e+00 : f32
    %336 = vector.broadcast %cst_95 : f32 to vector<16x256xf32>
    %337 = arith.subf %336, %333 : vector<16x256xf32>
    %338 = arith.select %335, %337, %333 : vector<16x256xi1>, vector<16x256xf32>
    %cst_96 = arith.constant 1.000000e+00 : f32
    %339 = vector.broadcast %cst_96 : f32 to vector<16x256xf32>
    %340 = arith.addf %339, %338 : vector<16x256xf32>
    %341 = arith.mulf %304, %340 : vector<16x256xf32>
    %c0_97 = arith.constant 0 : index
    %c0_98 = arith.constant 0 : index
    %342 = vector.load %arg16[%c0_97, %c0_98] : memref<256x32xf32, #tpu.memory_space<vmem>>, vector<256x32xf32>
    %cst_99 = arith.constant dense<0.000000e+00> : vector<16x32xf32>
    %343 = tpu.matmul %341, %342, %cst_99 {dimension_numbers = #tpu.dot_dimension_numbers<[1], [0], [0], [1], [0, 0, 1, 1], [], []>} : vector<16x256xf32>, vector<256x32xf32>, vector<16x32xf32> -> vector<16x32xf32>
    %c0_100 = arith.constant 0 : index
    %c0_101 = arith.constant 0 : index
    %344 = vector.load %arg17[%c0_100, %c0_101] : memref<1x32xf32, #tpu.memory_space<vmem>>, vector<1x32xf32>
    %345 = vector.broadcast %344 : vector<1x32xf32> to vector<16x32xf32>
    %346 = arith.addf %343, %345 : vector<16x32xf32>
    %c0_102 = arith.constant 0 : index
    %c0_103 = arith.constant 0 : index
    %347 = vector.load %arg18[%c0_102, %c0_103] : memref<1x32xf32, #tpu.memory_space<vmem>>, vector<1x32xf32>
    %348 = vector.broadcast %347 : vector<1x32xf32> to vector<16x32xf32>
    %349 = arith.mulf %348, %346 : vector<16x32xf32>
    %350 = arith.addf %275, %349 : vector<16x32xf32>
    %c0_104 = arith.constant 0 : index
    %c0_105 = arith.constant 0 : index
    %c0_106 = arith.constant 0 : index
    %351 = vector.load %arg19[%c0_104, %c0_105, %c0_106] : memref<1x16x32xf32, #tpu.memory_space<vmem>>, vector<1x16x32xf32>
    %352 = vector.shape_cast %351 : vector<1x16x32xf32> to vector<16x32xf32>
    %353 = vector.shape_cast %350 : vector<16x32xf32> to vector<1x16x32xf32>
    tpu.vector_store %arg19[%c0_104, %c0_105, %c0_106], %353 {strides = array<i32>} : memref<1x16x32xf32, #tpu.memory_space<vmem>>, vector<1x16x32xf32>,
    return
  }
  func.func @transform_0(%arg0: i32) -> (i32, i32, i32) {
    %c0_i32 = arith.constant 0 : i32
    %c0_i32_0 = arith.constant 0 : i32
    %c0_i32_1 = arith.constant 0 : i32
    return %arg0, %c0_i32, %c0_i32_0 : i32, i32, i32
  }
  func.func @transform_1(%arg0: i32) -> (i32, i32, i32) {
    %c0_i32 = arith.constant 0 : i32
    %c0_i32_0 = arith.constant 0 : i32
    %c0_i32_1 = arith.constant 0 : i32
    %c0_i32_2 = arith.constant 0 : i32
    return %c0_i32, %c0_i32_0, %c0_i32_1 : i32, i32, i32
  }
  func.func @transform_2(%arg0: i32) -> (i32, i32) {
    %c0_i32 = arith.constant 0 : i32
    %c0_i32_0 = arith.constant 0 : i32
    %c0_i32_1 = arith.constant 0 : i32
    return %c0_i32, %c0_i32_0 : i32, i32
  }
  func.func @transform_3(%arg0: i32) -> (i32, i32) {
    %c0_i32 = arith.constant 0 : i32
    %c0_i32_0 = arith.constant 0 : i32
    %c0_i32_1 = arith.constant 0 : i32
    return %c0_i32, %c0_i32_0 : i32, i32
  }
  func.func @transform_4(%arg0: i32) -> (i32, i32) {
    %c0_i32 = arith.constant 0 : i32
    %c0_i32_0 = arith.constant 0 : i32
    %c0_i32_1 = arith.constant 0 : i32
    return %c0_i32, %c0_i32_0 : i32, i32
  }
  func.func @transform_5(%arg0: i32) -> (i32, i32) {
    %c0_i32 = arith.constant 0 : i32
    %c0_i32_0 = arith.constant 0 : i32
    %c0_i32_1 = arith.constant 0 : i32
    return %c0_i32, %c0_i32_0 : i32, i32
  }
  func.func @transform_6(%arg0: i32) -> (i32, i32) {
    %c0_i32 = arith.constant 0 : i32
    %c0_i32_0 = arith.constant 0 : i32
    %c0_i32_1 = arith.constant 0 : i32
    return %c0_i32, %c0_i32_0 : i32, i32
  }
  func.func @transform_7(%arg0: i32) -> (i32, i32) {
    %c0_i32 = arith.constant 0 : i32
    %c0_i32_0 = arith.constant 0 : i32
    %c0_i32_1 = arith.constant 0 : i32
    return %c0_i32, %c0_i32_0 : i32, i32
  }
  func.func @transform_8(%arg0: i32) -> (i32, i32) {
    %c0_i32 = arith.constant 0 : i32
    %c0_i32_0 = arith.constant 0 : i32
    %c0_i32_1 = arith.constant 0 : i32
    return %c0_i32, %c0_i32_0 : i32, i32
  }
  func.func @transform_9(%arg0: i32) -> (i32, i32) {
    %c0_i32 = arith.constant 0 : i32
    %c0_i32_0 = arith.constant 0 : i32
    %c0_i32_1 = arith.constant 0 : i32
    return %c0_i32, %c0_i32_0 : i32, i32
  }
  func.func @transform_10(%arg0: i32) -> (i32, i32) {
    %c0_i32 = arith.constant 0 : i32
    %c0_i32_0 = arith.constant 0 : i32
    %c0_i32_1 = arith.constant 0 : i32
    return %c0_i32, %c0_i32_0 : i32, i32
  }
  func.func @transform_11(%arg0: i32) -> (i32, i32) {
    %c0_i32 = arith.constant 0 : i32
    %c0_i32_0 = arith.constant 0 : i32
    %c0_i32_1 = arith.constant 0 : i32
    return %c0_i32, %c0_i32_0 : i32, i32
  }
  func.func @transform_12(%arg0: i32) -> (i32, i32) {
    %c0_i32 = arith.constant 0 : i32
    %c0_i32_0 = arith.constant 0 : i32
    %c0_i32_1 = arith.constant 0 : i32
    return %c0_i32, %c0_i32_0 : i32, i32
  }
  func.func @transform_13(%arg0: i32) -> (i32, i32) {
    %c0_i32 = arith.constant 0 : i32
    %c0_i32_0 = arith.constant 0 : i32
    %c0_i32_1 = arith.constant 0 : i32
    return %c0_i32, %c0_i32_0 : i32, i32
  }
  func.func @transform_14(%arg0: i32) -> (i32, i32) {
    %c0_i32 = arith.constant 0 : i32
    %c0_i32_0 = arith.constant 0 : i32
    %c0_i32_1 = arith.constant 0 : i32
    return %c0_i32, %c0_i32_0 : i32, i32
  }
  func.func @transform_15(%arg0: i32) -> (i32, i32) {
    %c0_i32 = arith.constant 0 : i32
    %c0_i32_0 = arith.constant 0 : i32
    %c0_i32_1 = arith.constant 0 : i32
    return %c0_i32, %c0_i32_0 : i32, i32
  }
  func.func @transform_16(%arg0: i32) -> (i32, i32) {
    %c0_i32 = arith.constant 0 : i32
    %c0_i32_0 = arith.constant 0 : i32
    %c0_i32_1 = arith.constant 0 : i32
    return %c0_i32, %c0_i32_0 : i32, i32
  }
  func.func @transform_17(%arg0: i32) -> (i32, i32) {
    %c0_i32 = arith.constant 0 : i32
    %c0_i32_0 = arith.constant 0 : i32
    %c0_i32_1 = arith.constant 0 : i32
    return %c0_i32, %c0_i32_0 : i32, i32
  }
  func.func @transform_18(%arg0: i32) -> (i32, i32, i32) {
    %c0_i32 = arith.constant 0 : i32
    %c0_i32_0 = arith.constant 0 : i32
    %c0_i32_1 = arith.constant 0 : i32
    return %arg0, %c0_i32, %c0_i32_0 : i32, i32, i32
  }
}

module attributes {stable_mosaic.version = 11 : i64} {
  func.func @_hdb_kernel(%arg0: i32, %arg1: memref<1x16x32xf32, #tpu.memory_space<vmem>>, %arg2: memref<9x16x1xf32, #tpu.memory_space<vmem>>, %arg3: memref<9x32xf32, #tpu.memory_space<vmem>>, %arg4: memref<1x32xf32, #tpu.memory_space<vmem>>, %arg5: memref<1x32xf32, #tpu.memory_space<vmem>>, %arg6: memref<1x32xf32, #tpu.memory_space<vmem>>, %arg7: memref<32x96xf32, #tpu.memory_space<vmem>>, %arg8: memref<1x96xf32, #tpu.memory_space<vmem>>, %arg9: memref<32x32xf32, #tpu.memory_space<vmem>>, %arg10: memref<1x32xf32, #tpu.memory_space<vmem>>, %arg11: memref<1x32xf32, #tpu.memory_space<vmem>>, %arg12: memref<1x32xf32, #tpu.memory_space<vmem>>, %arg13: memref<1x32xf32, #tpu.memory_space<vmem>>, %arg14: memref<32x256xf32, #tpu.memory_space<vmem>>, %arg15: memref<1x256xf32, #tpu.memory_space<vmem>>, %arg16: memref<256x32xf32, #tpu.memory_space<vmem>>, %arg17: memref<1x32xf32, #tpu.memory_space<vmem>>, %arg18: memref<1x32xf32, #tpu.memory_space<vmem>>, %arg19: memref<1x16x32xf32, #tpu.memory_space<vmem>>) attributes {dimension_semantics = [#tpu.dimension_semantics<parallel>], iteration_bounds = array<i64: 2>, scalar_prefetch = 0 : i64, scratch_operands = 0 : i64, tpu.core_type = #tpu.core_type<tc>, window_params = [{transform_indices = @transform_0, window_bounds = array<i64: 1, 16, 32>}, {pipeline_mode = #tpu.pipeline_mode<synchronous>, transform_indices = @transform_1, window_bounds = array<i64: 9, 16, 1>}, {pipeline_mode = #tpu.pipeline_mode<synchronous>, transform_indices = @transform_2, window_bounds = array<i64: 9, 32>}, {pipeline_mode = #tpu.pipeline_mode<synchronous>, transform_indices = @transform_3, window_bounds = array<i64: 1, 32>}, {pipeline_mode = #tpu.pipeline_mode<synchronous>, transform_indices = @transform_4, window_bounds = array<i64: 1, 32>}, {pipeline_mode = #tpu.pipeline_mode<synchronous>, transform_indices = @transform_5, window_bounds = array<i64: 1, 32>}, {pipeline_mode = #tpu.pipeline_mode<synchronous>, transform_indices = @transform_6, window_bounds = array<i64: 32, 96>}, {pipeline_mode = #tpu.pipeline_mode<synchronous>, transform_indices = @transform_7, window_bounds = array<i64: 1, 96>}, {pipeline_mode = #tpu.pipeline_mode<synchronous>, transform_indices = @transform_8, window_bounds = array<i64: 32, 32>}, {pipeline_mode = #tpu.pipeline_mode<synchronous>, transform_indices = @transform_9, window_bounds = array<i64: 1, 32>}, {pipeline_mode = #tpu.pipeline_mode<synchronous>, transform_indices = @transform_10, window_bounds = array<i64: 1, 32>}, {pipeline_mode = #tpu.pipeline_mode<synchronous>, transform_indices = @transform_11, window_bounds = array<i64: 1, 32>}, {pipeline_mode = #tpu.pipeline_mode<synchronous>, transform_indices = @transform_12, window_bounds = array<i64: 1, 32>}, {pipeline_mode = #tpu.pipeline_mode<synchronous>, transform_indices = @transform_13, window_bounds = array<i64: 32, 256>}, {pipeline_mode = #tpu.pipeline_mode<synchronous>, transform_indices = @transform_14, window_bounds = array<i64: 1, 256>}, {pipeline_mode = #tpu.pipeline_mode<synchronous>, transform_indices = @transform_15, window_bounds = array<i64: 256, 32>}, {pipeline_mode = #tpu.pipeline_mode<synchronous>, transform_indices = @transform_16, window_bounds = array<i64: 1, 32>}, {pipeline_mode = #tpu.pipeline_mode<synchronous>, transform_indices = @transform_17, window_bounds = array<i64: 1, 32>}, {transform_indices = @transform_18, window_bounds = array<i64: 1, 16, 32>}]} {
    %c0 = arith.constant 0 : index
    %c0_0 = arith.constant 0 : index
    %c0_1 = arith.constant 0 : index
    %0 = vector.load %arg1[%c0, %c0_0, %c0_1] : memref<1x16x32xf32, #tpu.memory_space<vmem>>, vector<1x16x32xf32>
    %1 = vector.shape_cast %0 : vector<1x16x32xf32> to vector<16x32xf32>
    %c0_2 = arith.constant 0 : index
    %c0_3 = arith.constant 0 : index
    %2 = vector.load %arg3[%c0_2, %c0_3] : memref<9x32xf32, #tpu.memory_space<vmem>>, vector<9x32xf32>
    %c0_4 = arith.constant 0 : index
    %c0_5 = arith.constant 0 : index
    %c0_6 = arith.constant 0 : index
    %3 = vector.load %arg2[%c0_4, %c0_5, %c0_6] : memref<9x16x1xf32, #tpu.memory_space<vmem>>, vector<9x16x1xf32>
    %4 = vector.extract_strided_slice %3 {offsets = [4, 0, 0], sizes = [1, 16, 1], strides = [1, 1, 1]} : vector<9x16x1xf32> to vector<1x16x1xf32>
    %5 = vector.shape_cast %4 : vector<1x16x1xf32> to vector<16x1xf32>
    %6 = vector.broadcast %5 : vector<16x1xf32> to vector<16x32xf32>
    %7 = arith.mulf %1, %6 : vector<16x32xf32>
    %8 = vector.extract_strided_slice %2 {offsets = [4, 0], sizes = [1, 32], strides = [1, 1]} : vector<9x32xf32> to vector<1x32xf32>
    %9 = vector.broadcast %8 : vector<1x32xf32> to vector<16x32xf32>
    %10 = arith.mulf %7, %9 : vector<16x32xf32>
    %11 = vector.extract_strided_slice %1 {offsets = [11, 0], sizes = [5, 32], strides = [1, 1]} : vector<16x32xf32> to vector<5x32xf32>
    %12 = vector.extract_strided_slice %1 {offsets = [0, 0], sizes = [11, 32], strides = [1, 1]} : vector<16x32xf32> to vector<11x32xf32>
    %13 = tpu.concatenate %11, %12 in 0 : vector<5x32xf32>, vector<11x32xf32> -> vector<16x32xf32>
    %14 = vector.extract_strided_slice %3 {offsets = [0, 0, 0], sizes = [1, 16, 1], strides = [1, 1, 1]} : vector<9x16x1xf32> to vector<1x16x1xf32>
    %15 = vector.shape_cast %14 : vector<1x16x1xf32> to vector<16x1xf32>
    %16 = vector.broadcast %15 : vector<16x1xf32> to vector<16x32xf32>
    %17 = arith.mulf %13, %16 : vector<16x32xf32>
    %18 = vector.extract_strided_slice %2 {offsets = [0, 0], sizes = [1, 32], strides = [1, 1]} : vector<9x32xf32> to vector<1x32xf32>
    %19 = vector.broadcast %18 : vector<1x32xf32> to vector<16x32xf32>
    %20 = arith.mulf %17, %19 : vector<16x32xf32>
    %21 = arith.addf %10, %20 : vector<16x32xf32>
    %22 = vector.extract_strided_slice %1 {offsets = [12, 0], sizes = [4, 32], strides = [1, 1]} : vector<16x32xf32> to vector<4x32xf32>
    %23 = vector.extract_strided_slice %1 {offsets = [0, 0], sizes = [12, 32], strides = [1, 1]} : vector<16x32xf32> to vector<12x32xf32>
    %24 = tpu.concatenate %22, %23 in 0 : vector<4x32xf32>, vector<12x32xf32> -> vector<16x32xf32>
    %25 = vector.extract_strided_slice %3 {offsets = [1, 0, 0], sizes = [1, 16, 1], strides = [1, 1, 1]} : vector<9x16x1xf32> to vector<1x16x1xf32>
    %26 = vector.shape_cast %25 : vector<1x16x1xf32> to vector<16x1xf32>
    %27 = vector.broadcast %26 : vector<16x1xf32> to vector<16x32xf32>
    %28 = arith.mulf %24, %27 : vector<16x32xf32>
    %29 = vector.extract_strided_slice %2 {offsets = [1, 0], sizes = [1, 32], strides = [1, 1]} : vector<9x32xf32> to vector<1x32xf32>
    %30 = vector.broadcast %29 : vector<1x32xf32> to vector<16x32xf32>
    %31 = arith.mulf %28, %30 : vector<16x32xf32>
    %32 = arith.addf %21, %31 : vector<16x32xf32>
    %33 = vector.extract_strided_slice %1 {offsets = [13, 0], sizes = [3, 32], strides = [1, 1]} : vector<16x32xf32> to vector<3x32xf32>
    %34 = vector.extract_strided_slice %1 {offsets = [0, 0], sizes = [13, 32], strides = [1, 1]} : vector<16x32xf32> to vector<13x32xf32>
    %35 = tpu.concatenate %33, %34 in 0 : vector<3x32xf32>, vector<13x32xf32> -> vector<16x32xf32>
    %36 = vector.extract_strided_slice %3 {offsets = [2, 0, 0], sizes = [1, 16, 1], strides = [1, 1, 1]} : vector<9x16x1xf32> to vector<1x16x1xf32>
    %37 = vector.shape_cast %36 : vector<1x16x1xf32> to vector<16x1xf32>
    %38 = vector.broadcast %37 : vector<16x1xf32> to vector<16x32xf32>
    %39 = arith.mulf %35, %38 : vector<16x32xf32>
    %40 = vector.extract_strided_slice %2 {offsets = [2, 0], sizes = [1, 32], strides = [1, 1]} : vector<9x32xf32> to vector<1x32xf32>
    %41 = vector.broadcast %40 : vector<1x32xf32> to vector<16x32xf32>
    %42 = arith.mulf %39, %41 : vector<16x32xf32>
    %43 = arith.addf %32, %42 : vector<16x32xf32>
    %44 = vector.extract_strided_slice %1 {offsets = [15, 0], sizes = [1, 32], strides = [1, 1]} : vector<16x32xf32> to vector<1x32xf32>
    %45 = vector.extract_strided_slice %1 {offsets = [0, 0], sizes = [15, 32], strides = [1, 1]} : vector<16x32xf32> to vector<15x32xf32>
    %46 = tpu.concatenate %44, %45 in 0 : vector<1x32xf32>, vector<15x32xf32> -> vector<16x32xf32>
    %47 = vector.extract_strided_slice %3 {offsets = [3, 0, 0], sizes = [1, 16, 1], strides = [1, 1, 1]} : vector<9x16x1xf32> to vector<1x16x1xf32>
    %48 = vector.shape_cast %47 : vector<1x16x1xf32> to vector<16x1xf32>
    %49 = vector.broadcast %48 : vector<16x1xf32> to vector<16x32xf32>
    %50 = arith.mulf %46, %49 : vector<16x32xf32>
    %51 = vector.extract_strided_slice %2 {offsets = [3, 0], sizes = [1, 32], strides = [1, 1]} : vector<9x32xf32> to vector<1x32xf32>
    %52 = vector.broadcast %51 : vector<1x32xf32> to vector<16x32xf32>
    %53 = arith.mulf %50, %52 : vector<16x32xf32>
    %54 = arith.addf %43, %53 : vector<16x32xf32>
    %55 = vector.extract_strided_slice %1 {offsets = [1, 0], sizes = [15, 32], strides = [1, 1]} : vector<16x32xf32> to vector<15x32xf32>
    %56 = vector.extract_strided_slice %1 {offsets = [0, 0], sizes = [1, 32], strides = [1, 1]} : vector<16x32xf32> to vector<1x32xf32>
    %57 = tpu.concatenate %55, %56 in 0 : vector<15x32xf32>, vector<1x32xf32> -> vector<16x32xf32>
    %58 = vector.extract_strided_slice %3 {offsets = [5, 0, 0], sizes = [1, 16, 1], strides = [1, 1, 1]} : vector<9x16x1xf32> to vector<1x16x1xf32>
    %59 = vector.shape_cast %58 : vector<1x16x1xf32> to vector<16x1xf32>
    %60 = vector.broadcast %59 : vector<16x1xf32> to vector<16x32xf32>
    %61 = arith.mulf %57, %60 : vector<16x32xf32>
    %62 = vector.extract_strided_slice %2 {offsets = [5, 0], sizes = [1, 32], strides = [1, 1]} : vector<9x32xf32> to vector<1x32xf32>
    %63 = vector.broadcast %62 : vector<1x32xf32> to vector<16x32xf32>
    %64 = arith.mulf %61, %63 : vector<16x32xf32>
    %65 = arith.addf %54, %64 : vector<16x32xf32>
    %66 = vector.extract_strided_slice %1 {offsets = [3, 0], sizes = [13, 32], strides = [1, 1]} : vector<16x32xf32> to vector<13x32xf32>
    %67 = vector.extract_strided_slice %1 {offsets = [0, 0], sizes = [3, 32], strides = [1, 1]} : vector<16x32xf32> to vector<3x32xf32>
    %68 = tpu.concatenate %66, %67 in 0 : vector<13x32xf32>, vector<3x32xf32> -> vector<16x32xf32>
    %69 = vector.extract_strided_slice %3 {offsets = [6, 0, 0], sizes = [1, 16, 1], strides = [1, 1, 1]} : vector<9x16x1xf32> to vector<1x16x1xf32>
    %70 = vector.shape_cast %69 : vector<1x16x1xf32> to vector<16x1xf32>
    %71 = vector.broadcast %70 : vector<16x1xf32> to vector<16x32xf32>
    %72 = arith.mulf %68, %71 : vector<16x32xf32>
    %73 = vector.extract_strided_slice %2 {offsets = [6, 0], sizes = [1, 32], strides = [1, 1]} : vector<9x32xf32> to vector<1x32xf32>
    %74 = vector.broadcast %73 : vector<1x32xf32> to vector<16x32xf32>
    %75 = arith.mulf %72, %74 : vector<16x32xf32>
    %76 = arith.addf %65, %75 : vector<16x32xf32>
    %77 = vector.extract_strided_slice %1 {offsets = [4, 0], sizes = [12, 32], strides = [1, 1]} : vector<16x32xf32> to vector<12x32xf32>
    %78 = vector.extract_strided_slice %1 {offsets = [0, 0], sizes = [4, 32], strides = [1, 1]} : vector<16x32xf32> to vector<4x32xf32>
    %79 = tpu.concatenate %77, %78 in 0 : vector<12x32xf32>, vector<4x32xf32> -> vector<16x32xf32>
    %80 = vector.extract_strided_slice %3 {offsets = [7, 0, 0], sizes = [1, 16, 1], strides = [1, 1, 1]} : vector<9x16x1xf32> to vector<1x16x1xf32>
    %81 = vector.shape_cast %80 : vector<1x16x1xf32> to vector<16x1xf32>
    %82 = vector.broadcast %81 : vector<16x1xf32> to vector<16x32xf32>
    %83 = arith.mulf %79, %82 : vector<16x32xf32>
    %84 = vector.extract_strided_slice %2 {offsets = [7, 0], sizes = [1, 32], strides = [1, 1]} : vector<9x32xf32> to vector<1x32xf32>
    %85 = vector.broadcast %84 : vector<1x32xf32> to vector<16x32xf32>
    %86 = arith.mulf %83, %85 : vector<16x32xf32>
    %87 = arith.addf %76, %86 : vector<16x32xf32>
    %88 = vector.extract_strided_slice %1 {offsets = [5, 0], sizes = [11, 32], strides = [1, 1]} : vector<16x32xf32> to vector<11x32xf32>
    %89 = vector.extract_strided_slice %1 {offsets = [0, 0], sizes = [5, 32], strides = [1, 1]} : vector<16x32xf32> to vector<5x32xf32>
    %90 = tpu.concatenate %88, %89 in 0 : vector<11x32xf32>, vector<5x32xf32> -> vector<16x32xf32>
    %91 = vector.extract_strided_slice %3 {offsets = [8, 0, 0], sizes = [1, 16, 1], strides = [1, 1, 1]} : vector<9x16x1xf32> to vector<1x16x1xf32>
    %92 = vector.shape_cast %91 : vector<1x16x1xf32> to vector<16x1xf32>
    %93 = vector.broadcast %92 : vector<16x1xf32> to vector<16x32xf32>
    %94 = arith.mulf %90, %93 : vector<16x32xf32>
    %95 = vector.extract_strided_slice %2 {offsets = [8, 0], sizes = [1, 32], strides = [1, 1]} : vector<9x32xf32> to vector<1x32xf32>
    %96 = vector.broadcast %95 : vector<1x32xf32> to vector<16x32xf32>
    %97 = arith.mulf %94, %96 : vector<16x32xf32>
    %98 = arith.addf %87, %97 : vector<16x32xf32>
    %99 = arith.addf %1, %98 : vector<16x32xf32>
    %c0_7 = arith.constant 0 : index
    %c0_8 = arith.constant 0 : index
    %100 = vector.load %arg4[%c0_7, %c0_8] : memref<1x32xf32, #tpu.memory_space<vmem>>, vector<1x32xf32>
    %101 = vector.broadcast %100 : vector<1x32xf32> to vector<16x32xf32>
    %102 = arith.addf %99, %101 : vector<16x32xf32>
    %c0_9 = arith.constant 0 : index
    %c0_10 = arith.constant 0 : index
    %103 = vector.load %arg5[%c0_9, %c0_10] : memref<1x32xf32, #tpu.memory_space<vmem>>, vector<1x32xf32>
    %c0_11 = arith.constant 0 : index
    %c0_12 = arith.constant 0 : index
    %104 = vector.load %arg6[%c0_11, %c0_12] : memref<1x32xf32, #tpu.memory_space<vmem>>, vector<1x32xf32>
    %cst = arith.constant dense<0.000000e+00> : vector<16xf32>
    %105 = vector.multi_reduction <add>, %102, %cst [1] : vector<16x32xf32> to vector<16xf32>
    %106 = vector.shape_cast %105 : vector<16xf32> to vector<16x1xf32>
    %cst_13 = arith.constant 3.200000e+01 : f32
    %107 = vector.broadcast %cst_13 : f32 to vector<16x1xf32>
    %108 = arith.divf %106, %107 : vector<16x1xf32>
    %109 = vector.broadcast %108 : vector<16x1xf32> to vector<16x32xf32>
    %110 = arith.subf %102, %109 : vector<16x32xf32>
    %111 = arith.mulf %110, %110 : vector<16x32xf32>
    %cst_14 = arith.constant dense<0.000000e+00> : vector<16xf32>
    %112 = vector.multi_reduction <add>, %111, %cst_14 [1] : vector<16x32xf32> to vector<16xf32>
    %113 = vector.shape_cast %112 : vector<16xf32> to vector<16x1xf32>
    %cst_15 = arith.constant 3.200000e+01 : f32
    %114 = vector.broadcast %cst_15 : f32 to vector<16x1xf32>
    %115 = arith.divf %113, %114 : vector<16x1xf32>
    %cst_16 = arith.constant 9.99999974E-6 : f32
    %116 = vector.broadcast %cst_16 : f32 to vector<16x1xf32>
    %117 = arith.addf %115, %116 : vector<16x1xf32>
    %118 = math.rsqrt %117 : vector<16x1xf32>
    %119 = vector.broadcast %118 : vector<16x1xf32> to vector<16x32xf32>
    %120 = arith.mulf %110, %119 : vector<16x32xf32>
    %121 = vector.broadcast %103 : vector<1x32xf32> to vector<16x32xf32>
    %122 = arith.mulf %120, %121 : vector<16x32xf32>
    %123 = vector.broadcast %104 : vector<1x32xf32> to vector<16x32xf32>
    %124 = arith.addf %122, %123 : vector<16x32xf32>
    %c0_17 = arith.constant 0 : index
    %c0_18 = arith.constant 0 : index
    %125 = vector.load %arg7[%c0_17, %c0_18] : memref<32x96xf32, #tpu.memory_space<vmem>>, vector<32x96xf32>
    %cst_19 = arith.constant dense<0.000000e+00> : vector<16x96xf32>
    %126 = tpu.matmul %124, %125, %cst_19 {dimension_numbers = #tpu.dot_dimension_numbers<[1], [0], [0], [1], [0, 0, 1, 1], [], []>} : vector<16x32xf32>, vector<32x96xf32>, vector<16x96xf32> -> vector<16x96xf32>
    %c0_20 = arith.constant 0 : index
    %c0_21 = arith.constant 0 : index
    %127 = vector.load %arg8[%c0_20, %c0_21] : memref<1x96xf32, #tpu.memory_space<vmem>>, vector<1x96xf32>
    %128 = vector.broadcast %127 : vector<1x96xf32> to vector<16x96xf32>
    %129 = arith.addf %126, %128 : vector<16x96xf32>
    %130 = vector.extract_strided_slice %129 {offsets = [0, 0], sizes = [16, 4], strides = [1, 1]} : vector<16x96xf32> to vector<16x4xf32>
    %131 = vector.extract_strided_slice %129 {offsets = [0, 32], sizes = [16, 4], strides = [1, 1]} : vector<16x96xf32> to vector<16x4xf32>
    %132 = vector.extract_strided_slice %129 {offsets = [0, 64], sizes = [16, 4], strides = [1, 1]} : vector<16x96xf32> to vector<16x4xf32>
    %cst_22 = arith.constant dense<0.000000e+00> : vector<16x16xf32>
    %133 = tpu.matmul %130, %131, %cst_22 {dimension_numbers = #tpu.dot_dimension_numbers<[1], [1], [0], [0], [0, 0, 1, 0], [], []>} : vector<16x4xf32>, vector<16x4xf32>, vector<16x16xf32> -> vector<16x16xf32>
    %cst_23 = arith.constant 5.000000e-01 : f32
    %134 = vector.broadcast %cst_23 : f32 to vector<16x16xf32>
    %135 = arith.mulf %133, %134 : vector<16x16xf32>
    %cst_24 = arith.constant dense<0xFF800000> : vector<16xf32>
    %136 = vector.multi_reduction <maximumf>, %135, %cst_24 [1] : vector<16x16xf32> to vector<16xf32>
    %137 = vector.shape_cast %136 : vector<16xf32> to vector<16x1xf32>
    %138 = vector.broadcast %137 : vector<16x1xf32> to vector<16x16xf32>
    %139 = arith.subf %135, %138 : vector<16x16xf32>
    %140 = math.exp %139 : vector<16x16xf32>
    %cst_25 = arith.constant dense<0.000000e+00> : vector<16xf32>
    %141 = vector.multi_reduction <add>, %140, %cst_25 [1] : vector<16x16xf32> to vector<16xf32>
    %142 = vector.shape_cast %141 : vector<16xf32> to vector<16x1xf32>
    %143 = tpu.reciprocal %142 {approx = true} : vector<16x1xf32> -> vector<16x1xf32>
    %144 = vector.broadcast %143 : vector<16x1xf32> to vector<16x16xf32>
    %145 = arith.mulf %140, %144 : vector<16x16xf32>
    %cst_26 = arith.constant dense<0.000000e+00> : vector<16x4xf32>
    %146 = tpu.matmul %145, %132, %cst_26 {dimension_numbers = #tpu.dot_dimension_numbers<[1], [0], [0], [1], [0, 0, 1, 1], [], []>} : vector<16x16xf32>, vector<16x4xf32>, vector<16x4xf32> -> vector<16x4xf32>
    %147 = vector.extract_strided_slice %129 {offsets = [0, 4], sizes = [16, 4], strides = [1, 1]} : vector<16x96xf32> to vector<16x4xf32>
    %148 = vector.extract_strided_slice %129 {offsets = [0, 36], sizes = [16, 4], strides = [1, 1]} : vector<16x96xf32> to vector<16x4xf32>
    %149 = vector.extract_strided_slice %129 {offsets = [0, 68], sizes = [16, 4], strides = [1, 1]} : vector<16x96xf32> to vector<16x4xf32>
    %cst_27 = arith.constant dense<0.000000e+00> : vector<16x16xf32>
    %150 = tpu.matmul %147, %148, %cst_27 {dimension_numbers = #tpu.dot_dimension_numbers<[1], [1], [0], [0], [0, 0, 1, 0], [], []>} : vector<16x4xf32>, vector<16x4xf32>, vector<16x16xf32> -> vector<16x16xf32>
    %cst_28 = arith.constant 5.000000e-01 : f32
    %151 = vector.broadcast %cst_28 : f32 to vector<16x16xf32>
    %152 = arith.mulf %150, %151 : vector<16x16xf32>
    %cst_29 = arith.constant dense<0xFF800000> : vector<16xf32>
    %153 = vector.multi_reduction <maximumf>, %152, %cst_29 [1] : vector<16x16xf32> to vector<16xf32>
    %154 = vector.shape_cast %153 : vector<16xf32> to vector<16x1xf32>
    %155 = vector.broadcast %154 : vector<16x1xf32> to vector<16x16xf32>
    %156 = arith.subf %152, %155 : vector<16x16xf32>
    %157 = math.exp %156 : vector<16x16xf32>
    %cst_30 = arith.constant dense<0.000000e+00> : vector<16xf32>
    %158 = vector.multi_reduction <add>, %157, %cst_30 [1] : vector<16x16xf32> to vector<16xf32>
    %159 = vector.shape_cast %158 : vector<16xf32> to vector<16x1xf32>
    %160 = tpu.reciprocal %159 {approx = true} : vector<16x1xf32> -> vector<16x1xf32>
    %161 = vector.broadcast %160 : vector<16x1xf32> to vector<16x16xf32>
    %162 = arith.mulf %157, %161 : vector<16x16xf32>
    %cst_31 = arith.constant dense<0.000000e+00> : vector<16x4xf32>
    %163 = tpu.matmul %162, %149, %cst_31 {dimension_numbers = #tpu.dot_dimension_numbers<[1], [0], [0], [1], [0, 0, 1, 1], [], []>} : vector<16x16xf32>, vector<16x4xf32>, vector<16x4xf32> -> vector<16x4xf32>
    %164 = vector.extract_strided_slice %129 {offsets = [0, 8], sizes = [16, 4], strides = [1, 1]} : vector<16x96xf32> to vector<16x4xf32>
    %165 = vector.extract_strided_slice %129 {offsets = [0, 40], sizes = [16, 4], strides = [1, 1]} : vector<16x96xf32> to vector<16x4xf32>
    %166 = vector.extract_strided_slice %129 {offsets = [0, 72], sizes = [16, 4], strides = [1, 1]} : vector<16x96xf32> to vector<16x4xf32>
    %cst_32 = arith.constant dense<0.000000e+00> : vector<16x16xf32>
    %167 = tpu.matmul %164, %165, %cst_32 {dimension_numbers = #tpu.dot_dimension_numbers<[1], [1], [0], [0], [0, 0, 1, 0], [], []>} : vector<16x4xf32>, vector<16x4xf32>, vector<16x16xf32> -> vector<16x16xf32>
    %cst_33 = arith.constant 5.000000e-01 : f32
    %168 = vector.broadcast %cst_33 : f32 to vector<16x16xf32>
    %169 = arith.mulf %167, %168 : vector<16x16xf32>
    %cst_34 = arith.constant dense<0xFF800000> : vector<16xf32>
    %170 = vector.multi_reduction <maximumf>, %169, %cst_34 [1] : vector<16x16xf32> to vector<16xf32>
    %171 = vector.shape_cast %170 : vector<16xf32> to vector<16x1xf32>
    %172 = vector.broadcast %171 : vector<16x1xf32> to vector<16x16xf32>
    %173 = arith.subf %169, %172 : vector<16x16xf32>
    %174 = math.exp %173 : vector<16x16xf32>
    %cst_35 = arith.constant dense<0.000000e+00> : vector<16xf32>
    %175 = vector.multi_reduction <add>, %174, %cst_35 [1] : vector<16x16xf32> to vector<16xf32>
    %176 = vector.shape_cast %175 : vector<16xf32> to vector<16x1xf32>
    %177 = tpu.reciprocal %176 {approx = true} : vector<16x1xf32> -> vector<16x1xf32>
    %178 = vector.broadcast %177 : vector<16x1xf32> to vector<16x16xf32>
    %179 = arith.mulf %174, %178 : vector<16x16xf32>
    %cst_36 = arith.constant dense<0.000000e+00> : vector<16x4xf32>
    %180 = tpu.matmul %179, %166, %cst_36 {dimension_numbers = #tpu.dot_dimension_numbers<[1], [0], [0], [1], [0, 0, 1, 1], [], []>} : vector<16x16xf32>, vector<16x4xf32>, vector<16x4xf32> -> vector<16x4xf32>
    %181 = vector.extract_strided_slice %129 {offsets = [0, 12], sizes = [16, 4], strides = [1, 1]} : vector<16x96xf32> to vector<16x4xf32>
    %182 = vector.extract_strided_slice %129 {offsets = [0, 44], sizes = [16, 4], strides = [1, 1]} : vector<16x96xf32> to vector<16x4xf32>
    %183 = vector.extract_strided_slice %129 {offsets = [0, 76], sizes = [16, 4], strides = [1, 1]} : vector<16x96xf32> to vector<16x4xf32>
    %cst_37 = arith.constant dense<0.000000e+00> : vector<16x16xf32>
    %184 = tpu.matmul %181, %182, %cst_37 {dimension_numbers = #tpu.dot_dimension_numbers<[1], [1], [0], [0], [0, 0, 1, 0], [], []>} : vector<16x4xf32>, vector<16x4xf32>, vector<16x16xf32> -> vector<16x16xf32>
    %cst_38 = arith.constant 5.000000e-01 : f32
    %185 = vector.broadcast %cst_38 : f32 to vector<16x16xf32>
    %186 = arith.mulf %184, %185 : vector<16x16xf32>
    %cst_39 = arith.constant dense<0xFF800000> : vector<16xf32>
    %187 = vector.multi_reduction <maximumf>, %186, %cst_39 [1] : vector<16x16xf32> to vector<16xf32>
    %188 = vector.shape_cast %187 : vector<16xf32> to vector<16x1xf32>
    %189 = vector.broadcast %188 : vector<16x1xf32> to vector<16x16xf32>
    %190 = arith.subf %186, %189 : vector<16x16xf32>
    %191 = math.exp %190 : vector<16x16xf32>
    %cst_40 = arith.constant dense<0.000000e+00> : vector<16xf32>
    %192 = vector.multi_reduction <add>, %191, %cst_40 [1] : vector<16x16xf32> to vector<16xf32>
    %193 = vector.shape_cast %192 : vector<16xf32> to vector<16x1xf32>
    %194 = tpu.reciprocal %193 {approx = true} : vector<16x1xf32> -> vector<16x1xf32>
    %195 = vector.broadcast %194 : vector<16x1xf32> to vector<16x16xf32>
    %196 = arith.mulf %191, %195 : vector<16x16xf32>
    %cst_41 = arith.constant dense<0.000000e+00> : vector<16x4xf32>
    %197 = tpu.matmul %196, %183, %cst_41 {dimension_numbers = #tpu.dot_dimension_numbers<[1], [0], [0], [1], [0, 0, 1, 1], [], []>} : vector<16x16xf32>, vector<16x4xf32>, vector<16x4xf32> -> vector<16x4xf32>
    %198 = vector.extract_strided_slice %129 {offsets = [0, 16], sizes = [16, 4], strides = [1, 1]} : vector<16x96xf32> to vector<16x4xf32>
    %199 = vector.extract_strided_slice %129 {offsets = [0, 48], sizes = [16, 4], strides = [1, 1]} : vector<16x96xf32> to vector<16x4xf32>
    %200 = vector.extract_strided_slice %129 {offsets = [0, 80], sizes = [16, 4], strides = [1, 1]} : vector<16x96xf32> to vector<16x4xf32>
    %cst_42 = arith.constant dense<0.000000e+00> : vector<16x16xf32>
    %201 = tpu.matmul %198, %199, %cst_42 {dimension_numbers = #tpu.dot_dimension_numbers<[1], [1], [0], [0], [0, 0, 1, 0], [], []>} : vector<16x4xf32>, vector<16x4xf32>, vector<16x16xf32> -> vector<16x16xf32>
    %cst_43 = arith.constant 5.000000e-01 : f32
    %202 = vector.broadcast %cst_43 : f32 to vector<16x16xf32>
    %203 = arith.mulf %201, %202 : vector<16x16xf32>
    %cst_44 = arith.constant dense<0xFF800000> : vector<16xf32>
    %204 = vector.multi_reduction <maximumf>, %203, %cst_44 [1] : vector<16x16xf32> to vector<16xf32>
    %205 = vector.shape_cast %204 : vector<16xf32> to vector<16x1xf32>
    %206 = vector.broadcast %205 : vector<16x1xf32> to vector<16x16xf32>
    %207 = arith.subf %203, %206 : vector<16x16xf32>
    %208 = math.exp %207 : vector<16x16xf32>
    %cst_45 = arith.constant dense<0.000000e+00> : vector<16xf32>
    %209 = vector.multi_reduction <add>, %208, %cst_45 [1] : vector<16x16xf32> to vector<16xf32>
    %210 = vector.shape_cast %209 : vector<16xf32> to vector<16x1xf32>
    %211 = tpu.reciprocal %210 {approx = true} : vector<16x1xf32> -> vector<16x1xf32>
    %212 = vector.broadcast %211 : vector<16x1xf32> to vector<16x16xf32>
    %213 = arith.mulf %208, %212 : vector<16x16xf32>
    %cst_46 = arith.constant dense<0.000000e+00> : vector<16x4xf32>
    %214 = tpu.matmul %213, %200, %cst_46 {dimension_numbers = #tpu.dot_dimension_numbers<[1], [0], [0], [1], [0, 0, 1, 1], [], []>} : vector<16x16xf32>, vector<16x4xf32>, vector<16x4xf32> -> vector<16x4xf32>
    %215 = vector.extract_strided_slice %129 {offsets = [0, 20], sizes = [16, 4], strides = [1, 1]} : vector<16x96xf32> to vector<16x4xf32>
    %216 = vector.extract_strided_slice %129 {offsets = [0, 52], sizes = [16, 4], strides = [1, 1]} : vector<16x96xf32> to vector<16x4xf32>
    %217 = vector.extract_strided_slice %129 {offsets = [0, 84], sizes = [16, 4], strides = [1, 1]} : vector<16x96xf32> to vector<16x4xf32>
    %cst_47 = arith.constant dense<0.000000e+00> : vector<16x16xf32>
    %218 = tpu.matmul %215, %216, %cst_47 {dimension_numbers = #tpu.dot_dimension_numbers<[1], [1], [0], [0], [0, 0, 1, 0], [], []>} : vector<16x4xf32>, vector<16x4xf32>, vector<16x16xf32> -> vector<16x16xf32>
    %cst_48 = arith.constant 5.000000e-01 : f32
    %219 = vector.broadcast %cst_48 : f32 to vector<16x16xf32>
    %220 = arith.mulf %218, %219 : vector<16x16xf32>
    %cst_49 = arith.constant dense<0xFF800000> : vector<16xf32>
    %221 = vector.multi_reduction <maximumf>, %220, %cst_49 [1] : vector<16x16xf32> to vector<16xf32>
    %222 = vector.shape_cast %221 : vector<16xf32> to vector<16x1xf32>
    %223 = vector.broadcast %222 : vector<16x1xf32> to vector<16x16xf32>
    %224 = arith.subf %220, %223 : vector<16x16xf32>
    %225 = math.exp %224 : vector<16x16xf32>
    %cst_50 = arith.constant dense<0.000000e+00> : vector<16xf32>
    %226 = vector.multi_reduction <add>, %225, %cst_50 [1] : vector<16x16xf32> to vector<16xf32>
    %227 = vector.shape_cast %226 : vector<16xf32> to vector<16x1xf32>
    %228 = tpu.reciprocal %227 {approx = true} : vector<16x1xf32> -> vector<16x1xf32>
    %229 = vector.broadcast %228 : vector<16x1xf32> to vector<16x16xf32>
    %230 = arith.mulf %225, %229 : vector<16x16xf32>
    %cst_51 = arith.constant dense<0.000000e+00> : vector<16x4xf32>
    %231 = tpu.matmul %230, %217, %cst_51 {dimension_numbers = #tpu.dot_dimension_numbers<[1], [0], [0], [1], [0, 0, 1, 1], [], []>} : vector<16x16xf32>, vector<16x4xf32>, vector<16x4xf32> -> vector<16x4xf32>
    %232 = vector.extract_strided_slice %129 {offsets = [0, 24], sizes = [16, 4], strides = [1, 1]} : vector<16x96xf32> to vector<16x4xf32>
    %233 = vector.extract_strided_slice %129 {offsets = [0, 56], sizes = [16, 4], strides = [1, 1]} : vector<16x96xf32> to vector<16x4xf32>
    %234 = vector.extract_strided_slice %129 {offsets = [0, 88], sizes = [16, 4], strides = [1, 1]} : vector<16x96xf32> to vector<16x4xf32>
    %cst_52 = arith.constant dense<0.000000e+00> : vector<16x16xf32>
    %235 = tpu.matmul %232, %233, %cst_52 {dimension_numbers = #tpu.dot_dimension_numbers<[1], [1], [0], [0], [0, 0, 1, 0], [], []>} : vector<16x4xf32>, vector<16x4xf32>, vector<16x16xf32> -> vector<16x16xf32>
    %cst_53 = arith.constant 5.000000e-01 : f32
    %236 = vector.broadcast %cst_53 : f32 to vector<16x16xf32>
    %237 = arith.mulf %235, %236 : vector<16x16xf32>
    %cst_54 = arith.constant dense<0xFF800000> : vector<16xf32>
    %238 = vector.multi_reduction <maximumf>, %237, %cst_54 [1] : vector<16x16xf32> to vector<16xf32>
    %239 = vector.shape_cast %238 : vector<16xf32> to vector<16x1xf32>
    %240 = vector.broadcast %239 : vector<16x1xf32> to vector<16x16xf32>
    %241 = arith.subf %237, %240 : vector<16x16xf32>
    %242 = math.exp %241 : vector<16x16xf32>
    %cst_55 = arith.constant dense<0.000000e+00> : vector<16xf32>
    %243 = vector.multi_reduction <add>, %242, %cst_55 [1] : vector<16x16xf32> to vector<16xf32>
    %244 = vector.shape_cast %243 : vector<16xf32> to vector<16x1xf32>
    %245 = tpu.reciprocal %244 {approx = true} : vector<16x1xf32> -> vector<16x1xf32>
    %246 = vector.broadcast %245 : vector<16x1xf32> to vector<16x16xf32>
    %247 = arith.mulf %242, %246 : vector<16x16xf32>
    %cst_56 = arith.constant dense<0.000000e+00> : vector<16x4xf32>
    %248 = tpu.matmul %247, %234, %cst_56 {dimension_numbers = #tpu.dot_dimension_numbers<[1], [0], [0], [1], [0, 0, 1, 1], [], []>} : vector<16x16xf32>, vector<16x4xf32>, vector<16x4xf32> -> vector<16x4xf32>
    %249 = vector.extract_strided_slice %129 {offsets = [0, 28], sizes = [16, 4], strides = [1, 1]} : vector<16x96xf32> to vector<16x4xf32>
    %250 = vector.extract_strided_slice %129 {offsets = [0, 60], sizes = [16, 4], strides = [1, 1]} : vector<16x96xf32> to vector<16x4xf32>
    %251 = vector.extract_strided_slice %129 {offsets = [0, 92], sizes = [16, 4], strides = [1, 1]} : vector<16x96xf32> to vector<16x4xf32>
    %cst_57 = arith.constant dense<0.000000e+00> : vector<16x16xf32>
    %252 = tpu.matmul %249, %250, %cst_57 {dimension_numbers = #tpu.dot_dimension_numbers<[1], [1], [0], [0], [0, 0, 1, 0], [], []>} : vector<16x4xf32>, vector<16x4xf32>, vector<16x16xf32> -> vector<16x16xf32>
    %cst_58 = arith.constant 5.000000e-01 : f32
    %253 = vector.broadcast %cst_58 : f32 to vector<16x16xf32>
    %254 = arith.mulf %252, %253 : vector<16x16xf32>
    %cst_59 = arith.constant dense<0xFF800000> : vector<16xf32>
    %255 = vector.multi_reduction <maximumf>, %254, %cst_59 [1] : vector<16x16xf32> to vector<16xf32>
    %256 = vector.shape_cast %255 : vector<16xf32> to vector<16x1xf32>
    %257 = vector.broadcast %256 : vector<16x1xf32> to vector<16x16xf32>
    %258 = arith.subf %254, %257 : vector<16x16xf32>
    %259 = math.exp %258 : vector<16x16xf32>
    %cst_60 = arith.constant dense<0.000000e+00> : vector<16xf32>
    %260 = vector.multi_reduction <add>, %259, %cst_60 [1] : vector<16x16xf32> to vector<16xf32>
    %261 = vector.shape_cast %260 : vector<16xf32> to vector<16x1xf32>
    %262 = tpu.reciprocal %261 {approx = true} : vector<16x1xf32> -> vector<16x1xf32>
    %263 = vector.broadcast %262 : vector<16x1xf32> to vector<16x16xf32>
    %264 = arith.mulf %259, %263 : vector<16x16xf32>
    %cst_61 = arith.constant dense<0.000000e+00> : vector<16x4xf32>
    %265 = tpu.matmul %264, %251, %cst_61 {dimension_numbers = #tpu.dot_dimension_numbers<[1], [0], [0], [1], [0, 0, 1, 1], [], []>} : vector<16x16xf32>, vector<16x4xf32>, vector<16x4xf32> -> vector<16x4xf32>
    %266 = tpu.concatenate %146, %163, %180, %197, %214, %231, %248, %265 in 1 : vector<16x4xf32>, vector<16x4xf32>, vector<16x4xf32>, vector<16x4xf32>, vector<16x4xf32>, vector<16x4xf32>, vector<16x4xf32>, vector<16x4xf32> -> vector<16x32xf32>
    %c0_62 = arith.constant 0 : index
    %c0_63 = arith.constant 0 : index
    %267 = vector.load %arg11[%c0_62, %c0_63] : memref<1x32xf32, #tpu.memory_space<vmem>>, vector<1x32xf32>
    %c0_64 = arith.constant 0 : index
    %c0_65 = arith.constant 0 : index
    %268 = vector.load %arg9[%c0_64, %c0_65] : memref<32x32xf32, #tpu.memory_space<vmem>>, vector<32x32xf32>
    %cst_66 = arith.constant dense<0.000000e+00> : vector<16x32xf32>
    %269 = tpu.matmul %266, %268, %cst_66 {dimension_numbers = #tpu.dot_dimension_numbers<[1], [0], [0], [1], [0, 0, 1, 1], [], []>} : vector<16x32xf32>, vector<32x32xf32>, vector<16x32xf32> -> vector<16x32xf32>
    %c0_67 = arith.constant 0 : index
    %c0_68 = arith.constant 0 : index
    %270 = vector.load %arg10[%c0_67, %c0_68] : memref<1x32xf32, #tpu.memory_space<vmem>>, vector<1x32xf32>
    %271 = vector.broadcast %270 : vector<1x32xf32> to vector<16x32xf32>
    %272 = arith.addf %269, %271 : vector<16x32xf32>
    %273 = vector.broadcast %267 : vector<1x32xf32> to vector<16x32xf32>
    %274 = arith.mulf %273, %272 : vector<16x32xf32>
    %275 = arith.addf %102, %274 : vector<16x32xf32>
    %c0_69 = arith.constant 0 : index
    %c0_70 = arith.constant 0 : index
    %276 = vector.load %arg12[%c0_69, %c0_70] : memref<1x32xf32, #tpu.memory_space<vmem>>, vector<1x32xf32>
    %c0_71 = arith.constant 0 : index
    %c0_72 = arith.constant 0 : index
    %277 = vector.load %arg13[%c0_71, %c0_72] : memref<1x32xf32, #tpu.memory_space<vmem>>, vector<1x32xf32>
    %cst_73 = arith.constant dense<0.000000e+00> : vector<16xf32>
    %278 = vector.multi_reduction <add>, %275, %cst_73 [1] : vector<16x32xf32> to vector<16xf32>
    %279 = vector.shape_cast %278 : vector<16xf32> to vector<16x1xf32>
    %cst_74 = arith.constant 3.200000e+01 : f32
    %280 = vector.broadcast %cst_74 : f32 to vector<16x1xf32>
    %281 = arith.divf %279, %280 : vector<16x1xf32>
    %282 = vector.broadcast %281 : vector<16x1xf32> to vector<16x32xf32>
    %283 = arith.subf %275, %282 : vector<16x32xf32>
    %284 = arith.mulf %283, %283 : vector<16x32xf32>
    %cst_75 = arith.constant dense<0.000000e+00> : vector<16xf32>
    %285 = vector.multi_reduction <add>, %284, %cst_75 [1] : vector<16x32xf32> to vector<16xf32>
    %286 = vector.shape_cast %285 : vector<16xf32> to vector<16x1xf32>
    %cst_76 = arith.constant 3.200000e+01 : f32
    %287 = vector.broadcast %cst_76 : f32 to vector<16x1xf32>
    %288 = arith.divf %286, %287 : vector<16x1xf32>
    %cst_77 = arith.constant 9.99999974E-6 : f32
    %289 = vector.broadcast %cst_77 : f32 to vector<16x1xf32>
    %290 = arith.addf %288, %289 : vector<16x1xf32>
    %291 = math.rsqrt %290 : vector<16x1xf32>
    %292 = vector.broadcast %291 : vector<16x1xf32> to vector<16x32xf32>
    %293 = arith.mulf %283, %292 : vector<16x32xf32>
    %294 = vector.broadcast %276 : vector<1x32xf32> to vector<16x32xf32>
    %295 = arith.mulf %293, %294 : vector<16x32xf32>
    %296 = vector.broadcast %277 : vector<1x32xf32> to vector<16x32xf32>
    %297 = arith.addf %295, %296 : vector<16x32xf32>
    %c0_78 = arith.constant 0 : index
    %c0_79 = arith.constant 0 : index
    %298 = vector.load %arg14[%c0_78, %c0_79] : memref<32x256xf32, #tpu.memory_space<vmem>>, vector<32x256xf32>
    %cst_80 = arith.constant dense<0.000000e+00> : vector<16x256xf32>
    %299 = tpu.matmul %297, %298, %cst_80 {dimension_numbers = #tpu.dot_dimension_numbers<[1], [0], [0], [1], [0, 0, 1, 1], [], []>} : vector<16x32xf32>, vector<32x256xf32>, vector<16x256xf32> -> vector<16x256xf32>
    %c0_81 = arith.constant 0 : index
    %c0_82 = arith.constant 0 : index
    %300 = vector.load %arg15[%c0_81, %c0_82] : memref<1x256xf32, #tpu.memory_space<vmem>>, vector<1x256xf32>
    %301 = vector.broadcast %300 : vector<1x256xf32> to vector<16x256xf32>
    %302 = arith.addf %299, %301 : vector<16x256xf32>
    %cst_83 = arith.constant 5.000000e-01 : f32
    %303 = vector.broadcast %cst_83 : f32 to vector<16x256xf32>
    %304 = arith.mulf %303, %302 : vector<16x256xf32>
    %cst_84 = arith.constant 0.707106769 : f32
    %305 = vector.broadcast %cst_84 : f32 to vector<16x256xf32>
    %306 = arith.mulf %302, %305 : vector<16x256xf32>
    %307 = math.absf %306 : vector<16x256xf32>
    %cst_85 = arith.constant 0.327591091 : f32
    %308 = vector.broadcast %cst_85 : f32 to vector<16x256xf32>
    %309 = arith.mulf %308, %307 : vector<16x256xf32>
    %cst_86 = arith.constant 1.000000e+00 : f32
    %310 = vector.broadcast %cst_86 : f32 to vector<16x256xf32>
    %311 = arith.addf %310, %309 : vector<16x256xf32>
    %312 = tpu.reciprocal %311 {approx = true} : vector<16x256xf32> -> vector<16x256xf32>
    %cst_87 = arith.constant 1.06140542 : f32
    %313 = vector.broadcast %cst_87 : f32 to vector<16x256xf32>
    %314 = arith.mulf %313, %312 : vector<16x256xf32>
    %cst_88 = arith.constant -1.45315206 : f32
    %315 = vector.broadcast %cst_88 : f32 to vector<16x256xf32>
    %316 = arith.addf %314, %315 : vector<16x256xf32>
    %317 = arith.mulf %316, %312 : vector<16x256xf32>
    %cst_89 = arith.constant 1.42141378 : f32
    %318 = vector.broadcast %cst_89 : f32 to vector<16x256xf32>
    %319 = arith.addf %317, %318 : vector<16x256xf32>
    %320 = arith.mulf %319, %312 : vector<16x256xf32>
    %cst_90 = arith.constant -0.284496725 : f32
    %321 = vector.broadcast %cst_90 : f32 to vector<16x256xf32>
    %322 = arith.addf %320, %321 : vector<16x256xf32>
    %323 = arith.mulf %322, %312 : vector<16x256xf32>
    %cst_91 = arith.constant 0.254829586 : f32
    %324 = vector.broadcast %cst_91 : f32 to vector<16x256xf32>
    %325 = arith.addf %323, %324 : vector<16x256xf32>
    %326 = arith.mulf %325, %312 : vector<16x256xf32>
    %cst_92 = arith.constant 0.000000e+00 : f32
    %327 = vector.broadcast %cst_92 : f32 to vector<16x256xf32>
    %328 = arith.subf %327, %307 : vector<16x256xf32>
    %329 = arith.mulf %328, %307 : vector<16x256xf32>
    %330 = math.exp %329 : vector<16x256xf32>
    %331 = arith.mulf %326, %330 : vector<16x256xf32>
    %cst_93 = arith.constant 1.000000e+00 : f32
    %332 = vector.broadcast %cst_93 : f32 to vector<16x256xf32>
    %333 = arith.subf %332, %331 : vector<16x256xf32>
    %cst_94 = arith.constant 0.000000e+00 : f32
    %334 = vector.broadcast %cst_94 : f32 to vector<16x256xf32>
    %335 = arith.cmpf olt, %306, %334 : vector<16x256xf32>
    %cst_95 = arith.constant 0.000000e+00 : f32
    %336 = vector.broadcast %cst_95 : f32 to vector<16x256xf32>
    %337 = arith.subf %336, %333 : vector<16x256xf32>
    %338 = arith.select %335, %337, %333 : vector<16x256xi1>, vector<16x256xf32>
    %cst_96 = arith.constant 1.000000e+00 : f32
    %339 = vector.broadcast %cst_96 : f32 to vector<16x256xf32>
    %340 = arith.addf %339, %338 : vector<16x256xf32>
    %341 = arith.mulf %304, %340 : vector<16x256xf32>
    %c0_97 = arith.constant 0 : index
    %c0_98 = arith.constant 0 : index
    %342 = vector.load %arg16[%c0_97, %c0_98] : memref<256x32xf32, #tpu.memory_space<vmem>>, vector<256x32xf32>
    %cst_99 = arith.constant dense<0.000000e+00> : vector<16x32xf32>
    %343 = tpu.matmul %341, %342, %cst_99 {dimension_numbers = #tpu.dot_dimension_numbers<[1], [0], [0], [1], [0, 0, 1, 1], [], []>} : vector<16x256xf32>, vector<256x32xf32>, vector<16x32xf32> -> vector<16x32xf32>
    %c0_100 = arith.constant 0 : index
    %c0_101 = arith.constant 0 : index
    %344 = vector.load %arg17[%c0_100, %c0_101] : memref<1x32xf32, #tpu.memory_space<vmem>>, vector<1x32xf32>
    %345 = vector.broadcast %344 : vector<1x32xf32> to vector<16x32xf32>
    %346 = arith.addf %343, %345 : vector<16x32xf32>
    %c0_102 = arith.constant 0 : index
    %c0_103 = arith.constant 0 : index
    %347 = vector.load %arg18[%c0_102, %c0_103] : memref<1x32xf32, #tpu.memory_space<vmem>>, vector<1x32xf32>
    %348 = vector.broadcast %347 : vector<1x32xf32> to vector<16x32xf32>
    %349 = arith.mulf %348, %346 : vector<16x32xf32>
    %350 = arith.addf %275, %349 : vector<16x32xf32>
    %c0_104 = arith.constant 0 : index
    %c0_105 = arith.constant 0 : index
    %c0_106 = arith.constant 0 : index
    %351 = vector.load %arg19[%c0_104, %c0_105, %c0_106] : memref<1x16x32xf32, #tpu.memory_space<vmem>>, vector<1x16x32xf32>
    %352 = vector.shape_cast %351 : vector<1x16x32xf32> to vector<16x32xf32>
    %353 = vector.shape_cast %350 : vector<16x32xf32> to vector<1x16x32xf32>
    tpu.vector_store %arg19[%c0_104, %c0_105, %c0_106], %353 {strides = array<i32>} : memref<1x16x32xf32, #tpu.memory_space<vmem>>, vector<1x16x32xf32>,
    return
  }
  func.func @transform_0(%arg0: i32) -> (i32, i32, i32) {
    %c0_i32 = arith.constant 0 : i32
    %c0_i32_0 = arith.constant 0 : i32
    %c0_i32_1 = arith.constant 0 : i32
    return %arg0, %c0_i32, %c0_i32_0 : i32, i32, i32
  }
  func.func @transform_1(%arg0: i32) -> (i32, i32, i32) {
    %c0_i32 = arith.constant 0 : i32
    %c0_i32_0 = arith.constant 0 : i32
    %c0_i32_1 = arith.constant 0 : i32
    %c0_i32_2 = arith.constant 0 : i32
    return %c0_i32, %c0_i32_0, %c0_i32_1 : i32, i32, i32
  }
  func.func @transform_2(%arg0: i32) -> (i32, i32) {
    %c0_i32 = arith.constant 0 : i32
    %c0_i32_0 = arith.constant 0 : i32
    %c0_i32_1 = arith.constant 0 : i32
    return %c0_i32, %c0_i32_0 : i32, i32
  }
  func.func @transform_3(%arg0: i32) -> (i32, i32) {
    %c0_i32 = arith.constant 0 : i32
    %c0_i32_0 = arith.constant 0 : i32
    %c0_i32_1 = arith.constant 0 : i32
    return %c0_i32, %c0_i32_0 : i32, i32
  }
  func.func @transform_4(%arg0: i32) -> (i32, i32) {
    %c0_i32 = arith.constant 0 : i32
    %c0_i32_0 = arith.constant 0 : i32
    %c0_i32_1 = arith.constant 0 : i32
    return %c0_i32, %c0_i32_0 : i32, i32
  }
  func.func @transform_5(%arg0: i32) -> (i32, i32) {
    %c0_i32 = arith.constant 0 : i32
    %c0_i32_0 = arith.constant 0 : i32
    %c0_i32_1 = arith.constant 0 : i32
    return %c0_i32, %c0_i32_0 : i32, i32
  }
  func.func @transform_6(%arg0: i32) -> (i32, i32) {
    %c0_i32 = arith.constant 0 : i32
    %c0_i32_0 = arith.constant 0 : i32
    %c0_i32_1 = arith.constant 0 : i32
    return %c0_i32, %c0_i32_0 : i32, i32
  }
  func.func @transform_7(%arg0: i32) -> (i32, i32) {
    %c0_i32 = arith.constant 0 : i32
    %c0_i32_0 = arith.constant 0 : i32
    %c0_i32_1 = arith.constant 0 : i32
    return %c0_i32, %c0_i32_0 : i32, i32
  }
  func.func @transform_8(%arg0: i32) -> (i32, i32) {
    %c0_i32 = arith.constant 0 : i32
    %c0_i32_0 = arith.constant 0 : i32
    %c0_i32_1 = arith.constant 0 : i32
    return %c0_i32, %c0_i32_0 : i32, i32
  }
  func.func @transform_9(%arg0: i32) -> (i32, i32) {
    %c0_i32 = arith.constant 0 : i32
    %c0_i32_0 = arith.constant 0 : i32
    %c0_i32_1 = arith.constant 0 : i32
    return %c0_i32, %c0_i32_0 : i32, i32
  }
  func.func @transform_10(%arg0: i32) -> (i32, i32) {
    %c0_i32 = arith.constant 0 : i32
    %c0_i32_0 = arith.constant 0 : i32
    %c0_i32_1 = arith.constant 0 : i32
    return %c0_i32, %c0_i32_0 : i32, i32
  }
  func.func @transform_11(%arg0: i32) -> (i32, i32) {
    %c0_i32 = arith.constant 0 : i32
    %c0_i32_0 = arith.constant 0 : i32
    %c0_i32_1 = arith.constant 0 : i32
    return %c0_i32, %c0_i32_0 : i32, i32
  }
  func.func @transform_12(%arg0: i32) -> (i32, i32) {
    %c0_i32 = arith.constant 0 : i32
    %c0_i32_0 = arith.constant 0 : i32
    %c0_i32_1 = arith.constant 0 : i32
    return %c0_i32, %c0_i32_0 : i32, i32
  }
  func.func @transform_13(%arg0: i32) -> (i32, i32) {
    %c0_i32 = arith.constant 0 : i32
    %c0_i32_0 = arith.constant 0 : i32
    %c0_i32_1 = arith.constant 0 : i32
    return %c0_i32, %c0_i32_0 : i32, i32
  }
  func.func @transform_14(%arg0: i32) -> (i32, i32) {
    %c0_i32 = arith.constant 0 : i32
    %c0_i32_0 = arith.constant 0 : i32
    %c0_i32_1 = arith.constant 0 : i32
    return %c0_i32, %c0_i32_0 : i32, i32
  }
  func.func @transform_15(%arg0: i32) -> (i32, i32) {
    %c0_i32 = arith.constant 0 : i32
    %c0_i32_0 = arith.constant 0 : i32
    %c0_i32_1 = arith.constant 0 : i32
    return %c0_i32, %c0_i32_0 : i32, i32
  }
  func.func @transform_16(%arg0: i32) -> (i32, i32) {
    %c0_i32 = arith.constant 0 : i32
    %c0_i32_0 = arith.constant 0 : i32
    %c0_i32_1 = arith.constant 0 : i32
    return %c0_i32, %c0_i32_0 : i32, i32
  }
  func.func @transform_17(%arg0: i32) -> (i32, i32) {
    %c0_i32 = arith.constant 0 : i32
    %c0_i32_0 = arith.constant 0 : i32
    %c0_i32_1 = arith.constant 0 : i32
    return %c0_i32, %c0_i32_0 : i32, i32
  }
  func.func @transform_18(%arg0: i32) -> (i32, i32, i32) {
    %c0_i32 = arith.constant 0 : i32
    %c0_i32_0 = arith.constant 0 : i32
    %c0_i32_1 = arith.constant 0 : i32
    return %arg0, %c0_i32, %c0_i32_0 : i32, i32, i32
  }
}

</mosaic_0001>

<llo_original>
// kernel: tpu_custom_call.1
$region0: #{tpu_custom_call.1}
  #allocation0 [shape = 'u32[]', space=smem, size = 0x4, offset = 0x4, fixed_abs, tag = 'smem constant byte address 0x4 - core index']
  #allocation1 [shape = 'u32[144,128]{1,0:T(1,128)}', space=vmem, size = 0x12000, scoped, tag = 'internal scratch']
  %s0 = inlined_call_operand.vmem [shape: f32[2,16,32], index: 0, kind: input, shape index: {}]
  %s1 = inlined_call_operand.vmem [shape: f32[9,16,1], index: 1, kind: input, shape index: {}]
  %s2 = inlined_call_operand.vmem [shape: f32[9,32], index: 2, kind: input, shape index: {}]
  %s3 = inlined_call_operand.vmem [shape: f32[1,32], index: 3, kind: input, shape index: {}]
  %s4 = inlined_call_operand.vmem [shape: f32[1,32], index: 4, kind: input, shape index: {}]
  %s5 = inlined_call_operand.vmem [shape: f32[1,32], index: 5, kind: input, shape index: {}]
  %s6 = inlined_call_operand.vmem [shape: f32[32,96], index: 6, kind: input, shape index: {}]
  %s7 = inlined_call_operand.vmem [shape: f32[1,96], index: 7, kind: input, shape index: {}]
  %s8 = inlined_call_operand.vmem [shape: f32[32,32], index: 8, kind: input, shape index: {}]
  %s9 = inlined_call_operand.vmem [shape: f32[1,32], index: 9, kind: input, shape index: {}]
  %s10 = inlined_call_operand.vmem [shape: f32[1,32], index: 10, kind: input, shape index: {}]
  %s11 = inlined_call_operand.vmem [shape: f32[1,32], index: 11, kind: input, shape index: {}]
  %s12 = inlined_call_operand.vmem [shape: f32[1,32], index: 12, kind: input, shape index: {}]
  %s13 = inlined_call_operand.vmem [shape: f32[32,256], index: 13, kind: input, shape index: {}]
  %s14 = inlined_call_operand.vmem [shape: f32[1,256], index: 14, kind: input, shape index: {}]
  %s15 = inlined_call_operand.vmem [shape: f32[256,32], index: 15, kind: input, shape index: {}]
  %s16 = inlined_call_operand.vmem [shape: f32[1,32], index: 16, kind: input, shape index: {}]
  %s17 = inlined_call_operand.vmem [shape: f32[1,32], index: 17, kind: input, shape index: {}]
  %s18 = inlined_call_operand.hbm [shape: f32[2,16,32], index: 18, kind: output, shape index: {}]
  %s19 = sld [smem:[#allocation0]]
  $region105: #{tpu_custom_call.1} parent=0
    _
  %s21 = ssub.s32 1, %s19
  %s22 = scalar_select 0, %s21, %s19
  $region1: #{tpu_custom_call.1} parent=0
    #allocation2 [shape = 'u8[16384]{0}', space=vmem, size = 0x4000, scoped, tag = 'output window, operand 0']
    #allocation3 [shape = 's32[2]{0}', space=sflag, size = 0x8, scoped, tag = 'scoped memory for tpu_custom_call.1']
    %23 = vsyncpa [#allocation3], 0
    %s24 = scalar_lea.sflag [#allocation3], 1
    %25 = vsyncpa %s24, 0
    loop: start=0, step=1, limit=4
    $region2: #{tpu_custom_call.1} parent=1 // loop_pre_header
      _
    $region3: #{tpu_custom_call.1} parent=1 // loop_header
      %s27 = sphi 0, %s31
      %p28 = scmp.ge.s32.totalorder %s27, 4
      %s37 = sphi 0, %s39
      %s40 = sphi 0, %s37
      %s41 = sphi 0, %s40
      %s57 = sphi 0, %s41
      %s61 = sphi 0, %s61
      %s63 = sphi 0, %s61
      %s64 = sphi 0, %s63
      %s78 = sphi 0, %s64
      %s82 = sphi 0, %s82
      %s84 = sphi 0, %s82
      %s85 = sphi 0, %s84
      %s99 = sphi 0, %s85
      %s103 = sphi 0, %s103
      %s105 = sphi 0, %s103
      %s106 = sphi 0, %s105
      %s120 = sphi 0, %s106
      %s124 = sphi 0, %s124
      %s126 = sphi 0, %s124
      %s127 = sphi 0, %s126
      %s141 = sphi 0, %s127
      %s145 = sphi 0, %s145
      %s147 = sphi 0, %s145
      %s148 = sphi 0, %s147
      %s162 = sphi 0, %s148
      %s166 = sphi 0, %s166
      %s168 = sphi 0, %s166
      %s169 = sphi 0, %s168
      %s183 = sphi 0, %s169
      %s187 = sphi 0, %s187
      %s189 = sphi 0, %s187
      %s190 = sphi 0, %s189
      %s204 = sphi 0, %s190
      %s208 = sphi 0, %s208
      %s210 = sphi 0, %s208
      %s211 = sphi 0, %s210
      %s225 = sphi 0, %s211
      %s229 = sphi 0, %s229
      %s231 = sphi 0, %s229
      %s232 = sphi 0, %s231
      %s246 = sphi 0, %s232
      %s250 = sphi 0, %s250
      %s252 = sphi 0, %s250
      %s253 = sphi 0, %s252
      %s267 = sphi 0, %s253
      %s271 = sphi 0, %s271
      %s273 = sphi 0, %s271
      %s274 = sphi 0, %s273
      %s288 = sphi 0, %s274
      %s292 = sphi 0, %s292
      %s294 = sphi 0, %s292
      %s295 = sphi 0, %s294
      %s309 = sphi 0, %s295
      %s313 = sphi 0, %s313
      %s315 = sphi 0, %s313
      %s316 = sphi 0, %s315
      %s330 = sphi 0, %s316
      %s334 = sphi 0, %s334
      %s336 = sphi 0, %s334
      %s337 = sphi 0, %s336
      %s351 = sphi 0, %s337
      %s355 = sphi 0, %s355
      %s357 = sphi 0, %s355
      %s358 = sphi 0, %s357
      %s372 = sphi 0, %s358
      %s376 = sphi 0, %s376
      %s378 = sphi 0, %s376
      %s379 = sphi 0, %s378
      %s393 = sphi 0, %s379
      %s397 = sphi 0, %s397
      %s399 = sphi 0, %s397
      %s400 = sphi 0, %s399
      %s414 = sphi 0, %s400
      %s420 = sphi 0, %s422
      %s423 = sphi 0, %s420
      %s424 = sphi 0, %s423
      %s440 = sphi 0, %s424
    $region4: #{tpu_custom_call.1} parent=1 // loop_header_branch
      %30 = sbr.rel (%p28) target = $region8
    $region5: #{tpu_custom_call.1} parent=1 // loop_body
      %s32 = ssub.s32 %s27, 1
      %s33 = ssub.s32 %s27, 2
      %s34 = sadd.s32 %s27, 1
      %s35 = ssub.s32 %s27, %s34
      %p36 = scmp.eq.s32.totalorder %s35, 0
      %s38 = sadd.s32 %s37, 1
      %s39 = scalar_select %p36, %s37, %s38
      %p42 = pneg %p36
      %p43 = scmp.eq.s32.totalorder %s27, 1
      %p44 = por %p42, %p43
      %p45 = scmp.ne.s32.totalorder %s37, %s40
      %p46 = scmp.eq.s32.totalorder %s27, 0
      %p47 = por %p45, %p46
      %p48 = scmp.ne.s32.totalorder %s37, %s40
      %p49 = scmp.eq.s32.totalorder %s32, 1
      %p50 = por %p48, %p49
      %p51 = scmp.ne.s32.totalorder %s40, %s41
      %p52 = scmp.eq.s32.totalorder %s32, 0
      %p53 = por %p51, %p52
      %p54 = scmp.ne.s32.totalorder %s40, %s41
      %p55 = scmp.eq.s32.totalorder %s33, 1
      %p56 = por %p54, %p55
      %p58 = scmp.ne.s32.totalorder %s41, %s57
      %p59 = scmp.eq.s32.totalorder %s33, 0
      %p60 = por %p58, %p59
      %s62 = sadd.s32 %s61, 1
      %p65 = scmp.eq.s32.totalorder %s27, 1
      %p66 = scmp.ne.s32.totalorder %s61, %s63
      %p67 = scmp.eq.s32.totalorder %s27, 0
      %p68 = por %p66, %p67
      %p69 = scmp.ne.s32.totalorder %s61, %s63
      %p70 = scmp.eq.s32.totalorder %s32, 1
      %p71 = por %p69, %p70
      %p72 = scmp.ne.s32.totalorder %s63, %s64
      %p73 = scmp.eq.s32.totalorder %s32, 0
      %p74 = por %p72, %p73
      %p75 = scmp.ne.s32.totalorder %s63, %s64
      %p76 = scmp.eq.s32.totalorder %s33, 1
      %p77 = por %p75, %p76
      %p79 = scmp.ne.s32.totalorder %s64, %s78
      %p80 = scmp.eq.s32.totalorder %s33, 0
      %p81 = por %p79, %p80
      %s83 = sadd.s32 %s82, 1
      %p86 = scmp.eq.s32.totalorder %s27, 1
      %p87 = scmp.ne.s32.totalorder %s82, %s84
      %p88 = scmp.eq.s32.totalorder %s27, 0
      %p89 = por %p87, %p88
      %p90 = scmp.ne.s32.totalorder %s82, %s84
      %p91 = scmp.eq.s32.totalorder %s32, 1
      %p92 = por %p90, %p91
      %p93 = scmp.ne.s32.totalorder %s84, %s85
      %p94 = scmp.eq.s32.totalorder %s32, 0
      %p95 = por %p93, %p94
      %p96 = scmp.ne.s32.totalorder %s84, %s85
      %p97 = scmp.eq.s32.totalorder %s33, 1
      %p98 = por %p96, %p97
      %p100 = scmp.ne.s32.totalorder %s85, %s99
      %p101 = scmp.eq.s32.totalorder %s33, 0
      %p102 = por %p100, %p101
      %s104 = sadd.s32 %s103, 1
      %p107 = scmp.eq.s32.totalorder %s27, 1
      %p108 = scmp.ne.s32.totalorder %s103, %s105
      %p109 = scmp.eq.s32.totalorder %s27, 0
      %p110 = por %p108, %p109
      %p111 = scmp.ne.s32.totalorder %s103, %s105
      %p112 = scmp.eq.s32.totalorder %s32, 1
      %p113 = por %p111, %p112
      %p114 = scmp.ne.s32.totalorder %s105, %s106
      %p115 = scmp.eq.s32.totalorder %s32, 0
      %p116 = por %p114, %p115
      %p117 = scmp.ne.s32.totalorder %s105, %s106
      %p118 = scmp.eq.s32.totalorder %s33, 1
      %p119 = por %p117, %p118
      %p121 = scmp.ne.s32.totalorder %s106, %s120
      %p122 = scmp.eq.s32.totalorder %s33, 0
      %p123 = por %p121, %p122
      %s125 = sadd.s32 %s124, 1
      %p128 = scmp.eq.s32.totalorder %s27, 1
      %p129 = scmp.ne.s32.totalorder %s124, %s126
      %p130 = scmp.eq.s32.totalorder %s27, 0
      %p131 = por %p129, %p130
      %p132 = scmp.ne.s32.totalorder %s124, %s126
      %p133 = scmp.eq.s32.totalorder %s32, 1
      %p134 = por %p132, %p133
      %p135 = scmp.ne.s32.totalorder %s126, %s127
      %p136 = scmp.eq.s32.totalorder %s32, 0
      %p137 = por %p135, %p136
      %p138 = scmp.ne.s32.totalorder %s126, %s127
      %p139 = scmp.eq.s32.totalorder %s33, 1
      %p140 = por %p138, %p139
      %p142 = scmp.ne.s32.totalorder %s127, %s141
      %p143 = scmp.eq.s32.totalorder %s33, 0
      %p144 = por %p142, %p143
      %s146 = sadd.s32 %s145, 1
      %p149 = scmp.eq.s32.totalorder %s27, 1
      %p150 = scmp.ne.s32.totalorder %s145, %s147
      %p151 = scmp.eq.s32.totalorder %s27, 0
      %p152 = por %p150, %p151
      %p153 = scmp.ne.s32.totalorder %s145, %s147
      %p154 = scmp.eq.s32.totalorder %s32, 1
      %p155 = por %p153, %p154
      %p156 = scmp.ne.s32.totalorder %s147, %s148
      %p157 = scmp.eq.s32.totalorder %s32, 0
      %p158 = por %p156, %p157
      %p159 = scmp.ne.s32.totalorder %s147, %s148
      %p160 = scmp.eq.s32.totalorder %s33, 1
      %p161 = por %p159, %p160
      %p163 = scmp.ne.s32.totalorder %s148, %s162
      %p164 = scmp.eq.s32.totalorder %s33, 0
      %p165 = por %p163, %p164
      %s167 = sadd.s32 %s166, 1
      %p170 = scmp.eq.s32.totalorder %s27, 1
      %p171 = scmp.ne.s32.totalorder %s166, %s168
      %p172 = scmp.eq.s32.totalorder %s27, 0
      %p173 = por %p171, %p172
      %p174 = scmp.ne.s32.totalorder %s166, %s168
      %p175 = scmp.eq.s32.totalorder %s32, 1
      %p176 = por %p174, %p175
      %p177 = scmp.ne.s32.totalorder %s168, %s169
      %p178 = scmp.eq.s32.totalorder %s32, 0
      %p179 = por %p177, %p178
      %p180 = scmp.ne.s32.totalorder %s168, %s169
      %p181 = scmp.eq.s32.totalorder %s33, 1
      %p182 = por %p180, %p181
      %p184 = scmp.ne.s32.totalorder %s169, %s183
      %p185 = scmp.eq.s32.totalorder %s33, 0
      %p186 = por %p184, %p185
      %s188 = sadd.s32 %s187, 1
      %p191 = scmp.eq.s32.totalorder %s27, 1
      %p192 = scmp.ne.s32.totalorder %s187, %s189
      %p193 = scmp.eq.s32.totalorder %s27, 0
      %p194 = por %p192, %p193
      %p195 = scmp.ne.s32.totalorder %s187, %s189
      %p196 = scmp.eq.s32.totalorder %s32, 1
      %p197 = por %p195, %p196
      %p198 = scmp.ne.s32.totalorder %s189, %s190
      %p199 = scmp.eq.s32.totalorder %s32, 0
      %p200 = por %p198, %p199
      %p201 = scmp.ne.s32.totalorder %s189, %s190
      %p202 = scmp.eq.s32.totalorder %s33, 1
      %p203 = por %p201, %p202
      %p205 = scmp.ne.s32.totalorder %s190, %s204
      %p206 = scmp.eq.s32.totalorder %s33, 0
      %p207 = por %p205, %p206
      %s209 = sadd.s32 %s208, 1
      %p212 = scmp.eq.s32.totalorder %s27, 1
      %p213 = scmp.ne.s32.totalorder %s208, %s210
      %p214 = scmp.eq.s32.totalorder %s27, 0
      %p215 = por %p213, %p214
      %p216 = scmp.ne.s32.totalorder %s208, %s210
      %p217 = scmp.eq.s32.totalorder %s32, 1
      %p218 = por %p216, %p217
      %p219 = scmp.ne.s32.totalorder %s210, %s211
      %p220 = scmp.eq.s32.totalorder %s32, 0
      %p221 = por %p219, %p220
      %p222 = scmp.ne.s32.totalorder %s210, %s211
      %p223 = scmp.eq.s32.totalorder %s33, 1
      %p224 = por %p222, %p223
      %p226 = scmp.ne.s32.totalorder %s211, %s225
      %p227 = scmp.eq.s32.totalorder %s33, 0
      %p228 = por %p226, %p227
      %s230 = sadd.s32 %s229, 1
      %p233 = scmp.eq.s32.totalorder %s27, 1
      %p234 = scmp.ne.s32.totalorder %s229, %s231
      %p235 = scmp.eq.s32.totalorder %s27, 0
      %p236 = por %p234, %p235
      %p237 = scmp.ne.s32.totalorder %s229, %s231
      %p238 = scmp.eq.s32.totalorder %s32, 1
      %p239 = por %p237, %p238
      %p240 = scmp.ne.s32.totalorder %s231, %s232
      %p241 = scmp.eq.s32.totalorder %s32, 0
      %p242 = por %p240, %p241
      %p243 = scmp.ne.s32.totalorder %s231, %s232
      %p244 = scmp.eq.s32.totalorder %s33, 1
      %p245 = por %p243, %p244
      %p247 = scmp.ne.s32.totalorder %s232, %s246
      %p248 = scmp.eq.s32.totalorder %s33, 0
      %p249 = por %p247, %p248
      %s251 = sadd.s32 %s250, 1
      %p254 = scmp.eq.s32.totalorder %s27, 1
      %p255 = scmp.ne.s32.totalorder %s250, %s252
      %p256 = scmp.eq.s32.totalorder %s27, 0
      %p257 = por %p255, %p256
      %p258 = scmp.ne.s32.totalorder %s250, %s252
      %p259 = scmp.eq.s32.totalorder %s32, 1
      %p260 = por %p258, %p259
      %p261 = scmp.ne.s32.totalorder %s252, %s253
      %p262 = scmp.eq.s32.totalorder %s32, 0
      %p263 = por %p261, %p262
      %p264 = scmp.ne.s32.totalorder %s252, %s253
      %p265 = scmp.eq.s32.totalorder %s33, 1
      %p266 = por %p264, %p265
      %p268 = scmp.ne.s32.totalorder %s253, %s267
      %p269 = scmp.eq.s32.totalorder %s33, 0
      %p270 = por %p268, %p269
      %s272 = sadd.s32 %s271, 1
      %p275 = scmp.eq.s32.totalorder %s27, 1
      %p276 = scmp.ne.s32.totalorder %s271, %s273
      %p277 = scmp.eq.s32.totalorder %s27, 0
      %p278 = por %p276, %p277
      %p279 = scmp.ne.s32.totalorder %s271, %s273
      %p280 = scmp.eq.s32.totalorder %s32, 1
      %p281 = por %p279, %p280
      %p282 = scmp.ne.s32.totalorder %s273, %s274
      %p283 = scmp.eq.s32.totalorder %s32, 0
      %p284 = por %p282, %p283
      %p285 = scmp.ne.s32.totalorder %s273, %s274
      %p286 = scmp.eq.s32.totalorder %s33, 1
      %p287 = por %p285, %p286
      %p289 = scmp.ne.s32.totalorder %s274, %s288
      %p290 = scmp.eq.s32.totalorder %s33, 0
      %p291 = por %p289, %p290
      %s293 = sadd.s32 %s292, 1
      %p296 = scmp.eq.s32.totalorder %s27, 1
      %p297 = scmp.ne.s32.totalorder %s292, %s294
      %p298 = scmp.eq.s32.totalorder %s27, 0
      %p299 = por %p297, %p298
      %p300 = scmp.ne.s32.totalorder %s292, %s294
      %p301 = scmp.eq.s32.totalorder %s32, 1
      %p302 = por %p300, %p301
      %p303 = scmp.ne.s32.totalorder %s294, %s295
      %p304 = scmp.eq.s32.totalorder %s32, 0
      %p305 = por %p303, %p304
      %p306 = scmp.ne.s32.totalorder %s294, %s295
      %p307 = scmp.eq.s32.totalorder %s33, 1
      %p308 = por %p306, %p307
      %p310 = scmp.ne.s32.totalorder %s295, %s309
      %p311 = scmp.eq.s32.totalorder %s33, 0
      %p312 = por %p310, %p311
      %s314 = sadd.s32 %s313, 1
      %p317 = scmp.eq.s32.totalorder %s27, 1
      %p318 = scmp.ne.s32.totalorder %s313, %s315
      %p319 = scmp.eq.s32.totalorder %s27, 0
      %p320 = por %p318, %p319
      %p321 = scmp.ne.s32.totalorder %s313, %s315
      %p322 = scmp.eq.s32.totalorder %s32, 1
      %p323 = por %p321, %p322
      %p324 = scmp.ne.s32.totalorder %s315, %s316
      %p325 = scmp.eq.s32.totalorder %s32, 0
      %p326 = por %p324, %p325
      %p327 = scmp.ne.s32.totalorder %s315, %s316
      %p328 = scmp.eq.s32.totalorder %s33, 1
      %p329 = por %p327, %p328
      %p331 = scmp.ne.s32.totalorder %s316, %s330
      %p332 = scmp.eq.s32.totalorder %s33, 0
      %p333 = por %p331, %p332
      %s335 = sadd.s32 %s334, 1
      %p338 = scmp.eq.s32.totalorder %s27, 1
      %p339 = scmp.ne.s32.totalorder %s334, %s336
      %p340 = scmp.eq.s32.totalorder %s27, 0
      %p341 = por %p339, %p340
      %p342 = scmp.ne.s32.totalorder %s334, %s336
      %p343 = scmp.eq.s32.totalorder %s32, 1
      %p344 = por %p342, %p343
      %p345 = scmp.ne.s32.totalorder %s336, %s337
      %p346 = scmp.eq.s32.totalorder %s32, 0
      %p347 = por %p345, %p346
      %p348 = scmp.ne.s32.totalorder %s336, %s337
      %p349 = scmp.eq.s32.totalorder %s33, 1
      %p350 = por %p348, %p349
      %p352 = scmp.ne.s32.totalorder %s337, %s351
      %p353 = scmp.eq.s32.totalorder %s33, 0
      %p354 = por %p352, %p353
      %s356 = sadd.s32 %s355, 1
      %p359 = scmp.eq.s32.totalorder %s27, 1
      %p360 = scmp.ne.s32.totalorder %s355, %s357
      %p361 = scmp.eq.s32.totalorder %s27, 0
      %p362 = por %p360, %p361
      %p363 = scmp.ne.s32.totalorder %s355, %s357
      %p364 = scmp.eq.s32.totalorder %s32, 1
      %p365 = por %p363, %p364
      %p366 = scmp.ne.s32.totalorder %s357, %s358
      %p367 = scmp.eq.s32.totalorder %s32, 0
      %p368 = por %p366, %p367
      %p369 = scmp.ne.s32.totalorder %s357, %s358
      %p370 = scmp.eq.s32.totalorder %s33, 1
      %p371 = por %p369, %p370
      %p373 = scmp.ne.s32.totalorder %s358, %s372
      %p374 = scmp.eq.s32.totalorder %s33, 0
      %p375 = por %p373, %p374
      %s377 = sadd.s32 %s376, 1
      %p380 = scmp.eq.s32.totalorder %s27, 1
      %p381 = scmp.ne.s32.totalorder %s376, %s378
      %p382 = scmp.eq.s32.totalorder %s27, 0
      %p383 = por %p381, %p382
      %p384 = scmp.ne.s32.totalorder %s376, %s378
      %p385 = scmp.eq.s32.totalorder %s32, 1
      %p386 = por %p384, %p385
      %p387 = scmp.ne.s32.totalorder %s378, %s379
      %p388 = scmp.eq.s32.totalorder %s32, 0
      %p389 = por %p387, %p388
      %p390 = scmp.ne.s32.totalorder %s378, %s379
      %p391 = scmp.eq.s32.totalorder %s33, 1
      %p392 = por %p390, %p391
      %p394 = scmp.ne.s32.totalorder %s379, %s393
      %p395 = scmp.eq.s32.totalorder %s33, 0
      %p396 = por %p394, %p395
      %s398 = sadd.s32 %s397, 1
      %p401 = scmp.eq.s32.totalorder %s27, 1
      %p402 = scmp.ne.s32.totalorder %s397, %s399
      %p403 = scmp.eq.s32.totalorder %s27, 0
      %p404 = por %p402, %p403
      %p405 = scmp.ne.s32.totalorder %s397, %s399
      %p406 = scmp.eq.s32.totalorder %s32, 1
      %p407 = por %p405, %p406
      %p408 = scmp.ne.s32.totalorder %s399, %s400
      %p409 = scmp.eq.s32.totalorder %s32, 0
      %p410 = por %p408, %p409
      %p411 = scmp.ne.s32.totalorder %s399, %s400
      %p412 = scmp.eq.s32.totalorder %s33, 1
      %p413 = por %p411, %p412
      %p415 = scmp.ne.s32.totalorder %s400, %s414
      %p416 = scmp.eq.s32.totalorder %s33, 0
      %p417 = por %p415, %p416
      %s418 = ssub.s32 %s27, %s34
      %p419 = scmp.eq.s32.totalorder %s418, 0
      %s421 = sadd.s32 %s420, 1
      %s422 = scalar_select %p419, %s420, %s421
      %p425 = pneg %p419
      %p426 = scmp.eq.s32.totalorder %s27, 1
      %p427 = por %p425, %p426
      %p428 = scmp.ne.s32.totalorder %s420, %s423
      %p429 = scmp.eq.s32.totalorder %s27, 0
      %p430 = por %p428, %p429
      %p431 = scmp.ne.s32.totalorder %s420, %s423
      %p432 = scmp.eq.s32.totalorder %s32, 1
      %p433 = por %p431, %p432
      %p434 = scmp.ne.s32.totalorder %s423, %s424
      %p435 = scmp.eq.s32.totalorder %s32, 0
      %p436 = por %p434, %p435
      %p437 = scmp.ne.s32.totalorder %s423, %s424
      %p438 = scmp.eq.s32.totalorder %s33, 1
      %p439 = por %p437, %p438
      %p441 = scmp.ne.s32.totalorder %s424, %s440
      %p442 = scmp.eq.s32.totalorder %s33, 0
      %p443 = por %p441, %p442
      %p444 = scmp.le.s32.totalorder 1, %s27
      %p445 = scmp.lt.s32.totalorder %s27, 3
      %p446 = pnand %p444, %p445
      %p447 = pneg %p446
      // Predicated region
      $region9: #{tpu_custom_call.1} parent=5 // pred_check
        _
      $region10: #{tpu_custom_call.1} parent=5 // pred_check_branch
        %449 = sbr.rel (%p446) target = $region12
      $region11: #{tpu_custom_call.1} parent=5 // pred_region
        %s450 = ssub.s32 %s27, 1
        // Predicated region
        $region13: #{tpu_custom_call.1} parent=11 // pred_check
          %p451 = pneg %p74
        $region14: #{tpu_custom_call.1} parent=11 // pred_check_branch
          %453 = sbr.rel (%p451) target = $region16
        $region15: #{tpu_custom_call.1} parent=11 // pred_region
          _
        $region16: #{tpu_custom_call.1} parent=11 // pred_fallthru
          _
        // Predicated region
        $region17: #{tpu_custom_call.1} parent=11 // pred_check
          %p454 = pneg %p95
        $region18: #{tpu_custom_call.1} parent=11 // pred_check_branch
          %456 = sbr.rel (%p454) target = $region20
        $region19: #{tpu_custom_call.1} parent=11 // pred_region
          _
        $region20: #{tpu_custom_call.1} parent=11 // pred_fallthru
          _
        // Predicated region
        $region21: #{tpu_custom_call.1} parent=11 // pred_check
          %p457 = pneg %p116
        $region22: #{tpu_custom_call.1} parent=11 // pred_check_branch
          %459 = sbr.rel (%p457) target = $region24
        $region23: #{tpu_custom_call.1} parent=11 // pred_region
          _
        $region24: #{tpu_custom_call.1} parent=11 // pred_fallthru
          _
        // Predicated region
        $region25: #{tpu_custom_call.1} parent=11 // pred_check
          %p460 = pneg %p137
        $region26: #{tpu_custom_call.1} parent=11 // pred_check_branch
          %462 = sbr.rel (%p460) target = $region28
        $region27: #{tpu_custom_call.1} parent=11 // pred_region
          _
        $region28: #{tpu_custom_call.1} parent=11 // pred_fallthru
          _
        // Predicated region
        $region29: #{tpu_custom_call.1} parent=11 // pred_check
          %p463 = pneg %p158
        $region30: #{tpu_custom_call.1} parent=11 // pred_check_branch
          %465 = sbr.rel (%p463) target = $region32
        $region31: #{tpu_custom_call.1} parent=11 // pred_region
          _
        $region32: #{tpu_custom_call.1} parent=11 // pred_fallthru
          _
        // Predicated region
        $region33: #{tpu_custom_call.1} parent=11 // pred_check
          %p466 = pneg %p179
        $region34: #{tpu_custom_call.1} parent=11 // pred_check_branch
          %468 = sbr.rel (%p466) target = $region36
        $region35: #{tpu_custom_call.1} parent=11 // pred_region
          _
        $region36: #{tpu_custom_call.1} parent=11 // pred_fallthru
          _
        // Predicated region
        $region37: #{tpu_custom_call.1} parent=11 // pred_check
          %p469 = pneg %p200
        $region38: #{tpu_custom_call.1} parent=11 // pred_check_branch
          %471 = sbr.rel (%p469) target = $region40
        $region39: #{tpu_custom_call.1} parent=11 // pred_region
          _
        $region40: #{tpu_custom_call.1} parent=11 // pred_fallthru
          _
        // Predicated region
        $region41: #{tpu_custom_call.1} parent=11 // pred_check
          %p472 = pneg %p221
        $region42: #{tpu_custom_call.1} parent=11 // pred_check_branch
          %474 = sbr.rel (%p472) target = $region44
        $region43: #{tpu_custom_call.1} parent=11 // pred_region
          _
        $region44: #{tpu_custom_call.1} parent=11 // pred_fallthru
          _
        // Predicated region
        $region45: #{tpu_custom_call.1} parent=11 // pred_check
          %p475 = pneg %p242
        $region46: #{tpu_custom_call.1} parent=11 // pred_check_branch
          %477 = sbr.rel (%p475) target = $region48
        $region47: #{tpu_custom_call.1} parent=11 // pred_region
          _
        $region48: #{tpu_custom_call.1} parent=11 // pred_fallthru
          _
        // Predicated region
        $region49: #{tpu_custom_call.1} parent=11 // pred_check
          %p478 = pneg %p263
        $region50: #{tpu_custom_call.1} parent=11 // pred_check_branch
          %480 = sbr.rel (%p478) target = $region52
        $region51: #{tpu_custom_call.1} parent=11 // pred_region
          _
        $region52: #{tpu_custom_call.1} parent=11 // pred_fallthru
          _
        // Predicated region
        $region53: #{tpu_custom_call.1} parent=11 // pred_check
          %p481 = pneg %p284
        $region54: #{tpu_custom_call.1} parent=11 // pred_check_branch
          %483 = sbr.rel (%p481) target = $region56
        $region55: #{tpu_custom_call.1} parent=11 // pred_region
          _
        $region56: #{tpu_custom_call.1} parent=11 // pred_fallthru
          _
        // Predicated region
        $region57: #{tpu_custom_call.1} parent=11 // pred_check
          %p484 = pneg %p305
        $region58: #{tpu_custom_call.1} parent=11 // pred_check_branch
          %486 = sbr.rel (%p484) target = $region60
        $region59: #{tpu_custom_call.1} parent=11 // pred_region
          _
        $region60: #{tpu_custom_call.1} parent=11 // pred_fallthru
          _
        // Predicated region
        $region61: #{tpu_custom_call.1} parent=11 // pred_check
          %p487 = pneg %p326
        $region62: #{tpu_custom_call.1} parent=11 // pred_check_branch
          %489 = sbr.rel (%p487) target = $region64
        $region63: #{tpu_custom_call.1} parent=11 // pred_region
          _
        $region64: #{tpu_custom_call.1} parent=11 // pred_fallthru
          _
        // Predicated region
        $region65: #{tpu_custom_call.1} parent=11 // pred_check
          %p490 = pneg %p347
        $region66: #{tpu_custom_call.1} parent=11 // pred_check_branch
          %492 = sbr.rel (%p490) target = $region68
        $region67: #{tpu_custom_call.1} parent=11 // pred_region
          _
        $region68: #{tpu_custom_call.1} parent=11 // pred_fallthru
          _
        // Predicated region
        $region69: #{tpu_custom_call.1} parent=11 // pred_check
          %p493 = pneg %p368
        $region70: #{tpu_custom_call.1} parent=11 // pred_check_branch
          %495 = sbr.rel (%p493) target = $region72
        $region71: #{tpu_custom_call.1} parent=11 // pred_region
          _
        $region72: #{tpu_custom_call.1} parent=11 // pred_fallthru
          _
        // Predicated region
        $region73: #{tpu_custom_call.1} parent=11 // pred_check
          %p496 = pneg %p389
        $region74: #{tpu_custom_call.1} parent=11 // pred_check_branch
          %498 = sbr.rel (%p496) target = $region76
        $region75: #{tpu_custom_call.1} parent=11 // pred_region
          _
        $region76: #{tpu_custom_call.1} parent=11 // pred_fallthru
          _
        // Predicated region
        $region77: #{tpu_custom_call.1} parent=11 // pred_check
          %p499 = pneg %p410
        $region78: #{tpu_custom_call.1} parent=11 // pred_check_branch
          %501 = sbr.rel (%p499) target = $region80
        $region79: #{tpu_custom_call.1} parent=11 // pred_region
          _
        $region80: #{tpu_custom_call.1} parent=11 // pred_fallthru
          _
      $region12: #{tpu_custom_call.1} parent=5 // pred_fallthru
        _
      %p502 = scmp.lt.s32.totalorder %s27, 2
      // Predicated region
      $region81: #{tpu_custom_call.1} parent=5 // pred_check
        %p503 = pneg %p502
      $region82: #{tpu_custom_call.1} parent=5 // pred_check_branch
        %505 = sbr.rel (%p503) target = $region84
      $region83: #{tpu_custom_call.1} parent=5 // pred_region
        // Predicated region
        $region85: #{tpu_custom_call.1} parent=83 // pred_check
          %p506 = pneg %p47
        $region86: #{tpu_custom_call.1} parent=83 // pred_check_branch
          %508 = sbr.rel (%p506) target = $region88
        $region87: #{tpu_custom_call.1} parent=83 // pred_region
          %p509 = scmp.lt.s32.totalorder %s27, 1
          %s510 = scalar_select %p509, %s27, 1
          %s511 = smul.addr %s510, 2
          %s512 = smul.addr %s511, 8
          %s513 = scalar_lea.vmem %s0, %s512
        $region88: #{tpu_custom_call.1} parent=83 // pred_fallthru
          _
      $region84: #{tpu_custom_call.1} parent=5 // pred_fallthru
        _
      %p514 = scmp.le.s32.totalorder 1, %s27
      %p515 = scmp.lt.s32.totalorder %s27, 3
      %p516 = pnand %p514, %p515
      %p517 = pneg %p516
      // Predicated region
      $region89: #{tpu_custom_call.1} parent=5 // pred_check
        _
      $region90: #{tpu_custom_call.1} parent=5 // pred_check_branch
        %519 = sbr.rel (%p516) target = $region92
      $region91: #{tpu_custom_call.1} parent=5 // pred_region
        %s520 = ssub.s32 %s27, 1
        %p521 = scmp.lt.s32.totalorder %s32, 1
        %s522 = scalar_select %p521, %s32, 1
        %s523 = smul.addr %s522, 2
        %s524 = smul.addr %s523, 8
        %s525 = scalar_lea.vmem %s0, %s524
        %p526 = pneg %p53
        %p527 = pneg %p50
        %p528 = pneg %p74
        %p529 = pneg %p71
        %p530 = pneg %p95
        %p531 = pneg %p92
        %p532 = pneg %p116
        %p533 = pneg %p113
        %p534 = pneg %p137
        %p535 = pneg %p134
        %p536 = pneg %p158
        %p537 = pneg %p155
        %p538 = pneg %p179
        %p539 = pneg %p176
        %p540 = pneg %p200
        %p541 = pneg %p197
        %p542 = pneg %p221
        %p543 = pneg %p218
        %p544 = pneg %p242
        %p545 = pneg %p239
        %p546 = pneg %p263
        %p547 = pneg %p260
        %p548 = pneg %p284
        %p549 = pneg %p281
        %p550 = pneg %p305
        %p551 = pneg %p302
        %p552 = pneg %p326
        %p553 = pneg %p323
        %p554 = pneg %p347
        %p555 = pneg %p344
        %p556 = pneg %p368
        %p557 = pneg %p365
        %p558 = pneg %p389
        %p559 = pneg %p386
        %p560 = pneg %p410
        %p561 = pneg %p407
        %p562 = pneg %p436
        %p563 = pneg %p433
        %s564 = sand.u32 %s423, 1
        %s565 = scalar_lea.sflag [#allocation3], %s564
        %s566 = sand.u32 %s423, 1
        %s567 = smul.addr %s566, 16
        %s568 = scalar_lea.vmem [#allocation2], %s567
        %p569 = scmp.lt.s32.totalorder %s32, 1
        %s570 = scalar_select %p569, %s32, 1
        %s571 = smul.addr %s570, 2
        %s572 = smul.addr %s571, 8
        %s573 = scalar_lea.vmem %s0, %s572
        %v574 = vld [vmem:[%s573] sm:$0xff]
        %v575 = vld [vmem:[%s573 + $0x8] sm:$0xff]
        %v576 = vld [vmem:[%s2] sm:$0xff]
        %v577 = vld [vmem:[%s2 + $0x8] sm:$0x1]
        %v578 = vld [vmem:[%s1] sm:$0xff]
        %v579 = vld [vmem:[%s1 + $0x8] sm:$0xff]
        %v580 = vld [vmem:[%s1 + $0x10] sm:$0xff]
        %v581 = vld [vmem:[%s1 + $0x18] sm:$0xff]
        %v582 = vld [vmem:[%s1 + $0x20] sm:$0xff]
        %v583 = vld [vmem:[%s1 + $0x28] sm:$0xff]
        %v584 = vld [vmem:[%s1 + $0x30] sm:$0xff]
        %v585 = vld [vmem:[%s1 + $0x38] sm:$0xff]
        %v586 = vld [vmem:[%s1 + $0x40] sm:$0xff]
        %v587 = vld [vmem:[%s1 + $0x48] sm:$0xff]
        %v588 = vld [vmem:[%s1 + $0x50] sm:$0xff]
        %v589 = vld [vmem:[%s1 + $0x58] sm:$0xff]
        %v590 = vld [vmem:[%s1 + $0x60] sm:$0xff]
        %v591 = vld [vmem:[%s1 + $0x68] sm:$0xff]
        %v592 = vld [vmem:[%s1 + $0x70] sm:$0xff]
        %v593 = vld [vmem:[%s1 + $0x78] sm:$0xff]
        %v594 = vld [vmem:[%s1 + $0x80] sm:$0xff]
        %v595 = vld [vmem:[%s1 + $0x88] sm:$0xff]
        %597 = vset.pattern.permute.xlu0 0
        %598 = vperm.xlu0 %597, %v586
        %v599 = vpop.permute.xlu0 %598
        %602 = vset.pattern.permute.xlu0 0
        %603 = vperm.xlu0 %602, %v587
        %v604 = vpop.permute.xlu0 %603
        %v606 = vmul.f32 %v574, %v599
        %v607 = vmul.f32 %v575, %v604
        %v608 = vlaneseq
        %v609 = vshrl.u32 %v608, 7
        %v610 = vsub.s32 4, %v609
        %v611 = vrot.slane %v576, %v610
        %v612 = vmul.f32 %v606, %v611
        %v613 = vmul.f32 %v607, %v611
        %v615 = vrot.slane %v575, 3
        %vm618 = vcmask 1044480
        %v619 = vrot.slane %v574, 3
        %v620 = vsel %vm618, %v619, %v615
        %v623 = vsel %vm618, %v615, %v619
        %625 = vset.pattern.permute.xlu0 0
        %626 = vperm.xlu0 %625, %v578
        %v627 = vpop.permute.xlu0 %626
        %630 = vset.pattern.permute.xlu0 0
        %631 = vperm.xlu0 %630, %v579
        %v632 = vpop.permute.xlu0 %631
        %v634 = vmul.f32 %v623, %v627
        %v635 = vmul.f32 %v620, %v632
        %v636 = vlaneseq
        %v637 = vshrl.u32 %v636, 7
        %v638 = vsub.s32 0, %v637
        %v639 = vrot.slane %v576, %v638
        %v640 = vmul.f32 %v634, %v639
        %v641 = vmul.f32 %v635, %v639
        %v642 = vadd.f32 %v612, %v640
        %v643 = vadd.f32 %v613, %v641
        %v644 = vrot.slane %v575, 4
        %vm646 = vcmask 1043456
        %v647 = vrot.slane %v574, 4
        %v648 = vsel %vm646, %v647, %v644
        %v651 = vsel %vm646, %v644, %v647
        %653 = vset.pattern.permute.xlu0 0
        %654 = vperm.xlu0 %653, %v580
        %v655 = vpop.permute.xlu0 %654
        %658 = vset.pattern.permute.xlu0 0
        %659 = vperm.xlu0 %658, %v581
        %v660 = vpop.permute.xlu0 %659
        %v662 = vmul.f32 %v651, %v655
        %v663 = vmul.f32 %v648, %v660
        %v664 = vlaneseq
        %v665 = vshrl.u32 %v664, 7
        %v666 = vsub.s32 1, %v665
        %v667 = vrot.slane %v576, %v666
        %v668 = vmul.f32 %v662, %v667
        %v669 = vmul.f32 %v663, %v667
        %v670 = vadd.f32 %v642, %v668
        %v671 = vadd.f32 %v643, %v669
        %v672 = vrot.slane %v575, 5
        %vm674 = vcmask 1042432
        %v675 = vrot.slane %v574, 5
        %v676 = vsel %vm674, %v675, %v672
        %v679 = vsel %vm674, %v672, %v675
        %681 = vset.pattern.permute.xlu0 0
        %682 = vperm.xlu0 %681, %v582
        %v683 = vpop.permute.xlu0 %682
        %686 = vset.pattern.permute.xlu0 0
        %687 = vperm.xlu0 %686, %v583
        %v688 = vpop.permute.xlu0 %687
        %v690 = vmul.f32 %v679, %v683
        %v691 = vmul.f32 %v676, %v688
        %v692 = vlaneseq
        %v693 = vshrl.u32 %v692, 7
        %v694 = vsub.s32 2, %v693
        %v695 = vrot.slane %v576, %v694
        %v696 = vmul.f32 %v690, %v695
        %v697 = vmul.f32 %v691, %v695
        %v698 = vadd.f32 %v670, %v696
        %v699 = vadd.f32 %v671, %v697
        %v700 = vrot.slane %v575, 7
        %vm702 = vcmask 1040384
        %v703 = vrot.slane %v574, 7
        %v704 = vsel %vm702, %v703, %v700
        %v707 = vsel %vm702, %v700, %v703
        %709 = vset.pattern.permute.xlu0 0
        %710 = vperm.xlu0 %709, %v584
        %v711 = vpop.permute.xlu0 %710
        %714 = vset.pattern.permute.xlu0 0
        %715 = vperm.xlu0 %714, %v585
        %v716 = vpop.permute.xlu0 %715
        %v718 = vmul.f32 %v707, %v711
        %v719 = vmul.f32 %v704, %v716
        %v720 = vlaneseq
        %v721 = vshrl.u32 %v720, 7
        %v722 = vsub.s32 3, %v721
        %v723 = vrot.slane %v576, %v722
        %v724 = vmul.f32 %v718, %v723
        %v725 = vmul.f32 %v719, %v723
        %v726 = vadd.f32 %v698, %v724
        %v727 = vadd.f32 %v699, %v725
        %vm728 = vcmask 1046528
        %v729 = vrot.slane %v574, 1
        %v730 = vrot.slane %v575, 1
        %v731 = vsel %vm728, %v729, %v730
        %v735 = vsel %vm728, %v730, %v729
        %737 = vset.pattern.permute.xlu0 0
        %738 = vperm.xlu0 %737, %v588
        %v739 = vpop.permute.xlu0 %738
        %742 = vset.pattern.permute.xlu0 0
        %743 = vperm.xlu0 %742, %v589
        %v744 = vpop.permute.xlu0 %743
        %v746 = vmul.f32 %v731, %v739
        %v747 = vmul.f32 %v735, %v744
        %v748 = vlaneseq
        %v749 = vshrl.u32 %v748, 7
        %v750 = vsub.s32 5, %v749
        %v751 = vrot.slane %v576, %v750
        %v752 = vmul.f32 %v746, %v751
        %v753 = vmul.f32 %v747, %v751
        %v754 = vadd.f32 %v726, %v752
        %v755 = vadd.f32 %v727, %v753
        %757 = vset.pattern.permute.xlu0 0
        %758 = vperm.xlu0 %757, %v590
        %v759 = vpop.permute.xlu0 %758
        %762 = vset.pattern.permute.xlu0 0
        %763 = vperm.xlu0 %762, %v591
        %v764 = vpop.permute.xlu0 %763
        %v766 = vmul.f32 %v620, %v759
        %v767 = vmul.f32 %v623, %v764
        %v768 = vlaneseq
        %v769 = vshrl.u32 %v768, 7
        %v770 = vsub.s32 6, %v769
        %v771 = vrot.slane %v576, %v770
        %v772 = vmul.f32 %v766, %v771
        %v773 = vmul.f32 %v767, %v771
        %v774 = vadd.f32 %v754, %v772
        %v775 = vadd.f32 %v755, %v773
        %777 = vset.pattern.permute.xlu0 0
        %778 = vperm.xlu0 %777, %v592
        %v779 = vpop.permute.xlu0 %778
        %782 = vset.pattern.permute.xlu0 0
        %783 = vperm.xlu0 %782, %v593
        %v784 = vpop.permute.xlu0 %783
        %v786 = vmul.f32 %v648, %v779
        %v787 = vmul.f32 %v651, %v784
        %v788 = vlaneseq
        %v789 = vshrl.u32 %v788, 7
        %v790 = vsub.s32 7, %v789
        %v791 = vrot.slane %v576, %v790
        %v792 = vmul.f32 %v786, %v791
        %v793 = vmul.f32 %v787, %v791
        %v794 = vadd.f32 %v774, %v792
        %v795 = vadd.f32 %v775, %v793
        %797 = vset.pattern.permute.xlu0 0
        %798 = vperm.xlu0 %797, %v594
        %v799 = vpop.permute.xlu0 %798
        %802 = vset.pattern.permute.xlu0 0
        %803 = vperm.xlu0 %802, %v595
        %v804 = vpop.permute.xlu0 %803
        %v806 = vmul.f32 %v676, %v799
        %v807 = vmul.f32 %v679, %v804
        %v808 = vlaneseq
        %v809 = vshrl.u32 %v808, 7
        %v810 = vsub.s32 0, %v809
        %v811 = vrot.slane %v577, %v810
        %v812 = vmul.f32 %v806, %v811
        %v813 = vmul.f32 %v807, %v811
        %v814 = vadd.f32 %v794, %v812
        %v815 = vadd.f32 %v795, %v813
        %v816 = vadd.f32 %v574, %v814
        %v817 = vadd.f32 %v575, %v815
        %v818 = vld [vmem:[%s3] sm:$0x1]
        %v820 = vlaneseq
        %v821 = vshrl.u32 %v820, 7
        %v822 = vsub.s32 0, %v821
        %v823 = vrot.slane %v818, %v822
        %v825 = vadd.f32 %v816, %v823
        %v826 = vadd.f32 %v817, %v823
        %v827 = vld [vmem:[%s4] sm:$0x1]
        %v828 = vld [vmem:[%s5] sm:$0x1]
        %vm829 = vcmask 261120
        %v830 = vsel %vm829, %v825, 0.0
        %831 = vadd.xlane.f32.xlu0 %v830
        %v832 = vpop.xlane.xlu0 %831
        %v833 = vsel %vm829, %v826, 0.0
        %834 = vadd.xlane.f32.xlu0 %v833
        %v835 = vpop.xlane.xlu0 %834
        %v836 = vrcp.pop 32.0
        %v837 = vmul.f32 %v832, %v836
        %v838 = vmul.f32 %v835, %v836
        %v839 = vsub.f32 %v825, %v837
        %v840 = vsub.f32 %v826, %v838
        %v841 = vmul.f32 %v839, %v839
        %v842 = vmul.f32 %v840, %v840
        %v843 = vsel %vm829, %v841, 0.0
        %844 = vadd.xlane.f32.xlu0 %v843
        %v845 = vpop.xlane.xlu0 %844
        %v846 = vsel %vm829, %v842, 0.0
        %847 = vadd.xlane.f32.xlu0 %v846
        %v848 = vpop.xlane.xlu0 %847
        %v849 = vmul.f32 %v845, %v836
        %v850 = vmul.f32 %v848, %v836
        %v851 = vadd.f32 %v849, 1e-05
        %v852 = vadd.f32 %v850, 1e-05
        %v853 = vrsqrt.pop %v851
        %v854 = vrsqrt.pop %v852
        %v855 = vmul.f32 %v839, %v853
        %v856 = vmul.f32 %v840, %v854
        %v858 = vlaneseq
        %v859 = vshrl.u32 %v858, 7
        %v860 = vsub.s32 0, %v859
        %v861 = vrot.slane %v827, %v860
        %v863 = vmul.f32 %v855, %v861
        %v864 = vmul.f32 %v856, %v861
        %v866 = vlaneseq
        %v867 = vshrl.u32 %v866, 7
        %v868 = vsub.s32 0, %v867
        %v869 = vrot.slane %v828, %v868
        %v871 = vadd.f32 %v863, %v869
        %v872 = vadd.f32 %v864, %v869
        %v873 = vld [vmem:[%s6] sm:$0xff]
        %v874 = vld [vmem:[%s6 + $0x8] sm:$0xff]
        %v875 = vld [vmem:[%s6 + $0x10] sm:$0xff]
        %v876 = vld [vmem:[%s6 + $0x18] sm:$0xff]
        %v877 = vld [vmem:[%s7] sm:$0x1]
        %v879 = vlaneseq
        %v880 = vshrl.u32 %v879, 7
        %v881 = vsub.s32 0, %v880
        %v882 = vrot.slane %v877, %v881
        %v885 = vsel %vm829, %v871, 0
        %v888 = vsel %vm829, %v872, 0
        %890 = vmatprep.subr.mxu0 0.0
        %891 = vmatpush1.msra.mxu0 %v873
        %892 = vmatprep.subr.mxu0 0.0
        %893 = vmatpush1.msra.mxu0 %v874
        %894 = vmatprep.subr.mxu0 0.0
        %895 = vmatpush1.msra.mxu0 %v875
        %896 = vmatprep.subr.mxu0 0.0
        %897 = vmatpush1.msra.mxu0 %v876
        %898 = vmatprep.subr.mxu0 0.0
        %899 = vmatpush1.msra.mxu0 0.0
        %900 = vmatprep.subr.mxu0 0.0
        %901 = vmatpush1.msra.mxu0 0.0
        %902 = vmatprep.subr.mxu0 0.0
        %903 = vmatpush1.msra.mxu0 0.0
        %904 = vmatprep.subr.mxu0 0.0
        %905 = vmatpush1.msra.mxu0 0.0
        %906 = vmatprep.subr.mxu0 0.0
        %907 = vmatpush1.msra.mxu0 0.0
        %908 = vmatprep.subr.mxu0 0.0
        %909 = vmatpush1.msra.mxu0 0.0
        %910 = vmatprep.subr.mxu0 0.0
        %911 = vmatpush1.msra.mxu0 0.0
        %912 = vmatprep.subr.mxu0 0.0
        %913 = vmatpush1.msra.mxu0 0.0
        %914 = vmatprep.subr.mxu0 0.0
        %915 = vmatpush1.msra.mxu0 0.0
        %916 = vmatprep.subr.mxu0 0.0
        %917 = vmatpush1.msra.mxu0 0.0
        %918 = vmatprep.subr.mxu0 0.0
        %919 = vmatpush1.msra.mxu0 0.0
        %920 = vmatprep.subr.mxu0 0.0
        %921 = vmatpush1.msra.mxu0 0.0
        %922 = vmatprep.subr.mxu0 0.0
        %923 = vmatpush1.msra.mxu0 0.0
        %924 = vmatprep.subr.mxu0 0.0
        %925 = vmatpush1.msra.mxu0 0.0
        %926 = vmatprep.subr.mxu0 0.0
        %927 = vmatpush1.msra.mxu0 0.0
        %928 = vmatprep.subr.mxu0 0.0
        %929 = vmatpush1.msra.mxu0 0.0
        %930 = vmatprep.subr.mxu0 0.0
        %931 = vmatpush1.msra.mxu0 0.0
        %932 = vmatprep.subr.mxu0 0.0
        %933 = vmatpush1.msra.mxu0 0.0
        %934 = vmatprep.subr.mxu0 0.0
        %935 = vmatpush1.msra.mxu0 0.0
        %936 = vmatprep.subr.mxu0 0.0
        %937 = vmatpush1.msra.mxu0 0.0
        %938 = vmatprep.subr.mxu0 0.0
        %939 = vmatpush1.msra.mxu0 0.0
        %940 = vmatprep.subr.mxu0 0.0
        %941 = vmatpush1.msra.mxu0 0.0
        %942 = vmatprep.subr.mxu0 0.0
        %943 = vmatpush1.msra.mxu0 0.0
        %944 = vmatprep.subr.mxu0 0.0
        %945 = vmatpush1.msra.mxu0 0.0
        %946 = vmatprep.subr.mxu0 0.0
        %947 = vmatpush1.msra.mxu0 0.0
        %948 = vmatprep.subr.mxu0 0.0
        %949 = vmatpush1.msra.mxu0 0.0
        %950 = vmatprep.subr.mxu0 0.0
        %951 = vmatpush1.msra.mxu0 0.0
        %952 = vmatprep.subr.mxu0 0.0
        %953 = vmatpush1.msra.mxu0 0.0
        %954 = vmatprep.mubr.f32.mxu0 0.0
        %955 = vmatmul.mubr.f32.gmra.mrb[0].mxu0 %v885
        %v956 = vpop.f32.mrb[0].mxu0
        %v957 = vadd.f32 %v882, %v956
        %v958 = vpop.f32.mrb[0].mxu0
        %959 = vmatprep.mubr.f32.mxu0 0.0
        %960 = vmatmul.mubr.f32.gmra.mrb[0].mxu0 %v888
        %v961 = vpop.f32.mrb[0].mxu0
        %v962 = vadd.f32 %v882, %v961
        %v963 = vpop.f32.mrb[0].mxu0
        %964 = vdwg.mxu0
        %967 = vrot.lane.b32.xlu0 %v957, 96
        %v968 = vpop.permute.xlu0 %967
        %969 = vrot.lane.b32.xlu0 %v962, 96
        %v970 = vpop.permute.xlu0 %969
        %vm971 = vcmask 31744
        %v972 = vsel %vm971, %v957, 0
        %v974 = vsel %vm971, %v962, 0
        %v976 = vsel %vm971, %v968, 0
        %v978 = vsel %vm971, %v970, 0
        %980 = vmatprep.subr.mxu0 0.0
        %981 = vmatpush1.xpose.msra.mxu0 %v976
        %982 = vmatprep.subr.mxu0 0.0
        %983 = vmatpush1.xpose.msra.mxu0 %v978
        %984 = vmatprep.subr.mxu0 0.0
        %985 = vmatpush1.xpose.msra.mxu0 0.0
        %986 = vmatprep.subr.mxu0 0.0
        %987 = vmatpush1.xpose.msra.mxu0 0.0
        %988 = vmatprep.subr.mxu0 0.0
        %989 = vmatpush1.xpose.msra.mxu0 0.0
        %990 = vmatprep.subr.mxu0 0.0
        %991 = vmatpush1.xpose.msra.mxu0 0.0
        %992 = vmatprep.subr.mxu0 0.0
        %993 = vmatpush1.xpose.msra.mxu0 0.0
        %994 = vmatprep.subr.mxu0 0.0
        %995 = vmatpush1.xpose.msra.mxu0 0.0
        %996 = vmatprep.subr.mxu0 0.0
        %997 = vmatpush1.xpose.msra.mxu0 0.0
        %998 = vmatprep.subr.mxu0 0.0
        %999 = vmatpush1.xpose.msra.mxu0 0.0
        %1000 = vmatprep.subr.mxu0 0.0
        %1001 = vmatpush1.xpose.msra.mxu0 0.0
        %1002 = vmatprep.subr.mxu0 0.0
        %1003 = vmatpush1.xpose.msra.mxu0 0.0
        %1004 = vmatprep.subr.mxu0 0.0
        %1005 = vmatpush1.xpose.msra.mxu0 0.0
        %1006 = vmatprep.subr.mxu0 0.0
        %1007 = vmatpush1.xpose.msra.mxu0 0.0
        %1008 = vmatprep.subr.mxu0 0.0
        %1009 = vmatpush1.xpose.msra.mxu0 0.0
        %1010 = vmatprep.subr.mxu0 0.0
        %1011 = vmatpush1.xpose.msra.mxu0 0.0
        %1012 = vmatprep.subr.mxu0 0.0
        %1013 = vmatpush1.xpose.msra.mxu0 0.0
        %1014 = vmatprep.subr.mxu0 0.0
        %1015 = vmatpush1.xpose.msra.mxu0 0.0
        %1016 = vmatprep.subr.mxu0 0.0
        %1017 = vmatpush1.xpose.msra.mxu0 0.0
        %1018 = vmatprep.subr.mxu0 0.0
        %1019 = vmatpush1.xpose.msra.mxu0 0.0
        %1020 = vmatprep.subr.mxu0 0.0
        %1021 = vmatpush1.xpose.msra.mxu0 0.0
        %1022 = vmatprep.subr.mxu0 0.0
        %1023 = vmatpush1.xpose.msra.mxu0 0.0
        %1024 = vmatprep.subr.mxu0 0.0
        %1025 = vmatpush1.xpose.msra.mxu0 0.0
        %1026 = vmatprep.subr.mxu0 0.0
        %1027 = vmatpush1.xpose.msra.mxu0 0.0
        %1028 = vmatprep.subr.mxu0 0.0
        %1029 = vmatpush1.xpose.msra.mxu0 0.0
        %1030 = vmatprep.subr.mxu0 0.0
        %1031 = vmatpush1.xpose.msra.mxu0 0.0
        %1032 = vmatprep.subr.mxu0 0.0
        %1033 = vmatpush1.xpose.msra.mxu0 0.0
        %1034 = vmatprep.subr.mxu0 0.0
        %1035 = vmatpush1.xpose.msra.mxu0 0.0
        %1036 = vmatprep.subr.mxu0 0.0
        %1037 = vmatpush1.xpose.msra.mxu0 0.0
        %1038 = vmatprep.subr.mxu0 0.0
        %1039 = vmatpush1.xpose.msra.mxu0 0.0
        %1040 = vmatprep.subr.mxu0 0.0
        %1041 = vmatpush1.xpose.msra.mxu0 0.0
        %1042 = vmatprep.subr.mxu0 0.0
        %1043 = vmatpush1.xpose.msra.mxu0 0.0
        %1044 = vmatprep.mubr.f32.mxu0 0.0
        %1045 = vmatmul.mubr.f32.gmra.mrb[0].mxu0 %v972
        %v1046 = vpop.f32.mrb[0].mxu0
        %v1047 = vadd.f32 0.0, %v1046
        %v1048 = vpop.f32.mrb[0].mxu0
        %1049 = vmatprep.mubr.f32.mxu0 0.0
        %1050 = vmatmul.mubr.f32.gmra.mrb[0].mxu0 %v974
        %v1051 = vpop.f32.mrb[0].mxu0
        %v1052 = vadd.f32 0.0, %v1051
        %v1053 = vpop.f32.mrb[0].mxu0
        %1054 = vdwg.mxu0
        %v1055 = vmul.f32 %v1047, 0.5
        %v1056 = vmul.f32 %v1052, 0.5
        %vm1057 = vcmask 130048
        %v1058 = vsel %vm1057, %v1055, -inf
        %1059 = vmax.xlane.f32.xlu0 %v1058
        %v1060 = vpop.xlane.xlu0 %1059
        %v1061 = vsel %vm1057, %v1056, -inf
        %1062 = vmax.xlane.f32.xlu0 %v1061
        %v1063 = vpop.xlane.xlu0 %1062
        %v1064 = vsub.f32 %v1055, %v1060
        %v1065 = vsub.f32 %v1056, %v1063
        %v1066 = vmul.f32 %v1064, 1.442695
        %v1067 = vpow.pop %v1066
        %v1068 = vmul.f32 %v1065, 1.442695
        %v1069 = vpow.pop %v1068
        %v1070 = vsel %vm1057, %v1067, 0.0
        %1071 = vadd.xlane.f32.xlu0 %v1070
        %v1072 = vpop.xlane.xlu0 %1071
        %v1073 = vsel %vm1057, %v1069, 0.0
        %1074 = vadd.xlane.f32.xlu0 %v1073
        %v1075 = vpop.xlane.xlu0 %1074
        %v1076 = vrcp.pop %v1072
        %v1077 = vrcp.pop %v1075
        %v1078 = vmul.f32 %v1067, %v1076
        %v1079 = vmul.f32 %v1069, %v1077
        %1080 = vrot.lane.b32.xlu0 %v957, 64
        %v1081 = vpop.permute.xlu0 %1080
        %1082 = vrot.lane.b32.xlu0 %v962, 64
        %v1083 = vpop.permute.xlu0 %1082
        %v1087 = vsel %vm1057, %v1078, 0
        %v1090 = vsel %vm1057, %v1079, 0
        %1092 = vmatprep.subr.mxu0 0.0
        %1093 = vmatpush1.msra.mxu0 %v1081
        %1094 = vmatprep.subr.mxu0 0.0
        %1095 = vmatpush1.msra.mxu0 %v1083
        %1096 = vmatprep.subr.mxu0 0.0
        %1097 = vmatpush1.msra.mxu0 0.0
        %1098 = vmatprep.subr.mxu0 0.0
        %1099 = vmatpush1.msra.mxu0 0.0
        %1100 = vmatprep.subr.mxu0 0.0
        %1101 = vmatpush1.msra.mxu0 0.0
        %1102 = vmatprep.subr.mxu0 0.0
        %1103 = vmatpush1.msra.mxu0 0.0
        %1104 = vmatprep.subr.mxu0 0.0
        %1105 = vmatpush1.msra.mxu0 0.0
        %1106 = vmatprep.subr.mxu0 0.0
        %1107 = vmatpush1.msra.mxu0 0.0
        %1108 = vmatprep.subr.mxu0 0.0
        %1109 = vmatpush1.msra.mxu0 0.0
        %1110 = vmatprep.subr.mxu0 0.0
        %1111 = vmatpush1.msra.mxu0 0.0
        %1112 = vmatprep.subr.mxu0 0.0
        %1113 = vmatpush1.msra.mxu0 0.0
        %1114 = vmatprep.subr.mxu0 0.0
        %1115 = vmatpush1.msra.mxu0 0.0
        %1116 = vmatprep.subr.mxu0 0.0
        %1117 = vmatpush1.msra.mxu0 0.0
        %1118 = vmatprep.subr.mxu0 0.0
        %1119 = vmatpush1.msra.mxu0 0.0
        %1120 = vmatprep.subr.mxu0 0.0
        %1121 = vmatpush1.msra.mxu0 0.0
        %1122 = vmatprep.subr.mxu0 0.0
        %1123 = vmatpush1.msra.mxu0 0.0
        %1124 = vmatprep.subr.mxu0 0.0
        %1125 = vmatpush1.msra.mxu0 0.0
        %1126 = vmatprep.subr.mxu0 0.0
        %1127 = vmatpush1.msra.mxu0 0.0
        %1128 = vmatprep.subr.mxu0 0.0
        %1129 = vmatpush1.msra.mxu0 0.0
        %1130 = vmatprep.subr.mxu0 0.0
        %1131 = vmatpush1.msra.mxu0 0.0
        %1132 = vmatprep.subr.mxu0 0.0
        %1133 = vmatpush1.msra.mxu0 0.0
        %1134 = vmatprep.subr.mxu0 0.0
        %1135 = vmatpush1.msra.mxu0 0.0
        %1136 = vmatprep.subr.mxu0 0.0
        %1137 = vmatpush1.msra.mxu0 0.0
        %1138 = vmatprep.subr.mxu0 0.0
        %1139 = vmatpush1.msra.mxu0 0.0
        %1140 = vmatprep.subr.mxu0 0.0
        %1141 = vmatpush1.msra.mxu0 0.0
        %1142 = vmatprep.subr.mxu0 0.0
        %1143 = vmatpush1.msra.mxu0 0.0
        %1144 = vmatprep.subr.mxu0 0.0
        %1145 = vmatpush1.msra.mxu0 0.0
        %1146 = vmatprep.subr.mxu0 0.0
        %1147 = vmatpush1.msra.mxu0 0.0
        %1148 = vmatprep.subr.mxu0 0.0
        %1149 = vmatpush1.msra.mxu0 0.0
        %1150 = vmatprep.subr.mxu0 0.0
        %1151 = vmatpush1.msra.mxu0 0.0
        %1152 = vmatprep.subr.mxu0 0.0
        %1153 = vmatpush1.msra.mxu0 0.0
        %1154 = vmatprep.subr.mxu0 0.0
        %1155 = vmatpush1.msra.mxu0 0.0
        %1156 = vmatprep.mubr.f32.mxu0 0.0
        %1157 = vmatmul.mubr.f32.gmra.mrb[0].mxu0 %v1087
        %v1158 = vpop.f32.mrb[0].mxu0
        %v1159 = vadd.f32 0.0, %v1158
        %v1160 = vpop.f32.mrb[0].mxu0
        %1161 = vmatprep.mubr.f32.mxu0 0.0
        %1162 = vmatmul.mubr.f32.gmra.mrb[0].mxu0 %v1090
        %v1163 = vpop.f32.mrb[0].mxu0
        %v1164 = vadd.f32 0.0, %v1163
        %v1165 = vpop.f32.mrb[0].mxu0
        %1166 = vdwg.mxu0
        %1167 = vrot.lane.b32.xlu0 %v957, 124
        %v1168 = vpop.permute.xlu0 %1167
        %1169 = vrot.lane.b32.xlu0 %v962, 124
        %v1170 = vpop.permute.xlu0 %1169
        %1171 = vrot.lane.b32.xlu0 %v957, 92
        %v1172 = vpop.permute.xlu0 %1171
        %1173 = vrot.lane.b32.xlu0 %v962, 92
        %v1174 = vpop.permute.xlu0 %1173
        %v1175 = vsel %vm971, %v1168, 0
        %v1177 = vsel %vm971, %v1170, 0
        %v1179 = vsel %vm971, %v1172, 0
        %v1181 = vsel %vm971, %v1174, 0
        %1183 = vmatprep.subr.mxu0 0.0
        %1184 = vmatpush1.xpose.msra.mxu0 %v1179
        %1185 = vmatprep.subr.mxu0 0.0
        %1186 = vmatpush1.xpose.msra.mxu0 %v1181
        %1187 = vmatprep.subr.mxu0 0.0
        %1188 = vmatpush1.xpose.msra.mxu0 0.0
        %1189 = vmatprep.subr.mxu0 0.0
        %1190 = vmatpush1.xpose.msra.mxu0 0.0
        %1191 = vmatprep.subr.mxu0 0.0
        %1192 = vmatpush1.xpose.msra.mxu0 0.0
        %1193 = vmatprep.subr.mxu0 0.0
        %1194 = vmatpush1.xpose.msra.mxu0 0.0
        %1195 = vmatprep.subr.mxu0 0.0
        %1196 = vmatpush1.xpose.msra.mxu0 0.0
        %1197 = vmatprep.subr.mxu0 0.0
        %1198 = vmatpush1.xpose.msra.mxu0 0.0
        %1199 = vmatprep.subr.mxu0 0.0
        %1200 = vmatpush1.xpose.msra.mxu0 0.0
        %1201 = vmatprep.subr.mxu0 0.0
        %1202 = vmatpush1.xpose.msra.mxu0 0.0
        %1203 = vmatprep.subr.mxu0 0.0
        %1204 = vmatpush1.xpose.msra.mxu0 0.0
        %1205 = vmatprep.subr.mxu0 0.0
        %1206 = vmatpush1.xpose.msra.mxu0 0.0
        %1207 = vmatprep.subr.mxu0 0.0
        %1208 = vmatpush1.xpose.msra.mxu0 0.0
        %1209 = vmatprep.subr.mxu0 0.0
        %1210 = vmatpush1.xpose.msra.mxu0 0.0
        %1211 = vmatprep.subr.mxu0 0.0
        %1212 = vmatpush1.xpose.msra.mxu0 0.0
        %1213 = vmatprep.subr.mxu0 0.0
        %1214 = vmatpush1.xpose.msra.mxu0 0.0
        %1215 = vmatprep.subr.mxu0 0.0
        %1216 = vmatpush1.xpose.msra.mxu0 0.0
        %1217 = vmatprep.subr.mxu0 0.0
        %1218 = vmatpush1.xpose.msra.mxu0 0.0
        %1219 = vmatprep.subr.mxu0 0.0
        %1220 = vmatpush1.xpose.msra.mxu0 0.0
        %1221 = vmatprep.subr.mxu0 0.0
        %1222 = vmatpush1.xpose.msra.mxu0 0.0
        %1223 = vmatprep.subr.mxu0 0.0
        %1224 = vmatpush1.xpose.msra.mxu0 0.0
        %1225 = vmatprep.subr.mxu0 0.0
        %1226 = vmatpush1.xpose.msra.mxu0 0.0
        %1227 = vmatprep.subr.mxu0 0.0
        %1228 = vmatpush1.xpose.msra.mxu0 0.0
        %1229 = vmatprep.subr.mxu0 0.0
        %1230 = vmatpush1.xpose.msra.mxu0 0.0
        %1231 = vmatprep.subr.mxu0 0.0
        %1232 = vmatpush1.xpose.msra.mxu0 0.0
        %1233 = vmatprep.subr.mxu0 0.0
        %1234 = vmatpush1.xpose.msra.mxu0 0.0
        %1235 = vmatprep.subr.mxu0 0.0
        %1236 = vmatpush1.xpose.msra.mxu0 0.0
        %1237 = vmatprep.subr.mxu0 0.0
        %1238 = vmatpush1.xpose.msra.mxu0 0.0
        %1239 = vmatprep.subr.mxu0 0.0
        %1240 = vmatpush1.xpose.msra.mxu0 0.0
        %1241 = vmatprep.subr.mxu0 0.0
        %1242 = vmatpush1.xpose.msra.mxu0 0.0
        %1243 = vmatprep.subr.mxu0 0.0
        %1244 = vmatpush1.xpose.msra.mxu0 0.0
        %1245 = vmatprep.subr.mxu0 0.0
        %1246 = vmatpush1.xpose.msra.mxu0 0.0
        %1247 = vmatprep.mubr.f32.mxu0 0.0
        %1248 = vmatmul.mubr.f32.gmra.mrb[0].mxu0 %v1175
        %v1249 = vpop.f32.mrb[0].mxu0
        %v1250 = vadd.f32 0.0, %v1249
        %v1251 = vpop.f32.mrb[0].mxu0
        %1252 = vmatprep.mubr.f32.mxu0 0.0
        %1253 = vmatmul.mubr.f32.gmra.mrb[0].mxu0 %v1177
        %v1254 = vpop.f32.mrb[0].mxu0
        %v1255 = vadd.f32 0.0, %v1254
        %v1256 = vpop.f32.mrb[0].mxu0
        %1257 = vdwg.mxu0
        %v1258 = vmul.f32 %v1250, 0.5
        %v1259 = vmul.f32 %v1255, 0.5
        %v1260 = vsel %vm1057, %v1258, -inf
        %1261 = vmax.xlane.f32.xlu0 %v1260
        %v1262 = vpop.xlane.xlu0 %1261
        %v1263 = vsel %vm1057, %v1259, -inf
        %1264 = vmax.xlane.f32.xlu0 %v1263
        %v1265 = vpop.xlane.xlu0 %1264
        %v1266 = vsub.f32 %v1258, %v1262
        %v1267 = vsub.f32 %v1259, %v1265
        %v1268 = vmul.f32 %v1266, 1.442695
        %v1269 = vpow.pop %v1268
        %v1270 = vmul.f32 %v1267, 1.442695
        %v1271 = vpow.pop %v1270
        %v1272 = vsel %vm1057, %v1269, 0.0
        %1273 = vadd.xlane.f32.xlu0 %v1272
        %v1274 = vpop.xlane.xlu0 %1273
        %v1275 = vsel %vm1057, %v1271, 0.0
        %1276 = vadd.xlane.f32.xlu0 %v1275
        %v1277 = vpop.xlane.xlu0 %1276
        %v1278 = vrcp.pop %v1274
        %v1279 = vrcp.pop %v1277
        %v1280 = vmul.f32 %v1269, %v1278
        %v1281 = vmul.f32 %v1271, %v1279
        %1282 = vrot.lane.b32.xlu0 %v957, 60
        %v1283 = vpop.permute.xlu0 %1282
        %1284 = vrot.lane.b32.xlu0 %v962, 60
        %v1285 = vpop.permute.xlu0 %1284
        %v1289 = vsel %vm1057, %v1280, 0
        %v1292 = vsel %vm1057, %v1281, 0
        %1294 = vmatprep.subr.mxu0 0.0
        %1295 = vmatpush1.msra.mxu0 %v1283
        %1296 = vmatprep.subr.mxu0 0.0
        %1297 = vmatpush1.msra.mxu0 %v1285
        %1298 = vmatprep.subr.mxu0 0.0
        %1299 = vmatpush1.msra.mxu0 0.0
        %1300 = vmatprep.subr.mxu0 0.0
        %1301 = vmatpush1.msra.mxu0 0.0
        %1302 = vmatprep.subr.mxu0 0.0
        %1303 = vmatpush1.msra.mxu0 0.0
        %1304 = vmatprep.subr.mxu0 0.0
        %1305 = vmatpush1.msra.mxu0 0.0
        %1306 = vmatprep.subr.mxu0 0.0
        %1307 = vmatpush1.msra.mxu0 0.0
        %1308 = vmatprep.subr.mxu0 0.0
        %1309 = vmatpush1.msra.mxu0 0.0
        %1310 = vmatprep.subr.mxu0 0.0
        %1311 = vmatpush1.msra.mxu0 0.0
        %1312 = vmatprep.subr.mxu0 0.0
        %1313 = vmatpush1.msra.mxu0 0.0
        %1314 = vmatprep.subr.mxu0 0.0
        %1315 = vmatpush1.msra.mxu0 0.0
        %1316 = vmatprep.subr.mxu0 0.0
        %1317 = vmatpush1.msra.mxu0 0.0
        %1318 = vmatprep.subr.mxu0 0.0
        %1319 = vmatpush1.msra.mxu0 0.0
        %1320 = vmatprep.subr.mxu0 0.0
        %1321 = vmatpush1.msra.mxu0 0.0
        %1322 = vmatprep.subr.mxu0 0.0
        %1323 = vmatpush1.msra.mxu0 0.0
        %1324 = vmatprep.subr.mxu0 0.0
        %1325 = vmatpush1.msra.mxu0 0.0
        %1326 = vmatprep.subr.mxu0 0.0
        %1327 = vmatpush1.msra.mxu0 0.0
        %1328 = vmatprep.subr.mxu0 0.0
        %1329 = vmatpush1.msra.mxu0 0.0
        %1330 = vmatprep.subr.mxu0 0.0
        %1331 = vmatpush1.msra.mxu0 0.0
        %1332 = vmatprep.subr.mxu0 0.0
        %1333 = vmatpush1.msra.mxu0 0.0
        %1334 = vmatprep.subr.mxu0 0.0
        %1335 = vmatpush1.msra.mxu0 0.0
        %1336 = vmatprep.subr.mxu0 0.0
        %1337 = vmatpush1.msra.mxu0 0.0
        %1338 = vmatprep.subr.mxu0 0.0
        %1339 = vmatpush1.msra.mxu0 0.0
        %1340 = vmatprep.subr.mxu0 0.0
        %1341 = vmatpush1.msra.mxu0 0.0
        %1342 = vmatprep.subr.mxu0 0.0
        %1343 = vmatpush1.msra.mxu0 0.0
        %1344 = vmatprep.subr.mxu0 0.0
        %1345 = vmatpush1.msra.mxu0 0.0
        %1346 = vmatprep.subr.mxu0 0.0
        %1347 = vmatpush1.msra.mxu0 0.0
        %1348 = vmatprep.subr.mxu0 0.0
        %1349 = vmatpush1.msra.mxu0 0.0
        %1350 = vmatprep.subr.mxu0 0.0
        %1351 = vmatpush1.msra.mxu0 0.0
        %1352 = vmatprep.subr.mxu0 0.0
        %1353 = vmatpush1.msra.mxu0 0.0
        %1354 = vmatprep.subr.mxu0 0.0
        %1355 = vmatpush1.msra.mxu0 0.0
        %1356 = vmatprep.subr.mxu0 0.0
        %1357 = vmatpush1.msra.mxu0 0.0
        %1358 = vmatprep.mubr.f32.mxu0 0.0
        %1359 = vmatmul.mubr.f32.gmra.mrb[0].mxu0 %v1289
        %v1360 = vpop.f32.mrb[0].mxu0
        %v1361 = vadd.f32 0.0, %v1360
        %v1362 = vpop.f32.mrb[0].mxu0
        %1363 = vmatprep.mubr.f32.mxu0 0.0
        %1364 = vmatmul.mubr.f32.gmra.mrb[0].mxu0 %v1292
        %v1365 = vpop.f32.mrb[0].mxu0
        %v1366 = vadd.f32 0.0, %v1365
        %v1367 = vpop.f32.mrb[0].mxu0
        %1368 = vdwg.mxu0
        %1369 = vrot.lane.b32.xlu0 %v957, 120
        %v1370 = vpop.permute.xlu0 %1369
        %1371 = vrot.lane.b32.xlu0 %v962, 120
        %v1372 = vpop.permute.xlu0 %1371
        %1373 = vrot.lane.b32.xlu0 %v957, 88
        %v1374 = vpop.permute.xlu0 %1373
        %1375 = vrot.lane.b32.xlu0 %v962, 88
        %v1376 = vpop.permute.xlu0 %1375
        %v1377 = vsel %vm971, %v1370, 0
        %v1379 = vsel %vm971, %v1372, 0
        %v1381 = vsel %vm971, %v1374, 0
        %v1383 = vsel %vm971, %v1376, 0
        %1385 = vmatprep.subr.mxu0 0.0
        %1386 = vmatpush1.xpose.msra.mxu0 %v1381
        %1387 = vmatprep.subr.mxu0 0.0
        %1388 = vmatpush1.xpose.msra.mxu0 %v1383
        %1389 = vmatprep.subr.mxu0 0.0
        %1390 = vmatpush1.xpose.msra.mxu0 0.0
        %1391 = vmatprep.subr.mxu0 0.0
        %1392 = vmatpush1.xpose.msra.mxu0 0.0
        %1393 = vmatprep.subr.mxu0 0.0
        %1394 = vmatpush1.xpose.msra.mxu0 0.0
        %1395 = vmatprep.subr.mxu0 0.0
        %1396 = vmatpush1.xpose.msra.mxu0 0.0
        %1397 = vmatprep.subr.mxu0 0.0
        %1398 = vmatpush1.xpose.msra.mxu0 0.0
        %1399 = vmatprep.subr.mxu0 0.0
        %1400 = vmatpush1.xpose.msra.mxu0 0.0
        %1401 = vmatprep.subr.mxu0 0.0
        %1402 = vmatpush1.xpose.msra.mxu0 0.0
        %1403 = vmatprep.subr.mxu0 0.0
        %1404 = vmatpush1.xpose.msra.mxu0 0.0
        %1405 = vmatprep.subr.mxu0 0.0
        %1406 = vmatpush1.xpose.msra.mxu0 0.0
        %1407 = vmatprep.subr.mxu0 0.0
        %1408 = vmatpush1.xpose.msra.mxu0 0.0
        %1409 = vmatprep.subr.mxu0 0.0
        %1410 = vmatpush1.xpose.msra.mxu0 0.0
        %1411 = vmatprep.subr.mxu0 0.0
        %1412 = vmatpush1.xpose.msra.mxu0 0.0
        %1413 = vmatprep.subr.mxu0 0.0
        %1414 = vmatpush1.xpose.msra.mxu0 0.0
        %1415 = vmatprep.subr.mxu0 0.0
        %1416 = vmatpush1.xpose.msra.mxu0 0.0
        %1417 = vmatprep.subr.mxu0 0.0
        %1418 = vmatpush1.xpose.msra.mxu0 0.0
        %1419 = vmatprep.subr.mxu0 0.0
        %1420 = vmatpush1.xpose.msra.mxu0 0.0
        %1421 = vmatprep.subr.mxu0 0.0
        %1422 = vmatpush1.xpose.msra.mxu0 0.0
        %1423 = vmatprep.subr.mxu0 0.0
        %1424 = vmatpush1.xpose.msra.mxu0 0.0
        %1425 = vmatprep.subr.mxu0 0.0
        %1426 = vmatpush1.xpose.msra.mxu0 0.0
        %1427 = vmatprep.subr.mxu0 0.0
        %1428 = vmatpush1.xpose.msra.mxu0 0.0
        %1429 = vmatprep.subr.mxu0 0.0
        %1430 = vmatpush1.xpose.msra.mxu0 0.0
        %1431 = vmatprep.subr.mxu0 0.0
        %1432 = vmatpush1.xpose.msra.mxu0 0.0
        %1433 = vmatprep.subr.mxu0 0.0
        %1434 = vmatpush1.xpose.msra.mxu0 0.0
        %1435 = vmatprep.subr.mxu0 0.0
        %1436 = vmatpush1.xpose.msra.mxu0 0.0
        %1437 = vmatprep.subr.mxu0 0.0
        %1438 = vmatpush1.xpose.msra.mxu0 0.0
        %1439 = vmatprep.subr.mxu0 0.0
        %1440 = vmatpush1.xpose.msra.mxu0 0.0
        %1441 = vmatprep.subr.mxu0 0.0
        %1442 = vmatpush1.xpose.msra.mxu0 0.0
        %1443 = vmatprep.subr.mxu0 0.0
        %1444 = vmatpush1.xpose.msra.mxu0 0.0
        %1445 = vmatprep.subr.mxu0 0.0
        %1446 = vmatpush1.xpose.msra.mxu0 0.0
        %1447 = vmatprep.subr.mxu0 0.0
        %1448 = vmatpush1.xpose.msra.mxu0 0.0
        %1449 = vmatprep.mubr.f32.mxu0 0.0
        %1450 = vmatmul.mubr.f32.gmra.mrb[0].mxu0 %v1377
        %v1451 = vpop.f32.mrb[0].mxu0
        %v1452 = vadd.f32 0.0, %v1451
        %v1453 = vpop.f32.mrb[0].mxu0
        %1454 = vmatprep.mubr.f32.mxu0 0.0
        %1455 = vmatmul.mubr.f32.gmra.mrb[0].mxu0 %v1379
        %v1456 = vpop.f32.mrb[0].mxu0
        %v1457 = vadd.f32 0.0, %v1456
        %v1458 = vpop.f32.mrb[0].mxu0
        %1459 = vdwg.mxu0
        %v1460 = vmul.f32 %v1452, 0.5
        %v1461 = vmul.f32 %v1457, 0.5
        %v1462 = vsel %vm1057, %v1460, -inf
        %1463 = vmax.xlane.f32.xlu0 %v1462
        %v1464 = vpop.xlane.xlu0 %1463
        %v1465 = vsel %vm1057, %v1461, -inf
        %1466 = vmax.xlane.f32.xlu0 %v1465
        %v1467 = vpop.xlane.xlu0 %1466
        %v1468 = vsub.f32 %v1460, %v1464
        %v1469 = vsub.f32 %v1461, %v1467
        %v1470 = vmul.f32 %v1468, 1.442695
        %v1471 = vpow.pop %v1470
        %v1472 = vmul.f32 %v1469, 1.442695
        %v1473 = vpow.pop %v1472
        %v1474 = vsel %vm1057, %v1471, 0.0
        %1475 = vadd.xlane.f32.xlu0 %v1474
        %v1476 = vpop.xlane.xlu0 %1475
        %v1477 = vsel %vm1057, %v1473, 0.0
        %1478 = vadd.xlane.f32.xlu0 %v1477
        %v1479 = vpop.xlane.xlu0 %1478
        %v1480 = vrcp.pop %v1476
        %v1481 = vrcp.pop %v1479
        %v1482 = vmul.f32 %v1471, %v1480
        %v1483 = vmul.f32 %v1473, %v1481
        %1484 = vrot.lane.b32.xlu0 %v957, 56
        %v1485 = vpop.permute.xlu0 %1484
        %1486 = vrot.lane.b32.xlu0 %v962, 56
        %v1487 = vpop.permute.xlu0 %1486
        %v1491 = vsel %vm1057, %v1482, 0
        %v1494 = vsel %vm1057, %v1483, 0
        %1496 = vmatprep.subr.mxu0 0.0
        %1497 = vmatpush1.msra.mxu0 %v1485
        %1498 = vmatprep.subr.mxu0 0.0
        %1499 = vmatpush1.msra.mxu0 %v1487
        %1500 = vmatprep.subr.mxu0 0.0
        %1501 = vmatpush1.msra.mxu0 0.0
        %1502 = vmatprep.subr.mxu0 0.0
        %1503 = vmatpush1.msra.mxu0 0.0
        %1504 = vmatprep.subr.mxu0 0.0
        %1505 = vmatpush1.msra.mxu0 0.0
        %1506 = vmatprep.subr.mxu0 0.0
        %1507 = vmatpush1.msra.mxu0 0.0
        %1508 = vmatprep.subr.mxu0 0.0
        %1509 = vmatpush1.msra.mxu0 0.0
        %1510 = vmatprep.subr.mxu0 0.0
        %1511 = vmatpush1.msra.mxu0 0.0
        %1512 = vmatprep.subr.mxu0 0.0
        %1513 = vmatpush1.msra.mxu0 0.0
        %1514 = vmatprep.subr.mxu0 0.0
        %1515 = vmatpush1.msra.mxu0 0.0
        %1516 = vmatprep.subr.mxu0 0.0
        %1517 = vmatpush1.msra.mxu0 0.0
        %1518 = vmatprep.subr.mxu0 0.0
        %1519 = vmatpush1.msra.mxu0 0.0
        %1520 = vmatprep.subr.mxu0 0.0
        %1521 = vmatpush1.msra.mxu0 0.0
        %1522 = vmatprep.subr.mxu0 0.0
        %1523 = vmatpush1.msra.mxu0 0.0
        %1524 = vmatprep.subr.mxu0 0.0
        %1525 = vmatpush1.msra.mxu0 0.0
        %1526 = vmatprep.subr.mxu0 0.0
        %1527 = vmatpush1.msra.mxu0 0.0
        %1528 = vmatprep.subr.mxu0 0.0
        %1529 = vmatpush1.msra.mxu0 0.0
        %1530 = vmatprep.subr.mxu0 0.0
        %1531 = vmatpush1.msra.mxu0 0.0
        %1532 = vmatprep.subr.mxu0 0.0
        %1533 = vmatpush1.msra.mxu0 0.0
        %1534 = vmatprep.subr.mxu0 0.0
        %1535 = vmatpush1.msra.mxu0 0.0
        %1536 = vmatprep.subr.mxu0 0.0
        %1537 = vmatpush1.msra.mxu0 0.0
        %1538 = vmatprep.subr.mxu0 0.0
        %1539 = vmatpush1.msra.mxu0 0.0
        %1540 = vmatprep.subr.mxu0 0.0
        %1541 = vmatpush1.msra.mxu0 0.0
        %1542 = vmatprep.subr.mxu0 0.0
        %1543 = vmatpush1.msra.mxu0 0.0
        %1544 = vmatprep.subr.mxu0 0.0
        %1545 = vmatpush1.msra.mxu0 0.0
        %1546 = vmatprep.subr.mxu0 0.0
        %1547 = vmatpush1.msra.mxu0 0.0
        %1548 = vmatprep.subr.mxu0 0.0
        %1549 = vmatpush1.msra.mxu0 0.0
        %1550 = vmatprep.subr.mxu0 0.0
        %1551 = vmatpush1.msra.mxu0 0.0
        %1552 = vmatprep.subr.mxu0 0.0
        %1553 = vmatpush1.msra.mxu0 0.0
        %1554 = vmatprep.subr.mxu0 0.0
        %1555 = vmatpush1.msra.mxu0 0.0
        %1556 = vmatprep.subr.mxu0 0.0
        %1557 = vmatpush1.msra.mxu0 0.0
        %1558 = vmatprep.subr.mxu0 0.0
        %1559 = vmatpush1.msra.mxu0 0.0
        %1560 = vmatprep.mubr.f32.mxu0 0.0
        %1561 = vmatmul.mubr.f32.gmra.mrb[0].mxu0 %v1491
        %v1562 = vpop.f32.mrb[0].mxu0
        %v1563 = vadd.f32 0.0, %v1562
        %v1564 = vpop.f32.mrb[0].mxu0
        %1565 = vmatprep.mubr.f32.mxu0 0.0
        %1566 = vmatmul.mubr.f32.gmra.mrb[0].mxu0 %v1494
        %v1567 = vpop.f32.mrb[0].mxu0
        %v1568 = vadd.f32 0.0, %v1567
        %v1569 = vpop.f32.mrb[0].mxu0
        %1570 = vdwg.mxu0
        %1571 = vrot.lane.b32.xlu0 %v957, 116
        %v1572 = vpop.permute.xlu0 %1571
        %1573 = vrot.lane.b32.xlu0 %v962, 116
        %v1574 = vpop.permute.xlu0 %1573
        %1575 = vrot.lane.b32.xlu0 %v957, 84
        %v1576 = vpop.permute.xlu0 %1575
        %1577 = vrot.lane.b32.xlu0 %v962, 84
        %v1578 = vpop.permute.xlu0 %1577
        %v1579 = vsel %vm971, %v1572, 0
        %v1581 = vsel %vm971, %v1574, 0
        %v1583 = vsel %vm971, %v1576, 0
        %v1585 = vsel %vm971, %v1578, 0
        %1587 = vmatprep.subr.mxu0 0.0
        %1588 = vmatpush1.xpose.msra.mxu0 %v1583
        %1589 = vmatprep.subr.mxu0 0.0
        %1590 = vmatpush1.xpose.msra.mxu0 %v1585
        %1591 = vmatprep.subr.mxu0 0.0
        %1592 = vmatpush1.xpose.msra.mxu0 0.0
        %1593 = vmatprep.subr.mxu0 0.0
        %1594 = vmatpush1.xpose.msra.mxu0 0.0
        %1595 = vmatprep.subr.mxu0 0.0
        %1596 = vmatpush1.xpose.msra.mxu0 0.0
        %1597 = vmatprep.subr.mxu0 0.0
        %1598 = vmatpush1.xpose.msra.mxu0 0.0
        %1599 = vmatprep.subr.mxu0 0.0
        %1600 = vmatpush1.xpose.msra.mxu0 0.0
        %1601 = vmatprep.subr.mxu0 0.0
        %1602 = vmatpush1.xpose.msra.mxu0 0.0
        %1603 = vmatprep.subr.mxu0 0.0
        %1604 = vmatpush1.xpose.msra.mxu0 0.0
        %1605 = vmatprep.subr.mxu0 0.0
        %1606 = vmatpush1.xpose.msra.mxu0 0.0
        %1607 = vmatprep.subr.mxu0 0.0
        %1608 = vmatpush1.xpose.msra.mxu0 0.0
        %1609 = vmatprep.subr.mxu0 0.0
        %1610 = vmatpush1.xpose.msra.mxu0 0.0
        %1611 = vmatprep.subr.mxu0 0.0
        %1612 = vmatpush1.xpose.msra.mxu0 0.0
        %1613 = vmatprep.subr.mxu0 0.0
        %1614 = vmatpush1.xpose.msra.mxu0 0.0
        %1615 = vmatprep.subr.mxu0 0.0
        %1616 = vmatpush1.xpose.msra.mxu0 0.0
        %1617 = vmatprep.subr.mxu0 0.0
        %1618 = vmatpush1.xpose.msra.mxu0 0.0
        %1619 = vmatprep.subr.mxu0 0.0
        %1620 = vmatpush1.xpose.msra.mxu0 0.0
        %1621 = vmatprep.subr.mxu0 0.0
        %1622 = vmatpush1.xpose.msra.mxu0 0.0
        %1623 = vmatprep.subr.mxu0 0.0
        %1624 = vmatpush1.xpose.msra.mxu0 0.0
        %1625 = vmatprep.subr.mxu0 0.0
        %1626 = vmatpush1.xpose.msra.mxu0 0.0
        %1627 = vmatprep.subr.mxu0 0.0
        %1628 = vmatpush1.xpose.msra.mxu0 0.0
        %1629 = vmatprep.subr.mxu0 0.0
        %1630 = vmatpush1.xpose.msra.mxu0 0.0
        %1631 = vmatprep.subr.mxu0 0.0
        %1632 = vmatpush1.xpose.msra.mxu0 0.0
        %1633 = vmatprep.subr.mxu0 0.0
        %1634 = vmatpush1.xpose.msra.mxu0 0.0
        %1635 = vmatprep.subr.mxu0 0.0
        %1636 = vmatpush1.xpose.msra.mxu0 0.0
        %1637 = vmatprep.subr.mxu0 0.0
        %1638 = vmatpush1.xpose.msra.mxu0 0.0
        %1639 = vmatprep.subr.mxu0 0.0
        %1640 = vmatpush1.xpose.msra.mxu0 0.0
        %1641 = vmatprep.subr.mxu0 0.0
        %1642 = vmatpush1.xpose.msra.mxu0 0.0
        %1643 = vmatprep.subr.mxu0 0.0
        %1644 = vmatpush1.xpose.msra.mxu0 0.0
        %1645 = vmatprep.subr.mxu0 0.0
        %1646 = vmatpush1.xpose.msra.mxu0 0.0
        %1647 = vmatprep.subr.mxu0 0.0
        %1648 = vmatpush1.xpose.msra.mxu0 0.0
        %1649 = vmatprep.subr.mxu0 0.0
        %1650 = vmatpush1.xpose.msra.mxu0 0.0
        %1651 = vmatprep.mubr.f32.mxu0 0.0
        %1652 = vmatmul.mubr.f32.gmra.mrb[0].mxu0 %v1579
        %v1653 = vpop.f32.mrb[0].mxu0
        %v1654 = vadd.f32 0.0, %v1653
        %v1655 = vpop.f32.mrb[0].mxu0
        %1656 = vmatprep.mubr.f32.mxu0 0.0
        %1657 = vmatmul.mubr.f32.gmra.mrb[0].mxu0 %v1581
        %v1658 = vpop.f32.mrb[0].mxu0
        %v1659 = vadd.f32 0.0, %v1658
        %v1660 = vpop.f32.mrb[0].mxu0
        %1661 = vdwg.mxu0
        %v1662 = vmul.f32 %v1654, 0.5
        %v1663 = vmul.f32 %v1659, 0.5
        %v1664 = vsel %vm1057, %v1662, -inf
        %1665 = vmax.xlane.f32.xlu0 %v1664
        %v1666 = vpop.xlane.xlu0 %1665
        %v1667 = vsel %vm1057, %v1663, -inf
        %1668 = vmax.xlane.f32.xlu0 %v1667
        %v1669 = vpop.xlane.xlu0 %1668
        %v1670 = vsub.f32 %v1662, %v1666
        %v1671 = vsub.f32 %v1663, %v1669
        %v1672 = vmul.f32 %v1670, 1.442695
        %v1673 = vpow.pop %v1672
        %v1674 = vmul.f32 %v1671, 1.442695
        %v1675 = vpow.pop %v1674
        %v1676 = vsel %vm1057, %v1673, 0.0
        %1677 = vadd.xlane.f32.xlu0 %v1676
        %v1678 = vpop.xlane.xlu0 %1677
        %v1679 = vsel %vm1057, %v1675, 0.0
        %1680 = vadd.xlane.f32.xlu0 %v1679
        %v1681 = vpop.xlane.xlu0 %1680
        %v1682 = vrcp.pop %v1678
        %v1683 = vrcp.pop %v1681
        %v1684 = vmul.f32 %v1673, %v1682
        %v1685 = vmul.f32 %v1675, %v1683
        %1686 = vrot.lane.b32.xlu0 %v957, 52
        %v1687 = vpop.permute.xlu0 %1686
        %1688 = vrot.lane.b32.xlu0 %v962, 52
        %v1689 = vpop.permute.xlu0 %1688
        %v1693 = vsel %vm1057, %v1684, 0
        %v1696 = vsel %vm1057, %v1685, 0
        %1698 = vmatprep.subr.mxu0 0.0
        %1699 = vmatpush1.msra.mxu0 %v1687
        %1700 = vmatprep.subr.mxu0 0.0
        %1701 = vmatpush1.msra.mxu0 %v1689
        %1702 = vmatprep.subr.mxu0 0.0
        %1703 = vmatpush1.msra.mxu0 0.0
        %1704 = vmatprep.subr.mxu0 0.0
        %1705 = vmatpush1.msra.mxu0 0.0
        %1706 = vmatprep.subr.mxu0 0.0
        %1707 = vmatpush1.msra.mxu0 0.0
        %1708 = vmatprep.subr.mxu0 0.0
        %1709 = vmatpush1.msra.mxu0 0.0
        %1710 = vmatprep.subr.mxu0 0.0
        %1711 = vmatpush1.msra.mxu0 0.0
        %1712 = vmatprep.subr.mxu0 0.0
        %1713 = vmatpush1.msra.mxu0 0.0
        %1714 = vmatprep.subr.mxu0 0.0
        %1715 = vmatpush1.msra.mxu0 0.0
        %1716 = vmatprep.subr.mxu0 0.0
        %1717 = vmatpush1.msra.mxu0 0.0
        %1718 = vmatprep.subr.mxu0 0.0
        %1719 = vmatpush1.msra.mxu0 0.0
        %1720 = vmatprep.subr.mxu0 0.0
        %1721 = vmatpush1.msra.mxu0 0.0
        %1722 = vmatprep.subr.mxu0 0.0
        %1723 = vmatpush1.msra.mxu0 0.0
        %1724 = vmatprep.subr.mxu0 0.0
        %1725 = vmatpush1.msra.mxu0 0.0
        %1726 = vmatprep.subr.mxu0 0.0
        %1727 = vmatpush1.msra.mxu0 0.0
        %1728 = vmatprep.subr.mxu0 0.0
        %1729 = vmatpush1.msra.mxu0 0.0
        %1730 = vmatprep.subr.mxu0 0.0
        %1731 = vmatpush1.msra.mxu0 0.0
        %1732 = vmatprep.subr.mxu0 0.0
        %1733 = vmatpush1.msra.mxu0 0.0
        %1734 = vmatprep.subr.mxu0 0.0
        %1735 = vmatpush1.msra.mxu0 0.0
        %1736 = vmatprep.subr.mxu0 0.0
        %1737 = vmatpush1.msra.mxu0 0.0
        %1738 = vmatprep.subr.mxu0 0.0
        %1739 = vmatpush1.msra.mxu0 0.0
        %1740 = vmatprep.subr.mxu0 0.0
        %1741 = vmatpush1.msra.mxu0 0.0
        %1742 = vmatprep.subr.mxu0 0.0
        %1743 = vmatpush1.msra.mxu0 0.0
        %1744 = vmatprep.subr.mxu0 0.0
        %1745 = vmatpush1.msra.mxu0 0.0
        %1746 = vmatprep.subr.mxu0 0.0
        %1747 = vmatpush1.msra.mxu0 0.0
        %1748 = vmatprep.subr.mxu0 0.0
        %1749 = vmatpush1.msra.mxu0 0.0
        %1750 = vmatprep.subr.mxu0 0.0
        %1751 = vmatpush1.msra.mxu0 0.0
        %1752 = vmatprep.subr.mxu0 0.0
        %1753 = vmatpush1.msra.mxu0 0.0
        %1754 = vmatprep.subr.mxu0 0.0
        %1755 = vmatpush1.msra.mxu0 0.0
        %1756 = vmatprep.subr.mxu0 0.0
        %1757 = vmatpush1.msra.mxu0 0.0
        %1758 = vmatprep.subr.mxu0 0.0
        %1759 = vmatpush1.msra.mxu0 0.0
        %1760 = vmatprep.subr.mxu0 0.0
        %1761 = vmatpush1.msra.mxu0 0.0
        %1762 = vmatprep.mubr.f32.mxu0 0.0
        %1763 = vmatmul.mubr.f32.gmra.mrb[0].mxu0 %v1693
        %v1764 = vpop.f32.mrb[0].mxu0
        %v1765 = vadd.f32 0.0, %v1764
        %v1766 = vpop.f32.mrb[0].mxu0
        %1767 = vmatprep.mubr.f32.mxu0 0.0
        %1768 = vmatmul.mubr.f32.gmra.mrb[0].mxu0 %v1696
        %v1769 = vpop.f32.mrb[0].mxu0
        %v1770 = vadd.f32 0.0, %v1769
        %v1771 = vpop.f32.mrb[0].mxu0
        %1772 = vdwg.mxu0
        %1773 = vrot.lane.b32.xlu0 %v957, 112
        %v1774 = vpop.permute.xlu0 %1773
        %1775 = vrot.lane.b32.xlu0 %v962, 112
        %v1776 = vpop.permute.xlu0 %1775
        %1777 = vrot.lane.b32.xlu0 %v957, 80
        %v1778 = vpop.permute.xlu0 %1777
        %1779 = vrot.lane.b32.xlu0 %v962, 80
        %v1780 = vpop.permute.xlu0 %1779
        %v1781 = vsel %vm971, %v1774, 0
        %v1783 = vsel %vm971, %v1776, 0
        %v1785 = vsel %vm971, %v1778, 0
        %v1787 = vsel %vm971, %v1780, 0
        %1789 = vmatprep.subr.mxu0 0.0
        %1790 = vmatpush1.xpose.msra.mxu0 %v1785
        %1791 = vmatprep.subr.mxu0 0.0
        %1792 = vmatpush1.xpose.msra.mxu0 %v1787
        %1793 = vmatprep.subr.mxu0 0.0
        %1794 = vmatpush1.xpose.msra.mxu0 0.0
        %1795 = vmatprep.subr.mxu0 0.0
        %1796 = vmatpush1.xpose.msra.mxu0 0.0
        %1797 = vmatprep.subr.mxu0 0.0
        %1798 = vmatpush1.xpose.msra.mxu0 0.0
        %1799 = vmatprep.subr.mxu0 0.0
        %1800 = vmatpush1.xpose.msra.mxu0 0.0
        %1801 = vmatprep.subr.mxu0 0.0
        %1802 = vmatpush1.xpose.msra.mxu0 0.0
        %1803 = vmatprep.subr.mxu0 0.0
        %1804 = vmatpush1.xpose.msra.mxu0 0.0
        %1805 = vmatprep.subr.mxu0 0.0
        %1806 = vmatpush1.xpose.msra.mxu0 0.0
        %1807 = vmatprep.subr.mxu0 0.0
        %1808 = vmatpush1.xpose.msra.mxu0 0.0
        %1809 = vmatprep.subr.mxu0 0.0
        %1810 = vmatpush1.xpose.msra.mxu0 0.0
        %1811 = vmatprep.subr.mxu0 0.0
        %1812 = vmatpush1.xpose.msra.mxu0 0.0
        %1813 = vmatprep.subr.mxu0 0.0
        %1814 = vmatpush1.xpose.msra.mxu0 0.0
        %1815 = vmatprep.subr.mxu0 0.0
        %1816 = vmatpush1.xpose.msra.mxu0 0.0
        %1817 = vmatprep.subr.mxu0 0.0
        %1818 = vmatpush1.xpose.msra.mxu0 0.0
        %1819 = vmatprep.subr.mxu0 0.0
        %1820 = vmatpush1.xpose.msra.mxu0 0.0
        %1821 = vmatprep.subr.mxu0 0.0
        %1822 = vmatpush1.xpose.msra.mxu0 0.0
        %1823 = vmatprep.subr.mxu0 0.0
        %1824 = vmatpush1.xpose.msra.mxu0 0.0
        %1825 = vmatprep.subr.mxu0 0.0
        %1826 = vmatpush1.xpose.msra.mxu0 0.0
        %1827 = vmatprep.subr.mxu0 0.0
        %1828 = vmatpush1.xpose.msra.mxu0 0.0
        %1829 = vmatprep.subr.mxu0 0.0
        %1830 = vmatpush1.xpose.msra.mxu0 0.0
        %1831 = vmatprep.subr.mxu0 0.0
        %1832 = vmatpush1.xpose.msra.mxu0 0.0
        %1833 = vmatprep.subr.mxu0 0.0
        %1834 = vmatpush1.xpose.msra.mxu0 0.0
        %1835 = vmatprep.subr.mxu0 0.0
        %1836 = vmatpush1.xpose.msra.mxu0 0.0
        %1837 = vmatprep.subr.mxu0 0.0
        %1838 = vmatpush1.xpose.msra.mxu0 0.0
        %1839 = vmatprep.subr.mxu0 0.0
        %1840 = vmatpush1.xpose.msra.mxu0 0.0
        %1841 = vmatprep.subr.mxu0 0.0
        %1842 = vmatpush1.xpose.msra.mxu0 0.0
        %1843 = vmatprep.subr.mxu0 0.0
        %1844 = vmatpush1.xpose.msra.mxu0 0.0
        %1845 = vmatprep.subr.mxu0 0.0
        %1846 = vmatpush1.xpose.msra.mxu0 0.0
        %1847 = vmatprep.subr.mxu0 0.0
        %1848 = vmatpush1.xpose.msra.mxu0 0.0
        %1849 = vmatprep.subr.mxu0 0.0
        %1850 = vmatpush1.xpose.msra.mxu0 0.0
        %1851 = vmatprep.subr.mxu0 0.0
        %1852 = vmatpush1.xpose.msra.mxu0 0.0
        %1853 = vmatprep.mubr.f32.mxu0 0.0
        %1854 = vmatmul.mubr.f32.gmra.mrb[0].mxu0 %v1781
        %v1855 = vpop.f32.mrb[0].mxu0
        %v1856 = vadd.f32 0.0, %v1855
        %v1857 = vpop.f32.mrb[0].mxu0
        %1858 = vmatprep.mubr.f32.mxu0 0.0
        %1859 = vmatmul.mubr.f32.gmra.mrb[0].mxu0 %v1783
        %v1860 = vpop.f32.mrb[0].mxu0
        %v1861 = vadd.f32 0.0, %v1860
        %v1862 = vpop.f32.mrb[0].mxu0
        %1863 = vdwg.mxu0
        %v1864 = vmul.f32 %v1856, 0.5
        %v1865 = vmul.f32 %v1861, 0.5
        %v1866 = vsel %vm1057, %v1864, -inf
        %1867 = vmax.xlane.f32.xlu0 %v1866
        %v1868 = vpop.xlane.xlu0 %1867
        %v1869 = vsel %vm1057, %v1865, -inf
        %1870 = vmax.xlane.f32.xlu0 %v1869
        %v1871 = vpop.xlane.xlu0 %1870
        %v1872 = vsub.f32 %v1864, %v1868
        %v1873 = vsub.f32 %v1865, %v1871
        %v1874 = vmul.f32 %v1872, 1.442695
        %v1875 = vpow.pop %v1874
        %v1876 = vmul.f32 %v1873, 1.442695
        %v1877 = vpow.pop %v1876
        %v1878 = vsel %vm1057, %v1875, 0.0
        %1879 = vadd.xlane.f32.xlu0 %v1878
        %v1880 = vpop.xlane.xlu0 %1879
        %v1881 = vsel %vm1057, %v1877, 0.0
        %1882 = vadd.xlane.f32.xlu0 %v1881
        %v1883 = vpop.xlane.xlu0 %1882
        %v1884 = vrcp.pop %v1880
        %v1885 = vrcp.pop %v1883
        %v1886 = vmul.f32 %v1875, %v1884
        %v1887 = vmul.f32 %v1877, %v1885
        %1888 = vrot.lane.b32.xlu0 %v957, 48
        %v1889 = vpop.permute.xlu0 %1888
        %1890 = vrot.lane.b32.xlu0 %v962, 48
        %v1891 = vpop.permute.xlu0 %1890
        %v1895 = vsel %vm1057, %v1886, 0
        %v1898 = vsel %vm1057, %v1887, 0
        %1900 = vmatprep.subr.mxu0 0.0
        %1901 = vmatpush1.msra.mxu0 %v1889
        %1902 = vmatprep.subr.mxu0 0.0
        %1903 = vmatpush1.msra.mxu0 %v1891
        %1904 = vmatprep.subr.mxu0 0.0
        %1905 = vmatpush1.msra.mxu0 0.0
        %1906 = vmatprep.subr.mxu0 0.0
        %1907 = vmatpush1.msra.mxu0 0.0
        %1908 = vmatprep.subr.mxu0 0.0
        %1909 = vmatpush1.msra.mxu0 0.0
        %1910 = vmatprep.subr.mxu0 0.0
        %1911 = vmatpush1.msra.mxu0 0.0
        %1912 = vmatprep.subr.mxu0 0.0
        %1913 = vmatpush1.msra.mxu0 0.0
        %1914 = vmatprep.subr.mxu0 0.0
        %1915 = vmatpush1.msra.mxu0 0.0
        %1916 = vmatprep.subr.mxu0 0.0
        %1917 = vmatpush1.msra.mxu0 0.0
        %1918 = vmatprep.subr.mxu0 0.0
        %1919 = vmatpush1.msra.mxu0 0.0
        %1920 = vmatprep.subr.mxu0 0.0
        %1921 = vmatpush1.msra.mxu0 0.0
        %1922 = vmatprep.subr.mxu0 0.0
        %1923 = vmatpush1.msra.mxu0 0.0
        %1924 = vmatprep.subr.mxu0 0.0
        %1925 = vmatpush1.msra.mxu0 0.0
        %1926 = vmatprep.subr.mxu0 0.0
        %1927 = vmatpush1.msra.mxu0 0.0
        %1928 = vmatprep.subr.mxu0 0.0
        %1929 = vmatpush1.msra.mxu0 0.0
        %1930 = vmatprep.subr.mxu0 0.0
        %1931 = vmatpush1.msra.mxu0 0.0
        %1932 = vmatprep.subr.mxu0 0.0
        %1933 = vmatpush1.msra.mxu0 0.0
        %1934 = vmatprep.subr.mxu0 0.0
        %1935 = vmatpush1.msra.mxu0 0.0
        %1936 = vmatprep.subr.mxu0 0.0
        %1937 = vmatpush1.msra.mxu0 0.0
        %1938 = vmatprep.subr.mxu0 0.0
        %1939 = vmatpush1.msra.mxu0 0.0
        %1940 = vmatprep.subr.mxu0 0.0
        %1941 = vmatpush1.msra.mxu0 0.0
        %1942 = vmatprep.subr.mxu0 0.0
        %1943 = vmatpush1.msra.mxu0 0.0
        %1944 = vmatprep.subr.mxu0 0.0
        %1945 = vmatpush1.msra.mxu0 0.0
        %1946 = vmatprep.subr.mxu0 0.0
        %1947 = vmatpush1.msra.mxu0 0.0
        %1948 = vmatprep.subr.mxu0 0.0
        %1949 = vmatpush1.msra.mxu0 0.0
        %1950 = vmatprep.subr.mxu0 0.0
        %1951 = vmatpush1.msra.mxu0 0.0
        %1952 = vmatprep.subr.mxu0 0.0
        %1953 = vmatpush1.msra.mxu0 0.0
        %1954 = vmatprep.subr.mxu0 0.0
        %1955 = vmatpush1.msra.mxu0 0.0
        %1956 = vmatprep.subr.mxu0 0.0
        %1957 = vmatpush1.msra.mxu0 0.0
        %1958 = vmatprep.subr.mxu0 0.0
        %1959 = vmatpush1.msra.mxu0 0.0
        %1960 = vmatprep.subr.mxu0 0.0
        %1961 = vmatpush1.msra.mxu0 0.0
        %1962 = vmatprep.subr.mxu0 0.0
        %1963 = vmatpush1.msra.mxu0 0.0
        %1964 = vmatprep.mubr.f32.mxu0 0.0
        %1965 = vmatmul.mubr.f32.gmra.mrb[0].mxu0 %v1895
        %v1966 = vpop.f32.mrb[0].mxu0
        %v1967 = vadd.f32 0.0, %v1966
        %v1968 = vpop.f32.mrb[0].mxu0
        %1969 = vmatprep.mubr.f32.mxu0 0.0
        %1970 = vmatmul.mubr.f32.gmra.mrb[0].mxu0 %v1898
        %v1971 = vpop.f32.mrb[0].mxu0
        %v1972 = vadd.f32 0.0, %v1971
        %v1973 = vpop.f32.mrb[0].mxu0
        %1974 = vdwg.mxu0
        %1975 = vrot.lane.b32.xlu0 %v957, 108
        %v1976 = vpop.permute.xlu0 %1975
        %1977 = vrot.lane.b32.xlu0 %v962, 108
        %v1978 = vpop.permute.xlu0 %1977
        %1979 = vrot.lane.b32.xlu0 %v957, 76
        %v1980 = vpop.permute.xlu0 %1979
        %1981 = vrot.lane.b32.xlu0 %v962, 76
        %v1982 = vpop.permute.xlu0 %1981
        %v1983 = vsel %vm971, %v1976, 0
        %v1985 = vsel %vm971, %v1978, 0
        %v1987 = vsel %vm971, %v1980, 0
        %v1989 = vsel %vm971, %v1982, 0
        %1991 = vmatprep.subr.mxu0 0.0
        %1992 = vmatpush1.xpose.msra.mxu0 %v1987
        %1993 = vmatprep.subr.mxu0 0.0
        %1994 = vmatpush1.xpose.msra.mxu0 %v1989
        %1995 = vmatprep.subr.mxu0 0.0
        %1996 = vmatpush1.xpose.msra.mxu0 0.0
        %1997 = vmatprep.subr.mxu0 0.0
        %1998 = vmatpush1.xpose.msra.mxu0 0.0
        %1999 = vmatprep.subr.mxu0 0.0
        %2000 = vmatpush1.xpose.msra.mxu0 0.0
        %2001 = vmatprep.subr.mxu0 0.0
        %2002 = vmatpush1.xpose.msra.mxu0 0.0
        %2003 = vmatprep.subr.mxu0 0.0
        %2004 = vmatpush1.xpose.msra.mxu0 0.0
        %2005 = vmatprep.subr.mxu0 0.0
        %2006 = vmatpush1.xpose.msra.mxu0 0.0
        %2007 = vmatprep.subr.mxu0 0.0
        %2008 = vmatpush1.xpose.msra.mxu0 0.0
        %2009 = vmatprep.subr.mxu0 0.0
        %2010 = vmatpush1.xpose.msra.mxu0 0.0
        %2011 = vmatprep.subr.mxu0 0.0
        %2012 = vmatpush1.xpose.msra.mxu0 0.0
        %2013 = vmatprep.subr.mxu0 0.0
        %2014 = vmatpush1.xpose.msra.mxu0 0.0
        %2015 = vmatprep.subr.mxu0 0.0
        %2016 = vmatpush1.xpose.msra.mxu0 0.0
        %2017 = vmatprep.subr.mxu0 0.0
        %2018 = vmatpush1.xpose.msra.mxu0 0.0
        %2019 = vmatprep.subr.mxu0 0.0
        %2020 = vmatpush1.xpose.msra.mxu0 0.0
        %2021 = vmatprep.subr.mxu0 0.0
        %2022 = vmatpush1.xpose.msra.mxu0 0.0
        %2023 = vmatprep.subr.mxu0 0.0
        %2024 = vmatpush1.xpose.msra.mxu0 0.0
        %2025 = vmatprep.subr.mxu0 0.0
        %2026 = vmatpush1.xpose.msra.mxu0 0.0
        %2027 = vmatprep.subr.mxu0 0.0
        %2028 = vmatpush1.xpose.msra.mxu0 0.0
        %2029 = vmatprep.subr.mxu0 0.0
        %2030 = vmatpush1.xpose.msra.mxu0 0.0
        %2031 = vmatprep.subr.mxu0 0.0
        %2032 = vmatpush1.xpose.msra.mxu0 0.0
        %2033 = vmatprep.subr.mxu0 0.0
        %2034 = vmatpush1.xpose.msra.mxu0 0.0
        %2035 = vmatprep.subr.mxu0 0.0
        %2036 = vmatpush1.xpose.msra.mxu0 0.0
        %2037 = vmatprep.subr.mxu0 0.0
        %2038 = vmatpush1.xpose.msra.mxu0 0.0
        %2039 = vmatprep.subr.mxu0 0.0
        %2040 = vmatpush1.xpose.msra.mxu0 0.0
        %2041 = vmatprep.subr.mxu0 0.0
        %2042 = vmatpush1.xpose.msra.mxu0 0.0
        %2043 = vmatprep.subr.mxu0 0.0
        %2044 = vmatpush1.xpose.msra.mxu0 0.0
        %2045 = vmatprep.subr.mxu0 0.0
        %2046 = vmatpush1.xpose.msra.mxu0 0.0
        %2047 = vmatprep.subr.mxu0 0.0
        %2048 = vmatpush1.xpose.msra.mxu0 0.0
        %2049 = vmatprep.subr.mxu0 0.0
        %2050 = vmatpush1.xpose.msra.mxu0 0.0
        %2051 = vmatprep.subr.mxu0 0.0
        %2052 = vmatpush1.xpose.msra.mxu0 0.0
        %2053 = vmatprep.subr.mxu0 0.0
        %2054 = vmatpush1.xpose.msra.mxu0 0.0
        %2055 = vmatprep.mubr.f32.mxu0 0.0
        %2056 = vmatmul.mubr.f32.gmra.mrb[0].mxu0 %v1983
        %v2057 = vpop.f32.mrb[0].mxu0
        %v2058 = vadd.f32 0.0, %v2057
        %v2059 = vpop.f32.mrb[0].mxu0
        %2060 = vmatprep.mubr.f32.mxu0 0.0
        %2061 = vmatmul.mubr.f32.gmra.mrb[0].mxu0 %v1985
        %v2062 = vpop.f32.mrb[0].mxu0
        %v2063 = vadd.f32 0.0, %v2062
        %v2064 = vpop.f32.mrb[0].mxu0
        %2065 = vdwg.mxu0
        %v2066 = vmul.f32 %v2058, 0.5
        %v2067 = vmul.f32 %v2063, 0.5
        %v2068 = vsel %vm1057, %v2066, -inf
        %2069 = vmax.xlane.f32.xlu0 %v2068
        %v2070 = vpop.xlane.xlu0 %2069
        %v2071 = vsel %vm1057, %v2067, -inf
        %2072 = vmax.xlane.f32.xlu0 %v2071
        %v2073 = vpop.xlane.xlu0 %2072
        %v2074 = vsub.f32 %v2066, %v2070
        %v2075 = vsub.f32 %v2067, %v2073
        %v2076 = vmul.f32 %v2074, 1.442695
        %v2077 = vpow.pop %v2076
        %v2078 = vmul.f32 %v2075, 1.442695
        %v2079 = vpow.pop %v2078
        %v2080 = vsel %vm1057, %v2077, 0.0
        %2081 = vadd.xlane.f32.xlu0 %v2080
        %v2082 = vpop.xlane.xlu0 %2081
        %v2083 = vsel %vm1057, %v2079, 0.0
        %2084 = vadd.xlane.f32.xlu0 %v2083
        %v2085 = vpop.xlane.xlu0 %2084
        %v2086 = vrcp.pop %v2082
        %v2087 = vrcp.pop %v2085
        %v2088 = vmul.f32 %v2077, %v2086
        %v2089 = vmul.f32 %v2079, %v2087
        %2090 = vrot.lane.b32.xlu0 %v957, 44
        %v2091 = vpop.permute.xlu0 %2090
        %2092 = vrot.lane.b32.xlu0 %v962, 44
        %v2093 = vpop.permute.xlu0 %2092
        %v2097 = vsel %vm1057, %v2088, 0
        %v2100 = vsel %vm1057, %v2089, 0
        %2102 = vmatprep.subr.mxu0 0.0
        %2103 = vmatpush1.msra.mxu0 %v2091
        %2104 = vmatprep.subr.mxu0 0.0
        %2105 = vmatpush1.msra.mxu0 %v2093
        %2106 = vmatprep.subr.mxu0 0.0
        %2107 = vmatpush1.msra.mxu0 0.0
        %2108 = vmatprep.subr.mxu0 0.0
        %2109 = vmatpush1.msra.mxu0 0.0
        %2110 = vmatprep.subr.mxu0 0.0
        %2111 = vmatpush1.msra.mxu0 0.0
        %2112 = vmatprep.subr.mxu0 0.0
        %2113 = vmatpush1.msra.mxu0 0.0
        %2114 = vmatprep.subr.mxu0 0.0
        %2115 = vmatpush1.msra.mxu0 0.0
        %2116 = vmatprep.subr.mxu0 0.0
        %2117 = vmatpush1.msra.mxu0 0.0
        %2118 = vmatprep.subr.mxu0 0.0
        %2119 = vmatpush1.msra.mxu0 0.0
        %2120 = vmatprep.subr.mxu0 0.0
        %2121 = vmatpush1.msra.mxu0 0.0
        %2122 = vmatprep.subr.mxu0 0.0
        %2123 = vmatpush1.msra.mxu0 0.0
        %2124 = vmatprep.subr.mxu0 0.0
        %2125 = vmatpush1.msra.mxu0 0.0
        %2126 = vmatprep.subr.mxu0 0.0
        %2127 = vmatpush1.msra.mxu0 0.0
        %2128 = vmatprep.subr.mxu0 0.0
        %2129 = vmatpush1.msra.mxu0 0.0
        %2130 = vmatprep.subr.mxu0 0.0
        %2131 = vmatpush1.msra.mxu0 0.0
        %2132 = vmatprep.subr.mxu0 0.0
        %2133 = vmatpush1.msra.mxu0 0.0
        %2134 = vmatprep.subr.mxu0 0.0
        %2135 = vmatpush1.msra.mxu0 0.0
        %2136 = vmatprep.subr.mxu0 0.0
        %2137 = vmatpush1.msra.mxu0 0.0
        %2138 = vmatprep.subr.mxu0 0.0
        %2139 = vmatpush1.msra.mxu0 0.0
        %2140 = vmatprep.subr.mxu0 0.0
        %2141 = vmatpush1.msra.mxu0 0.0
        %2142 = vmatprep.subr.mxu0 0.0
        %2143 = vmatpush1.msra.mxu0 0.0
        %2144 = vmatprep.subr.mxu0 0.0
        %2145 = vmatpush1.msra.mxu0 0.0
        %2146 = vmatprep.subr.mxu0 0.0
        %2147 = vmatpush1.msra.mxu0 0.0
        %2148 = vmatprep.subr.mxu0 0.0
        %2149 = vmatpush1.msra.mxu0 0.0
        %2150 = vmatprep.subr.mxu0 0.0
        %2151 = vmatpush1.msra.mxu0 0.0
        %2152 = vmatprep.subr.mxu0 0.0
        %2153 = vmatpush1.msra.mxu0 0.0
        %2154 = vmatprep.subr.mxu0 0.0
        %2155 = vmatpush1.msra.mxu0 0.0
        %2156 = vmatprep.subr.mxu0 0.0
        %2157 = vmatpush1.msra.mxu0 0.0
        %2158 = vmatprep.subr.mxu0 0.0
        %2159 = vmatpush1.msra.mxu0 0.0
        %2160 = vmatprep.subr.mxu0 0.0
        %2161 = vmatpush1.msra.mxu0 0.0
        %2162 = vmatprep.subr.mxu0 0.0
        %2163 = vmatpush1.msra.mxu0 0.0
        %2164 = vmatprep.subr.mxu0 0.0
        %2165 = vmatpush1.msra.mxu0 0.0
        %2166 = vmatprep.mubr.f32.mxu0 0.0
        %2167 = vmatmul.mubr.f32.gmra.mrb[0].mxu0 %v2097
        %v2168 = vpop.f32.mrb[0].mxu0
        %v2169 = vadd.f32 0.0, %v2168
        %v2170 = vpop.f32.mrb[0].mxu0
        %2171 = vmatprep.mubr.f32.mxu0 0.0
        %2172 = vmatmul.mubr.f32.gmra.mrb[0].mxu0 %v2100
        %v2173 = vpop.f32.mrb[0].mxu0
        %v2174 = vadd.f32 0.0, %v2173
        %v2175 = vpop.f32.mrb[0].mxu0
        %2176 = vdwg.mxu0
        %2177 = vrot.lane.b32.xlu0 %v957, 104
        %v2178 = vpop.permute.xlu0 %2177
        %2179 = vrot.lane.b32.xlu0 %v962, 104
        %v2180 = vpop.permute.xlu0 %2179
        %2181 = vrot.lane.b32.xlu0 %v957, 72
        %v2182 = vpop.permute.xlu0 %2181
        %2183 = vrot.lane.b32.xlu0 %v962, 72
        %v2184 = vpop.permute.xlu0 %2183
        %v2185 = vsel %vm971, %v2178, 0
        %v2187 = vsel %vm971, %v2180, 0
        %v2189 = vsel %vm971, %v2182, 0
        %v2191 = vsel %vm971, %v2184, 0
        %2193 = vmatprep.subr.mxu0 0.0
        %2194 = vmatpush1.xpose.msra.mxu0 %v2189
        %2195 = vmatprep.subr.mxu0 0.0
        %2196 = vmatpush1.xpose.msra.mxu0 %v2191
        %2197 = vmatprep.subr.mxu0 0.0
        %2198 = vmatpush1.xpose.msra.mxu0 0.0
        %2199 = vmatprep.subr.mxu0 0.0
        %2200 = vmatpush1.xpose.msra.mxu0 0.0
        %2201 = vmatprep.subr.mxu0 0.0
        %2202 = vmatpush1.xpose.msra.mxu0 0.0
        %2203 = vmatprep.subr.mxu0 0.0
        %2204 = vmatpush1.xpose.msra.mxu0 0.0
        %2205 = vmatprep.subr.mxu0 0.0
        %2206 = vmatpush1.xpose.msra.mxu0 0.0
        %2207 = vmatprep.subr.mxu0 0.0
        %2208 = vmatpush1.xpose.msra.mxu0 0.0
        %2209 = vmatprep.subr.mxu0 0.0
        %2210 = vmatpush1.xpose.msra.mxu0 0.0
        %2211 = vmatprep.subr.mxu0 0.0
        %2212 = vmatpush1.xpose.msra.mxu0 0.0
        %2213 = vmatprep.subr.mxu0 0.0
        %2214 = vmatpush1.xpose.msra.mxu0 0.0
        %2215 = vmatprep.subr.mxu0 0.0
        %2216 = vmatpush1.xpose.msra.mxu0 0.0
        %2217 = vmatprep.subr.mxu0 0.0
        %2218 = vmatpush1.xpose.msra.mxu0 0.0
        %2219 = vmatprep.subr.mxu0 0.0
        %2220 = vmatpush1.xpose.msra.mxu0 0.0
        %2221 = vmatprep.subr.mxu0 0.0
        %2222 = vmatpush1.xpose.msra.mxu0 0.0
        %2223 = vmatprep.subr.mxu0 0.0
        %2224 = vmatpush1.xpose.msra.mxu0 0.0
        %2225 = vmatprep.subr.mxu0 0.0
        %2226 = vmatpush1.xpose.msra.mxu0 0.0
        %2227 = vmatprep.subr.mxu0 0.0
        %2228 = vmatpush1.xpose.msra.mxu0 0.0
        %2229 = vmatprep.subr.mxu0 0.0
        %2230 = vmatpush1.xpose.msra.mxu0 0.0
        %2231 = vmatprep.subr.mxu0 0.0
        %2232 = vmatpush1.xpose.msra.mxu0 0.0
        %2233 = vmatprep.subr.mxu0 0.0
        %2234 = vmatpush1.xpose.msra.mxu0 0.0
        %2235 = vmatprep.subr.mxu0 0.0
        %2236 = vmatpush1.xpose.msra.mxu0 0.0
        %2237 = vmatprep.subr.mxu0 0.0
        %2238 = vmatpush1.xpose.msra.mxu0 0.0
        %2239 = vmatprep.subr.mxu0 0.0
        %2240 = vmatpush1.xpose.msra.mxu0 0.0
        %2241 = vmatprep.subr.mxu0 0.0
        %2242 = vmatpush1.xpose.msra.mxu0 0.0
        %2243 = vmatprep.subr.mxu0 0.0
        %2244 = vmatpush1.xpose.msra.mxu0 0.0
        %2245 = vmatprep.subr.mxu0 0.0
        %2246 = vmatpush1.xpose.msra.mxu0 0.0
        %2247 = vmatprep.subr.mxu0 0.0
        %2248 = vmatpush1.xpose.msra.mxu0 0.0
        %2249 = vmatprep.subr.mxu0 0.0
        %2250 = vmatpush1.xpose.msra.mxu0 0.0
        %2251 = vmatprep.subr.mxu0 0.0
        %2252 = vmatpush1.xpose.msra.mxu0 0.0
        %2253 = vmatprep.subr.mxu0 0.0
        %2254 = vmatpush1.xpose.msra.mxu0 0.0
        %2255 = vmatprep.subr.mxu0 0.0
        %2256 = vmatpush1.xpose.msra.mxu0 0.0
        %2257 = vmatprep.mubr.f32.mxu0 0.0
        %2258 = vmatmul.mubr.f32.gmra.mrb[0].mxu0 %v2185
        %v2259 = vpop.f32.mrb[0].mxu0
        %v2260 = vadd.f32 0.0, %v2259
        %v2261 = vpop.f32.mrb[0].mxu0
        %2262 = vmatprep.mubr.f32.mxu0 0.0
        %2263 = vmatmul.mubr.f32.gmra.mrb[0].mxu0 %v2187
        %v2264 = vpop.f32.mrb[0].mxu0
        %v2265 = vadd.f32 0.0, %v2264
        %v2266 = vpop.f32.mrb[0].mxu0
        %2267 = vdwg.mxu0
        %v2268 = vmul.f32 %v2260, 0.5
        %v2269 = vmul.f32 %v2265, 0.5
        %v2270 = vsel %vm1057, %v2268, -inf
        %2271 = vmax.xlane.f32.xlu0 %v2270
        %v2272 = vpop.xlane.xlu0 %2271
        %v2273 = vsel %vm1057, %v2269, -inf
        %2274 = vmax.xlane.f32.xlu0 %v2273
        %v2275 = vpop.xlane.xlu0 %2274
        %v2276 = vsub.f32 %v2268, %v2272
        %v2277 = vsub.f32 %v2269, %v2275
        %v2278 = vmul.f32 %v2276, 1.442695
        %v2279 = vpow.pop %v2278
        %v2280 = vmul.f32 %v2277, 1.442695
        %v2281 = vpow.pop %v2280
        %v2282 = vsel %vm1057, %v2279, 0.0
        %2283 = vadd.xlane.f32.xlu0 %v2282
        %v2284 = vpop.xlane.xlu0 %2283
        %v2285 = vsel %vm1057, %v2281, 0.0
        %2286 = vadd.xlane.f32.xlu0 %v2285
        %v2287 = vpop.xlane.xlu0 %2286
        %v2288 = vrcp.pop %v2284
        %v2289 = vrcp.pop %v2287
        %v2290 = vmul.f32 %v2279, %v2288
        %v2291 = vmul.f32 %v2281, %v2289
        %2292 = vrot.lane.b32.xlu0 %v957, 40
        %v2293 = vpop.permute.xlu0 %2292
        %2294 = vrot.lane.b32.xlu0 %v962, 40
        %v2295 = vpop.permute.xlu0 %2294
        %v2299 = vsel %vm1057, %v2290, 0
        %v2302 = vsel %vm1057, %v2291, 0
        %2304 = vmatprep.subr.mxu0 0.0
        %2305 = vmatpush1.msra.mxu0 %v2293
        %2306 = vmatprep.subr.mxu0 0.0
        %2307 = vmatpush1.msra.mxu0 %v2295
        %2308 = vmatprep.subr.mxu0 0.0
        %2309 = vmatpush1.msra.mxu0 0.0
        %2310 = vmatprep.subr.mxu0 0.0
        %2311 = vmatpush1.msra.mxu0 0.0
        %2312 = vmatprep.subr.mxu0 0.0
        %2313 = vmatpush1.msra.mxu0 0.0
        %2314 = vmatprep.subr.mxu0 0.0
        %2315 = vmatpush1.msra.mxu0 0.0
        %2316 = vmatprep.subr.mxu0 0.0
        %2317 = vmatpush1.msra.mxu0 0.0
        %2318 = vmatprep.subr.mxu0 0.0
        %2319 = vmatpush1.msra.mxu0 0.0
        %2320 = vmatprep.subr.mxu0 0.0
        %2321 = vmatpush1.msra.mxu0 0.0
        %2322 = vmatprep.subr.mxu0 0.0
        %2323 = vmatpush1.msra.mxu0 0.0
        %2324 = vmatprep.subr.mxu0 0.0
        %2325 = vmatpush1.msra.mxu0 0.0
        %2326 = vmatprep.subr.mxu0 0.0
        %2327 = vmatpush1.msra.mxu0 0.0
        %2328 = vmatprep.subr.mxu0 0.0
        %2329 = vmatpush1.msra.mxu0 0.0
        %2330 = vmatprep.subr.mxu0 0.0
        %2331 = vmatpush1.msra.mxu0 0.0
        %2332 = vmatprep.subr.mxu0 0.0
        %2333 = vmatpush1.msra.mxu0 0.0
        %2334 = vmatprep.subr.mxu0 0.0
        %2335 = vmatpush1.msra.mxu0 0.0
        %2336 = vmatprep.subr.mxu0 0.0
        %2337 = vmatpush1.msra.mxu0 0.0
        %2338 = vmatprep.subr.mxu0 0.0
        %2339 = vmatpush1.msra.mxu0 0.0
        %2340 = vmatprep.subr.mxu0 0.0
        %2341 = vmatpush1.msra.mxu0 0.0
        %2342 = vmatprep.subr.mxu0 0.0
        %2343 = vmatpush1.msra.mxu0 0.0
        %2344 = vmatprep.subr.mxu0 0.0
        %2345 = vmatpush1.msra.mxu0 0.0
        %2346 = vmatprep.subr.mxu0 0.0
        %2347 = vmatpush1.msra.mxu0 0.0
        %2348 = vmatprep.subr.mxu0 0.0
        %2349 = vmatpush1.msra.mxu0 0.0
        %2350 = vmatprep.subr.mxu0 0.0
        %2351 = vmatpush1.msra.mxu0 0.0
        %2352 = vmatprep.subr.mxu0 0.0
        %2353 = vmatpush1.msra.mxu0 0.0
        %2354 = vmatprep.subr.mxu0 0.0
        %2355 = vmatpush1.msra.mxu0 0.0
        %2356 = vmatprep.subr.mxu0 0.0
        %2357 = vmatpush1.msra.mxu0 0.0
        %2358 = vmatprep.subr.mxu0 0.0
        %2359 = vmatpush1.msra.mxu0 0.0
        %2360 = vmatprep.subr.mxu0 0.0
        %2361 = vmatpush1.msra.mxu0 0.0
        %2362 = vmatprep.subr.mxu0 0.0
        %2363 = vmatpush1.msra.mxu0 0.0
        %2364 = vmatprep.subr.mxu0 0.0
        %2365 = vmatpush1.msra.mxu0 0.0
        %2366 = vmatprep.subr.mxu0 0.0
        %2367 = vmatpush1.msra.mxu0 0.0
        %2368 = vmatprep.mubr.f32.mxu0 0.0
        %2369 = vmatmul.mubr.f32.gmra.mrb[0].mxu0 %v2299
        %v2370 = vpop.f32.mrb[0].mxu0
        %v2371 = vadd.f32 0.0, %v2370
        %v2372 = vpop.f32.mrb[0].mxu0
        %2373 = vmatprep.mubr.f32.mxu0 0.0
        %2374 = vmatmul.mubr.f32.gmra.mrb[0].mxu0 %v2302
        %v2375 = vpop.f32.mrb[0].mxu0
        %v2376 = vadd.f32 0.0, %v2375
        %v2377 = vpop.f32.mrb[0].mxu0
        %2378 = vdwg.mxu0
        %2379 = vrot.lane.b32.xlu0 %v957, 100
        %v2380 = vpop.permute.xlu0 %2379
        %2381 = vrot.lane.b32.xlu0 %v962, 100
        %v2382 = vpop.permute.xlu0 %2381
        %2383 = vrot.lane.b32.xlu0 %v957, 68
        %v2384 = vpop.permute.xlu0 %2383
        %2385 = vrot.lane.b32.xlu0 %v962, 68
        %v2386 = vpop.permute.xlu0 %2385
        %v2387 = vsel %vm971, %v2380, 0
        %v2389 = vsel %vm971, %v2382, 0
        %v2391 = vsel %vm971, %v2384, 0
        %v2393 = vsel %vm971, %v2386, 0
        %2395 = vmatprep.subr.mxu0 0.0
        %2396 = vmatpush1.xpose.msra.mxu0 %v2391
        %2397 = vmatprep.subr.mxu0 0.0
        %2398 = vmatpush1.xpose.msra.mxu0 %v2393
        %2399 = vmatprep.subr.mxu0 0.0
        %2400 = vmatpush1.xpose.msra.mxu0 0.0
        %2401 = vmatprep.subr.mxu0 0.0
        %2402 = vmatpush1.xpose.msra.mxu0 0.0
        %2403 = vmatprep.subr.mxu0 0.0
        %2404 = vmatpush1.xpose.msra.mxu0 0.0
        %2405 = vmatprep.subr.mxu0 0.0
        %2406 = vmatpush1.xpose.msra.mxu0 0.0
        %2407 = vmatprep.subr.mxu0 0.0
        %2408 = vmatpush1.xpose.msra.mxu0 0.0
        %2409 = vmatprep.subr.mxu0 0.0
        %2410 = vmatpush1.xpose.msra.mxu0 0.0
        %2411 = vmatprep.subr.mxu0 0.0
        %2412 = vmatpush1.xpose.msra.mxu0 0.0
        %2413 = vmatprep.subr.mxu0 0.0
        %2414 = vmatpush1.xpose.msra.mxu0 0.0
        %2415 = vmatprep.subr.mxu0 0.0
        %2416 = vmatpush1.xpose.msra.mxu0 0.0
        %2417 = vmatprep.subr.mxu0 0.0
        %2418 = vmatpush1.xpose.msra.mxu0 0.0
        %2419 = vmatprep.subr.mxu0 0.0
        %2420 = vmatpush1.xpose.msra.mxu0 0.0
        %2421 = vmatprep.subr.mxu0 0.0
        %2422 = vmatpush1.xpose.msra.mxu0 0.0
        %2423 = vmatprep.subr.mxu0 0.0
        %2424 = vmatpush1.xpose.msra.mxu0 0.0
        %2425 = vmatprep.subr.mxu0 0.0
        %2426 = vmatpush1.xpose.msra.mxu0 0.0
        %2427 = vmatprep.subr.mxu0 0.0
        %2428 = vmatpush1.xpose.msra.mxu0 0.0
        %2429 = vmatprep.subr.mxu0 0.0
        %2430 = vmatpush1.xpose.msra.mxu0 0.0
        %2431 = vmatprep.subr.mxu0 0.0
        %2432 = vmatpush1.xpose.msra.mxu0 0.0
        %2433 = vmatprep.subr.mxu0 0.0
        %2434 = vmatpush1.xpose.msra.mxu0 0.0
        %2435 = vmatprep.subr.mxu0 0.0
        %2436 = vmatpush1.xpose.msra.mxu0 0.0
        %2437 = vmatprep.subr.mxu0 0.0
        %2438 = vmatpush1.xpose.msra.mxu0 0.0
        %2439 = vmatprep.subr.mxu0 0.0
        %2440 = vmatpush1.xpose.msra.mxu0 0.0
        %2441 = vmatprep.subr.mxu0 0.0
        %2442 = vmatpush1.xpose.msra.mxu0 0.0
        %2443 = vmatprep.subr.mxu0 0.0
        %2444 = vmatpush1.xpose.msra.mxu0 0.0
        %2445 = vmatprep.subr.mxu0 0.0
        %2446 = vmatpush1.xpose.msra.mxu0 0.0
        %2447 = vmatprep.subr.mxu0 0.0
        %2448 = vmatpush1.xpose.msra.mxu0 0.0
        %2449 = vmatprep.subr.mxu0 0.0
        %2450 = vmatpush1.xpose.msra.mxu0 0.0
        %2451 = vmatprep.subr.mxu0 0.0
        %2452 = vmatpush1.xpose.msra.mxu0 0.0
        %2453 = vmatprep.subr.mxu0 0.0
        %2454 = vmatpush1.xpose.msra.mxu0 0.0
        %2455 = vmatprep.subr.mxu0 0.0
        %2456 = vmatpush1.xpose.msra.mxu0 0.0
        %2457 = vmatprep.subr.mxu0 0.0
        %2458 = vmatpush1.xpose.msra.mxu0 0.0
        %2459 = vmatprep.mubr.f32.mxu0 0.0
        %2460 = vmatmul.mubr.f32.gmra.mrb[0].mxu0 %v2387
        %v2461 = vpop.f32.mrb[0].mxu0
        %v2462 = vadd.f32 0.0, %v2461
        %v2463 = vpop.f32.mrb[0].mxu0
        %2464 = vmatprep.mubr.f32.mxu0 0.0
        %2465 = vmatmul.mubr.f32.gmra.mrb[0].mxu0 %v2389
        %v2466 = vpop.f32.mrb[0].mxu0
        %v2467 = vadd.f32 0.0, %v2466
        %v2468 = vpop.f32.mrb[0].mxu0
        %2469 = vdwg.mxu0
        %v2470 = vmul.f32 %v2462, 0.5
        %v2471 = vmul.f32 %v2467, 0.5
        %v2472 = vsel %vm1057, %v2470, -inf
        %2473 = vmax.xlane.f32.xlu0 %v2472
        %v2474 = vpop.xlane.xlu0 %2473
        %v2475 = vsel %vm1057, %v2471, -inf
        %2476 = vmax.xlane.f32.xlu0 %v2475
        %v2477 = vpop.xlane.xlu0 %2476
        %v2478 = vsub.f32 %v2470, %v2474
        %v2479 = vsub.f32 %v2471, %v2477
        %v2480 = vmul.f32 %v2478, 1.442695
        %v2481 = vpow.pop %v2480
        %v2482 = vmul.f32 %v2479, 1.442695
        %v2483 = vpow.pop %v2482
        %v2484 = vsel %vm1057, %v2481, 0.0
        %2485 = vadd.xlane.f32.xlu0 %v2484
        %v2486 = vpop.xlane.xlu0 %2485
        %v2487 = vsel %vm1057, %v2483, 0.0
        %2488 = vadd.xlane.f32.xlu0 %v2487
        %v2489 = vpop.xlane.xlu0 %2488
        %v2490 = vrcp.pop %v2486
        %v2491 = vrcp.pop %v2489
        %v2492 = vmul.f32 %v2481, %v2490
        %v2493 = vmul.f32 %v2483, %v2491
        %2494 = vrot.lane.b32.xlu0 %v957, 36
        %v2495 = vpop.permute.xlu0 %2494
        %2496 = vrot.lane.b32.xlu0 %v962, 36
        %v2497 = vpop.permute.xlu0 %2496
        %v2501 = vsel %vm1057, %v2492, 0
        %v2504 = vsel %vm1057, %v2493, 0
        %2506 = vmatprep.subr.mxu0 0.0
        %2507 = vmatpush1.msra.mxu0 %v2495
        %2508 = vmatprep.subr.mxu0 0.0
        %2509 = vmatpush1.msra.mxu0 %v2497
        %2510 = vmatprep.subr.mxu0 0.0
        %2511 = vmatpush1.msra.mxu0 0.0
        %2512 = vmatprep.subr.mxu0 0.0
        %2513 = vmatpush1.msra.mxu0 0.0
        %2514 = vmatprep.subr.mxu0 0.0
        %2515 = vmatpush1.msra.mxu0 0.0
        %2516 = vmatprep.subr.mxu0 0.0
        %2517 = vmatpush1.msra.mxu0 0.0
        %2518 = vmatprep.subr.mxu0 0.0
        %2519 = vmatpush1.msra.mxu0 0.0
        %2520 = vmatprep.subr.mxu0 0.0
        %2521 = vmatpush1.msra.mxu0 0.0
        %2522 = vmatprep.subr.mxu0 0.0
        %2523 = vmatpush1.msra.mxu0 0.0
        %2524 = vmatprep.subr.mxu0 0.0
        %2525 = vmatpush1.msra.mxu0 0.0
        %2526 = vmatprep.subr.mxu0 0.0
        %2527 = vmatpush1.msra.mxu0 0.0
        %2528 = vmatprep.subr.mxu0 0.0
        %2529 = vmatpush1.msra.mxu0 0.0
        %2530 = vmatprep.subr.mxu0 0.0
        %2531 = vmatpush1.msra.mxu0 0.0
        %2532 = vmatprep.subr.mxu0 0.0
        %2533 = vmatpush1.msra.mxu0 0.0
        %2534 = vmatprep.subr.mxu0 0.0
        %2535 = vmatpush1.msra.mxu0 0.0
        %2536 = vmatprep.subr.mxu0 0.0
        %2537 = vmatpush1.msra.mxu0 0.0
        %2538 = vmatprep.subr.mxu0 0.0
        %2539 = vmatpush1.msra.mxu0 0.0
        %2540 = vmatprep.subr.mxu0 0.0
        %2541 = vmatpush1.msra.mxu0 0.0
        %2542 = vmatprep.subr.mxu0 0.0
        %2543 = vmatpush1.msra.mxu0 0.0
        %2544 = vmatprep.subr.mxu0 0.0
        %2545 = vmatpush1.msra.mxu0 0.0
        %2546 = vmatprep.subr.mxu0 0.0
        %2547 = vmatpush1.msra.mxu0 0.0
        %2548 = vmatprep.subr.mxu0 0.0
        %2549 = vmatpush1.msra.mxu0 0.0
        %2550 = vmatprep.subr.mxu0 0.0
        %2551 = vmatpush1.msra.mxu0 0.0
        %2552 = vmatprep.subr.mxu0 0.0
        %2553 = vmatpush1.msra.mxu0 0.0
        %2554 = vmatprep.subr.mxu0 0.0
        %2555 = vmatpush1.msra.mxu0 0.0
        %2556 = vmatprep.subr.mxu0 0.0
        %2557 = vmatpush1.msra.mxu0 0.0
        %2558 = vmatprep.subr.mxu0 0.0
        %2559 = vmatpush1.msra.mxu0 0.0
        %2560 = vmatprep.subr.mxu0 0.0
        %2561 = vmatpush1.msra.mxu0 0.0
        %2562 = vmatprep.subr.mxu0 0.0
        %2563 = vmatpush1.msra.mxu0 0.0
        %2564 = vmatprep.subr.mxu0 0.0
        %2565 = vmatpush1.msra.mxu0 0.0
        %2566 = vmatprep.subr.mxu0 0.0
        %2567 = vmatpush1.msra.mxu0 0.0
        %2568 = vmatprep.subr.mxu0 0.0
        %2569 = vmatpush1.msra.mxu0 0.0
        %2570 = vmatprep.mubr.f32.mxu0 0.0
        %2571 = vmatmul.mubr.f32.gmra.mrb[0].mxu0 %v2501
        %v2572 = vpop.f32.mrb[0].mxu0
        %v2573 = vadd.f32 0.0, %v2572
        %v2574 = vpop.f32.mrb[0].mxu0
        %2575 = vmatprep.mubr.f32.mxu0 0.0
        %2576 = vmatmul.mubr.f32.gmra.mrb[0].mxu0 %v2504
        %v2577 = vpop.f32.mrb[0].mxu0
        %v2578 = vadd.f32 0.0, %v2577
        %v2579 = vpop.f32.mrb[0].mxu0
        %2580 = vdwg.mxu0
        %2583 = vrot.lane.b32.xlu0 %v1361, 4
        %v2584 = vpop.permute.xlu0 %2583
        %2585 = vrot.lane.b32.xlu0 %v1366, 4
        %v2586 = vpop.permute.xlu0 %2585
        %2591 = vrot.lane.b32.xlu0 %v1563, 8
        %v2592 = vpop.permute.xlu0 %2591
        %2593 = vrot.lane.b32.xlu0 %v1568, 8
        %v2594 = vpop.permute.xlu0 %2593
        %2599 = vrot.lane.b32.xlu0 %v1765, 12
        %v2600 = vpop.permute.xlu0 %2599
        %2601 = vrot.lane.b32.xlu0 %v1770, 12
        %v2602 = vpop.permute.xlu0 %2601
        %2607 = vrot.lane.b32.xlu0 %v1967, 16
        %v2608 = vpop.permute.xlu0 %2607
        %2609 = vrot.lane.b32.xlu0 %v1972, 16
        %v2610 = vpop.permute.xlu0 %2609
        %2615 = vrot.lane.b32.xlu0 %v2169, 20
        %v2616 = vpop.permute.xlu0 %2615
        %2617 = vrot.lane.b32.xlu0 %v2174, 20
        %v2618 = vpop.permute.xlu0 %2617
        %2623 = vrot.lane.b32.xlu0 %v2371, 24
        %v2624 = vpop.permute.xlu0 %2623
        %2625 = vrot.lane.b32.xlu0 %v2376, 24
        %v2626 = vpop.permute.xlu0 %2625
        %2631 = vrot.lane.b32.xlu0 %v2573, 28
        %v2632 = vpop.permute.xlu0 %2631
        %2633 = vrot.lane.b32.xlu0 %v2578, 28
        %v2634 = vpop.permute.xlu0 %2633
        %v2637 = vsel %vm971, %v1159, %v2584
        %v2638 = vsel %vm971, %v1164, %v2586
        %vm2639 = vcmask 64512
        %v2640 = vsel %vm2639, %v2637, %v2592
        %v2641 = vsel %vm2639, %v2638, %v2594
        %vm2642 = vcmask 97280
        %v2643 = vsel %vm2642, %v2640, %v2600
        %v2644 = vsel %vm2642, %v2641, %v2602
        %v2645 = vsel %vm1057, %v2643, %v2608
        %v2646 = vsel %vm1057, %v2644, %v2610
        %vm2647 = vcmask 162816
        %v2648 = vsel %vm2647, %v2645, %v2616
        %v2649 = vsel %vm2647, %v2646, %v2618
        %vm2650 = vcmask 195584
        %v2651 = vsel %vm2650, %v2648, %v2624
        %v2652 = vsel %vm2650, %v2649, %v2626
        %vm2653 = vcmask 228352
        %v2654 = vsel %vm2653, %v2651, %v2632
        %v2655 = vsel %vm2653, %v2652, %v2634
        %v2656 = vld [vmem:[%s10] sm:$0x1]
        %v2657 = vld [vmem:[%s8] sm:$0xff]
        %v2658 = vld [vmem:[%s8 + $0x8] sm:$0xff]
        %v2659 = vld [vmem:[%s8 + $0x10] sm:$0xff]
        %v2660 = vld [vmem:[%s8 + $0x18] sm:$0xff]
        %v2661 = vld [vmem:[%s9] sm:$0x1]
        %v2663 = vlaneseq
        %v2664 = vshrl.u32 %v2663, 7
        %v2665 = vsub.s32 0, %v2664
        %v2666 = vrot.slane %v2661, %v2665
        %v2669 = vsel %vm829, %v2654, 0
        %v2672 = vsel %vm829, %v2655, 0
        %2674 = vmatprep.subr.mxu0 0.0
        %2675 = vmatpush1.msra.mxu0 %v2657
        %2676 = vmatprep.subr.mxu0 0.0
        %2677 = vmatpush1.msra.mxu0 %v2658
        %2678 = vmatprep.subr.mxu0 0.0
        %2679 = vmatpush1.msra.mxu0 %v2659
        %2680 = vmatprep.subr.mxu0 0.0
        %2681 = vmatpush1.msra.mxu0 %v2660
        %2682 = vmatprep.subr.mxu0 0.0
        %2683 = vmatpush1.msra.mxu0 0.0
        %2684 = vmatprep.subr.mxu0 0.0
        %2685 = vmatpush1.msra.mxu0 0.0
        %2686 = vmatprep.subr.mxu0 0.0
        %2687 = vmatpush1.msra.mxu0 0.0
        %2688 = vmatprep.subr.mxu0 0.0
        %2689 = vmatpush1.msra.mxu0 0.0
        %2690 = vmatprep.subr.mxu0 0.0
        %2691 = vmatpush1.msra.mxu0 0.0
        %2692 = vmatprep.subr.mxu0 0.0
        %2693 = vmatpush1.msra.mxu0 0.0
        %2694 = vmatprep.subr.mxu0 0.0
        %2695 = vmatpush1.msra.mxu0 0.0
        %2696 = vmatprep.subr.mxu0 0.0
        %2697 = vmatpush1.msra.mxu0 0.0
        %2698 = vmatprep.subr.mxu0 0.0
        %2699 = vmatpush1.msra.mxu0 0.0
        %2700 = vmatprep.subr.mxu0 0.0
        %2701 = vmatpush1.msra.mxu0 0.0
        %2702 = vmatprep.subr.mxu0 0.0
        %2703 = vmatpush1.msra.mxu0 0.0
        %2704 = vmatprep.subr.mxu0 0.0
        %2705 = vmatpush1.msra.mxu0 0.0
        %2706 = vmatprep.subr.mxu0 0.0
        %2707 = vmatpush1.msra.mxu0 0.0
        %2708 = vmatprep.subr.mxu0 0.0
        %2709 = vmatpush1.msra.mxu0 0.0
        %2710 = vmatprep.subr.mxu0 0.0
        %2711 = vmatpush1.msra.mxu0 0.0
        %2712 = vmatprep.subr.mxu0 0.0
        %2713 = vmatpush1.msra.mxu0 0.0
        %2714 = vmatprep.subr.mxu0 0.0
        %2715 = vmatpush1.msra.mxu0 0.0
        %2716 = vmatprep.subr.mxu0 0.0
        %2717 = vmatpush1.msra.mxu0 0.0
        %2718 = vmatprep.subr.mxu0 0.0
        %2719 = vmatpush1.msra.mxu0 0.0
        %2720 = vmatprep.subr.mxu0 0.0
        %2721 = vmatpush1.msra.mxu0 0.0
        %2722 = vmatprep.subr.mxu0 0.0
        %2723 = vmatpush1.msra.mxu0 0.0
        %2724 = vmatprep.subr.mxu0 0.0
        %2725 = vmatpush1.msra.mxu0 0.0
        %2726 = vmatprep.subr.mxu0 0.0
        %2727 = vmatpush1.msra.mxu0 0.0
        %2728 = vmatprep.subr.mxu0 0.0
        %2729 = vmatpush1.msra.mxu0 0.0
        %2730 = vmatprep.subr.mxu0 0.0
        %2731 = vmatpush1.msra.mxu0 0.0
        %2732 = vmatprep.subr.mxu0 0.0
        %2733 = vmatpush1.msra.mxu0 0.0
        %2734 = vmatprep.subr.mxu0 0.0
        %2735 = vmatpush1.msra.mxu0 0.0
        %2736 = vmatprep.subr.mxu0 0.0
        %2737 = vmatpush1.msra.mxu0 0.0
        %2738 = vmatprep.mubr.f32.mxu0 0.0
        %2739 = vmatmul.mubr.f32.gmra.mrb[0].mxu0 %v2669
        %v2740 = vpop.f32.mrb[0].mxu0
        %v2741 = vadd.f32 %v2666, %v2740
        %v2742 = vpop.f32.mrb[0].mxu0
        %2743 = vmatprep.mubr.f32.mxu0 0.0
        %2744 = vmatmul.mubr.f32.gmra.mrb[0].mxu0 %v2672
        %v2745 = vpop.f32.mrb[0].mxu0
        %v2746 = vadd.f32 %v2666, %v2745
        %v2747 = vpop.f32.mrb[0].mxu0
        %2748 = vdwg.mxu0
        %v2750 = vlaneseq
        %v2751 = vshrl.u32 %v2750, 7
        %v2752 = vsub.s32 0, %v2751
        %v2753 = vrot.slane %v2656, %v2752
        %v2755 = vmul.f32 %v2753, %v2741
        %v2756 = vmul.f32 %v2753, %v2746
        %v2757 = vadd.f32 %v825, %v2755
        %v2758 = vadd.f32 %v826, %v2756
        %v2759 = vld [vmem:[%s11] sm:$0x1]
        %v2760 = vld [vmem:[%s12] sm:$0x1]
        %v2761 = vsel %vm829, %v2757, 0.0
        %2762 = vadd.xlane.f32.xlu0 %v2761
        %v2763 = vpop.xlane.xlu0 %2762
        %v2764 = vsel %vm829, %v2758, 0.0
        %2765 = vadd.xlane.f32.xlu0 %v2764
        %v2766 = vpop.xlane.xlu0 %2765
        %v2767 = vmul.f32 %v2763, %v836
        %v2768 = vmul.f32 %v2766, %v836
        %v2769 = vsub.f32 %v2757, %v2767
        %v2770 = vsub.f32 %v2758, %v2768
        %v2771 = vmul.f32 %v2769, %v2769
        %v2772 = vmul.f32 %v2770, %v2770
        %v2773 = vsel %vm829, %v2771, 0.0
        %2774 = vadd.xlane.f32.xlu0 %v2773
        %v2775 = vpop.xlane.xlu0 %2774
        %v2776 = vsel %vm829, %v2772, 0.0
        %2777 = vadd.xlane.f32.xlu0 %v2776
        %v2778 = vpop.xlane.xlu0 %2777
        %v2779 = vmul.f32 %v2775, %v836
        %v2780 = vmul.f32 %v2778, %v836
        %v2781 = vadd.f32 %v2779, 1e-05
        %v2782 = vadd.f32 %v2780, 1e-05
        %v2783 = vrsqrt.pop %v2781
        %v2784 = vrsqrt.pop %v2782
        %v2785 = vmul.f32 %v2769, %v2783
        %v2786 = vmul.f32 %v2770, %v2784
        %v2788 = vlaneseq
        %v2789 = vshrl.u32 %v2788, 7
        %v2790 = vsub.s32 0, %v2789
        %v2791 = vrot.slane %v2759, %v2790
        %v2793 = vmul.f32 %v2785, %v2791
        %v2794 = vmul.f32 %v2786, %v2791
        %v2796 = vlaneseq
        %v2797 = vshrl.u32 %v2796, 7
        %v2798 = vsub.s32 0, %v2797
        %v2799 = vrot.slane %v2760, %v2798
        %v2801 = vadd.f32 %v2793, %v2799
        %v2802 = vadd.f32 %v2794, %v2799
        %v2803 = vld [vmem:[%s13] sm:$0xff]
        %v2804 = vld [vmem:[%s13 + $0x8] sm:$0xff]
        %v2805 = vld [vmem:[%s13 + $0x10] sm:$0xff]
        %v2806 = vld [vmem:[%s13 + $0x18] sm:$0xff]
        %v2807 = vld [vmem:[%s13 + $0x20] sm:$0xff]
        %v2808 = vld [vmem:[%s13 + $0x28] sm:$0xff]
        %v2809 = vld [vmem:[%s13 + $0x30] sm:$0xff]
        %v2810 = vld [vmem:[%s13 + $0x38] sm:$0xff]
        %v2811 = vld [vmem:[%s14] sm:$0x3]
        %v2813 = vlaneseq
        %v2814 = vshrl.u32 %v2813, 7
        %v2815 = vsub.s32 0, %v2814
        %v2816 = vrot.slane %v2811, %v2815
        %v2817 = vlaneseq
        %v2818 = vshrl.u32 %v2817, 7
        %v2819 = vsub.s32 1, %v2818
        %v2820 = vrot.slane %v2811, %v2819
        %v2824 = vsel %vm829, %v2801, 0
        %v2827 = vsel %vm829, %v2802, 0
        %2829 = vmatprep.subr.mxu0 %v2804
        %2830 = vmatpush1.msra.mxu0 %v2803
        %2831 = vmatprep.subr.mxu0 %v2806
        %2832 = vmatpush1.msra.mxu0 %v2805
        %2833 = vmatprep.subr.mxu0 %v2808
        %2834 = vmatpush1.msra.mxu0 %v2807
        %2835 = vmatprep.subr.mxu0 %v2810
        %2836 = vmatpush1.msra.mxu0 %v2809
        %2837 = vmatprep.subr.mxu0 0.0
        %2838 = vmatpush1.msra.mxu0 0.0
        %2839 = vmatprep.subr.mxu0 0.0
        %2840 = vmatpush1.msra.mxu0 0.0
        %2841 = vmatprep.subr.mxu0 0.0
        %2842 = vmatpush1.msra.mxu0 0.0
        %2843 = vmatprep.subr.mxu0 0.0
        %2844 = vmatpush1.msra.mxu0 0.0
        %2845 = vmatprep.subr.mxu0 0.0
        %2846 = vmatpush1.msra.mxu0 0.0
        %2847 = vmatprep.subr.mxu0 0.0
        %2848 = vmatpush1.msra.mxu0 0.0
        %2849 = vmatprep.subr.mxu0 0.0
        %2850 = vmatpush1.msra.mxu0 0.0
        %2851 = vmatprep.subr.mxu0 0.0
        %2852 = vmatpush1.msra.mxu0 0.0
        %2853 = vmatprep.subr.mxu0 0.0
        %2854 = vmatpush1.msra.mxu0 0.0
        %2855 = vmatprep.subr.mxu0 0.0
        %2856 = vmatpush1.msra.mxu0 0.0
        %2857 = vmatprep.subr.mxu0 0.0
        %2858 = vmatpush1.msra.mxu0 0.0
        %2859 = vmatprep.subr.mxu0 0.0
        %2860 = vmatpush1.msra.mxu0 0.0
        %2861 = vmatprep.subr.mxu0 0.0
        %2862 = vmatpush1.msra.mxu0 0.0
        %2863 = vmatprep.subr.mxu0 0.0
        %2864 = vmatpush1.msra.mxu0 0.0
        %2865 = vmatprep.subr.mxu0 0.0
        %2866 = vmatpush1.msra.mxu0 0.0
        %2867 = vmatprep.subr.mxu0 0.0
        %2868 = vmatpush1.msra.mxu0 0.0
        %2869 = vmatprep.subr.mxu0 0.0
        %2870 = vmatpush1.msra.mxu0 0.0
        %2871 = vmatprep.subr.mxu0 0.0
        %2872 = vmatpush1.msra.mxu0 0.0
        %2873 = vmatprep.subr.mxu0 0.0
        %2874 = vmatpush1.msra.mxu0 0.0
        %2875 = vmatprep.subr.mxu0 0.0
        %2876 = vmatpush1.msra.mxu0 0.0
        %2877 = vmatprep.subr.mxu0 0.0
        %2878 = vmatpush1.msra.mxu0 0.0
        %2879 = vmatprep.subr.mxu0 0.0
        %2880 = vmatpush1.msra.mxu0 0.0
        %2881 = vmatprep.subr.mxu0 0.0
        %2882 = vmatpush1.msra.mxu0 0.0
        %2883 = vmatprep.subr.mxu0 0.0
        %2884 = vmatpush1.msra.mxu0 0.0
        %2885 = vmatprep.subr.mxu0 0.0
        %2886 = vmatpush1.msra.mxu0 0.0
        %2887 = vmatprep.subr.mxu0 0.0
        %2888 = vmatpush1.msra.mxu0 0.0
        %2889 = vmatprep.subr.mxu0 0.0
        %2890 = vmatpush1.msra.mxu0 0.0
        %2891 = vmatprep.subr.mxu0 0.0
        %2892 = vmatpush1.msra.mxu0 0.0
        %2893 = vmatprep.mubr.f32.mxu0 0.0
        %2894 = vmatmul.mubr.f32.gmra.mrb[0].mxu0 %v2824
        %v2895 = vpop.f32.mrb[0].mxu0
        %v2896 = vadd.f32 %v2816, %v2895
        %v2897 = vpop.f32.mrb[0].mxu0
        %v2898 = vadd.f32 %v2820, %v2897
        %2899 = vmatprep.mubr.f32.mxu0 0.0
        %2900 = vmatmul.mubr.f32.gmra.mrb[0].mxu0 %v2827
        %v2901 = vpop.f32.mrb[0].mxu0
        %v2902 = vadd.f32 %v2816, %v2901
        %v2903 = vpop.f32.mrb[0].mxu0
        %v2904 = vadd.f32 %v2820, %v2903
        %2905 = vdwg.mxu0
        %v2906 = vmul.f32 %v2896, 0.5
        %v2907 = vmul.f32 %v2898, 0.5
        %v2908 = vmul.f32 %v2902, 0.5
        %v2909 = vmul.f32 %v2904, 0.5
        %v2910 = vmul.f32 %v2896, 0.70710677
        %v2911 = vmul.f32 %v2898, 0.70710677
        %v2912 = vmul.f32 %v2902, 0.70710677
        %v2913 = vmul.f32 %v2904, 0.70710677
        %v2914 = vand.u32 2147483647, %v2910
        %v2915 = vand.u32 2147483647, %v2911
        %v2916 = vand.u32 2147483647, %v2912
        %v2917 = vand.u32 2147483647, %v2913
        %v2918 = vmul.f32 %v2914, 0.3275911
        %v2919 = vmul.f32 %v2915, 0.3275911
        %v2920 = vmul.f32 %v2916, 0.3275911
        %v2921 = vmul.f32 %v2917, 0.3275911
        %v2922 = vadd.f32 %v2918, 1.0
        %v2923 = vadd.f32 %v2919, 1.0
        %v2924 = vadd.f32 %v2920, 1.0
        %v2925 = vadd.f32 %v2921, 1.0
        %v2926 = vrcp.pop %v2922
        %v2927 = vrcp.pop %v2923
        %v2928 = vrcp.pop %v2924
        %v2929 = vrcp.pop %v2925
        %v2930 = vmul.f32 %v2926, 1.0614054
        %v2931 = vmul.f32 %v2927, 1.0614054
        %v2932 = vmul.f32 %v2928, 1.0614054
        %v2933 = vmul.f32 %v2929, 1.0614054
        %v2934 = vadd.f32 %v2930, -1.4531521
        %v2935 = vadd.f32 %v2931, -1.4531521
        %v2936 = vadd.f32 %v2932, -1.4531521
        %v2937 = vadd.f32 %v2933, -1.4531521
        %v2938 = vmul.f32 %v2934, %v2926
        %v2939 = vmul.f32 %v2935, %v2927
        %v2940 = vmul.f32 %v2936, %v2928
        %v2941 = vmul.f32 %v2937, %v2929
        %v2942 = vadd.f32 %v2938, 1.4214138
        %v2943 = vadd.f32 %v2939, 1.4214138
        %v2944 = vadd.f32 %v2940, 1.4214138
        %v2945 = vadd.f32 %v2941, 1.4214138
        %v2946 = vmul.f32 %v2942, %v2926
        %v2947 = vmul.f32 %v2943, %v2927
        %v2948 = vmul.f32 %v2944, %v2928
        %v2949 = vmul.f32 %v2945, %v2929
        %v2950 = vadd.f32 %v2946, -0.28449672
        %v2951 = vadd.f32 %v2947, -0.28449672
        %v2952 = vadd.f32 %v2948, -0.28449672
        %v2953 = vadd.f32 %v2949, -0.28449672
        %v2954 = vmul.f32 %v2950, %v2926
        %v2955 = vmul.f32 %v2951, %v2927
        %v2956 = vmul.f32 %v2952, %v2928
        %v2957 = vmul.f32 %v2953, %v2929
        %v2958 = vadd.f32 %v2954, 0.2548296
        %v2959 = vadd.f32 %v2955, 0.2548296
        %v2960 = vadd.f32 %v2956, 0.2548296
        %v2961 = vadd.f32 %v2957, 0.2548296
        %v2962 = vmul.f32 %v2958, %v2926
        %v2963 = vmul.f32 %v2959, %v2927
        %v2964 = vmul.f32 %v2960, %v2928
        %v2965 = vmul.f32 %v2961, %v2929
        %v2966 = vsub.f32 0.0, %v2914
        %v2967 = vsub.f32 0.0, %v2915
        %v2968 = vsub.f32 0.0, %v2916
        %v2969 = vsub.f32 0.0, %v2917
        %v2970 = vmul.f32 %v2966, %v2914
        %v2971 = vmul.f32 %v2967, %v2915
        %v2972 = vmul.f32 %v2968, %v2916
        %v2973 = vmul.f32 %v2969, %v2917
        %v2974 = vmul.f32 %v2970, 1.442695
        %v2975 = vpow.pop %v2974
        %v2976 = vmul.f32 %v2971, 1.442695
        %v2977 = vpow.pop %v2976
        %v2978 = vmul.f32 %v2972, 1.442695
        %v2979 = vpow.pop %v2978
        %v2980 = vmul.f32 %v2973, 1.442695
        %v2981 = vpow.pop %v2980
        %v2982 = vmul.f32 %v2962, %v2975
        %v2983 = vmul.f32 %v2963, %v2977
        %v2984 = vmul.f32 %v2964, %v2979
        %v2985 = vmul.f32 %v2965, %v2981
        %v2986 = vsub.f32 1.0, %v2982
        %v2987 = vsub.f32 1.0, %v2983
        %v2988 = vsub.f32 1.0, %v2984
        %v2989 = vsub.f32 1.0, %v2985
        %vm2990 = vcmp.lt.f32.partialorder %v2910, 0.0
        %vm2991 = vcmp.lt.f32.partialorder %v2911, 0.0
        %vm2992 = vcmp.lt.f32.partialorder %v2912, 0.0
        %vm2993 = vcmp.lt.f32.partialorder %v2913, 0.0
        %v2994 = vsub.f32 0.0, %v2986
        %v2995 = vsub.f32 0.0, %v2987
        %v2996 = vsub.f32 0.0, %v2988
        %v2997 = vsub.f32 0.0, %v2989
        %v2998 = vsel %vm2990, %v2994, %v2986
        %v2999 = vsel %vm2991, %v2995, %v2987
        %v3000 = vsel %vm2992, %v2996, %v2988
        %v3001 = vsel %vm2993, %v2997, %v2989
        %v3002 = vadd.f32 %v2998, 1.0
        %v3003 = vadd.f32 %v2999, 1.0
        %v3004 = vadd.f32 %v3000, 1.0
        %v3005 = vadd.f32 %v3001, 1.0
        %v3006 = vmul.f32 %v2906, %v3002
        %v3007 = vmul.f32 %v2907, %v3003
        %v3008 = vmul.f32 %v2908, %v3004
        %v3009 = vmul.f32 %v2909, %v3005
        %v3010 = vld [vmem:[%s15] sm:$0xff]
        %v3011 = vld [vmem:[%s15 + $0x8] sm:$0xff]
        %v3012 = vld [vmem:[%s15 + $0x10] sm:$0xff]
        %v3013 = vld [vmem:[%s15 + $0x18] sm:$0xff]
        %v3014 = vld [vmem:[%s15 + $0x20] sm:$0xff]
        %v3015 = vld [vmem:[%s15 + $0x28] sm:$0xff]
        %v3016 = vld [vmem:[%s15 + $0x30] sm:$0xff]
        %v3017 = vld [vmem:[%s15 + $0x38] sm:$0xff]
        %v3018 = vld [vmem:[%s15 + $0x40] sm:$0xff]
        %v3019 = vld [vmem:[%s15 + $0x48] sm:$0xff]
        %v3020 = vld [vmem:[%s15 + $0x50] sm:$0xff]
        %v3021 = vld [vmem:[%s15 + $0x58] sm:$0xff]
        %v3022 = vld [vmem:[%s15 + $0x60] sm:$0xff]
        %v3023 = vld [vmem:[%s15 + $0x68] sm:$0xff]
        %v3024 = vld [vmem:[%s15 + $0x70] sm:$0xff]
        %v3025 = vld [vmem:[%s15 + $0x78] sm:$0xff]
        %v3026 = vld [vmem:[%s15 + $0x80] sm:$0xff]
        %v3027 = vld [vmem:[%s15 + $0x88] sm:$0xff]
        %v3028 = vld [vmem:[%s15 + $0x90] sm:$0xff]
        %v3029 = vld [vmem:[%s15 + $0x98] sm:$0xff]
        %v3030 = vld [vmem:[%s15 + $0xa0] sm:$0xff]
        %v3031 = vld [vmem:[%s15 + $0xa8] sm:$0xff]
        %v3032 = vld [vmem:[%s15 + $0xb0] sm:$0xff]
        %v3033 = vld [vmem:[%s15 + $0xb8] sm:$0xff]
        %v3034 = vld [vmem:[%s15 + $0xc0] sm:$0xff]
        %v3035 = vld [vmem:[%s15 + $0xc8] sm:$0xff]
        %v3036 = vld [vmem:[%s15 + $0xd0] sm:$0xff]
        %v3037 = vld [vmem:[%s15 + $0xd8] sm:$0xff]
        %v3038 = vld [vmem:[%s15 + $0xe0] sm:$0xff]
        %v3039 = vld [vmem:[%s15 + $0xe8] sm:$0xff]
        %v3040 = vld [vmem:[%s15 + $0xf0] sm:$0xff]
        %v3041 = vld [vmem:[%s15 + $0xf8] sm:$0xff]
        %v3042 = vld [vmem:[%s16] sm:$0x1]
        %v3044 = vlaneseq
        %v3045 = vshrl.u32 %v3044, 7
        %v3046 = vsub.s32 0, %v3045
        %v3047 = vrot.slane %v3042, %v3046
        %3049 = vmatprep.subr.mxu0 0.0
        %3050 = vmatpush1.msra.mxu0 %v3010
        %3051 = vmatprep.subr.mxu0 0.0
        %3052 = vmatpush1.msra.mxu0 %v3011
        %3053 = vmatprep.subr.mxu0 0.0
        %3054 = vmatpush1.msra.mxu0 %v3012
        %3055 = vmatprep.subr.mxu0 0.0
        %3056 = vmatpush1.msra.mxu0 %v3013
        %3057 = vmatprep.subr.mxu0 0.0
        %3058 = vmatpush1.msra.mxu0 %v3014
        %3059 = vmatprep.subr.mxu0 0.0
        %3060 = vmatpush1.msra.mxu0 %v3015
        %3061 = vmatprep.subr.mxu0 0.0
        %3062 = vmatpush1.msra.mxu0 %v3016
        %3063 = vmatprep.subr.mxu0 0.0
        %3064 = vmatpush1.msra.mxu0 %v3017
        %3065 = vmatprep.subr.mxu0 0.0
        %3066 = vmatpush1.msra.mxu0 %v3018
        %3067 = vmatprep.subr.mxu0 0.0
        %3068 = vmatpush1.msra.mxu0 %v3019
        %3069 = vmatprep.subr.mxu0 0.0
        %3070 = vmatpush1.msra.mxu0 %v3020
        %3071 = vmatprep.subr.mxu0 0.0
        %3072 = vmatpush1.msra.mxu0 %v3021
        %3073 = vmatprep.subr.mxu0 0.0
        %3074 = vmatpush1.msra.mxu0 %v3022
        %3075 = vmatprep.subr.mxu0 0.0
        %3076 = vmatpush1.msra.mxu0 %v3023
        %3077 = vmatprep.subr.mxu0 0.0
        %3078 = vmatpush1.msra.mxu0 %v3024
        %3079 = vmatprep.subr.mxu0 0.0
        %3080 = vmatpush1.msra.mxu0 %v3025
        %3081 = vmatprep.subr.mxu0 0.0
        %3082 = vmatpush1.msra.mxu0 %v3026
        %3083 = vmatprep.subr.mxu0 0.0
        %3084 = vmatpush1.msra.mxu0 %v3027
        %3085 = vmatprep.subr.mxu0 0.0
        %3086 = vmatpush1.msra.mxu0 %v3028
        %3087 = vmatprep.subr.mxu0 0.0
        %3088 = vmatpush1.msra.mxu0 %v3029
        %3089 = vmatprep.subr.mxu0 0.0
        %3090 = vmatpush1.msra.mxu0 %v3030
        %3091 = vmatprep.subr.mxu0 0.0
        %3092 = vmatpush1.msra.mxu0 %v3031
        %3093 = vmatprep.subr.mxu0 0.0
        %3094 = vmatpush1.msra.mxu0 %v3032
        %3095 = vmatprep.subr.mxu0 0.0
        %3096 = vmatpush1.msra.mxu0 %v3033
        %3097 = vmatprep.subr.mxu0 0.0
        %3098 = vmatpush1.msra.mxu0 %v3034
        %3099 = vmatprep.subr.mxu0 0.0
        %3100 = vmatpush1.msra.mxu0 %v3035
        %3101 = vmatprep.subr.mxu0 0.0
        %3102 = vmatpush1.msra.mxu0 %v3036
        %3103 = vmatprep.subr.mxu0 0.0
        %3104 = vmatpush1.msra.mxu0 %v3037
        %3105 = vmatprep.subr.mxu0 0.0
        %3106 = vmatpush1.msra.mxu0 %v3038
        %3107 = vmatprep.subr.mxu0 0.0
        %3108 = vmatpush1.msra.mxu0 %v3039
        %3109 = vmatprep.subr.mxu0 0.0
        %3110 = vmatpush1.msra.mxu0 %v3040
        %3111 = vmatprep.subr.mxu0 0.0
        %3112 = vmatpush1.msra.mxu0 %v3041
        %3113 = vmatprep.mubr.f32.mxu0 %v3007
        %3114 = vmatmul.mubr.f32.gmra.mrb[0].mxu0 %v3006
        %v3115 = vpop.f32.mrb[0].mxu0
        %v3116 = vadd.f32 %v3047, %v3115
        %v3117 = vpop.f32.mrb[0].mxu0
        %3118 = vmatprep.mubr.f32.mxu0 %v3009
        %3119 = vmatmul.mubr.f32.gmra.mrb[0].mxu0 %v3008
        %v3120 = vpop.f32.mrb[0].mxu0
        %v3121 = vadd.f32 %v3047, %v3120
        %v3122 = vpop.f32.mrb[0].mxu0
        %3123 = vdwg.mxu0
        %v3124 = vld [vmem:[%s17] sm:$0x1]
        %v3126 = vlaneseq
        %v3127 = vshrl.u32 %v3126, 7
        %v3128 = vsub.s32 0, %v3127
        %v3129 = vrot.slane %v3124, %v3128
        %v3131 = vmul.f32 %v3129, %v3116
        %v3132 = vmul.f32 %v3129, %v3121
        %v3133 = vadd.f32 %v2757, %v3131
        %v3134 = vadd.f32 %v2758, %v3132
        %3135 = vst.msk [vmem:[%s568] sm:$0xff] %vm829, %v3133
        %3136 = vst.msk [vmem:[%s568 + $0x8] sm:$0xff] %vm829, %v3134
        %s3137 = sand.u32 %s423, 1
        %s3138 = scalar_lea.sflag [#allocation3], %s3137
        %s3139 = sand.u32 %s423, 1
        %s3140 = smul.addr %s3139, 16
        %s3141 = scalar_lea.vmem [#allocation2], %s3140
        // Predicated region
        $region93: #{tpu_custom_call.1} parent=91 // pred_check
          %p3142 = pneg %p433
        $region94: #{tpu_custom_call.1} parent=91 // pred_check_branch
          %3144 = sbr.rel (%p3142) target = $region96
        $region95: #{tpu_custom_call.1} parent=91 // pred_region
          %s3146 = ssub.s32 256, 256
          %3147 = vsyncadd %s3138, %s3146
          %s3148 = smul.addr %s32, 2
          %s3149 = smul.addr %s3148, 128
          %s3150 = scalar_lea.hbm %s18, %s3149
          %s3151 = sshll.u32 %s3141, 4
          %s3152 = int_to_ptr.vmem [resolvable:$true] %s3151
          %3157 = dma.vmem_to_hbm [thread:$0]  %s3152, 256, %s3150, %s3138, 128, 128, 8
        $region96: #{tpu_custom_call.1} parent=91 // pred_fallthru
          _
      $region92: #{tpu_custom_call.1} parent=5 // pred_fallthru
        _
      %p3158 = scmp.le.s32.totalorder 2, %s27
      // Predicated region
      $region97: #{tpu_custom_call.1} parent=5 // pred_check
        %p3159 = pneg %p3158
      $region98: #{tpu_custom_call.1} parent=5 // pred_check_branch
        %3161 = sbr.rel (%p3159) target = $region100
      $region99: #{tpu_custom_call.1} parent=5 // pred_region
        %s3162 = ssub.s32 %s27, 2
        // Predicated region
        $region101: #{tpu_custom_call.1} parent=99 // pred_check
          %p3163 = pneg %p439
        $region102: #{tpu_custom_call.1} parent=99 // pred_check_branch
          %3165 = sbr.rel (%p3163) target = $region104
        $region103: #{tpu_custom_call.1} parent=99 // pred_region
          %s3166 = sand.u32 %s424, 1
          %s3167 = scalar_lea.sflag [#allocation3], %s3166
          %s3168 = sand.u32 %s424, 1
          %s3169 = smul.addr %s3168, 16
          %s3170 = scalar_lea.vmem [#allocation2], %s3169
          %3171 = dma.done %s3167, 256
        $region104: #{tpu_custom_call.1} parent=99 // pred_fallthru
          _
      $region100: #{tpu_custom_call.1} parent=5 // pred_fallthru
        _
    $region6: #{tpu_custom_call.1} parent=1 // loop_footer
      %s31 = sadd.s32 1, %s27
    $region7: #{tpu_custom_call.1} parent=1 // loop_footer_branch
      %26 = sbr.rel target = $region3
    $region8: #{tpu_custom_call.1} parent=1 // loop_exit
      _
    %3172 = vsyncpa [#allocation3], 1
    %s3173 = scalar_lea.sflag [#allocation3], 1
    %3174 = vsyncpa %s3173, 1

// kernel: tpu_custom_call.1
$region0: #{tpu_custom_call.1}
  #allocation0 [shape = 'u32[]', space=smem, size = 0x4, offset = 0x4, fixed_abs, tag = 'smem constant byte address 0x4 - core index']
  #allocation1 [shape = 'u32[144,128]{1,0:T(1,128)}', space=vmem, size = 0x12000, scoped, tag = 'internal scratch']
  %s0 = inlined_call_operand.vmem [shape: f32[2,16,32], index: 0, kind: input, shape index: {}]
  %s1 = inlined_call_operand.vmem [shape: f32[9,16,1], index: 1, kind: input, shape index: {}]
  %s2 = inlined_call_operand.vmem [shape: f32[9,32], index: 2, kind: input, shape index: {}]
  %s3 = inlined_call_operand.vmem [shape: f32[1,32], index: 3, kind: input, shape index: {}]
  %s4 = inlined_call_operand.vmem [shape: f32[1,32], index: 4, kind: input, shape index: {}]
  %s5 = inlined_call_operand.vmem [shape: f32[1,32], index: 5, kind: input, shape index: {}]
  %s6 = inlined_call_operand.vmem [shape: f32[32,96], index: 6, kind: input, shape index: {}]
  %s7 = inlined_call_operand.vmem [shape: f32[1,96], index: 7, kind: input, shape index: {}]
  %s8 = inlined_call_operand.vmem [shape: f32[32,32], index: 8, kind: input, shape index: {}]
  %s9 = inlined_call_operand.vmem [shape: f32[1,32], index: 9, kind: input, shape index: {}]
  %s10 = inlined_call_operand.vmem [shape: f32[1,32], index: 10, kind: input, shape index: {}]
  %s11 = inlined_call_operand.vmem [shape: f32[1,32], index: 11, kind: input, shape index: {}]
  %s12 = inlined_call_operand.vmem [shape: f32[1,32], index: 12, kind: input, shape index: {}]
  %s13 = inlined_call_operand.vmem [shape: f32[32,256], index: 13, kind: input, shape index: {}]
  %s14 = inlined_call_operand.vmem [shape: f32[1,256], index: 14, kind: input, shape index: {}]
  %s15 = inlined_call_operand.vmem [shape: f32[256,32], index: 15, kind: input, shape index: {}]
  %s16 = inlined_call_operand.vmem [shape: f32[1,32], index: 16, kind: input, shape index: {}]
  %s17 = inlined_call_operand.vmem [shape: f32[1,32], index: 17, kind: input, shape index: {}]
  %s18 = inlined_call_operand.hbm [shape: f32[2,16,32], index: 18, kind: output, shape index: {}]
  %s19 = sld [smem:[#allocation0]]
  $region105: #{tpu_custom_call.1} parent=0
    _
  %s21 = ssub.s32 1, %s19
  %s22 = scalar_select 0, %s21, %s19
  $region1: #{tpu_custom_call.1} parent=0
    #allocation2 [shape = 'u8[16384]{0}', space=vmem, size = 0x4000, scoped, tag = 'output window, operand 0']
    #allocation3 [shape = 's32[2]{0}', space=sflag, size = 0x8, scoped, tag = 'scoped memory for tpu_custom_call.1']
    %23 = vsyncpa [#allocation3], 0
    %s24 = scalar_lea.sflag [#allocation3], 1
    %25 = vsyncpa %s24, 0
    loop: start=0, step=1, limit=4
    $region2: #{tpu_custom_call.1} parent=1 // loop_pre_header
      _
    $region3: #{tpu_custom_call.1} parent=1 // loop_header
      %s27 = sphi 0, %s31
      %p28 = scmp.ge.s32.totalorder %s27, 4
      %s37 = sphi 0, %s39
      %s40 = sphi 0, %s37
      %s41 = sphi 0, %s40
      %s57 = sphi 0, %s41
      %s61 = sphi 0, %s61
      %s63 = sphi 0, %s61
      %s64 = sphi 0, %s63
      %s78 = sphi 0, %s64
      %s82 = sphi 0, %s82
      %s84 = sphi 0, %s82
      %s85 = sphi 0, %s84
      %s99 = sphi 0, %s85
      %s103 = sphi 0, %s103
      %s105 = sphi 0, %s103
      %s106 = sphi 0, %s105
      %s120 = sphi 0, %s106
      %s124 = sphi 0, %s124
      %s126 = sphi 0, %s124
      %s127 = sphi 0, %s126
      %s141 = sphi 0, %s127
      %s145 = sphi 0, %s145
      %s147 = sphi 0, %s145
      %s148 = sphi 0, %s147
      %s162 = sphi 0, %s148
      %s166 = sphi 0, %s166
      %s168 = sphi 0, %s166
      %s169 = sphi 0, %s168
      %s183 = sphi 0, %s169
      %s187 = sphi 0, %s187
      %s189 = sphi 0, %s187
      %s190 = sphi 0, %s189
      %s204 = sphi 0, %s190
      %s208 = sphi 0, %s208
      %s210 = sphi 0, %s208
      %s211 = sphi 0, %s210
      %s225 = sphi 0, %s211
      %s229 = sphi 0, %s229
      %s231 = sphi 0, %s229
      %s232 = sphi 0, %s231
      %s246 = sphi 0, %s232
      %s250 = sphi 0, %s250
      %s252 = sphi 0, %s250
      %s253 = sphi 0, %s252
      %s267 = sphi 0, %s253
      %s271 = sphi 0, %s271
      %s273 = sphi 0, %s271
      %s274 = sphi 0, %s273
      %s288 = sphi 0, %s274
      %s292 = sphi 0, %s292
      %s294 = sphi 0, %s292
      %s295 = sphi 0, %s294
      %s309 = sphi 0, %s295
      %s313 = sphi 0, %s313
      %s315 = sphi 0, %s313
      %s316 = sphi 0, %s315
      %s330 = sphi 0, %s316
      %s334 = sphi 0, %s334
      %s336 = sphi 0, %s334
      %s337 = sphi 0, %s336
      %s351 = sphi 0, %s337
      %s355 = sphi 0, %s355
      %s357 = sphi 0, %s355
      %s358 = sphi 0, %s357
      %s372 = sphi 0, %s358
      %s376 = sphi 0, %s376
      %s378 = sphi 0, %s376
      %s379 = sphi 0, %s378
      %s393 = sphi 0, %s379
      %s397 = sphi 0, %s397
      %s399 = sphi 0, %s397
      %s400 = sphi 0, %s399
      %s414 = sphi 0, %s400
      %s420 = sphi 0, %s422
      %s423 = sphi 0, %s420
      %s424 = sphi 0, %s423
      %s440 = sphi 0, %s424
    $region4: #{tpu_custom_call.1} parent=1 // loop_header_branch
      %30 = sbr.rel (%p28) target = $region8
    $region5: #{tpu_custom_call.1} parent=1 // loop_body
      %s32 = ssub.s32 %s27, 1
      %s33 = ssub.s32 %s27, 2
      %s34 = sadd.s32 %s27, 1
      %s35 = ssub.s32 %s27, %s34
      %p36 = scmp.eq.s32.totalorder %s35, 0
      %s38 = sadd.s32 %s37, 1
      %s39 = scalar_select %p36, %s37, %s38
      %p42 = pneg %p36
      %p43 = scmp.eq.s32.totalorder %s27, 1
      %p44 = por %p42, %p43
      %p45 = scmp.ne.s32.totalorder %s37, %s40
      %p46 = scmp.eq.s32.totalorder %s27, 0
      %p47 = por %p45, %p46
      %p48 = scmp.ne.s32.totalorder %s37, %s40
      %p49 = scmp.eq.s32.totalorder %s32, 1
      %p50 = por %p48, %p49
      %p51 = scmp.ne.s32.totalorder %s40, %s41
      %p52 = scmp.eq.s32.totalorder %s32, 0
      %p53 = por %p51, %p52
      %p54 = scmp.ne.s32.totalorder %s40, %s41
      %p55 = scmp.eq.s32.totalorder %s33, 1
      %p56 = por %p54, %p55
      %p58 = scmp.ne.s32.totalorder %s41, %s57
      %p59 = scmp.eq.s32.totalorder %s33, 0
      %p60 = por %p58, %p59
      %s62 = sadd.s32 %s61, 1
      %p65 = scmp.eq.s32.totalorder %s27, 1
      %p66 = scmp.ne.s32.totalorder %s61, %s63
      %p67 = scmp.eq.s32.totalorder %s27, 0
      %p68 = por %p66, %p67
      %p69 = scmp.ne.s32.totalorder %s61, %s63
      %p70 = scmp.eq.s32.totalorder %s32, 1
      %p71 = por %p69, %p70
      %p72 = scmp.ne.s32.totalorder %s63, %s64
      %p73 = scmp.eq.s32.totalorder %s32, 0
      %p74 = por %p72, %p73
      %p75 = scmp.ne.s32.totalorder %s63, %s64
      %p76 = scmp.eq.s32.totalorder %s33, 1
      %p77 = por %p75, %p76
      %p79 = scmp.ne.s32.totalorder %s64, %s78
      %p80 = scmp.eq.s32.totalorder %s33, 0
      %p81 = por %p79, %p80
      %s83 = sadd.s32 %s82, 1
      %p86 = scmp.eq.s32.totalorder %s27, 1
      %p87 = scmp.ne.s32.totalorder %s82, %s84
      %p88 = scmp.eq.s32.totalorder %s27, 0
      %p89 = por %p87, %p88
      %p90 = scmp.ne.s32.totalorder %s82, %s84
      %p91 = scmp.eq.s32.totalorder %s32, 1
      %p92 = por %p90, %p91
      %p93 = scmp.ne.s32.totalorder %s84, %s85
      %p94 = scmp.eq.s32.totalorder %s32, 0
      %p95 = por %p93, %p94
      %p96 = scmp.ne.s32.totalorder %s84, %s85
      %p97 = scmp.eq.s32.totalorder %s33, 1
      %p98 = por %p96, %p97
      %p100 = scmp.ne.s32.totalorder %s85, %s99
      %p101 = scmp.eq.s32.totalorder %s33, 0
      %p102 = por %p100, %p101
      %s104 = sadd.s32 %s103, 1
      %p107 = scmp.eq.s32.totalorder %s27, 1
      %p108 = scmp.ne.s32.totalorder %s103, %s105
      %p109 = scmp.eq.s32.totalorder %s27, 0
      %p110 = por %p108, %p109
      %p111 = scmp.ne.s32.totalorder %s103, %s105
      %p112 = scmp.eq.s32.totalorder %s32, 1
      %p113 = por %p111, %p112
      %p114 = scmp.ne.s32.totalorder %s105, %s106
      %p115 = scmp.eq.s32.totalorder %s32, 0
      %p116 = por %p114, %p115
      %p117 = scmp.ne.s32.totalorder %s105, %s106
      %p118 = scmp.eq.s32.totalorder %s33, 1
      %p119 = por %p117, %p118
      %p121 = scmp.ne.s32.totalorder %s106, %s120
      %p122 = scmp.eq.s32.totalorder %s33, 0
      %p123 = por %p121, %p122
      %s125 = sadd.s32 %s124, 1
      %p128 = scmp.eq.s32.totalorder %s27, 1
      %p129 = scmp.ne.s32.totalorder %s124, %s126
      %p130 = scmp.eq.s32.totalorder %s27, 0
      %p131 = por %p129, %p130
      %p132 = scmp.ne.s32.totalorder %s124, %s126
      %p133 = scmp.eq.s32.totalorder %s32, 1
      %p134 = por %p132, %p133
      %p135 = scmp.ne.s32.totalorder %s126, %s127
      %p136 = scmp.eq.s32.totalorder %s32, 0
      %p137 = por %p135, %p136
      %p138 = scmp.ne.s32.totalorder %s126, %s127
      %p139 = scmp.eq.s32.totalorder %s33, 1
      %p140 = por %p138, %p139
      %p142 = scmp.ne.s32.totalorder %s127, %s141
      %p143 = scmp.eq.s32.totalorder %s33, 0
      %p144 = por %p142, %p143
      %s146 = sadd.s32 %s145, 1
      %p149 = scmp.eq.s32.totalorder %s27, 1
      %p150 = scmp.ne.s32.totalorder %s145, %s147
      %p151 = scmp.eq.s32.totalorder %s27, 0
      %p152 = por %p150, %p151
      %p153 = scmp.ne.s32.totalorder %s145, %s147
      %p154 = scmp.eq.s32.totalorder %s32, 1
      %p155 = por %p153, %p154
      %p156 = scmp.ne.s32.totalorder %s147, %s148
      %p157 = scmp.eq.s32.totalorder %s32, 0
      %p158 = por %p156, %p157
      %p159 = scmp.ne.s32.totalorder %s147, %s148
      %p160 = scmp.eq.s32.totalorder %s33, 1
      %p161 = por %p159, %p160
      %p163 = scmp.ne.s32.totalorder %s148, %s162
      %p164 = scmp.eq.s32.totalorder %s33, 0
      %p165 = por %p163, %p164
      %s167 = sadd.s32 %s166, 1
      %p170 = scmp.eq.s32.totalorder %s27, 1
      %p171 = scmp.ne.s32.totalorder %s166, %s168
      %p172 = scmp.eq.s32.totalorder %s27, 0
      %p173 = por %p171, %p172
      %p174 = scmp.ne.s32.totalorder %s166, %s168
      %p175 = scmp.eq.s32.totalorder %s32, 1
      %p176 = por %p174, %p175
      %p177 = scmp.ne.s32.totalorder %s168, %s169
      %p178 = scmp.eq.s32.totalorder %s32, 0
      %p179 = por %p177, %p178
      %p180 = scmp.ne.s32.totalorder %s168, %s169
      %p181 = scmp.eq.s32.totalorder %s33, 1
      %p182 = por %p180, %p181
      %p184 = scmp.ne.s32.totalorder %s169, %s183
      %p185 = scmp.eq.s32.totalorder %s33, 0
      %p186 = por %p184, %p185
      %s188 = sadd.s32 %s187, 1
      %p191 = scmp.eq.s32.totalorder %s27, 1
      %p192 = scmp.ne.s32.totalorder %s187, %s189
      %p193 = scmp.eq.s32.totalorder %s27, 0
      %p194 = por %p192, %p193
      %p195 = scmp.ne.s32.totalorder %s187, %s189
      %p196 = scmp.eq.s32.totalorder %s32, 1
      %p197 = por %p195, %p196
      %p198 = scmp.ne.s32.totalorder %s189, %s190
      %p199 = scmp.eq.s32.totalorder %s32, 0
      %p200 = por %p198, %p199
      %p201 = scmp.ne.s32.totalorder %s189, %s190
      %p202 = scmp.eq.s32.totalorder %s33, 1
      %p203 = por %p201, %p202
      %p205 = scmp.ne.s32.totalorder %s190, %s204
      %p206 = scmp.eq.s32.totalorder %s33, 0
      %p207 = por %p205, %p206
      %s209 = sadd.s32 %s208, 1
      %p212 = scmp.eq.s32.totalorder %s27, 1
      %p213 = scmp.ne.s32.totalorder %s208, %s210
      %p214 = scmp.eq.s32.totalorder %s27, 0
      %p215 = por %p213, %p214
      %p216 = scmp.ne.s32.totalorder %s208, %s210
      %p217 = scmp.eq.s32.totalorder %s32, 1
      %p218 = por %p216, %p217
      %p219 = scmp.ne.s32.totalorder %s210, %s211
      %p220 = scmp.eq.s32.totalorder %s32, 0
      %p221 = por %p219, %p220
      %p222 = scmp.ne.s32.totalorder %s210, %s211
      %p223 = scmp.eq.s32.totalorder %s33, 1
      %p224 = por %p222, %p223
      %p226 = scmp.ne.s32.totalorder %s211, %s225
      %p227 = scmp.eq.s32.totalorder %s33, 0
      %p228 = por %p226, %p227
      %s230 = sadd.s32 %s229, 1
      %p233 = scmp.eq.s32.totalorder %s27, 1
      %p234 = scmp.ne.s32.totalorder %s229, %s231
      %p235 = scmp.eq.s32.totalorder %s27, 0
      %p236 = por %p234, %p235
      %p237 = scmp.ne.s32.totalorder %s229, %s231
      %p238 = scmp.eq.s32.totalorder %s32, 1
      %p239 = por %p237, %p238
      %p240 = scmp.ne.s32.totalorder %s231, %s232
      %p241 = scmp.eq.s32.totalorder %s32, 0
      %p242 = por %p240, %p241
      %p243 = scmp.ne.s32.totalorder %s231, %s232
      %p244 = scmp.eq.s32.totalorder %s33, 1
      %p245 = por %p243, %p244
      %p247 = scmp.ne.s32.totalorder %s232, %s246
      %p248 = scmp.eq.s32.totalorder %s33, 0
      %p249 = por %p247, %p248
      %s251 = sadd.s32 %s250, 1
      %p254 = scmp.eq.s32.totalorder %s27, 1
      %p255 = scmp.ne.s32.totalorder %s250, %s252
      %p256 = scmp.eq.s32.totalorder %s27, 0
      %p257 = por %p255, %p256
      %p258 = scmp.ne.s32.totalorder %s250, %s252
      %p259 = scmp.eq.s32.totalorder %s32, 1
      %p260 = por %p258, %p259
      %p261 = scmp.ne.s32.totalorder %s252, %s253
      %p262 = scmp.eq.s32.totalorder %s32, 0
      %p263 = por %p261, %p262
      %p264 = scmp.ne.s32.totalorder %s252, %s253
      %p265 = scmp.eq.s32.totalorder %s33, 1
      %p266 = por %p264, %p265
      %p268 = scmp.ne.s32.totalorder %s253, %s267
      %p269 = scmp.eq.s32.totalorder %s33, 0
      %p270 = por %p268, %p269
      %s272 = sadd.s32 %s271, 1
      %p275 = scmp.eq.s32.totalorder %s27, 1
      %p276 = scmp.ne.s32.totalorder %s271, %s273
      %p277 = scmp.eq.s32.totalorder %s27, 0
      %p278 = por %p276, %p277
      %p279 = scmp.ne.s32.totalorder %s271, %s273
      %p280 = scmp.eq.s32.totalorder %s32, 1
      %p281 = por %p279, %p280
      %p282 = scmp.ne.s32.totalorder %s273, %s274
      %p283 = scmp.eq.s32.totalorder %s32, 0
      %p284 = por %p282, %p283
      %p285 = scmp.ne.s32.totalorder %s273, %s274
      %p286 = scmp.eq.s32.totalorder %s33, 1
      %p287 = por %p285, %p286
      %p289 = scmp.ne.s32.totalorder %s274, %s288
      %p290 = scmp.eq.s32.totalorder %s33, 0
      %p291 = por %p289, %p290
      %s293 = sadd.s32 %s292, 1
      %p296 = scmp.eq.s32.totalorder %s27, 1
      %p297 = scmp.ne.s32.totalorder %s292, %s294
      %p298 = scmp.eq.s32.totalorder %s27, 0
      %p299 = por %p297, %p298
      %p300 = scmp.ne.s32.totalorder %s292, %s294
      %p301 = scmp.eq.s32.totalorder %s32, 1
      %p302 = por %p300, %p301
      %p303 = scmp.ne.s32.totalorder %s294, %s295
      %p304 = scmp.eq.s32.totalorder %s32, 0
      %p305 = por %p303, %p304
      %p306 = scmp.ne.s32.totalorder %s294, %s295
      %p307 = scmp.eq.s32.totalorder %s33, 1
      %p308 = por %p306, %p307
      %p310 = scmp.ne.s32.totalorder %s295, %s309
      %p311 = scmp.eq.s32.totalorder %s33, 0
      %p312 = por %p310, %p311
      %s314 = sadd.s32 %s313, 1
      %p317 = scmp.eq.s32.totalorder %s27, 1
      %p318 = scmp.ne.s32.totalorder %s313, %s315
      %p319 = scmp.eq.s32.totalorder %s27, 0
      %p320 = por %p318, %p319
      %p321 = scmp.ne.s32.totalorder %s313, %s315
      %p322 = scmp.eq.s32.totalorder %s32, 1
      %p323 = por %p321, %p322
      %p324 = scmp.ne.s32.totalorder %s315, %s316
      %p325 = scmp.eq.s32.totalorder %s32, 0
      %p326 = por %p324, %p325
      %p327 = scmp.ne.s32.totalorder %s315, %s316
      %p328 = scmp.eq.s32.totalorder %s33, 1
      %p329 = por %p327, %p328
      %p331 = scmp.ne.s32.totalorder %s316, %s330
      %p332 = scmp.eq.s32.totalorder %s33, 0
      %p333 = por %p331, %p332
      %s335 = sadd.s32 %s334, 1
      %p338 = scmp.eq.s32.totalorder %s27, 1
      %p339 = scmp.ne.s32.totalorder %s334, %s336
      %p340 = scmp.eq.s32.totalorder %s27, 0
      %p341 = por %p339, %p340
      %p342 = scmp.ne.s32.totalorder %s334, %s336
      %p343 = scmp.eq.s32.totalorder %s32, 1
      %p344 = por %p342, %p343
      %p345 = scmp.ne.s32.totalorder %s336, %s337
      %p346 = scmp.eq.s32.totalorder %s32, 0
      %p347 = por %p345, %p346
      %p348 = scmp.ne.s32.totalorder %s336, %s337
      %p349 = scmp.eq.s32.totalorder %s33, 1
      %p350 = por %p348, %p349
      %p352 = scmp.ne.s32.totalorder %s337, %s351
      %p353 = scmp.eq.s32.totalorder %s33, 0
      %p354 = por %p352, %p353
      %s356 = sadd.s32 %s355, 1
      %p359 = scmp.eq.s32.totalorder %s27, 1
      %p360 = scmp.ne.s32.totalorder %s355, %s357
      %p361 = scmp.eq.s32.totalorder %s27, 0
      %p362 = por %p360, %p361
      %p363 = scmp.ne.s32.totalorder %s355, %s357
      %p364 = scmp.eq.s32.totalorder %s32, 1
      %p365 = por %p363, %p364
      %p366 = scmp.ne.s32.totalorder %s357, %s358
      %p367 = scmp.eq.s32.totalorder %s32, 0
      %p368 = por %p366, %p367
      %p369 = scmp.ne.s32.totalorder %s357, %s358
      %p370 = scmp.eq.s32.totalorder %s33, 1
      %p371 = por %p369, %p370
      %p373 = scmp.ne.s32.totalorder %s358, %s372
      %p374 = scmp.eq.s32.totalorder %s33, 0
      %p375 = por %p373, %p374
      %s377 = sadd.s32 %s376, 1
      %p380 = scmp.eq.s32.totalorder %s27, 1
      %p381 = scmp.ne.s32.totalorder %s376, %s378
      %p382 = scmp.eq.s32.totalorder %s27, 0
      %p383 = por %p381, %p382
      %p384 = scmp.ne.s32.totalorder %s376, %s378
      %p385 = scmp.eq.s32.totalorder %s32, 1
      %p386 = por %p384, %p385
      %p387 = scmp.ne.s32.totalorder %s378, %s379
      %p388 = scmp.eq.s32.totalorder %s32, 0
      %p389 = por %p387, %p388
      %p390 = scmp.ne.s32.totalorder %s378, %s379
      %p391 = scmp.eq.s32.totalorder %s33, 1
      %p392 = por %p390, %p391
      %p394 = scmp.ne.s32.totalorder %s379, %s393
      %p395 = scmp.eq.s32.totalorder %s33, 0
      %p396 = por %p394, %p395
      %s398 = sadd.s32 %s397, 1
      %p401 = scmp.eq.s32.totalorder %s27, 1
      %p402 = scmp.ne.s32.totalorder %s397, %s399
      %p403 = scmp.eq.s32.totalorder %s27, 0
      %p404 = por %p402, %p403
      %p405 = scmp.ne.s32.totalorder %s397, %s399
      %p406 = scmp.eq.s32.totalorder %s32, 1
      %p407 = por %p405, %p406
      %p408 = scmp.ne.s32.totalorder %s399, %s400
      %p409 = scmp.eq.s32.totalorder %s32, 0
      %p410 = por %p408, %p409
      %p411 = scmp.ne.s32.totalorder %s399, %s400
      %p412 = scmp.eq.s32.totalorder %s33, 1
      %p413 = por %p411, %p412
      %p415 = scmp.ne.s32.totalorder %s400, %s414
      %p416 = scmp.eq.s32.totalorder %s33, 0
      %p417 = por %p415, %p416
      %s418 = ssub.s32 %s27, %s34
      %p419 = scmp.eq.s32.totalorder %s418, 0
      %s421 = sadd.s32 %s420, 1
      %s422 = scalar_select %p419, %s420, %s421
      %p425 = pneg %p419
      %p426 = scmp.eq.s32.totalorder %s27, 1
      %p427 = por %p425, %p426
      %p428 = scmp.ne.s32.totalorder %s420, %s423
      %p429 = scmp.eq.s32.totalorder %s27, 0
      %p430 = por %p428, %p429
      %p431 = scmp.ne.s32.totalorder %s420, %s423
      %p432 = scmp.eq.s32.totalorder %s32, 1
      %p433 = por %p431, %p432
      %p434 = scmp.ne.s32.totalorder %s423, %s424
      %p435 = scmp.eq.s32.totalorder %s32, 0
      %p436 = por %p434, %p435
      %p437 = scmp.ne.s32.totalorder %s423, %s424
      %p438 = scmp.eq.s32.totalorder %s33, 1
      %p439 = por %p437, %p438
      %p441 = scmp.ne.s32.totalorder %s424, %s440
      %p442 = scmp.eq.s32.totalorder %s33, 0
      %p443 = por %p441, %p442
      %p444 = scmp.le.s32.totalorder 1, %s27
      %p445 = scmp.lt.s32.totalorder %s27, 3
      %p446 = pnand %p444, %p445
      %p447 = pneg %p446
      // Predicated region
      $region9: #{tpu_custom_call.1} parent=5 // pred_check
        _
      $region10: #{tpu_custom_call.1} parent=5 // pred_check_branch
        %449 = sbr.rel (%p446) target = $region12
      $region11: #{tpu_custom_call.1} parent=5 // pred_region
        %s450 = ssub.s32 %s27, 1
        // Predicated region
        $region13: #{tpu_custom_call.1} parent=11 // pred_check
          %p451 = pneg %p74
        $region14: #{tpu_custom_call.1} parent=11 // pred_check_branch
          %453 = sbr.rel (%p451) target = $region16
        $region15: #{tpu_custom_call.1} parent=11 // pred_region
          _
        $region16: #{tpu_custom_call.1} parent=11 // pred_fallthru
          _
        // Predicated region
        $region17: #{tpu_custom_call.1} parent=11 // pred_check
          %p454 = pneg %p95
        $region18: #{tpu_custom_call.1} parent=11 // pred_check_branch
          %456 = sbr.rel (%p454) target = $region20
        $region19: #{tpu_custom_call.1} parent=11 // pred_region
          _
        $region20: #{tpu_custom_call.1} parent=11 // pred_fallthru
          _
        // Predicated region
        $region21: #{tpu_custom_call.1} parent=11 // pred_check
          %p457 = pneg %p116
        $region22: #{tpu_custom_call.1} parent=11 // pred_check_branch
          %459 = sbr.rel (%p457) target = $region24
        $region23: #{tpu_custom_call.1} parent=11 // pred_region
          _
        $region24: #{tpu_custom_call.1} parent=11 // pred_fallthru
          _
        // Predicated region
        $region25: #{tpu_custom_call.1} parent=11 // pred_check
          %p460 = pneg %p137
        $region26: #{tpu_custom_call.1} parent=11 // pred_check_branch
          %462 = sbr.rel (%p460) target = $region28
        $region27: #{tpu_custom_call.1} parent=11 // pred_region
          _
        $region28: #{tpu_custom_call.1} parent=11 // pred_fallthru
          _
        // Predicated region
        $region29: #{tpu_custom_call.1} parent=11 // pred_check
          %p463 = pneg %p158
        $region30: #{tpu_custom_call.1} parent=11 // pred_check_branch
          %465 = sbr.rel (%p463) target = $region32
        $region31: #{tpu_custom_call.1} parent=11 // pred_region
          _
        $region32: #{tpu_custom_call.1} parent=11 // pred_fallthru
          _
        // Predicated region
        $region33: #{tpu_custom_call.1} parent=11 // pred_check
          %p466 = pneg %p179
        $region34: #{tpu_custom_call.1} parent=11 // pred_check_branch
          %468 = sbr.rel (%p466) target = $region36
        $region35: #{tpu_custom_call.1} parent=11 // pred_region
          _
        $region36: #{tpu_custom_call.1} parent=11 // pred_fallthru
          _
        // Predicated region
        $region37: #{tpu_custom_call.1} parent=11 // pred_check
          %p469 = pneg %p200
        $region38: #{tpu_custom_call.1} parent=11 // pred_check_branch
          %471 = sbr.rel (%p469) target = $region40
        $region39: #{tpu_custom_call.1} parent=11 // pred_region
          _
        $region40: #{tpu_custom_call.1} parent=11 // pred_fallthru
          _
        // Predicated region
        $region41: #{tpu_custom_call.1} parent=11 // pred_check
          %p472 = pneg %p221
        $region42: #{tpu_custom_call.1} parent=11 // pred_check_branch
          %474 = sbr.rel (%p472) target = $region44
        $region43: #{tpu_custom_call.1} parent=11 // pred_region
          _
        $region44: #{tpu_custom_call.1} parent=11 // pred_fallthru
          _
        // Predicated region
        $region45: #{tpu_custom_call.1} parent=11 // pred_check
          %p475 = pneg %p242
        $region46: #{tpu_custom_call.1} parent=11 // pred_check_branch
          %477 = sbr.rel (%p475) target = $region48
        $region47: #{tpu_custom_call.1} parent=11 // pred_region
          _
        $region48: #{tpu_custom_call.1} parent=11 // pred_fallthru
          _
        // Predicated region
        $region49: #{tpu_custom_call.1} parent=11 // pred_check
          %p478 = pneg %p263
        $region50: #{tpu_custom_call.1} parent=11 // pred_check_branch
          %480 = sbr.rel (%p478) target = $region52
        $region51: #{tpu_custom_call.1} parent=11 // pred_region
          _
        $region52: #{tpu_custom_call.1} parent=11 // pred_fallthru
          _
        // Predicated region
        $region53: #{tpu_custom_call.1} parent=11 // pred_check
          %p481 = pneg %p284
        $region54: #{tpu_custom_call.1} parent=11 // pred_check_branch
          %483 = sbr.rel (%p481) target = $region56
        $region55: #{tpu_custom_call.1} parent=11 // pred_region
          _
        $region56: #{tpu_custom_call.1} parent=11 // pred_fallthru
          _
        // Predicated region
        $region57: #{tpu_custom_call.1} parent=11 // pred_check
          %p484 = pneg %p305
        $region58: #{tpu_custom_call.1} parent=11 // pred_check_branch
          %486 = sbr.rel (%p484) target = $region60
        $region59: #{tpu_custom_call.1} parent=11 // pred_region
          _
        $region60: #{tpu_custom_call.1} parent=11 // pred_fallthru
          _
        // Predicated region
        $region61: #{tpu_custom_call.1} parent=11 // pred_check
          %p487 = pneg %p326
        $region62: #{tpu_custom_call.1} parent=11 // pred_check_branch
          %489 = sbr.rel (%p487) target = $region64
        $region63: #{tpu_custom_call.1} parent=11 // pred_region
          _
        $region64: #{tpu_custom_call.1} parent=11 // pred_fallthru
          _
        // Predicated region
        $region65: #{tpu_custom_call.1} parent=11 // pred_check
          %p490 = pneg %p347
        $region66: #{tpu_custom_call.1} parent=11 // pred_check_branch
          %492 = sbr.rel (%p490) target = $region68
        $region67: #{tpu_custom_call.1} parent=11 // pred_region
          _
        $region68: #{tpu_custom_call.1} parent=11 // pred_fallthru
          _
        // Predicated region
        $region69: #{tpu_custom_call.1} parent=11 // pred_check
          %p493 = pneg %p368
        $region70: #{tpu_custom_call.1} parent=11 // pred_check_branch
          %495 = sbr.rel (%p493) target = $region72
        $region71: #{tpu_custom_call.1} parent=11 // pred_region
          _
        $region72: #{tpu_custom_call.1} parent=11 // pred_fallthru
          _
        // Predicated region
        $region73: #{tpu_custom_call.1} parent=11 // pred_check
          %p496 = pneg %p389
        $region74: #{tpu_custom_call.1} parent=11 // pred_check_branch
          %498 = sbr.rel (%p496) target = $region76
        $region75: #{tpu_custom_call.1} parent=11 // pred_region
          _
        $region76: #{tpu_custom_call.1} parent=11 // pred_fallthru
          _
        // Predicated region
        $region77: #{tpu_custom_call.1} parent=11 // pred_check
          %p499 = pneg %p410
        $region78: #{tpu_custom_call.1} parent=11 // pred_check_branch
          %501 = sbr.rel (%p499) target = $region80
        $region79: #{tpu_custom_call.1} parent=11 // pred_region
          _
        $region80: #{tpu_custom_call.1} parent=11 // pred_fallthru
          _
      $region12: #{tpu_custom_call.1} parent=5 // pred_fallthru
        _
      %p502 = scmp.lt.s32.totalorder %s27, 2
      // Predicated region
      $region81: #{tpu_custom_call.1} parent=5 // pred_check
        %p503 = pneg %p502
      $region82: #{tpu_custom_call.1} parent=5 // pred_check_branch
        %505 = sbr.rel (%p503) target = $region84
      $region83: #{tpu_custom_call.1} parent=5 // pred_region
        // Predicated region
        $region85: #{tpu_custom_call.1} parent=83 // pred_check
          %p506 = pneg %p47
        $region86: #{tpu_custom_call.1} parent=83 // pred_check_branch
          %508 = sbr.rel (%p506) target = $region88
        $region87: #{tpu_custom_call.1} parent=83 // pred_region
          %p509 = scmp.lt.s32.totalorder %s27, 1
          %s510 = scalar_select %p509, %s27, 1
          %s511 = smul.addr %s510, 2
          %s512 = smul.addr %s511, 8
          %s513 = scalar_lea.vmem %s0, %s512
        $region88: #{tpu_custom_call.1} parent=83 // pred_fallthru
          _
      $region84: #{tpu_custom_call.1} parent=5 // pred_fallthru
        _
      %p514 = scmp.le.s32.totalorder 1, %s27
      %p515 = scmp.lt.s32.totalorder %s27, 3
      %p516 = pnand %p514, %p515
      %p517 = pneg %p516
      // Predicated region
      $region89: #{tpu_custom_call.1} parent=5 // pred_check
        _
      $region90: #{tpu_custom_call.1} parent=5 // pred_check_branch
        %519 = sbr.rel (%p516) target = $region92
      $region91: #{tpu_custom_call.1} parent=5 // pred_region
        %s520 = ssub.s32 %s27, 1
        %p521 = scmp.lt.s32.totalorder %s32, 1
        %s522 = scalar_select %p521, %s32, 1
        %s523 = smul.addr %s522, 2
        %s524 = smul.addr %s523, 8
        %s525 = scalar_lea.vmem %s0, %s524
        %p526 = pneg %p53
        %p527 = pneg %p50
        %p528 = pneg %p74
        %p529 = pneg %p71
        %p530 = pneg %p95
        %p531 = pneg %p92
        %p532 = pneg %p116
        %p533 = pneg %p113
        %p534 = pneg %p137
        %p535 = pneg %p134
        %p536 = pneg %p158
        %p537 = pneg %p155
        %p538 = pneg %p179
        %p539 = pneg %p176
        %p540 = pneg %p200
        %p541 = pneg %p197
        %p542 = pneg %p221
        %p543 = pneg %p218
        %p544 = pneg %p242
        %p545 = pneg %p239
        %p546 = pneg %p263
        %p547 = pneg %p260
        %p548 = pneg %p284
        %p549 = pneg %p281
        %p550 = pneg %p305
        %p551 = pneg %p302
        %p552 = pneg %p326
        %p553 = pneg %p323
        %p554 = pneg %p347
        %p555 = pneg %p344
        %p556 = pneg %p368
        %p557 = pneg %p365
        %p558 = pneg %p389
        %p559 = pneg %p386
        %p560 = pneg %p410
        %p561 = pneg %p407
        %p562 = pneg %p436
        %p563 = pneg %p433
        %s564 = sand.u32 %s423, 1
        %s565 = scalar_lea.sflag [#allocation3], %s564
        %s566 = sand.u32 %s423, 1
        %s567 = smul.addr %s566, 16
        %s568 = scalar_lea.vmem [#allocation2], %s567
        %p569 = scmp.lt.s32.totalorder %s32, 1
        %s570 = scalar_select %p569, %s32, 1
        %s571 = smul.addr %s570, 2
        %s572 = smul.addr %s571, 8
        %s573 = scalar_lea.vmem %s0, %s572
        %v574 = vld [vmem:[%s573] sm:$0xff]
        %v575 = vld [vmem:[%s573 + $0x8] sm:$0xff]
        %v576 = vld [vmem:[%s2] sm:$0xff]
        %v577 = vld [vmem:[%s2 + $0x8] sm:$0x1]
        %v578 = vld [vmem:[%s1] sm:$0xff]
        %v579 = vld [vmem:[%s1 + $0x8] sm:$0xff]
        %v580 = vld [vmem:[%s1 + $0x10] sm:$0xff]
        %v581 = vld [vmem:[%s1 + $0x18] sm:$0xff]
        %v582 = vld [vmem:[%s1 + $0x20] sm:$0xff]
        %v583 = vld [vmem:[%s1 + $0x28] sm:$0xff]
        %v584 = vld [vmem:[%s1 + $0x30] sm:$0xff]
        %v585 = vld [vmem:[%s1 + $0x38] sm:$0xff]
        %v586 = vld [vmem:[%s1 + $0x40] sm:$0xff]
        %v587 = vld [vmem:[%s1 + $0x48] sm:$0xff]
        %v588 = vld [vmem:[%s1 + $0x50] sm:$0xff]
        %v589 = vld [vmem:[%s1 + $0x58] sm:$0xff]
        %v590 = vld [vmem:[%s1 + $0x60] sm:$0xff]
        %v591 = vld [vmem:[%s1 + $0x68] sm:$0xff]
        %v592 = vld [vmem:[%s1 + $0x70] sm:$0xff]
        %v593 = vld [vmem:[%s1 + $0x78] sm:$0xff]
        %v594 = vld [vmem:[%s1 + $0x80] sm:$0xff]
        %v595 = vld [vmem:[%s1 + $0x88] sm:$0xff]
        %597 = vset.pattern.permute.xlu0 0
        %598 = vperm.xlu0 %597, %v586
        %v599 = vpop.permute.xlu0 %598
        %602 = vset.pattern.permute.xlu0 0
        %603 = vperm.xlu0 %602, %v587
        %v604 = vpop.permute.xlu0 %603
        %v606 = vmul.f32 %v574, %v599
        %v607 = vmul.f32 %v575, %v604
        %v608 = vlaneseq
        %v609 = vshrl.u32 %v608, 7
        %v610 = vsub.s32 4, %v609
        %v611 = vrot.slane %v576, %v610
        %v612 = vmul.f32 %v606, %v611
        %v613 = vmul.f32 %v607, %v611
        %v615 = vrot.slane %v575, 3
        %vm618 = vcmask 1044480
        %v619 = vrot.slane %v574, 3
        %v620 = vsel %vm618, %v619, %v615
        %v623 = vsel %vm618, %v615, %v619
        %625 = vset.pattern.permute.xlu0 0
        %626 = vperm.xlu0 %625, %v578
        %v627 = vpop.permute.xlu0 %626
        %630 = vset.pattern.permute.xlu0 0
        %631 = vperm.xlu0 %630, %v579
        %v632 = vpop.permute.xlu0 %631
        %v634 = vmul.f32 %v623, %v627
        %v635 = vmul.f32 %v620, %v632
        %v636 = vlaneseq
        %v637 = vshrl.u32 %v636, 7
        %v638 = vsub.s32 0, %v637
        %v639 = vrot.slane %v576, %v638
        %v640 = vmul.f32 %v634, %v639
        %v641 = vmul.f32 %v635, %v639
        %v642 = vadd.f32 %v612, %v640
        %v643 = vadd.f32 %v613, %v641
        %v644 = vrot.slane %v575, 4
        %vm646 = vcmask 1043456
        %v647 = vrot.slane %v574, 4
        %v648 = vsel %vm646, %v647, %v644
        %v651 = vsel %vm646, %v644, %v647
        %653 = vset.pattern.permute.xlu0 0
        %654 = vperm.xlu0 %653, %v580
        %v655 = vpop.permute.xlu0 %654
        %658 = vset.pattern.permute.xlu0 0
        %659 = vperm.xlu0 %658, %v581
        %v660 = vpop.permute.xlu0 %659
        %v662 = vmul.f32 %v651, %v655
        %v663 = vmul.f32 %v648, %v660
        %v664 = vlaneseq
        %v665 = vshrl.u32 %v664, 7
        %v666 = vsub.s32 1, %v665
        %v667 = vrot.slane %v576, %v666
        %v668 = vmul.f32 %v662, %v667
        %v669 = vmul.f32 %v663, %v667
        %v670 = vadd.f32 %v642, %v668
        %v671 = vadd.f32 %v643, %v669
        %v672 = vrot.slane %v575, 5
        %vm674 = vcmask 1042432
        %v675 = vrot.slane %v574, 5
        %v676 = vsel %vm674, %v675, %v672
        %v679 = vsel %vm674, %v672, %v675
        %681 = vset.pattern.permute.xlu0 0
        %682 = vperm.xlu0 %681, %v582
        %v683 = vpop.permute.xlu0 %682
        %686 = vset.pattern.permute.xlu0 0
        %687 = vperm.xlu0 %686, %v583
        %v688 = vpop.permute.xlu0 %687
        %v690 = vmul.f32 %v679, %v683
        %v691 = vmul.f32 %v676, %v688
        %v692 = vlaneseq
        %v693 = vshrl.u32 %v692, 7
        %v694 = vsub.s32 2, %v693
        %v695 = vrot.slane %v576, %v694
        %v696 = vmul.f32 %v690, %v695
        %v697 = vmul.f32 %v691, %v695
        %v698 = vadd.f32 %v670, %v696
        %v699 = vadd.f32 %v671, %v697
        %v700 = vrot.slane %v575, 7
        %vm702 = vcmask 1040384
        %v703 = vrot.slane %v574, 7
        %v704 = vsel %vm702, %v703, %v700
        %v707 = vsel %vm702, %v700, %v703
        %709 = vset.pattern.permute.xlu0 0
        %710 = vperm.xlu0 %709, %v584
        %v711 = vpop.permute.xlu0 %710
        %714 = vset.pattern.permute.xlu0 0
        %715 = vperm.xlu0 %714, %v585
        %v716 = vpop.permute.xlu0 %715
        %v718 = vmul.f32 %v707, %v711
        %v719 = vmul.f32 %v704, %v716
        %v720 = vlaneseq
        %v721 = vshrl.u32 %v720, 7
        %v722 = vsub.s32 3, %v721
        %v723 = vrot.slane %v576, %v722
        %v724 = vmul.f32 %v718, %v723
        %v725 = vmul.f32 %v719, %v723
        %v726 = vadd.f32 %v698, %v724
        %v727 = vadd.f32 %v699, %v725
        %vm728 = vcmask 1046528
        %v729 = vrot.slane %v574, 1
        %v730 = vrot.slane %v575, 1
        %v731 = vsel %vm728, %v729, %v730
        %v735 = vsel %vm728, %v730, %v729
        %737 = vset.pattern.permute.xlu0 0
        %738 = vperm.xlu0 %737, %v588
        %v739 = vpop.permute.xlu0 %738
        %742 = vset.pattern.permute.xlu0 0
        %743 = vperm.xlu0 %742, %v589
        %v744 = vpop.permute.xlu0 %743
        %v746 = vmul.f32 %v731, %v739
        %v747 = vmul.f32 %v735, %v744
        %v748 = vlaneseq
        %v749 = vshrl.u32 %v748, 7
        %v750 = vsub.s32 5, %v749
        %v751 = vrot.slane %v576, %v750
        %v752 = vmul.f32 %v746, %v751
        %v753 = vmul.f32 %v747, %v751
        %v754 = vadd.f32 %v726, %v752
        %v755 = vadd.f32 %v727, %v753
        %757 = vset.pattern.permute.xlu0 0
        %758 = vperm.xlu0 %757, %v590
        %v759 = vpop.permute.xlu0 %758
        %762 = vset.pattern.permute.xlu0 0
        %763 = vperm.xlu0 %762, %v591
        %v764 = vpop.permute.xlu0 %763
        %v766 = vmul.f32 %v620, %v759
        %v767 = vmul.f32 %v623, %v764
        %v768 = vlaneseq
        %v769 = vshrl.u32 %v768, 7
        %v770 = vsub.s32 6, %v769
        %v771 = vrot.slane %v576, %v770
        %v772 = vmul.f32 %v766, %v771
        %v773 = vmul.f32 %v767, %v771
        %v774 = vadd.f32 %v754, %v772
        %v775 = vadd.f32 %v755, %v773
        %777 = vset.pattern.permute.xlu0 0
        %778 = vperm.xlu0 %777, %v592
        %v779 = vpop.permute.xlu0 %778
        %782 = vset.pattern.permute.xlu0 0
        %783 = vperm.xlu0 %782, %v593
        %v784 = vpop.permute.xlu0 %783
        %v786 = vmul.f32 %v648, %v779
        %v787 = vmul.f32 %v651, %v784
        %v788 = vlaneseq
        %v789 = vshrl.u32 %v788, 7
        %v790 = vsub.s32 7, %v789
        %v791 = vrot.slane %v576, %v790
        %v792 = vmul.f32 %v786, %v791
        %v793 = vmul.f32 %v787, %v791
        %v794 = vadd.f32 %v774, %v792
        %v795 = vadd.f32 %v775, %v793
        %797 = vset.pattern.permute.xlu0 0
        %798 = vperm.xlu0 %797, %v594
        %v799 = vpop.permute.xlu0 %798
        %802 = vset.pattern.permute.xlu0 0
        %803 = vperm.xlu0 %802, %v595
        %v804 = vpop.permute.xlu0 %803
        %v806 = vmul.f32 %v676, %v799
        %v807 = vmul.f32 %v679, %v804
        %v808 = vlaneseq
        %v809 = vshrl.u32 %v808, 7
        %v810 = vsub.s32 0, %v809
        %v811 = vrot.slane %v577, %v810
        %v812 = vmul.f32 %v806, %v811
        %v813 = vmul.f32 %v807, %v811
        %v814 = vadd.f32 %v794, %v812
        %v815 = vadd.f32 %v795, %v813
        %v816 = vadd.f32 %v574, %v814
        %v817 = vadd.f32 %v575, %v815
        %v818 = vld [vmem:[%s3] sm:$0x1]
        %v820 = vlaneseq
        %v821 = vshrl.u32 %v820, 7
        %v822 = vsub.s32 0, %v821
        %v823 = vrot.slane %v818, %v822
        %v825 = vadd.f32 %v816, %v823
        %v826 = vadd.f32 %v817, %v823
        %v827 = vld [vmem:[%s4] sm:$0x1]
        %v828 = vld [vmem:[%s5] sm:$0x1]
        %vm829 = vcmask 261120
        %v830 = vsel %vm829, %v825, 0.0
        %831 = vadd.xlane.f32.xlu0 %v830
        %v832 = vpop.xlane.xlu0 %831
        %v833 = vsel %vm829, %v826, 0.0
        %834 = vadd.xlane.f32.xlu0 %v833
        %v835 = vpop.xlane.xlu0 %834
        %v836 = vrcp.pop 32.0
        %v837 = vmul.f32 %v832, %v836
        %v838 = vmul.f32 %v835, %v836
        %v839 = vsub.f32 %v825, %v837
        %v840 = vsub.f32 %v826, %v838
        %v841 = vmul.f32 %v839, %v839
        %v842 = vmul.f32 %v840, %v840
        %v843 = vsel %vm829, %v841, 0.0
        %844 = vadd.xlane.f32.xlu0 %v843
        %v845 = vpop.xlane.xlu0 %844
        %v846 = vsel %vm829, %v842, 0.0
        %847 = vadd.xlane.f32.xlu0 %v846
        %v848 = vpop.xlane.xlu0 %847
        %v849 = vmul.f32 %v845, %v836
        %v850 = vmul.f32 %v848, %v836
        %v851 = vadd.f32 %v849, 1e-05
        %v852 = vadd.f32 %v850, 1e-05
        %v853 = vrsqrt.pop %v851
        %v854 = vrsqrt.pop %v852
        %v855 = vmul.f32 %v839, %v853
        %v856 = vmul.f32 %v840, %v854
        %v858 = vlaneseq
        %v859 = vshrl.u32 %v858, 7
        %v860 = vsub.s32 0, %v859
        %v861 = vrot.slane %v827, %v860
        %v863 = vmul.f32 %v855, %v861
        %v864 = vmul.f32 %v856, %v861
        %v866 = vlaneseq
        %v867 = vshrl.u32 %v866, 7
        %v868 = vsub.s32 0, %v867
        %v869 = vrot.slane %v828, %v868
        %v871 = vadd.f32 %v863, %v869
        %v872 = vadd.f32 %v864, %v869
        %v873 = vld [vmem:[%s6] sm:$0xff]
        %v874 = vld [vmem:[%s6 + $0x8] sm:$0xff]
        %v875 = vld [vmem:[%s6 + $0x10] sm:$0xff]
        %v876 = vld [vmem:[%s6 + $0x18] sm:$0xff]
        %v877 = vld [vmem:[%s7] sm:$0x1]
        %v879 = vlaneseq
        %v880 = vshrl.u32 %v879, 7
        %v881 = vsub.s32 0, %v880
        %v882 = vrot.slane %v877, %v881
        %v885 = vsel %vm829, %v871, 0
        %v888 = vsel %vm829, %v872, 0
        %890 = vmatprep.subr.mxu0 0.0
        %891 = vmatpush1.msra.mxu0 %v873
        %892 = vmatprep.subr.mxu0 0.0
        %893 = vmatpush1.msra.mxu0 %v874
        %894 = vmatprep.subr.mxu0 0.0
        %895 = vmatpush1.msra.mxu0 %v875
        %896 = vmatprep.subr.mxu0 0.0
        %897 = vmatpush1.msra.mxu0 %v876
        %898 = vmatprep.subr.mxu0 0.0
        %899 = vmatpush1.msra.mxu0 0.0
        %900 = vmatprep.subr.mxu0 0.0
        %901 = vmatpush1.msra.mxu0 0.0
        %902 = vmatprep.subr.mxu0 0.0
        %903 = vmatpush1.msra.mxu0 0.0
        %904 = vmatprep.subr.mxu0 0.0
        %905 = vmatpush1.msra.mxu0 0.0
        %906 = vmatprep.subr.mxu0 0.0
        %907 = vmatpush1.msra.mxu0 0.0
        %908 = vmatprep.subr.mxu0 0.0
        %909 = vmatpush1.msra.mxu0 0.0
        %910 = vmatprep.subr.mxu0 0.0
        %911 = vmatpush1.msra.mxu0 0.0
        %912 = vmatprep.subr.mxu0 0.0
        %913 = vmatpush1.msra.mxu0 0.0
        %914 = vmatprep.subr.mxu0 0.0
        %915 = vmatpush1.msra.mxu0 0.0
        %916 = vmatprep.subr.mxu0 0.0
        %917 = vmatpush1.msra.mxu0 0.0
        %918 = vmatprep.subr.mxu0 0.0
        %919 = vmatpush1.msra.mxu0 0.0
        %920 = vmatprep.subr.mxu0 0.0
        %921 = vmatpush1.msra.mxu0 0.0
        %922 = vmatprep.subr.mxu0 0.0
        %923 = vmatpush1.msra.mxu0 0.0
        %924 = vmatprep.subr.mxu0 0.0
        %925 = vmatpush1.msra.mxu0 0.0
        %926 = vmatprep.subr.mxu0 0.0
        %927 = vmatpush1.msra.mxu0 0.0
        %928 = vmatprep.subr.mxu0 0.0
        %929 = vmatpush1.msra.mxu0 0.0
        %930 = vmatprep.subr.mxu0 0.0
        %931 = vmatpush1.msra.mxu0 0.0
        %932 = vmatprep.subr.mxu0 0.0
        %933 = vmatpush1.msra.mxu0 0.0
        %934 = vmatprep.subr.mxu0 0.0
        %935 = vmatpush1.msra.mxu0 0.0
        %936 = vmatprep.subr.mxu0 0.0
        %937 = vmatpush1.msra.mxu0 0.0
        %938 = vmatprep.subr.mxu0 0.0
        %939 = vmatpush1.msra.mxu0 0.0
        %940 = vmatprep.subr.mxu0 0.0
        %941 = vmatpush1.msra.mxu0 0.0
        %942 = vmatprep.subr.mxu0 0.0
        %943 = vmatpush1.msra.mxu0 0.0
        %944 = vmatprep.subr.mxu0 0.0
        %945 = vmatpush1.msra.mxu0 0.0
        %946 = vmatprep.subr.mxu0 0.0
        %947 = vmatpush1.msra.mxu0 0.0
        %948 = vmatprep.subr.mxu0 0.0
        %949 = vmatpush1.msra.mxu0 0.0
        %950 = vmatprep.subr.mxu0 0.0
        %951 = vmatpush1.msra.mxu0 0.0
        %952 = vmatprep.subr.mxu0 0.0
        %953 = vmatpush1.msra.mxu0 0.0
        %954 = vmatprep.mubr.f32.mxu0 0.0
        %955 = vmatmul.mubr.f32.gmra.mrb[0].mxu0 %v885
        %v956 = vpop.f32.mrb[0].mxu0
        %v957 = vadd.f32 %v882, %v956
        %v958 = vpop.f32.mrb[0].mxu0
        %959 = vmatprep.mubr.f32.mxu0 0.0
        %960 = vmatmul.mubr.f32.gmra.mrb[0].mxu0 %v888
        %v961 = vpop.f32.mrb[0].mxu0
        %v962 = vadd.f32 %v882, %v961
        %v963 = vpop.f32.mrb[0].mxu0
        %964 = vdwg.mxu0
        %967 = vrot.lane.b32.xlu0 %v957, 96
        %v968 = vpop.permute.xlu0 %967
        %969 = vrot.lane.b32.xlu0 %v962, 96
        %v970 = vpop.permute.xlu0 %969
        %vm971 = vcmask 31744
        %v972 = vsel %vm971, %v957, 0
        %v974 = vsel %vm971, %v962, 0
        %v976 = vsel %vm971, %v968, 0
        %v978 = vsel %vm971, %v970, 0
        %980 = vmatprep.subr.mxu0 0.0
        %981 = vmatpush1.xpose.msra.mxu0 %v976
        %982 = vmatprep.subr.mxu0 0.0
        %983 = vmatpush1.xpose.msra.mxu0 %v978
        %984 = vmatprep.subr.mxu0 0.0
        %985 = vmatpush1.xpose.msra.mxu0 0.0
        %986 = vmatprep.subr.mxu0 0.0
        %987 = vmatpush1.xpose.msra.mxu0 0.0
        %988 = vmatprep.subr.mxu0 0.0
        %989 = vmatpush1.xpose.msra.mxu0 0.0
        %990 = vmatprep.subr.mxu0 0.0
        %991 = vmatpush1.xpose.msra.mxu0 0.0
        %992 = vmatprep.subr.mxu0 0.0
        %993 = vmatpush1.xpose.msra.mxu0 0.0
        %994 = vmatprep.subr.mxu0 0.0
        %995 = vmatpush1.xpose.msra.mxu0 0.0
        %996 = vmatprep.subr.mxu0 0.0
        %997 = vmatpush1.xpose.msra.mxu0 0.0
        %998 = vmatprep.subr.mxu0 0.0
        %999 = vmatpush1.xpose.msra.mxu0 0.0
        %1000 = vmatprep.subr.mxu0 0.0
        %1001 = vmatpush1.xpose.msra.mxu0 0.0
        %1002 = vmatprep.subr.mxu0 0.0
        %1003 = vmatpush1.xpose.msra.mxu0 0.0
        %1004 = vmatprep.subr.mxu0 0.0
        %1005 = vmatpush1.xpose.msra.mxu0 0.0
        %1006 = vmatprep.subr.mxu0 0.0
        %1007 = vmatpush1.xpose.msra.mxu0 0.0
        %1008 = vmatprep.subr.mxu0 0.0
        %1009 = vmatpush1.xpose.msra.mxu0 0.0
        %1010 = vmatprep.subr.mxu0 0.0
        %1011 = vmatpush1.xpose.msra.mxu0 0.0
        %1012 = vmatprep.subr.mxu0 0.0
        %1013 = vmatpush1.xpose.msra.mxu0 0.0
        %1014 = vmatprep.subr.mxu0 0.0
        %1015 = vmatpush1.xpose.msra.mxu0 0.0
        %1016 = vmatprep.subr.mxu0 0.0
        %1017 = vmatpush1.xpose.msra.mxu0 0.0
        %1018 = vmatprep.subr.mxu0 0.0
        %1019 = vmatpush1.xpose.msra.mxu0 0.0
        %1020 = vmatprep.subr.mxu0 0.0
        %1021 = vmatpush1.xpose.msra.mxu0 0.0
        %1022 = vmatprep.subr.mxu0 0.0
        %1023 = vmatpush1.xpose.msra.mxu0 0.0
        %1024 = vmatprep.subr.mxu0 0.0
        %1025 = vmatpush1.xpose.msra.mxu0 0.0
        %1026 = vmatprep.subr.mxu0 0.0
        %1027 = vmatpush1.xpose.msra.mxu0 0.0
        %1028 = vmatprep.subr.mxu0 0.0
        %1029 = vmatpush1.xpose.msra.mxu0 0.0
        %1030 = vmatprep.subr.mxu0 0.0
        %1031 = vmatpush1.xpose.msra.mxu0 0.0
        %1032 = vmatprep.subr.mxu0 0.0
        %1033 = vmatpush1.xpose.msra.mxu0 0.0
        %1034 = vmatprep.subr.mxu0 0.0
        %1035 = vmatpush1.xpose.msra.mxu0 0.0
        %1036 = vmatprep.subr.mxu0 0.0
        %1037 = vmatpush1.xpose.msra.mxu0 0.0
        %1038 = vmatprep.subr.mxu0 0.0
        %1039 = vmatpush1.xpose.msra.mxu0 0.0
        %1040 = vmatprep.subr.mxu0 0.0
        %1041 = vmatpush1.xpose.msra.mxu0 0.0
        %1042 = vmatprep.subr.mxu0 0.0
        %1043 = vmatpush1.xpose.msra.mxu0 0.0
        %1044 = vmatprep.mubr.f32.mxu0 0.0
        %1045 = vmatmul.mubr.f32.gmra.mrb[0].mxu0 %v972
        %v1046 = vpop.f32.mrb[0].mxu0
        %v1047 = vadd.f32 0.0, %v1046
        %v1048 = vpop.f32.mrb[0].mxu0
        %1049 = vmatprep.mubr.f32.mxu0 0.0
        %1050 = vmatmul.mubr.f32.gmra.mrb[0].mxu0 %v974
        %v1051 = vpop.f32.mrb[0].mxu0
        %v1052 = vadd.f32 0.0, %v1051
        %v1053 = vpop.f32.mrb[0].mxu0
        %1054 = vdwg.mxu0
        %v1055 = vmul.f32 %v1047, 0.5
        %v1056 = vmul.f32 %v1052, 0.5
        %vm1057 = vcmask 130048
        %v1058 = vsel %vm1057, %v1055, -inf
        %1059 = vmax.xlane.f32.xlu0 %v1058
        %v1060 = vpop.xlane.xlu0 %1059
        %v1061 = vsel %vm1057, %v1056, -inf
        %1062 = vmax.xlane.f32.xlu0 %v1061
        %v1063 = vpop.xlane.xlu0 %1062
        %v1064 = vsub.f32 %v1055, %v1060
        %v1065 = vsub.f32 %v1056, %v1063
        %v1066 = vmul.f32 %v1064, 1.442695
        %v1067 = vpow.pop %v1066
        %v1068 = vmul.f32 %v1065, 1.442695
        %v1069 = vpow.pop %v1068
        %v1070 = vsel %vm1057, %v1067, 0.0
        %1071 = vadd.xlane.f32.xlu0 %v1070
        %v1072 = vpop.xlane.xlu0 %1071
        %v1073 = vsel %vm1057, %v1069, 0.0
        %1074 = vadd.xlane.f32.xlu0 %v1073
        %v1075 = vpop.xlane.xlu0 %1074
        %v1076 = vrcp.pop %v1072
        %v1077 = vrcp.pop %v1075
        %v1078 = vmul.f32 %v1067, %v1076
        %v1079 = vmul.f32 %v1069, %v1077
        %1080 = vrot.lane.b32.xlu0 %v957, 64
        %v1081 = vpop.permute.xlu0 %1080
        %1082 = vrot.lane.b32.xlu0 %v962, 64
        %v1083 = vpop.permute.xlu0 %1082
        %v1087 = vsel %vm1057, %v1078, 0
        %v1090 = vsel %vm1057, %v1079, 0
        %1092 = vmatprep.subr.mxu0 0.0
        %1093 = vmatpush1.msra.mxu0 %v1081
        %1094 = vmatprep.subr.mxu0 0.0
        %1095 = vmatpush1.msra.mxu0 %v1083
        %1096 = vmatprep.subr.mxu0 0.0
        %1097 = vmatpush1.msra.mxu0 0.0
        %1098 = vmatprep.subr.mxu0 0.0
        %1099 = vmatpush1.msra.mxu0 0.0
        %1100 = vmatprep.subr.mxu0 0.0
        %1101 = vmatpush1.msra.mxu0 0.0
        %1102 = vmatprep.subr.mxu0 0.0
        %1103 = vmatpush1.msra.mxu0 0.0
        %1104 = vmatprep.subr.mxu0 0.0
        %1105 = vmatpush1.msra.mxu0 0.0
        %1106 = vmatprep.subr.mxu0 0.0
        %1107 = vmatpush1.msra.mxu0 0.0
        %1108 = vmatprep.subr.mxu0 0.0
        %1109 = vmatpush1.msra.mxu0 0.0
        %1110 = vmatprep.subr.mxu0 0.0
        %1111 = vmatpush1.msra.mxu0 0.0
        %1112 = vmatprep.subr.mxu0 0.0
        %1113 = vmatpush1.msra.mxu0 0.0
        %1114 = vmatprep.subr.mxu0 0.0
        %1115 = vmatpush1.msra.mxu0 0.0
        %1116 = vmatprep.subr.mxu0 0.0
        %1117 = vmatpush1.msra.mxu0 0.0
        %1118 = vmatprep.subr.mxu0 0.0
        %1119 = vmatpush1.msra.mxu0 0.0
        %1120 = vmatprep.subr.mxu0 0.0
        %1121 = vmatpush1.msra.mxu0 0.0
        %1122 = vmatprep.subr.mxu0 0.0
        %1123 = vmatpush1.msra.mxu0 0.0
        %1124 = vmatprep.subr.mxu0 0.0
        %1125 = vmatpush1.msra.mxu0 0.0
        %1126 = vmatprep.subr.mxu0 0.0
        %1127 = vmatpush1.msra.mxu0 0.0
        %1128 = vmatprep.subr.mxu0 0.0
        %1129 = vmatpush1.msra.mxu0 0.0
        %1130 = vmatprep.subr.mxu0 0.0
        %1131 = vmatpush1.msra.mxu0 0.0
        %1132 = vmatprep.subr.mxu0 0.0
        %1133 = vmatpush1.msra.mxu0 0.0
        %1134 = vmatprep.subr.mxu0 0.0
        %1135 = vmatpush1.msra.mxu0 0.0
        %1136 = vmatprep.subr.mxu0 0.0
        %1137 = vmatpush1.msra.mxu0 0.0
        %1138 = vmatprep.subr.mxu0 0.0
        %1139 = vmatpush1.msra.mxu0 0.0
        %1140 = vmatprep.subr.mxu0 0.0
        %1141 = vmatpush1.msra.mxu0 0.0
        %1142 = vmatprep.subr.mxu0 0.0
        %1143 = vmatpush1.msra.mxu0 0.0
        %1144 = vmatprep.subr.mxu0 0.0
        %1145 = vmatpush1.msra.mxu0 0.0
        %1146 = vmatprep.subr.mxu0 0.0
        %1147 = vmatpush1.msra.mxu0 0.0
        %1148 = vmatprep.subr.mxu0 0.0
        %1149 = vmatpush1.msra.mxu0 0.0
        %1150 = vmatprep.subr.mxu0 0.0
        %1151 = vmatpush1.msra.mxu0 0.0
        %1152 = vmatprep.subr.mxu0 0.0
        %1153 = vmatpush1.msra.mxu0 0.0
        %1154 = vmatprep.subr.mxu0 0.0
        %1155 = vmatpush1.msra.mxu0 0.0
        %1156 = vmatprep.mubr.f32.mxu0 0.0
        %1157 = vmatmul.mubr.f32.gmra.mrb[0].mxu0 %v1087
        %v1158 = vpop.f32.mrb[0].mxu0
        %v1159 = vadd.f32 0.0, %v1158
        %v1160 = vpop.f32.mrb[0].mxu0
        %1161 = vmatprep.mubr.f32.mxu0 0.0
        %1162 = vmatmul.mubr.f32.gmra.mrb[0].mxu0 %v1090
        %v1163 = vpop.f32.mrb[0].mxu0
        %v1164 = vadd.f32 0.0, %v1163
        %v1165 = vpop.f32.mrb[0].mxu0
        %1166 = vdwg.mxu0
        %1167 = vrot.lane.b32.xlu0 %v957, 124
        %v1168 = vpop.permute.xlu0 %1167
        %1169 = vrot.lane.b32.xlu0 %v962, 124
        %v1170 = vpop.permute.xlu0 %1169
        %1171 = vrot.lane.b32.xlu0 %v957, 92
        %v1172 = vpop.permute.xlu0 %1171
        %1173 = vrot.lane.b32.xlu0 %v962, 92
        %v1174 = vpop.permute.xlu0 %1173
        %v1175 = vsel %vm971, %v1168, 0
        %v1177 = vsel %vm971, %v1170, 0
        %v1179 = vsel %vm971, %v1172, 0
        %v1181 = vsel %vm971, %v1174, 0
        %1183 = vmatprep.subr.mxu0 0.0
        %1184 = vmatpush1.xpose.msra.mxu0 %v1179
        %1185 = vmatprep.subr.mxu0 0.0
        %1186 = vmatpush1.xpose.msra.mxu0 %v1181
        %1187 = vmatprep.subr.mxu0 0.0
        %1188 = vmatpush1.xpose.msra.mxu0 0.0
        %1189 = vmatprep.subr.mxu0 0.0
        %1190 = vmatpush1.xpose.msra.mxu0 0.0
        %1191 = vmatprep.subr.mxu0 0.0
        %1192 = vmatpush1.xpose.msra.mxu0 0.0
        %1193 = vmatprep.subr.mxu0 0.0
        %1194 = vmatpush1.xpose.msra.mxu0 0.0
        %1195 = vmatprep.subr.mxu0 0.0
        %1196 = vmatpush1.xpose.msra.mxu0 0.0
        %1197 = vmatprep.subr.mxu0 0.0
        %1198 = vmatpush1.xpose.msra.mxu0 0.0
        %1199 = vmatprep.subr.mxu0 0.0
        %1200 = vmatpush1.xpose.msra.mxu0 0.0
        %1201 = vmatprep.subr.mxu0 0.0
        %1202 = vmatpush1.xpose.msra.mxu0 0.0
        %1203 = vmatprep.subr.mxu0 0.0
        %1204 = vmatpush1.xpose.msra.mxu0 0.0
        %1205 = vmatprep.subr.mxu0 0.0
        %1206 = vmatpush1.xpose.msra.mxu0 0.0
        %1207 = vmatprep.subr.mxu0 0.0
        %1208 = vmatpush1.xpose.msra.mxu0 0.0
        %1209 = vmatprep.subr.mxu0 0.0
        %1210 = vmatpush1.xpose.msra.mxu0 0.0
        %1211 = vmatprep.subr.mxu0 0.0
        %1212 = vmatpush1.xpose.msra.mxu0 0.0
        %1213 = vmatprep.subr.mxu0 0.0
        %1214 = vmatpush1.xpose.msra.mxu0 0.0
        %1215 = vmatprep.subr.mxu0 0.0
        %1216 = vmatpush1.xpose.msra.mxu0 0.0
        %1217 = vmatprep.subr.mxu0 0.0
        %1218 = vmatpush1.xpose.msra.mxu0 0.0
        %1219 = vmatprep.subr.mxu0 0.0
        %1220 = vmatpush1.xpose.msra.mxu0 0.0
        %1221 = vmatprep.subr.mxu0 0.0
        %1222 = vmatpush1.xpose.msra.mxu0 0.0
        %1223 = vmatprep.subr.mxu0 0.0
        %1224 = vmatpush1.xpose.msra.mxu0 0.0
        %1225 = vmatprep.subr.mxu0 0.0
        %1226 = vmatpush1.xpose.msra.mxu0 0.0
        %1227 = vmatprep.subr.mxu0 0.0
        %1228 = vmatpush1.xpose.msra.mxu0 0.0
        %1229 = vmatprep.subr.mxu0 0.0
        %1230 = vmatpush1.xpose.msra.mxu0 0.0
        %1231 = vmatprep.subr.mxu0 0.0
        %1232 = vmatpush1.xpose.msra.mxu0 0.0
        %1233 = vmatprep.subr.mxu0 0.0
        %1234 = vmatpush1.xpose.msra.mxu0 0.0
        %1235 = vmatprep.subr.mxu0 0.0
        %1236 = vmatpush1.xpose.msra.mxu0 0.0
        %1237 = vmatprep.subr.mxu0 0.0
        %1238 = vmatpush1.xpose.msra.mxu0 0.0
        %1239 = vmatprep.subr.mxu0 0.0
        %1240 = vmatpush1.xpose.msra.mxu0 0.0
        %1241 = vmatprep.subr.mxu0 0.0
        %1242 = vmatpush1.xpose.msra.mxu0 0.0
        %1243 = vmatprep.subr.mxu0 0.0
        %1244 = vmatpush1.xpose.msra.mxu0 0.0
        %1245 = vmatprep.subr.mxu0 0.0
        %1246 = vmatpush1.xpose.msra.mxu0 0.0
        %1247 = vmatprep.mubr.f32.mxu0 0.0
        %1248 = vmatmul.mubr.f32.gmra.mrb[0].mxu0 %v1175
        %v1249 = vpop.f32.mrb[0].mxu0
        %v1250 = vadd.f32 0.0, %v1249
        %v1251 = vpop.f32.mrb[0].mxu0
        %1252 = vmatprep.mubr.f32.mxu0 0.0
        %1253 = vmatmul.mubr.f32.gmra.mrb[0].mxu0 %v1177
        %v1254 = vpop.f32.mrb[0].mxu0
        %v1255 = vadd.f32 0.0, %v1254
        %v1256 = vpop.f32.mrb[0].mxu0
        %1257 = vdwg.mxu0
        %v1258 = vmul.f32 %v1250, 0.5
        %v1259 = vmul.f32 %v1255, 0.5
        %v1260 = vsel %vm1057, %v1258, -inf
        %1261 = vmax.xlane.f32.xlu0 %v1260
        %v1262 = vpop.xlane.xlu0 %1261
        %v1263 = vsel %vm1057, %v1259, -inf
        %1264 = vmax.xlane.f32.xlu0 %v1263
        %v1265 = vpop.xlane.xlu0 %1264
        %v1266 = vsub.f32 %v1258, %v1262
        %v1267 = vsub.f32 %v1259, %v1265
        %v1268 = vmul.f32 %v1266, 1.442695
        %v1269 = vpow.pop %v1268
        %v1270 = vmul.f32 %v1267, 1.442695
        %v1271 = vpow.pop %v1270
        %v1272 = vsel %vm1057, %v1269, 0.0
        %1273 = vadd.xlane.f32.xlu0 %v1272
        %v1274 = vpop.xlane.xlu0 %1273
        %v1275 = vsel %vm1057, %v1271, 0.0
        %1276 = vadd.xlane.f32.xlu0 %v1275
        %v1277 = vpop.xlane.xlu0 %1276
        %v1278 = vrcp.pop %v1274
        %v1279 = vrcp.pop %v1277
        %v1280 = vmul.f32 %v1269, %v1278
        %v1281 = vmul.f32 %v1271, %v1279
        %1282 = vrot.lane.b32.xlu0 %v957, 60
        %v1283 = vpop.permute.xlu0 %1282
        %1284 = vrot.lane.b32.xlu0 %v962, 60
        %v1285 = vpop.permute.xlu0 %1284
        %v1289 = vsel %vm1057, %v1280, 0
        %v1292 = vsel %vm1057, %v1281, 0
        %1294 = vmatprep.subr.mxu0 0.0
        %1295 = vmatpush1.msra.mxu0 %v1283
        %1296 = vmatprep.subr.mxu0 0.0
        %1297 = vmatpush1.msra.mxu0 %v1285
        %1298 = vmatprep.subr.mxu0 0.0
        %1299 = vmatpush1.msra.mxu0 0.0
        %1300 = vmatprep.subr.mxu0 0.0
        %1301 = vmatpush1.msra.mxu0 0.0
        %1302 = vmatprep.subr.mxu0 0.0
        %1303 = vmatpush1.msra.mxu0 0.0
        %1304 = vmatprep.subr.mxu0 0.0
        %1305 = vmatpush1.msra.mxu0 0.0
        %1306 = vmatprep.subr.mxu0 0.0
        %1307 = vmatpush1.msra.mxu0 0.0
        %1308 = vmatprep.subr.mxu0 0.0
        %1309 = vmatpush1.msra.mxu0 0.0
        %1310 = vmatprep.subr.mxu0 0.0
        %1311 = vmatpush1.msra.mxu0 0.0
        %1312 = vmatprep.subr.mxu0 0.0
        %1313 = vmatpush1.msra.mxu0 0.0
        %1314 = vmatprep.subr.mxu0 0.0
        %1315 = vmatpush1.msra.mxu0 0.0
        %1316 = vmatprep.subr.mxu0 0.0
        %1317 = vmatpush1.msra.mxu0 0.0
        %1318 = vmatprep.subr.mxu0 0.0
        %1319 = vmatpush1.msra.mxu0 0.0
        %1320 = vmatprep.subr.mxu0 0.0
        %1321 = vmatpush1.msra.mxu0 0.0
        %1322 = vmatprep.subr.mxu0 0.0
        %1323 = vmatpush1.msra.mxu0 0.0
        %1324 = vmatprep.subr.mxu0 0.0
        %1325 = vmatpush1.msra.mxu0 0.0
        %1326 = vmatprep.subr.mxu0 0.0
        %1327 = vmatpush1.msra.mxu0 0.0
        %1328 = vmatprep.subr.mxu0 0.0
        %1329 = vmatpush1.msra.mxu0 0.0
        %1330 = vmatprep.subr.mxu0 0.0
        %1331 = vmatpush1.msra.mxu0 0.0
        %1332 = vmatprep.subr.mxu0 0.0
        %1333 = vmatpush1.msra.mxu0 0.0
        %1334 = vmatprep.subr.mxu0 0.0
        %1335 = vmatpush1.msra.mxu0 0.0
        %1336 = vmatprep.subr.mxu0 0.0
        %1337 = vmatpush1.msra.mxu0 0.0
        %1338 = vmatprep.subr.mxu0 0.0
        %1339 = vmatpush1.msra.mxu0 0.0
        %1340 = vmatprep.subr.mxu0 0.0
        %1341 = vmatpush1.msra.mxu0 0.0
        %1342 = vmatprep.subr.mxu0 0.0
        %1343 = vmatpush1.msra.mxu0 0.0
        %1344 = vmatprep.subr.mxu0 0.0
        %1345 = vmatpush1.msra.mxu0 0.0
        %1346 = vmatprep.subr.mxu0 0.0
        %1347 = vmatpush1.msra.mxu0 0.0
        %1348 = vmatprep.subr.mxu0 0.0
        %1349 = vmatpush1.msra.mxu0 0.0
        %1350 = vmatprep.subr.mxu0 0.0
        %1351 = vmatpush1.msra.mxu0 0.0
        %1352 = vmatprep.subr.mxu0 0.0
        %1353 = vmatpush1.msra.mxu0 0.0
        %1354 = vmatprep.subr.mxu0 0.0
        %1355 = vmatpush1.msra.mxu0 0.0
        %1356 = vmatprep.subr.mxu0 0.0
        %1357 = vmatpush1.msra.mxu0 0.0
        %1358 = vmatprep.mubr.f32.mxu0 0.0
        %1359 = vmatmul.mubr.f32.gmra.mrb[0].mxu0 %v1289
        %v1360 = vpop.f32.mrb[0].mxu0
        %v1361 = vadd.f32 0.0, %v1360
        %v1362 = vpop.f32.mrb[0].mxu0
        %1363 = vmatprep.mubr.f32.mxu0 0.0
        %1364 = vmatmul.mubr.f32.gmra.mrb[0].mxu0 %v1292
        %v1365 = vpop.f32.mrb[0].mxu0
        %v1366 = vadd.f32 0.0, %v1365
        %v1367 = vpop.f32.mrb[0].mxu0
        %1368 = vdwg.mxu0
        %1369 = vrot.lane.b32.xlu0 %v957, 120
        %v1370 = vpop.permute.xlu0 %1369
        %1371 = vrot.lane.b32.xlu0 %v962, 120
        %v1372 = vpop.permute.xlu0 %1371
        %1373 = vrot.lane.b32.xlu0 %v957, 88
        %v1374 = vpop.permute.xlu0 %1373
        %1375 = vrot.lane.b32.xlu0 %v962, 88
        %v1376 = vpop.permute.xlu0 %1375
        %v1377 = vsel %vm971, %v1370, 0
        %v1379 = vsel %vm971, %v1372, 0
        %v1381 = vsel %vm971, %v1374, 0
        %v1383 = vsel %vm971, %v1376, 0
        %1385 = vmatprep.subr.mxu0 0.0
        %1386 = vmatpush1.xpose.msra.mxu0 %v1381
        %1387 = vmatprep.subr.mxu0 0.0
        %1388 = vmatpush1.xpose.msra.mxu0 %v1383
        %1389 = vmatprep.subr.mxu0 0.0
        %1390 = vmatpush1.xpose.msra.mxu0 0.0
        %1391 = vmatprep.subr.mxu0 0.0
        %1392 = vmatpush1.xpose.msra.mxu0 0.0
        %1393 = vmatprep.subr.mxu0 0.0
        %1394 = vmatpush1.xpose.msra.mxu0 0.0
        %1395 = vmatprep.subr.mxu0 0.0
        %1396 = vmatpush1.xpose.msra.mxu0 0.0
        %1397 = vmatprep.subr.mxu0 0.0
        %1398 = vmatpush1.xpose.msra.mxu0 0.0
        %1399 = vmatprep.subr.mxu0 0.0
        %1400 = vmatpush1.xpose.msra.mxu0 0.0
        %1401 = vmatprep.subr.mxu0 0.0
        %1402 = vmatpush1.xpose.msra.mxu0 0.0
        %1403 = vmatprep.subr.mxu0 0.0
        %1404 = vmatpush1.xpose.msra.mxu0 0.0
        %1405 = vmatprep.subr.mxu0 0.0
        %1406 = vmatpush1.xpose.msra.mxu0 0.0
        %1407 = vmatprep.subr.mxu0 0.0
        %1408 = vmatpush1.xpose.msra.mxu0 0.0
        %1409 = vmatprep.subr.mxu0 0.0
        %1410 = vmatpush1.xpose.msra.mxu0 0.0
        %1411 = vmatprep.subr.mxu0 0.0
        %1412 = vmatpush1.xpose.msra.mxu0 0.0
        %1413 = vmatprep.subr.mxu0 0.0
        %1414 = vmatpush1.xpose.msra.mxu0 0.0
        %1415 = vmatprep.subr.mxu0 0.0
        %1416 = vmatpush1.xpose.msra.mxu0 0.0
        %1417 = vmatprep.subr.mxu0 0.0
        %1418 = vmatpush1.xpose.msra.mxu0 0.0
        %1419 = vmatprep.subr.mxu0 0.0
        %1420 = vmatpush1.xpose.msra.mxu0 0.0
        %1421 = vmatprep.subr.mxu0 0.0
        %1422 = vmatpush1.xpose.msra.mxu0 0.0
        %1423 = vmatprep.subr.mxu0 0.0
        %1424 = vmatpush1.xpose.msra.mxu0 0.0
        %1425 = vmatprep.subr.mxu0 0.0
        %1426 = vmatpush1.xpose.msra.mxu0 0.0
        %1427 = vmatprep.subr.mxu0 0.0
        %1428 = vmatpush1.xpose.msra.mxu0 0.0
        %1429 = vmatprep.subr.mxu0 0.0
        %1430 = vmatpush1.xpose.msra.mxu0 0.0
        %1431 = vmatprep.subr.mxu0 0.0
        %1432 = vmatpush1.xpose.msra.mxu0 0.0
        %1433 = vmatprep.subr.mxu0 0.0
        %1434 = vmatpush1.xpose.msra.mxu0 0.0
        %1435 = vmatprep.subr.mxu0 0.0
        %1436 = vmatpush1.xpose.msra.mxu0 0.0
        %1437 = vmatprep.subr.mxu0 0.0
        %1438 = vmatpush1.xpose.msra.mxu0 0.0
        %1439 = vmatprep.subr.mxu0 0.0
        %1440 = vmatpush1.xpose.msra.mxu0 0.0
        %1441 = vmatprep.subr.mxu0 0.0
        %1442 = vmatpush1.xpose.msra.mxu0 0.0
        %1443 = vmatprep.subr.mxu0 0.0
        %1444 = vmatpush1.xpose.msra.mxu0 0.0
        %1445 = vmatprep.subr.mxu0 0.0
        %1446 = vmatpush1.xpose.msra.mxu0 0.0
        %1447 = vmatprep.subr.mxu0 0.0
        %1448 = vmatpush1.xpose.msra.mxu0 0.0
        %1449 = vmatprep.mubr.f32.mxu0 0.0
        %1450 = vmatmul.mubr.f32.gmra.mrb[0].mxu0 %v1377
        %v1451 = vpop.f32.mrb[0].mxu0
        %v1452 = vadd.f32 0.0, %v1451
        %v1453 = vpop.f32.mrb[0].mxu0
        %1454 = vmatprep.mubr.f32.mxu0 0.0
        %1455 = vmatmul.mubr.f32.gmra.mrb[0].mxu0 %v1379
        %v1456 = vpop.f32.mrb[0].mxu0
        %v1457 = vadd.f32 0.0, %v1456
        %v1458 = vpop.f32.mrb[0].mxu0
        %1459 = vdwg.mxu0
        %v1460 = vmul.f32 %v1452, 0.5
        %v1461 = vmul.f32 %v1457, 0.5
        %v1462 = vsel %vm1057, %v1460, -inf
        %1463 = vmax.xlane.f32.xlu0 %v1462
        %v1464 = vpop.xlane.xlu0 %1463
        %v1465 = vsel %vm1057, %v1461, -inf
        %1466 = vmax.xlane.f32.xlu0 %v1465
        %v1467 = vpop.xlane.xlu0 %1466
        %v1468 = vsub.f32 %v1460, %v1464
        %v1469 = vsub.f32 %v1461, %v1467
        %v1470 = vmul.f32 %v1468, 1.442695
        %v1471 = vpow.pop %v1470
        %v1472 = vmul.f32 %v1469, 1.442695
        %v1473 = vpow.pop %v1472
        %v1474 = vsel %vm1057, %v1471, 0.0
        %1475 = vadd.xlane.f32.xlu0 %v1474
        %v1476 = vpop.xlane.xlu0 %1475
        %v1477 = vsel %vm1057, %v1473, 0.0
        %1478 = vadd.xlane.f32.xlu0 %v1477
        %v1479 = vpop.xlane.xlu0 %1478
        %v1480 = vrcp.pop %v1476
        %v1481 = vrcp.pop %v1479
        %v1482 = vmul.f32 %v1471, %v1480
        %v1483 = vmul.f32 %v1473, %v1481
        %1484 = vrot.lane.b32.xlu0 %v957, 56
        %v1485 = vpop.permute.xlu0 %1484
        %1486 = vrot.lane.b32.xlu0 %v962, 56
        %v1487 = vpop.permute.xlu0 %1486
        %v1491 = vsel %vm1057, %v1482, 0
        %v1494 = vsel %vm1057, %v1483, 0
        %1496 = vmatprep.subr.mxu0 0.0
        %1497 = vmatpush1.msra.mxu0 %v1485
        %1498 = vmatprep.subr.mxu0 0.0
        %1499 = vmatpush1.msra.mxu0 %v1487
        %1500 = vmatprep.subr.mxu0 0.0
        %1501 = vmatpush1.msra.mxu0 0.0
        %1502 = vmatprep.subr.mxu0 0.0
        %1503 = vmatpush1.msra.mxu0 0.0
        %1504 = vmatprep.subr.mxu0 0.0
        %1505 = vmatpush1.msra.mxu0 0.0
        %1506 = vmatprep.subr.mxu0 0.0
        %1507 = vmatpush1.msra.mxu0 0.0
        %1508 = vmatprep.subr.mxu0 0.0
        %1509 = vmatpush1.msra.mxu0 0.0
        %1510 = vmatprep.subr.mxu0 0.0
        %1511 = vmatpush1.msra.mxu0 0.0
        %1512 = vmatprep.subr.mxu0 0.0
        %1513 = vmatpush1.msra.mxu0 0.0
        %1514 = vmatprep.subr.mxu0 0.0
        %1515 = vmatpush1.msra.mxu0 0.0
        %1516 = vmatprep.subr.mxu0 0.0
        %1517 = vmatpush1.msra.mxu0 0.0
        %1518 = vmatprep.subr.mxu0 0.0
        %1519 = vmatpush1.msra.mxu0 0.0
        %1520 = vmatprep.subr.mxu0 0.0
        %1521 = vmatpush1.msra.mxu0 0.0
        %1522 = vmatprep.subr.mxu0 0.0
        %1523 = vmatpush1.msra.mxu0 0.0
        %1524 = vmatprep.subr.mxu0 0.0
        %1525 = vmatpush1.msra.mxu0 0.0
        %1526 = vmatprep.subr.mxu0 0.0
        %1527 = vmatpush1.msra.mxu0 0.0
        %1528 = vmatprep.subr.mxu0 0.0
        %1529 = vmatpush1.msra.mxu0 0.0
        %1530 = vmatprep.subr.mxu0 0.0
        %1531 = vmatpush1.msra.mxu0 0.0
        %1532 = vmatprep.subr.mxu0 0.0
        %1533 = vmatpush1.msra.mxu0 0.0
        %1534 = vmatprep.subr.mxu0 0.0
        %1535 = vmatpush1.msra.mxu0 0.0
        %1536 = vmatprep.subr.mxu0 0.0
        %1537 = vmatpush1.msra.mxu0 0.0
        %1538 = vmatprep.subr.mxu0 0.0
        %1539 = vmatpush1.msra.mxu0 0.0
        %1540 = vmatprep.subr.mxu0 0.0
        %1541 = vmatpush1.msra.mxu0 0.0
        %1542 = vmatprep.subr.mxu0 0.0
        %1543 = vmatpush1.msra.mxu0 0.0
        %1544 = vmatprep.subr.mxu0 0.0
        %1545 = vmatpush1.msra.mxu0 0.0
        %1546 = vmatprep.subr.mxu0 0.0
        %1547 = vmatpush1.msra.mxu0 0.0
        %1548 = vmatprep.subr.mxu0 0.0
        %1549 = vmatpush1.msra.mxu0 0.0
        %1550 = vmatprep.subr.mxu0 0.0
        %1551 = vmatpush1.msra.mxu0 0.0
        %1552 = vmatprep.subr.mxu0 0.0
        %1553 = vmatpush1.msra.mxu0 0.0
        %1554 = vmatprep.subr.mxu0 0.0
        %1555 = vmatpush1.msra.mxu0 0.0
        %1556 = vmatprep.subr.mxu0 0.0
        %1557 = vmatpush1.msra.mxu0 0.0
        %1558 = vmatprep.subr.mxu0 0.0
        %1559 = vmatpush1.msra.mxu0 0.0
        %1560 = vmatprep.mubr.f32.mxu0 0.0
        %1561 = vmatmul.mubr.f32.gmra.mrb[0].mxu0 %v1491
        %v1562 = vpop.f32.mrb[0].mxu0
        %v1563 = vadd.f32 0.0, %v1562
        %v1564 = vpop.f32.mrb[0].mxu0
        %1565 = vmatprep.mubr.f32.mxu0 0.0
        %1566 = vmatmul.mubr.f32.gmra.mrb[0].mxu0 %v1494
        %v1567 = vpop.f32.mrb[0].mxu0
        %v1568 = vadd.f32 0.0, %v1567
        %v1569 = vpop.f32.mrb[0].mxu0
        %1570 = vdwg.mxu0
        %1571 = vrot.lane.b32.xlu0 %v957, 116
        %v1572 = vpop.permute.xlu0 %1571
        %1573 = vrot.lane.b32.xlu0 %v962, 116
        %v1574 = vpop.permute.xlu0 %1573
        %1575 = vrot.lane.b32.xlu0 %v957, 84
        %v1576 = vpop.permute.xlu0 %1575
        %1577 = vrot.lane.b32.xlu0 %v962, 84
        %v1578 = vpop.permute.xlu0 %1577
        %v1579 = vsel %vm971, %v1572, 0
        %v1581 = vsel %vm971, %v1574, 0
        %v1583 = vsel %vm971, %v1576, 0
        %v1585 = vsel %vm971, %v1578, 0
        %1587 = vmatprep.subr.mxu0 0.0
        %1588 = vmatpush1.xpose.msra.mxu0 %v1583
        %1589 = vmatprep.subr.mxu0 0.0
        %1590 = vmatpush1.xpose.msra.mxu0 %v1585
        %1591 = vmatprep.subr.mxu0 0.0
        %1592 = vmatpush1.xpose.msra.mxu0 0.0
        %1593 = vmatprep.subr.mxu0 0.0
        %1594 = vmatpush1.xpose.msra.mxu0 0.0
        %1595 = vmatprep.subr.mxu0 0.0
        %1596 = vmatpush1.xpose.msra.mxu0 0.0
        %1597 = vmatprep.subr.mxu0 0.0
        %1598 = vmatpush1.xpose.msra.mxu0 0.0
        %1599 = vmatprep.subr.mxu0 0.0
        %1600 = vmatpush1.xpose.msra.mxu0 0.0
        %1601 = vmatprep.subr.mxu0 0.0
        %1602 = vmatpush1.xpose.msra.mxu0 0.0
        %1603 = vmatprep.subr.mxu0 0.0
        %1604 = vmatpush1.xpose.msra.mxu0 0.0
        %1605 = vmatprep.subr.mxu0 0.0
        %1606 = vmatpush1.xpose.msra.mxu0 0.0
        %1607 = vmatprep.subr.mxu0 0.0
        %1608 = vmatpush1.xpose.msra.mxu0 0.0
        %1609 = vmatprep.subr.mxu0 0.0
        %1610 = vmatpush1.xpose.msra.mxu0 0.0
        %1611 = vmatprep.subr.mxu0 0.0
        %1612 = vmatpush1.xpose.msra.mxu0 0.0
        %1613 = vmatprep.subr.mxu0 0.0
        %1614 = vmatpush1.xpose.msra.mxu0 0.0
        %1615 = vmatprep.subr.mxu0 0.0
        %1616 = vmatpush1.xpose.msra.mxu0 0.0
        %1617 = vmatprep.subr.mxu0 0.0
        %1618 = vmatpush1.xpose.msra.mxu0 0.0
        %1619 = vmatprep.subr.mxu0 0.0
        %1620 = vmatpush1.xpose.msra.mxu0 0.0
        %1621 = vmatprep.subr.mxu0 0.0
        %1622 = vmatpush1.xpose.msra.mxu0 0.0
        %1623 = vmatprep.subr.mxu0 0.0
        %1624 = vmatpush1.xpose.msra.mxu0 0.0
        %1625 = vmatprep.subr.mxu0 0.0
        %1626 = vmatpush1.xpose.msra.mxu0 0.0
        %1627 = vmatprep.subr.mxu0 0.0
        %1628 = vmatpush1.xpose.msra.mxu0 0.0
        %1629 = vmatprep.subr.mxu0 0.0
        %1630 = vmatpush1.xpose.msra.mxu0 0.0
        %1631 = vmatprep.subr.mxu0 0.0
        %1632 = vmatpush1.xpose.msra.mxu0 0.0
        %1633 = vmatprep.subr.mxu0 0.0
        %1634 = vmatpush1.xpose.msra.mxu0 0.0
        %1635 = vmatprep.subr.mxu0 0.0
        %1636 = vmatpush1.xpose.msra.mxu0 0.0
        %1637 = vmatprep.subr.mxu0 0.0
        %1638 = vmatpush1.xpose.msra.mxu0 0.0
        %1639 = vmatprep.subr.mxu0 0.0
        %1640 = vmatpush1.xpose.msra.mxu0 0.0
        %1641 = vmatprep.subr.mxu0 0.0
        %1642 = vmatpush1.xpose.msra.mxu0 0.0
        %1643 = vmatprep.subr.mxu0 0.0
        %1644 = vmatpush1.xpose.msra.mxu0 0.0
        %1645 = vmatprep.subr.mxu0 0.0
        %1646 = vmatpush1.xpose.msra.mxu0 0.0
        %1647 = vmatprep.subr.mxu0 0.0
        %1648 = vmatpush1.xpose.msra.mxu0 0.0
        %1649 = vmatprep.subr.mxu0 0.0
        %1650 = vmatpush1.xpose.msra.mxu0 0.0
        %1651 = vmatprep.mubr.f32.mxu0 0.0
        %1652 = vmatmul.mubr.f32.gmra.mrb[0].mxu0 %v1579
        %v1653 = vpop.f32.mrb[0].mxu0
        %v1654 = vadd.f32 0.0, %v1653
        %v1655 = vpop.f32.mrb[0].mxu0
        %1656 = vmatprep.mubr.f32.mxu0 0.0
        %1657 = vmatmul.mubr.f32.gmra.mrb[0].mxu0 %v1581
        %v1658 = vpop.f32.mrb[0].mxu0
        %v1659 = vadd.f32 0.0, %v1658
        %v1660 = vpop.f32.mrb[0].mxu0
        %1661 = vdwg.mxu0
        %v1662 = vmul.f32 %v1654, 0.5
        %v1663 = vmul.f32 %v1659, 0.5
        %v1664 = vsel %vm1057, %v1662, -inf
        %1665 = vmax.xlane.f32.xlu0 %v1664
        %v1666 = vpop.xlane.xlu0 %1665
        %v1667 = vsel %vm1057, %v1663, -inf
        %1668 = vmax.xlane.f32.xlu0 %v1667
        %v1669 = vpop.xlane.xlu0 %1668
        %v1670 = vsub.f32 %v1662, %v1666
        %v1671 = vsub.f32 %v1663, %v1669
        %v1672 = vmul.f32 %v1670, 1.442695
        %v1673 = vpow.pop %v1672
        %v1674 = vmul.f32 %v1671, 1.442695
        %v1675 = vpow.pop %v1674
        %v1676 = vsel %vm1057, %v1673, 0.0
        %1677 = vadd.xlane.f32.xlu0 %v1676
        %v1678 = vpop.xlane.xlu0 %1677
        %v1679 = vsel %vm1057, %v1675, 0.0
        %1680 = vadd.xlane.f32.xlu0 %v1679
        %v1681 = vpop.xlane.xlu0 %1680
        %v1682 = vrcp.pop %v1678
        %v1683 = vrcp.pop %v1681
        %v1684 = vmul.f32 %v1673, %v1682
        %v1685 = vmul.f32 %v1675, %v1683
        %1686 = vrot.lane.b32.xlu0 %v957, 52
        %v1687 = vpop.permute.xlu0 %1686
        %1688 = vrot.lane.b32.xlu0 %v962, 52
        %v1689 = vpop.permute.xlu0 %1688
        %v1693 = vsel %vm1057, %v1684, 0
        %v1696 = vsel %vm1057, %v1685, 0
        %1698 = vmatprep.subr.mxu0 0.0
        %1699 = vmatpush1.msra.mxu0 %v1687
        %1700 = vmatprep.subr.mxu0 0.0
        %1701 = vmatpush1.msra.mxu0 %v1689
        %1702 = vmatprep.subr.mxu0 0.0
        %1703 = vmatpush1.msra.mxu0 0.0
        %1704 = vmatprep.subr.mxu0 0.0
        %1705 = vmatpush1.msra.mxu0 0.0
        %1706 = vmatprep.subr.mxu0 0.0
        %1707 = vmatpush1.msra.mxu0 0.0
        %1708 = vmatprep.subr.mxu0 0.0
        %1709 = vmatpush1.msra.mxu0 0.0
        %1710 = vmatprep.subr.mxu0 0.0
        %1711 = vmatpush1.msra.mxu0 0.0
        %1712 = vmatprep.subr.mxu0 0.0
        %1713 = vmatpush1.msra.mxu0 0.0
        %1714 = vmatprep.subr.mxu0 0.0
        %1715 = vmatpush1.msra.mxu0 0.0
        %1716 = vmatprep.subr.mxu0 0.0
        %1717 = vmatpush1.msra.mxu0 0.0
        %1718 = vmatprep.subr.mxu0 0.0
        %1719 = vmatpush1.msra.mxu0 0.0
        %1720 = vmatprep.subr.mxu0 0.0
        %1721 = vmatpush1.msra.mxu0 0.0
        %1722 = vmatprep.subr.mxu0 0.0
        %1723 = vmatpush1.msra.mxu0 0.0
        %1724 = vmatprep.subr.mxu0 0.0
        %1725 = vmatpush1.msra.mxu0 0.0
        %1726 = vmatprep.subr.mxu0 0.0
        %1727 = vmatpush1.msra.mxu0 0.0
        %1728 = vmatprep.subr.mxu0 0.0
        %1729 = vmatpush1.msra.mxu0 0.0
        %1730 = vmatprep.subr.mxu0 0.0
        %1731 = vmatpush1.msra.mxu0 0.0
        %1732 = vmatprep.subr.mxu0 0.0
        %1733 = vmatpush1.msra.mxu0 0.0
        %1734 = vmatprep.subr.mxu0 0.0
        %1735 = vmatpush1.msra.mxu0 0.0
        %1736 = vmatprep.subr.mxu0 0.0
        %1737 = vmatpush1.msra.mxu0 0.0
        %1738 = vmatprep.subr.mxu0 0.0
        %1739 = vmatpush1.msra.mxu0 0.0
        %1740 = vmatprep.subr.mxu0 0.0
        %1741 = vmatpush1.msra.mxu0 0.0
        %1742 = vmatprep.subr.mxu0 0.0
        %1743 = vmatpush1.msra.mxu0 0.0
        %1744 = vmatprep.subr.mxu0 0.0
        %1745 = vmatpush1.msra.mxu0 0.0
        %1746 = vmatprep.subr.mxu0 0.0
        %1747 = vmatpush1.msra.mxu0 0.0
        %1748 = vmatprep.subr.mxu0 0.0
        %1749 = vmatpush1.msra.mxu0 0.0
        %1750 = vmatprep.subr.mxu0 0.0
        %1751 = vmatpush1.msra.mxu0 0.0
        %1752 = vmatprep.subr.mxu0 0.0
        %1753 = vmatpush1.msra.mxu0 0.0
        %1754 = vmatprep.subr.mxu0 0.0
        %1755 = vmatpush1.msra.mxu0 0.0
        %1756 = vmatprep.subr.mxu0 0.0
        %1757 = vmatpush1.msra.mxu0 0.0
        %1758 = vmatprep.subr.mxu0 0.0
        %1759 = vmatpush1.msra.mxu0 0.0
        %1760 = vmatprep.subr.mxu0 0.0
        %1761 = vmatpush1.msra.mxu0 0.0
        %1762 = vmatprep.mubr.f32.mxu0 0.0
        %1763 = vmatmul.mubr.f32.gmra.mrb[0].mxu0 %v1693
        %v1764 = vpop.f32.mrb[0].mxu0
        %v1765 = vadd.f32 0.0, %v1764
        %v1766 = vpop.f32.mrb[0].mxu0
        %1767 = vmatprep.mubr.f32.mxu0 0.0
        %1768 = vmatmul.mubr.f32.gmra.mrb[0].mxu0 %v1696
        %v1769 = vpop.f32.mrb[0].mxu0
        %v1770 = vadd.f32 0.0, %v1769
        %v1771 = vpop.f32.mrb[0].mxu0
        %1772 = vdwg.mxu0
        %1773 = vrot.lane.b32.xlu0 %v957, 112
        %v1774 = vpop.permute.xlu0 %1773
        %1775 = vrot.lane.b32.xlu0 %v962, 112
        %v1776 = vpop.permute.xlu0 %1775
        %1777 = vrot.lane.b32.xlu0 %v957, 80
        %v1778 = vpop.permute.xlu0 %1777
        %1779 = vrot.lane.b32.xlu0 %v962, 80
        %v1780 = vpop.permute.xlu0 %1779
        %v1781 = vsel %vm971, %v1774, 0
        %v1783 = vsel %vm971, %v1776, 0
        %v1785 = vsel %vm971, %v1778, 0
        %v1787 = vsel %vm971, %v1780, 0
        %1789 = vmatprep.subr.mxu0 0.0
        %1790 = vmatpush1.xpose.msra.mxu0 %v1785
        %1791 = vmatprep.subr.mxu0 0.0
        %1792 = vmatpush1.xpose.msra.mxu0 %v1787
        %1793 = vmatprep.subr.mxu0 0.0
        %1794 = vmatpush1.xpose.msra.mxu0 0.0
        %1795 = vmatprep.subr.mxu0 0.0
        %1796 = vmatpush1.xpose.msra.mxu0 0.0
        %1797 = vmatprep.subr.mxu0 0.0
        %1798 = vmatpush1.xpose.msra.mxu0 0.0
        %1799 = vmatprep.subr.mxu0 0.0
        %1800 = vmatpush1.xpose.msra.mxu0 0.0
        %1801 = vmatprep.subr.mxu0 0.0
        %1802 = vmatpush1.xpose.msra.mxu0 0.0
        %1803 = vmatprep.subr.mxu0 0.0
        %1804 = vmatpush1.xpose.msra.mxu0 0.0
        %1805 = vmatprep.subr.mxu0 0.0
        %1806 = vmatpush1.xpose.msra.mxu0 0.0
        %1807 = vmatprep.subr.mxu0 0.0
        %1808 = vmatpush1.xpose.msra.mxu0 0.0
        %1809 = vmatprep.subr.mxu0 0.0
        %1810 = vmatpush1.xpose.msra.mxu0 0.0
        %1811 = vmatprep.subr.mxu0 0.0
        %1812 = vmatpush1.xpose.msra.mxu0 0.0
        %1813 = vmatprep.subr.mxu0 0.0
        %1814 = vmatpush1.xpose.msra.mxu0 0.0
        %1815 = vmatprep.subr.mxu0 0.0
        %1816 = vmatpush1.xpose.msra.mxu0 0.0
        %1817 = vmatprep.subr.mxu0 0.0
        %1818 = vmatpush1.xpose.msra.mxu0 0.0
        %1819 = vmatprep.subr.mxu0 0.0
        %1820 = vmatpush1.xpose.msra.mxu0 0.0
        %1821 = vmatprep.subr.mxu0 0.0
        %1822 = vmatpush1.xpose.msra.mxu0 0.0
        %1823 = vmatprep.subr.mxu0 0.0
        %1824 = vmatpush1.xpose.msra.mxu0 0.0
        %1825 = vmatprep.subr.mxu0 0.0
        %1826 = vmatpush1.xpose.msra.mxu0 0.0
        %1827 = vmatprep.subr.mxu0 0.0
        %1828 = vmatpush1.xpose.msra.mxu0 0.0
        %1829 = vmatprep.subr.mxu0 0.0
        %1830 = vmatpush1.xpose.msra.mxu0 0.0
        %1831 = vmatprep.subr.mxu0 0.0
        %1832 = vmatpush1.xpose.msra.mxu0 0.0
        %1833 = vmatprep.subr.mxu0 0.0
        %1834 = vmatpush1.xpose.msra.mxu0 0.0
        %1835 = vmatprep.subr.mxu0 0.0
        %1836 = vmatpush1.xpose.msra.mxu0 0.0
        %1837 = vmatprep.subr.mxu0 0.0
        %1838 = vmatpush1.xpose.msra.mxu0 0.0
        %1839 = vmatprep.subr.mxu0 0.0
        %1840 = vmatpush1.xpose.msra.mxu0 0.0
        %1841 = vmatprep.subr.mxu0 0.0
        %1842 = vmatpush1.xpose.msra.mxu0 0.0
        %1843 = vmatprep.subr.mxu0 0.0
        %1844 = vmatpush1.xpose.msra.mxu0 0.0
        %1845 = vmatprep.subr.mxu0 0.0
        %1846 = vmatpush1.xpose.msra.mxu0 0.0
        %1847 = vmatprep.subr.mxu0 0.0
        %1848 = vmatpush1.xpose.msra.mxu0 0.0
        %1849 = vmatprep.subr.mxu0 0.0
        %1850 = vmatpush1.xpose.msra.mxu0 0.0
        %1851 = vmatprep.subr.mxu0 0.0
        %1852 = vmatpush1.xpose.msra.mxu0 0.0
        %1853 = vmatprep.mubr.f32.mxu0 0.0
        %1854 = vmatmul.mubr.f32.gmra.mrb[0].mxu0 %v1781
        %v1855 = vpop.f32.mrb[0].mxu0
        %v1856 = vadd.f32 0.0, %v1855
        %v1857 = vpop.f32.mrb[0].mxu0
        %1858 = vmatprep.mubr.f32.mxu0 0.0
        %1859 = vmatmul.mubr.f32.gmra.mrb[0].mxu0 %v1783
        %v1860 = vpop.f32.mrb[0].mxu0
        %v1861 = vadd.f32 0.0, %v1860
        %v1862 = vpop.f32.mrb[0].mxu0
        %1863 = vdwg.mxu0
        %v1864 = vmul.f32 %v1856, 0.5
        %v1865 = vmul.f32 %v1861, 0.5
        %v1866 = vsel %vm1057, %v1864, -inf
        %1867 = vmax.xlane.f32.xlu0 %v1866
        %v1868 = vpop.xlane.xlu0 %1867
        %v1869 = vsel %vm1057, %v1865, -inf
        %1870 = vmax.xlane.f32.xlu0 %v1869
        %v1871 = vpop.xlane.xlu0 %1870
        %v1872 = vsub.f32 %v1864, %v1868
        %v1873 = vsub.f32 %v1865, %v1871
        %v1874 = vmul.f32 %v1872, 1.442695
        %v1875 = vpow.pop %v1874
        %v1876 = vmul.f32 %v1873, 1.442695
        %v1877 = vpow.pop %v1876
        %v1878 = vsel %vm1057, %v1875, 0.0
        %1879 = vadd.xlane.f32.xlu0 %v1878
        %v1880 = vpop.xlane.xlu0 %1879
        %v1881 = vsel %vm1057, %v1877, 0.0
        %1882 = vadd.xlane.f32.xlu0 %v1881
        %v1883 = vpop.xlane.xlu0 %1882
        %v1884 = vrcp.pop %v1880
        %v1885 = vrcp.pop %v1883
        %v1886 = vmul.f32 %v1875, %v1884
        %v1887 = vmul.f32 %v1877, %v1885
        %1888 = vrot.lane.b32.xlu0 %v957, 48
        %v1889 = vpop.permute.xlu0 %1888
        %1890 = vrot.lane.b32.xlu0 %v962, 48
        %v1891 = vpop.permute.xlu0 %1890
        %v1895 = vsel %vm1057, %v1886, 0
        %v1898 = vsel %vm1057, %v1887, 0
        %1900 = vmatprep.subr.mxu0 0.0
        %1901 = vmatpush1.msra.mxu0 %v1889
        %1902 = vmatprep.subr.mxu0 0.0
        %1903 = vmatpush1.msra.mxu0 %v1891
        %1904 = vmatprep.subr.mxu0 0.0
        %1905 = vmatpush1.msra.mxu0 0.0
        %1906 = vmatprep.subr.mxu0 0.0
        %1907 = vmatpush1.msra.mxu0 0.0
        %1908 = vmatprep.subr.mxu0 0.0
        %1909 = vmatpush1.msra.mxu0 0.0
        %1910 = vmatprep.subr.mxu0 0.0
        %1911 = vmatpush1.msra.mxu0 0.0
        %1912 = vmatprep.subr.mxu0 0.0
        %1913 = vmatpush1.msra.mxu0 0.0
        %1914 = vmatprep.subr.mxu0 0.0
        %1915 = vmatpush1.msra.mxu0 0.0
        %1916 = vmatprep.subr.mxu0 0.0
        %1917 = vmatpush1.msra.mxu0 0.0
        %1918 = vmatprep.subr.mxu0 0.0
        %1919 = vmatpush1.msra.mxu0 0.0
        %1920 = vmatprep.subr.mxu0 0.0
        %1921 = vmatpush1.msra.mxu0 0.0
        %1922 = vmatprep.subr.mxu0 0.0
        %1923 = vmatpush1.msra.mxu0 0.0
        %1924 = vmatprep.subr.mxu0 0.0
        %1925 = vmatpush1.msra.mxu0 0.0
        %1926 = vmatprep.subr.mxu0 0.0
        %1927 = vmatpush1.msra.mxu0 0.0
        %1928 = vmatprep.subr.mxu0 0.0
        %1929 = vmatpush1.msra.mxu0 0.0
        %1930 = vmatprep.subr.mxu0 0.0
        %1931 = vmatpush1.msra.mxu0 0.0
        %1932 = vmatprep.subr.mxu0 0.0
        %1933 = vmatpush1.msra.mxu0 0.0
        %1934 = vmatprep.subr.mxu0 0.0
        %1935 = vmatpush1.msra.mxu0 0.0
        %1936 = vmatprep.subr.mxu0 0.0
        %1937 = vmatpush1.msra.mxu0 0.0
        %1938 = vmatprep.subr.mxu0 0.0
        %1939 = vmatpush1.msra.mxu0 0.0
        %1940 = vmatprep.subr.mxu0 0.0
        %1941 = vmatpush1.msra.mxu0 0.0
        %1942 = vmatprep.subr.mxu0 0.0
        %1943 = vmatpush1.msra.mxu0 0.0
        %1944 = vmatprep.subr.mxu0 0.0
        %1945 = vmatpush1.msra.mxu0 0.0
        %1946 = vmatprep.subr.mxu0 0.0
        %1947 = vmatpush1.msra.mxu0 0.0
        %1948 = vmatprep.subr.mxu0 0.0
        %1949 = vmatpush1.msra.mxu0 0.0
        %1950 = vmatprep.subr.mxu0 0.0
        %1951 = vmatpush1.msra.mxu0 0.0
        %1952 = vmatprep.subr.mxu0 0.0
        %1953 = vmatpush1.msra.mxu0 0.0
        %1954 = vmatprep.subr.mxu0 0.0
        %1955 = vmatpush1.msra.mxu0 0.0
        %1956 = vmatprep.subr.mxu0 0.0
        %1957 = vmatpush1.msra.mxu0 0.0
        %1958 = vmatprep.subr.mxu0 0.0
        %1959 = vmatpush1.msra.mxu0 0.0
        %1960 = vmatprep.subr.mxu0 0.0
        %1961 = vmatpush1.msra.mxu0 0.0
        %1962 = vmatprep.subr.mxu0 0.0
        %1963 = vmatpush1.msra.mxu0 0.0
        %1964 = vmatprep.mubr.f32.mxu0 0.0
        %1965 = vmatmul.mubr.f32.gmra.mrb[0].mxu0 %v1895
        %v1966 = vpop.f32.mrb[0].mxu0
        %v1967 = vadd.f32 0.0, %v1966
        %v1968 = vpop.f32.mrb[0].mxu0
        %1969 = vmatprep.mubr.f32.mxu0 0.0
        %1970 = vmatmul.mubr.f32.gmra.mrb[0].mxu0 %v1898
        %v1971 = vpop.f32.mrb[0].mxu0
        %v1972 = vadd.f32 0.0, %v1971
        %v1973 = vpop.f32.mrb[0].mxu0
        %1974 = vdwg.mxu0
        %1975 = vrot.lane.b32.xlu0 %v957, 108
        %v1976 = vpop.permute.xlu0 %1975
        %1977 = vrot.lane.b32.xlu0 %v962, 108
        %v1978 = vpop.permute.xlu0 %1977
        %1979 = vrot.lane.b32.xlu0 %v957, 76
        %v1980 = vpop.permute.xlu0 %1979
        %1981 = vrot.lane.b32.xlu0 %v962, 76
        %v1982 = vpop.permute.xlu0 %1981
        %v1983 = vsel %vm971, %v1976, 0
        %v1985 = vsel %vm971, %v1978, 0
        %v1987 = vsel %vm971, %v1980, 0
        %v1989 = vsel %vm971, %v1982, 0
        %1991 = vmatprep.subr.mxu0 0.0
        %1992 = vmatpush1.xpose.msra.mxu0 %v1987
        %1993 = vmatprep.subr.mxu0 0.0
        %1994 = vmatpush1.xpose.msra.mxu0 %v1989
        %1995 = vmatprep.subr.mxu0 0.0
        %1996 = vmatpush1.xpose.msra.mxu0 0.0
        %1997 = vmatprep.subr.mxu0 0.0
        %1998 = vmatpush1.xpose.msra.mxu0 0.0
        %1999 = vmatprep.subr.mxu0 0.0
        %2000 = vmatpush1.xpose.msra.mxu0 0.0
        %2001 = vmatprep.subr.mxu0 0.0
        %2002 = vmatpush1.xpose.msra.mxu0 0.0
        %2003 = vmatprep.subr.mxu0 0.0
        %2004 = vmatpush1.xpose.msra.mxu0 0.0
        %2005 = vmatprep.subr.mxu0 0.0
        %2006 = vmatpush1.xpose.msra.mxu0 0.0
        %2007 = vmatprep.subr.mxu0 0.0
        %2008 = vmatpush1.xpose.msra.mxu0 0.0
        %2009 = vmatprep.subr.mxu0 0.0
        %2010 = vmatpush1.xpose.msra.mxu0 0.0
        %2011 = vmatprep.subr.mxu0 0.0
        %2012 = vmatpush1.xpose.msra.mxu0 0.0
        %2013 = vmatprep.subr.mxu0 0.0
        %2014 = vmatpush1.xpose.msra.mxu0 0.0
        %2015 = vmatprep.subr.mxu0 0.0
        %2016 = vmatpush1.xpose.msra.mxu0 0.0
        %2017 = vmatprep.subr.mxu0 0.0
        %2018 = vmatpush1.xpose.msra.mxu0 0.0
        %2019 = vmatprep.subr.mxu0 0.0
        %2020 = vmatpush1.xpose.msra.mxu0 0.0
        %2021 = vmatprep.subr.mxu0 0.0
        %2022 = vmatpush1.xpose.msra.mxu0 0.0
        %2023 = vmatprep.subr.mxu0 0.0
        %2024 = vmatpush1.xpose.msra.mxu0 0.0
        %2025 = vmatprep.subr.mxu0 0.0
        %2026 = vmatpush1.xpose.msra.mxu0 0.0
        %2027 = vmatprep.subr.mxu0 0.0
        %2028 = vmatpush1.xpose.msra.mxu0 0.0
        %2029 = vmatprep.subr.mxu0 0.0
        %2030 = vmatpush1.xpose.msra.mxu0 0.0
        %2031 = vmatprep.subr.mxu0 0.0
        %2032 = vmatpush1.xpose.msra.mxu0 0.0
        %2033 = vmatprep.subr.mxu0 0.0
        %2034 = vmatpush1.xpose.msra.mxu0 0.0
        %2035 = vmatprep.subr.mxu0 0.0
        %2036 = vmatpush1.xpose.msra.mxu0 0.0
        %2037 = vmatprep.subr.mxu0 0.0
        %2038 = vmatpush1.xpose.msra.mxu0 0.0
        %2039 = vmatprep.subr.mxu0 0.0
        %2040 = vmatpush1.xpose.msra.mxu0 0.0
        %2041 = vmatprep.subr.mxu0 0.0
        %2042 = vmatpush1.xpose.msra.mxu0 0.0
        %2043 = vmatprep.subr.mxu0 0.0
        %2044 = vmatpush1.xpose.msra.mxu0 0.0
        %2045 = vmatprep.subr.mxu0 0.0
        %2046 = vmatpush1.xpose.msra.mxu0 0.0
        %2047 = vmatprep.subr.mxu0 0.0
        %2048 = vmatpush1.xpose.msra.mxu0 0.0
        %2049 = vmatprep.subr.mxu0 0.0
        %2050 = vmatpush1.xpose.msra.mxu0 0.0
        %2051 = vmatprep.subr.mxu0 0.0
        %2052 = vmatpush1.xpose.msra.mxu0 0.0
        %2053 = vmatprep.subr.mxu0 0.0
        %2054 = vmatpush1.xpose.msra.mxu0 0.0
        %2055 = vmatprep.mubr.f32.mxu0 0.0
        %2056 = vmatmul.mubr.f32.gmra.mrb[0].mxu0 %v1983
        %v2057 = vpop.f32.mrb[0].mxu0
        %v2058 = vadd.f32 0.0, %v2057
        %v2059 = vpop.f32.mrb[0].mxu0
        %2060 = vmatprep.mubr.f32.mxu0 0.0
        %2061 = vmatmul.mubr.f32.gmra.mrb[0].mxu0 %v1985
        %v2062 = vpop.f32.mrb[0].mxu0
        %v2063 = vadd.f32 0.0, %v2062
        %v2064 = vpop.f32.mrb[0].mxu0
        %2065 = vdwg.mxu0
        %v2066 = vmul.f32 %v2058, 0.5
        %v2067 = vmul.f32 %v2063, 0.5
        %v2068 = vsel %vm1057, %v2066, -inf
        %2069 = vmax.xlane.f32.xlu0 %v2068
        %v2070 = vpop.xlane.xlu0 %2069
        %v2071 = vsel %vm1057, %v2067, -inf
        %2072 = vmax.xlane.f32.xlu0 %v2071
        %v2073 = vpop.xlane.xlu0 %2072
        %v2074 = vsub.f32 %v2066, %v2070
        %v2075 = vsub.f32 %v2067, %v2073
        %v2076 = vmul.f32 %v2074, 1.442695
        %v2077 = vpow.pop %v2076
        %v2078 = vmul.f32 %v2075, 1.442695
        %v2079 = vpow.pop %v2078
        %v2080 = vsel %vm1057, %v2077, 0.0
        %2081 = vadd.xlane.f32.xlu0 %v2080
        %v2082 = vpop.xlane.xlu0 %2081
        %v2083 = vsel %vm1057, %v2079, 0.0
        %2084 = vadd.xlane.f32.xlu0 %v2083
        %v2085 = vpop.xlane.xlu0 %2084
        %v2086 = vrcp.pop %v2082
        %v2087 = vrcp.pop %v2085
        %v2088 = vmul.f32 %v2077, %v2086
        %v2089 = vmul.f32 %v2079, %v2087
        %2090 = vrot.lane.b32.xlu0 %v957, 44
        %v2091 = vpop.permute.xlu0 %2090
        %2092 = vrot.lane.b32.xlu0 %v962, 44
        %v2093 = vpop.permute.xlu0 %2092
        %v2097 = vsel %vm1057, %v2088, 0
        %v2100 = vsel %vm1057, %v2089, 0
        %2102 = vmatprep.subr.mxu0 0.0
        %2103 = vmatpush1.msra.mxu0 %v2091
        %2104 = vmatprep.subr.mxu0 0.0
        %2105 = vmatpush1.msra.mxu0 %v2093
        %2106 = vmatprep.subr.mxu0 0.0
        %2107 = vmatpush1.msra.mxu0 0.0
        %2108 = vmatprep.subr.mxu0 0.0
        %2109 = vmatpush1.msra.mxu0 0.0
        %2110 = vmatprep.subr.mxu0 0.0
        %2111 = vmatpush1.msra.mxu0 0.0
        %2112 = vmatprep.subr.mxu0 0.0
        %2113 = vmatpush1.msra.mxu0 0.0
        %2114 = vmatprep.subr.mxu0 0.0
        %2115 = vmatpush1.msra.mxu0 0.0
        %2116 = vmatprep.subr.mxu0 0.0
        %2117 = vmatpush1.msra.mxu0 0.0
        %2118 = vmatprep.subr.mxu0 0.0
        %2119 = vmatpush1.msra.mxu0 0.0
        %2120 = vmatprep.subr.mxu0 0.0
        %2121 = vmatpush1.msra.mxu0 0.0
        %2122 = vmatprep.subr.mxu0 0.0
        %2123 = vmatpush1.msra.mxu0 0.0
        %2124 = vmatprep.subr.mxu0 0.0
        %2125 = vmatpush1.msra.mxu0 0.0
        %2126 = vmatprep.subr.mxu0 0.0
        %2127 = vmatpush1.msra.mxu0 0.0
        %2128 = vmatprep.subr.mxu0 0.0
        %2129 = vmatpush1.msra.mxu0 0.0
        %2130 = vmatprep.subr.mxu0 0.0
        %2131 = vmatpush1.msra.mxu0 0.0
        %2132 = vmatprep.subr.mxu0 0.0
        %2133 = vmatpush1.msra.mxu0 0.0
        %2134 = vmatprep.subr.mxu0 0.0
        %2135 = vmatpush1.msra.mxu0 0.0
        %2136 = vmatprep.subr.mxu0 0.0
        %2137 = vmatpush1.msra.mxu0 0.0
        %2138 = vmatprep.subr.mxu0 0.0
        %2139 = vmatpush1.msra.mxu0 0.0
        %2140 = vmatprep.subr.mxu0 0.0
        %2141 = vmatpush1.msra.mxu0 0.0
        %2142 = vmatprep.subr.mxu0 0.0
        %2143 = vmatpush1.msra.mxu0 0.0
        %2144 = vmatprep.subr.mxu0 0.0
        %2145 = vmatpush1.msra.mxu0 0.0
        %2146 = vmatprep.subr.mxu0 0.0
        %2147 = vmatpush1.msra.mxu0 0.0
        %2148 = vmatprep.subr.mxu0 0.0
        %2149 = vmatpush1.msra.mxu0 0.0
        %2150 = vmatprep.subr.mxu0 0.0
        %2151 = vmatpush1.msra.mxu0 0.0
        %2152 = vmatprep.subr.mxu0 0.0
        %2153 = vmatpush1.msra.mxu0 0.0
        %2154 = vmatprep.subr.mxu0 0.0
        %2155 = vmatpush1.msra.mxu0 0.0
        %2156 = vmatprep.subr.mxu0 0.0
        %2157 = vmatpush1.msra.mxu0 0.0
        %2158 = vmatprep.subr.mxu0 0.0
        %2159 = vmatpush1.msra.mxu0 0.0
        %2160 = vmatprep.subr.mxu0 0.0
        %2161 = vmatpush1.msra.mxu0 0.0
        %2162 = vmatprep.subr.mxu0 0.0
        %2163 = vmatpush1.msra.mxu0 0.0
        %2164 = vmatprep.subr.mxu0 0.0
        %2165 = vmatpush1.msra.mxu0 0.0
        %2166 = vmatprep.mubr.f32.mxu0 0.0
        %2167 = vmatmul.mubr.f32.gmra.mrb[0].mxu0 %v2097
        %v2168 = vpop.f32.mrb[0].mxu0
        %v2169 = vadd.f32 0.0, %v2168
        %v2170 = vpop.f32.mrb[0].mxu0
        %2171 = vmatprep.mubr.f32.mxu0 0.0
        %2172 = vmatmul.mubr.f32.gmra.mrb[0].mxu0 %v2100
        %v2173 = vpop.f32.mrb[0].mxu0
        %v2174 = vadd.f32 0.0, %v2173
        %v2175 = vpop.f32.mrb[0].mxu0
        %2176 = vdwg.mxu0
        %2177 = vrot.lane.b32.xlu0 %v957, 104
        %v2178 = vpop.permute.xlu0 %2177
        %2179 = vrot.lane.b32.xlu0 %v962, 104
        %v2180 = vpop.permute.xlu0 %2179
        %2181 = vrot.lane.b32.xlu0 %v957, 72
        %v2182 = vpop.permute.xlu0 %2181
        %2183 = vrot.lane.b32.xlu0 %v962, 72
        %v2184 = vpop.permute.xlu0 %2183
        %v2185 = vsel %vm971, %v2178, 0
        %v2187 = vsel %vm971, %v2180, 0
        %v2189 = vsel %vm971, %v2182, 0
        %v2191 = vsel %vm971, %v2184, 0
        %2193 = vmatprep.subr.mxu0 0.0
        %2194 = vmatpush1.xpose.msra.mxu0 %v2189
        %2195 = vmatprep.subr.mxu0 0.0
        %2196 = vmatpush1.xpose.msra.mxu0 %v2191
        %2197 = vmatprep.subr.mxu0 0.0
        %2198 = vmatpush1.xpose.msra.mxu0 0.0
        %2199 = vmatprep.subr.mxu0 0.0
        %2200 = vmatpush1.xpose.msra.mxu0 0.0
        %2201 = vmatprep.subr.mxu0 0.0
        %2202 = vmatpush1.xpose.msra.mxu0 0.0
        %2203 = vmatprep.subr.mxu0 0.0
        %2204 = vmatpush1.xpose.msra.mxu0 0.0
        %2205 = vmatprep.subr.mxu0 0.0
        %2206 = vmatpush1.xpose.msra.mxu0 0.0
        %2207 = vmatprep.subr.mxu0 0.0
        %2208 = vmatpush1.xpose.msra.mxu0 0.0
        %2209 = vmatprep.subr.mxu0 0.0
        %2210 = vmatpush1.xpose.msra.mxu0 0.0
        %2211 = vmatprep.subr.mxu0 0.0
        %2212 = vmatpush1.xpose.msra.mxu0 0.0
        %2213 = vmatprep.subr.mxu0 0.0
        %2214 = vmatpush1.xpose.msra.mxu0 0.0
        %2215 = vmatprep.subr.mxu0 0.0
        %2216 = vmatpush1.xpose.msra.mxu0 0.0
        %2217 = vmatprep.subr.mxu0 0.0
        %2218 = vmatpush1.xpose.msra.mxu0 0.0
        %2219 = vmatprep.subr.mxu0 0.0
        %2220 = vmatpush1.xpose.msra.mxu0 0.0
        %2221 = vmatprep.subr.mxu0 0.0
        %2222 = vmatpush1.xpose.msra.mxu0 0.0
        %2223 = vmatprep.subr.mxu0 0.0
        %2224 = vmatpush1.xpose.msra.mxu0 0.0
        %2225 = vmatprep.subr.mxu0 0.0
        %2226 = vmatpush1.xpose.msra.mxu0 0.0
        %2227 = vmatprep.subr.mxu0 0.0
        %2228 = vmatpush1.xpose.msra.mxu0 0.0
        %2229 = vmatprep.subr.mxu0 0.0
        %2230 = vmatpush1.xpose.msra.mxu0 0.0
        %2231 = vmatprep.subr.mxu0 0.0
        %2232 = vmatpush1.xpose.msra.mxu0 0.0
        %2233 = vmatprep.subr.mxu0 0.0
        %2234 = vmatpush1.xpose.msra.mxu0 0.0
        %2235 = vmatprep.subr.mxu0 0.0
        %2236 = vmatpush1.xpose.msra.mxu0 0.0
        %2237 = vmatprep.subr.mxu0 0.0
        %2238 = vmatpush1.xpose.msra.mxu0 0.0
        %2239 = vmatprep.subr.mxu0 0.0
        %2240 = vmatpush1.xpose.msra.mxu0 0.0
        %2241 = vmatprep.subr.mxu0 0.0
        %2242 = vmatpush1.xpose.msra.mxu0 0.0
        %2243 = vmatprep.subr.mxu0 0.0
        %2244 = vmatpush1.xpose.msra.mxu0 0.0
        %2245 = vmatprep.subr.mxu0 0.0
        %2246 = vmatpush1.xpose.msra.mxu0 0.0
        %2247 = vmatprep.subr.mxu0 0.0
        %2248 = vmatpush1.xpose.msra.mxu0 0.0
        %2249 = vmatprep.subr.mxu0 0.0
        %2250 = vmatpush1.xpose.msra.mxu0 0.0
        %2251 = vmatprep.subr.mxu0 0.0
        %2252 = vmatpush1.xpose.msra.mxu0 0.0
        %2253 = vmatprep.subr.mxu0 0.0
        %2254 = vmatpush1.xpose.msra.mxu0 0.0
        %2255 = vmatprep.subr.mxu0 0.0
        %2256 = vmatpush1.xpose.msra.mxu0 0.0
        %2257 = vmatprep.mubr.f32.mxu0 0.0
        %2258 = vmatmul.mubr.f32.gmra.mrb[0].mxu0 %v2185
        %v2259 = vpop.f32.mrb[0].mxu0
        %v2260 = vadd.f32 0.0, %v2259
        %v2261 = vpop.f32.mrb[0].mxu0
        %2262 = vmatprep.mubr.f32.mxu0 0.0
        %2263 = vmatmul.mubr.f32.gmra.mrb[0].mxu0 %v2187
        %v2264 = vpop.f32.mrb[0].mxu0
        %v2265 = vadd.f32 0.0, %v2264
        %v2266 = vpop.f32.mrb[0].mxu0
        %2267 = vdwg.mxu0
        %v2268 = vmul.f32 %v2260, 0.5
        %v2269 = vmul.f32 %v2265, 0.5
        %v2270 = vsel %vm1057, %v2268, -inf
        %2271 = vmax.xlane.f32.xlu0 %v2270
        %v2272 = vpop.xlane.xlu0 %2271
        %v2273 = vsel %vm1057, %v2269, -inf
        %2274 = vmax.xlane.f32.xlu0 %v2273
        %v2275 = vpop.xlane.xlu0 %2274
        %v2276 = vsub.f32 %v2268, %v2272
        %v2277 = vsub.f32 %v2269, %v2275
        %v2278 = vmul.f32 %v2276, 1.442695
        %v2279 = vpow.pop %v2278
        %v2280 = vmul.f32 %v2277, 1.442695
        %v2281 = vpow.pop %v2280
        %v2282 = vsel %vm1057, %v2279, 0.0
        %2283 = vadd.xlane.f32.xlu0 %v2282
        %v2284 = vpop.xlane.xlu0 %2283
        %v2285 = vsel %vm1057, %v2281, 0.0
        %2286 = vadd.xlane.f32.xlu0 %v2285
        %v2287 = vpop.xlane.xlu0 %2286
        %v2288 = vrcp.pop %v2284
        %v2289 = vrcp.pop %v2287
        %v2290 = vmul.f32 %v2279, %v2288
        %v2291 = vmul.f32 %v2281, %v2289
        %2292 = vrot.lane.b32.xlu0 %v957, 40
        %v2293 = vpop.permute.xlu0 %2292
        %2294 = vrot.lane.b32.xlu0 %v962, 40
        %v2295 = vpop.permute.xlu0 %2294
        %v2299 = vsel %vm1057, %v2290, 0
        %v2302 = vsel %vm1057, %v2291, 0
        %2304 = vmatprep.subr.mxu0 0.0
        %2305 = vmatpush1.msra.mxu0 %v2293
        %2306 = vmatprep.subr.mxu0 0.0
        %2307 = vmatpush1.msra.mxu0 %v2295
        %2308 = vmatprep.subr.mxu0 0.0
        %2309 = vmatpush1.msra.mxu0 0.0
        %2310 = vmatprep.subr.mxu0 0.0
        %2311 = vmatpush1.msra.mxu0 0.0
        %2312 = vmatprep.subr.mxu0 0.0
        %2313 = vmatpush1.msra.mxu0 0.0
        %2314 = vmatprep.subr.mxu0 0.0
        %2315 = vmatpush1.msra.mxu0 0.0
        %2316 = vmatprep.subr.mxu0 0.0
        %2317 = vmatpush1.msra.mxu0 0.0
        %2318 = vmatprep.subr.mxu0 0.0
        %2319 = vmatpush1.msra.mxu0 0.0
        %2320 = vmatprep.subr.mxu0 0.0
        %2321 = vmatpush1.msra.mxu0 0.0
        %2322 = vmatprep.subr.mxu0 0.0
        %2323 = vmatpush1.msra.mxu0 0.0
        %2324 = vmatprep.subr.mxu0 0.0
        %2325 = vmatpush1.msra.mxu0 0.0
        %2326 = vmatprep.subr.mxu0 0.0
        %2327 = vmatpush1.msra.mxu0 0.0
        %2328 = vmatprep.subr.mxu0 0.0
        %2329 = vmatpush1.msra.mxu0 0.0
        %2330 = vmatprep.subr.mxu0 0.0
        %2331 = vmatpush1.msra.mxu0 0.0
        %2332 = vmatprep.subr.mxu0 0.0
        %2333 = vmatpush1.msra.mxu0 0.0
        %2334 = vmatprep.subr.mxu0 0.0
        %2335 = vmatpush1.msra.mxu0 0.0
        %2336 = vmatprep.subr.mxu0 0.0
        %2337 = vmatpush1.msra.mxu0 0.0
        %2338 = vmatprep.subr.mxu0 0.0
        %2339 = vmatpush1.msra.mxu0 0.0
        %2340 = vmatprep.subr.mxu0 0.0
        %2341 = vmatpush1.msra.mxu0 0.0
        %2342 = vmatprep.subr.mxu0 0.0
        %2343 = vmatpush1.msra.mxu0 0.0
        %2344 = vmatprep.subr.mxu0 0.0
        %2345 = vmatpush1.msra.mxu0 0.0
        %2346 = vmatprep.subr.mxu0 0.0
        %2347 = vmatpush1.msra.mxu0 0.0
        %2348 = vmatprep.subr.mxu0 0.0
        %2349 = vmatpush1.msra.mxu0 0.0
        %2350 = vmatprep.subr.mxu0 0.0
        %2351 = vmatpush1.msra.mxu0 0.0
        %2352 = vmatprep.subr.mxu0 0.0
        %2353 = vmatpush1.msra.mxu0 0.0
        %2354 = vmatprep.subr.mxu0 0.0
        %2355 = vmatpush1.msra.mxu0 0.0
        %2356 = vmatprep.subr.mxu0 0.0
        %2357 = vmatpush1.msra.mxu0 0.0
        %2358 = vmatprep.subr.mxu0 0.0
        %2359 = vmatpush1.msra.mxu0 0.0
        %2360 = vmatprep.subr.mxu0 0.0
        %2361 = vmatpush1.msra.mxu0 0.0
        %2362 = vmatprep.subr.mxu0 0.0
        %2363 = vmatpush1.msra.mxu0 0.0
        %2364 = vmatprep.subr.mxu0 0.0
        %2365 = vmatpush1.msra.mxu0 0.0
        %2366 = vmatprep.subr.mxu0 0.0
        %2367 = vmatpush1.msra.mxu0 0.0
        %2368 = vmatprep.mubr.f32.mxu0 0.0
        %2369 = vmatmul.mubr.f32.gmra.mrb[0].mxu0 %v2299
        %v2370 = vpop.f32.mrb[0].mxu0
        %v2371 = vadd.f32 0.0, %v2370
        %v2372 = vpop.f32.mrb[0].mxu0
        %2373 = vmatprep.mubr.f32.mxu0 0.0
        %2374 = vmatmul.mubr.f32.gmra.mrb[0].mxu0 %v2302
        %v2375 = vpop.f32.mrb[0].mxu0
        %v2376 = vadd.f32 0.0, %v2375
        %v2377 = vpop.f32.mrb[0].mxu0
        %2378 = vdwg.mxu0
        %2379 = vrot.lane.b32.xlu0 %v957, 100
        %v2380 = vpop.permute.xlu0 %2379
        %2381 = vrot.lane.b32.xlu0 %v962, 100
        %v2382 = vpop.permute.xlu0 %2381
        %2383 = vrot.lane.b32.xlu0 %v957, 68
        %v2384 = vpop.permute.xlu0 %2383
        %2385 = vrot.lane.b32.xlu0 %v962, 68
        %v2386 = vpop.permute.xlu0 %2385
        %v2387 = vsel %vm971, %v2380, 0
        %v2389 = vsel %vm971, %v2382, 0
        %v2391 = vsel %vm971, %v2384, 0
        %v2393 = vsel %vm971, %v2386, 0
        %2395 = vmatprep.subr.mxu0 0.0
        %2396 = vmatpush1.xpose.msra.mxu0 %v2391
        %2397 = vmatprep.subr.mxu0 0.0
        %2398 = vmatpush1.xpose.msra.mxu0 %v2393
        %2399 = vmatprep.subr.mxu0 0.0
        %2400 = vmatpush1.xpose.msra.mxu0 0.0
        %2401 = vmatprep.subr.mxu0 0.0
        %2402 = vmatpush1.xpose.msra.mxu0 0.0
        %2403 = vmatprep.subr.mxu0 0.0
        %2404 = vmatpush1.xpose.msra.mxu0 0.0
        %2405 = vmatprep.subr.mxu0 0.0
        %2406 = vmatpush1.xpose.msra.mxu0 0.0
        %2407 = vmatprep.subr.mxu0 0.0
        %2408 = vmatpush1.xpose.msra.mxu0 0.0
        %2409 = vmatprep.subr.mxu0 0.0
        %2410 = vmatpush1.xpose.msra.mxu0 0.0
        %2411 = vmatprep.subr.mxu0 0.0
        %2412 = vmatpush1.xpose.msra.mxu0 0.0
        %2413 = vmatprep.subr.mxu0 0.0
        %2414 = vmatpush1.xpose.msra.mxu0 0.0
        %2415 = vmatprep.subr.mxu0 0.0
        %2416 = vmatpush1.xpose.msra.mxu0 0.0
        %2417 = vmatprep.subr.mxu0 0.0
        %2418 = vmatpush1.xpose.msra.mxu0 0.0
        %2419 = vmatprep.subr.mxu0 0.0
        %2420 = vmatpush1.xpose.msra.mxu0 0.0
        %2421 = vmatprep.subr.mxu0 0.0
        %2422 = vmatpush1.xpose.msra.mxu0 0.0
        %2423 = vmatprep.subr.mxu0 0.0
        %2424 = vmatpush1.xpose.msra.mxu0 0.0
        %2425 = vmatprep.subr.mxu0 0.0
        %2426 = vmatpush1.xpose.msra.mxu0 0.0
        %2427 = vmatprep.subr.mxu0 0.0
        %2428 = vmatpush1.xpose.msra.mxu0 0.0
        %2429 = vmatprep.subr.mxu0 0.0
        %2430 = vmatpush1.xpose.msra.mxu0 0.0
        %2431 = vmatprep.subr.mxu0 0.0
        %2432 = vmatpush1.xpose.msra.mxu0 0.0
        %2433 = vmatprep.subr.mxu0 0.0
        %2434 = vmatpush1.xpose.msra.mxu0 0.0
        %2435 = vmatprep.subr.mxu0 0.0
        %2436 = vmatpush1.xpose.msra.mxu0 0.0
        %2437 = vmatprep.subr.mxu0 0.0
        %2438 = vmatpush1.xpose.msra.mxu0 0.0
        %2439 = vmatprep.subr.mxu0 0.0
        %2440 = vmatpush1.xpose.msra.mxu0 0.0
        %2441 = vmatprep.subr.mxu0 0.0
        %2442 = vmatpush1.xpose.msra.mxu0 0.0
        %2443 = vmatprep.subr.mxu0 0.0
        %2444 = vmatpush1.xpose.msra.mxu0 0.0
        %2445 = vmatprep.subr.mxu0 0.0
        %2446 = vmatpush1.xpose.msra.mxu0 0.0
        %2447 = vmatprep.subr.mxu0 0.0
        %2448 = vmatpush1.xpose.msra.mxu0 0.0
        %2449 = vmatprep.subr.mxu0 0.0
        %2450 = vmatpush1.xpose.msra.mxu0 0.0
        %2451 = vmatprep.subr.mxu0 0.0
        %2452 = vmatpush1.xpose.msra.mxu0 0.0
        %2453 = vmatprep.subr.mxu0 0.0
        %2454 = vmatpush1.xpose.msra.mxu0 0.0
        %2455 = vmatprep.subr.mxu0 0.0
        %2456 = vmatpush1.xpose.msra.mxu0 0.0
        %2457 = vmatprep.subr.mxu0 0.0
        %2458 = vmatpush1.xpose.msra.mxu0 0.0
        %2459 = vmatprep.mubr.f32.mxu0 0.0
        %2460 = vmatmul.mubr.f32.gmra.mrb[0].mxu0 %v2387
        %v2461 = vpop.f32.mrb[0].mxu0
        %v2462 = vadd.f32 0.0, %v2461
        %v2463 = vpop.f32.mrb[0].mxu0
        %2464 = vmatprep.mubr.f32.mxu0 0.0
        %2465 = vmatmul.mubr.f32.gmra.mrb[0].mxu0 %v2389
        %v2466 = vpop.f32.mrb[0].mxu0
        %v2467 = vadd.f32 0.0, %v2466
        %v2468 = vpop.f32.mrb[0].mxu0
        %2469 = vdwg.mxu0
        %v2470 = vmul.f32 %v2462, 0.5
        %v2471 = vmul.f32 %v2467, 0.5
        %v2472 = vsel %vm1057, %v2470, -inf
        %2473 = vmax.xlane.f32.xlu0 %v2472
        %v2474 = vpop.xlane.xlu0 %2473
        %v2475 = vsel %vm1057, %v2471, -inf
        %2476 = vmax.xlane.f32.xlu0 %v2475
        %v2477 = vpop.xlane.xlu0 %2476
        %v2478 = vsub.f32 %v2470, %v2474
        %v2479 = vsub.f32 %v2471, %v2477
        %v2480 = vmul.f32 %v2478, 1.442695
        %v2481 = vpow.pop %v2480
        %v2482 = vmul.f32 %v2479, 1.442695
        %v2483 = vpow.pop %v2482
        %v2484 = vsel %vm1057, %v2481, 0.0
        %2485 = vadd.xlane.f32.xlu0 %v2484
        %v2486 = vpop.xlane.xlu0 %2485
        %v2487 = vsel %vm1057, %v2483, 0.0
        %2488 = vadd.xlane.f32.xlu0 %v2487
        %v2489 = vpop.xlane.xlu0 %2488
        %v2490 = vrcp.pop %v2486
        %v2491 = vrcp.pop %v2489
        %v2492 = vmul.f32 %v2481, %v2490
        %v2493 = vmul.f32 %v2483, %v2491
        %2494 = vrot.lane.b32.xlu0 %v957, 36
        %v2495 = vpop.permute.xlu0 %2494
        %2496 = vrot.lane.b32.xlu0 %v962, 36
        %v2497 = vpop.permute.xlu0 %2496
        %v2501 = vsel %vm1057, %v2492, 0
        %v2504 = vsel %vm1057, %v2493, 0
        %2506 = vmatprep.subr.mxu0 0.0
        %2507 = vmatpush1.msra.mxu0 %v2495
        %2508 = vmatprep.subr.mxu0 0.0
        %2509 = vmatpush1.msra.mxu0 %v2497
        %2510 = vmatprep.subr.mxu0 0.0
        %2511 = vmatpush1.msra.mxu0 0.0
        %2512 = vmatprep.subr.mxu0 0.0
        %2513 = vmatpush1.msra.mxu0 0.0
        %2514 = vmatprep.subr.mxu0 0.0
        %2515 = vmatpush1.msra.mxu0 0.0
        %2516 = vmatprep.subr.mxu0 0.0
        %2517 = vmatpush1.msra.mxu0 0.0
        %2518 = vmatprep.subr.mxu0 0.0
        %2519 = vmatpush1.msra.mxu0 0.0
        %2520 = vmatprep.subr.mxu0 0.0
        %2521 = vmatpush1.msra.mxu0 0.0
        %2522 = vmatprep.subr.mxu0 0.0
        %2523 = vmatpush1.msra.mxu0 0.0
        %2524 = vmatprep.subr.mxu0 0.0
        %2525 = vmatpush1.msra.mxu0 0.0
        %2526 = vmatprep.subr.mxu0 0.0
        %2527 = vmatpush1.msra.mxu0 0.0
        %2528 = vmatprep.subr.mxu0 0.0
        %2529 = vmatpush1.msra.mxu0 0.0
        %2530 = vmatprep.subr.mxu0 0.0
        %2531 = vmatpush1.msra.mxu0 0.0
        %2532 = vmatprep.subr.mxu0 0.0
        %2533 = vmatpush1.msra.mxu0 0.0
        %2534 = vmatprep.subr.mxu0 0.0
        %2535 = vmatpush1.msra.mxu0 0.0
        %2536 = vmatprep.subr.mxu0 0.0
        %2537 = vmatpush1.msra.mxu0 0.0
        %2538 = vmatprep.subr.mxu0 0.0
        %2539 = vmatpush1.msra.mxu0 0.0
        %2540 = vmatprep.subr.mxu0 0.0
        %2541 = vmatpush1.msra.mxu0 0.0
        %2542 = vmatprep.subr.mxu0 0.0
        %2543 = vmatpush1.msra.mxu0 0.0
        %2544 = vmatprep.subr.mxu0 0.0
        %2545 = vmatpush1.msra.mxu0 0.0
        %2546 = vmatprep.subr.mxu0 0.0
        %2547 = vmatpush1.msra.mxu0 0.0
        %2548 = vmatprep.subr.mxu0 0.0
        %2549 = vmatpush1.msra.mxu0 0.0
        %2550 = vmatprep.subr.mxu0 0.0
        %2551 = vmatpush1.msra.mxu0 0.0
        %2552 = vmatprep.subr.mxu0 0.0
        %2553 = vmatpush1.msra.mxu0 0.0
        %2554 = vmatprep.subr.mxu0 0.0
        %2555 = vmatpush1.msra.mxu0 0.0
        %2556 = vmatprep.subr.mxu0 0.0
        %2557 = vmatpush1.msra.mxu0 0.0
        %2558 = vmatprep.subr.mxu0 0.0
        %2559 = vmatpush1.msra.mxu0 0.0
        %2560 = vmatprep.subr.mxu0 0.0
        %2561 = vmatpush1.msra.mxu0 0.0
        %2562 = vmatprep.subr.mxu0 0.0
        %2563 = vmatpush1.msra.mxu0 0.0
        %2564 = vmatprep.subr.mxu0 0.0
        %2565 = vmatpush1.msra.mxu0 0.0
        %2566 = vmatprep.subr.mxu0 0.0
        %2567 = vmatpush1.msra.mxu0 0.0
        %2568 = vmatprep.subr.mxu0 0.0
        %2569 = vmatpush1.msra.mxu0 0.0
        %2570 = vmatprep.mubr.f32.mxu0 0.0
        %2571 = vmatmul.mubr.f32.gmra.mrb[0].mxu0 %v2501
        %v2572 = vpop.f32.mrb[0].mxu0
        %v2573 = vadd.f32 0.0, %v2572
        %v2574 = vpop.f32.mrb[0].mxu0
        %2575 = vmatprep.mubr.f32.mxu0 0.0
        %2576 = vmatmul.mubr.f32.gmra.mrb[0].mxu0 %v2504
        %v2577 = vpop.f32.mrb[0].mxu0
        %v2578 = vadd.f32 0.0, %v2577
        %v2579 = vpop.f32.mrb[0].mxu0
        %2580 = vdwg.mxu0
        %2583 = vrot.lane.b32.xlu0 %v1361, 4
        %v2584 = vpop.permute.xlu0 %2583
        %2585 = vrot.lane.b32.xlu0 %v1366, 4
        %v2586 = vpop.permute.xlu0 %2585
        %2591 = vrot.lane.b32.xlu0 %v1563, 8
        %v2592 = vpop.permute.xlu0 %2591
        %2593 = vrot.lane.b32.xlu0 %v1568, 8
        %v2594 = vpop.permute.xlu0 %2593
        %2599 = vrot.lane.b32.xlu0 %v1765, 12
        %v2600 = vpop.permute.xlu0 %2599
        %2601 = vrot.lane.b32.xlu0 %v1770, 12
        %v2602 = vpop.permute.xlu0 %2601
        %2607 = vrot.lane.b32.xlu0 %v1967, 16
        %v2608 = vpop.permute.xlu0 %2607
        %2609 = vrot.lane.b32.xlu0 %v1972, 16
        %v2610 = vpop.permute.xlu0 %2609
        %2615 = vrot.lane.b32.xlu0 %v2169, 20
        %v2616 = vpop.permute.xlu0 %2615
        %2617 = vrot.lane.b32.xlu0 %v2174, 20
        %v2618 = vpop.permute.xlu0 %2617
        %2623 = vrot.lane.b32.xlu0 %v2371, 24
        %v2624 = vpop.permute.xlu0 %2623
        %2625 = vrot.lane.b32.xlu0 %v2376, 24
        %v2626 = vpop.permute.xlu0 %2625
        %2631 = vrot.lane.b32.xlu0 %v2573, 28
        %v2632 = vpop.permute.xlu0 %2631
        %2633 = vrot.lane.b32.xlu0 %v2578, 28
        %v2634 = vpop.permute.xlu0 %2633
        %v2637 = vsel %vm971, %v1159, %v2584
        %v2638 = vsel %vm971, %v1164, %v2586
        %vm2639 = vcmask 64512
        %v2640 = vsel %vm2639, %v2637, %v2592
        %v2641 = vsel %vm2639, %v2638, %v2594
        %vm2642 = vcmask 97280
        %v2643 = vsel %vm2642, %v2640, %v2600
        %v2644 = vsel %vm2642, %v2641, %v2602
        %v2645 = vsel %vm1057, %v2643, %v2608
        %v2646 = vsel %vm1057, %v2644, %v2610
        %vm2647 = vcmask 162816
        %v2648 = vsel %vm2647, %v2645, %v2616
        %v2649 = vsel %vm2647, %v2646, %v2618
        %vm2650 = vcmask 195584
        %v2651 = vsel %vm2650, %v2648, %v2624
        %v2652 = vsel %vm2650, %v2649, %v2626
        %vm2653 = vcmask 228352
        %v2654 = vsel %vm2653, %v2651, %v2632
        %v2655 = vsel %vm2653, %v2652, %v2634
        %v2656 = vld [vmem:[%s10] sm:$0x1]
        %v2657 = vld [vmem:[%s8] sm:$0xff]
        %v2658 = vld [vmem:[%s8 + $0x8] sm:$0xff]
        %v2659 = vld [vmem:[%s8 + $0x10] sm:$0xff]
        %v2660 = vld [vmem:[%s8 + $0x18] sm:$0xff]
        %v2661 = vld [vmem:[%s9] sm:$0x1]
        %v2663 = vlaneseq
        %v2664 = vshrl.u32 %v2663, 7
        %v2665 = vsub.s32 0, %v2664
        %v2666 = vrot.slane %v2661, %v2665
        %v2669 = vsel %vm829, %v2654, 0
        %v2672 = vsel %vm829, %v2655, 0
        %2674 = vmatprep.subr.mxu0 0.0
        %2675 = vmatpush1.msra.mxu0 %v2657
        %2676 = vmatprep.subr.mxu0 0.0
        %2677 = vmatpush1.msra.mxu0 %v2658
        %2678 = vmatprep.subr.mxu0 0.0
        %2679 = vmatpush1.msra.mxu0 %v2659
        %2680 = vmatprep.subr.mxu0 0.0
        %2681 = vmatpush1.msra.mxu0 %v2660
        %2682 = vmatprep.subr.mxu0 0.0
        %2683 = vmatpush1.msra.mxu0 0.0
        %2684 = vmatprep.subr.mxu0 0.0
        %2685 = vmatpush1.msra.mxu0 0.0
        %2686 = vmatprep.subr.mxu0 0.0
        %2687 = vmatpush1.msra.mxu0 0.0
        %2688 = vmatprep.subr.mxu0 0.0
        %2689 = vmatpush1.msra.mxu0 0.0
        %2690 = vmatprep.subr.mxu0 0.0
        %2691 = vmatpush1.msra.mxu0 0.0
        %2692 = vmatprep.subr.mxu0 0.0
        %2693 = vmatpush1.msra.mxu0 0.0
        %2694 = vmatprep.subr.mxu0 0.0
        %2695 = vmatpush1.msra.mxu0 0.0
        %2696 = vmatprep.subr.mxu0 0.0
        %2697 = vmatpush1.msra.mxu0 0.0
        %2698 = vmatprep.subr.mxu0 0.0
        %2699 = vmatpush1.msra.mxu0 0.0
        %2700 = vmatprep.subr.mxu0 0.0
        %2701 = vmatpush1.msra.mxu0 0.0
        %2702 = vmatprep.subr.mxu0 0.0
        %2703 = vmatpush1.msra.mxu0 0.0
        %2704 = vmatprep.subr.mxu0 0.0
        %2705 = vmatpush1.msra.mxu0 0.0
        %2706 = vmatprep.subr.mxu0 0.0
        %2707 = vmatpush1.msra.mxu0 0.0
        %2708 = vmatprep.subr.mxu0 0.0
        %2709 = vmatpush1.msra.mxu0 0.0
        %2710 = vmatprep.subr.mxu0 0.0
        %2711 = vmatpush1.msra.mxu0 0.0
        %2712 = vmatprep.subr.mxu0 0.0
        %2713 = vmatpush1.msra.mxu0 0.0
        %2714 = vmatprep.subr.mxu0 0.0
        %2715 = vmatpush1.msra.mxu0 0.0
        %2716 = vmatprep.subr.mxu0 0.0
        %2717 = vmatpush1.msra.mxu0 0.0
        %2718 = vmatprep.subr.mxu0 0.0
        %2719 = vmatpush1.msra.mxu0 0.0
        %2720 = vmatprep.subr.mxu0 0.0
        %2721 = vmatpush1.msra.mxu0 0.0
        %2722 = vmatprep.subr.mxu0 0.0
        %2723 = vmatpush1.msra.mxu0 0.0
        %2724 = vmatprep.subr.mxu0 0.0
        %2725 = vmatpush1.msra.mxu0 0.0
        %2726 = vmatprep.subr.mxu0 0.0
        %2727 = vmatpush1.msra.mxu0 0.0
        %2728 = vmatprep.subr.mxu0 0.0
        %2729 = vmatpush1.msra.mxu0 0.0
        %2730 = vmatprep.subr.mxu0 0.0
        %2731 = vmatpush1.msra.mxu0 0.0
        %2732 = vmatprep.subr.mxu0 0.0
        %2733 = vmatpush1.msra.mxu0 0.0
        %2734 = vmatprep.subr.mxu0 0.0
        %2735 = vmatpush1.msra.mxu0 0.0
        %2736 = vmatprep.subr.mxu0 0.0
        %2737 = vmatpush1.msra.mxu0 0.0
        %2738 = vmatprep.mubr.f32.mxu0 0.0
        %2739 = vmatmul.mubr.f32.gmra.mrb[0].mxu0 %v2669
        %v2740 = vpop.f32.mrb[0].mxu0
        %v2741 = vadd.f32 %v2666, %v2740
        %v2742 = vpop.f32.mrb[0].mxu0
        %2743 = vmatprep.mubr.f32.mxu0 0.0
        %2744 = vmatmul.mubr.f32.gmra.mrb[0].mxu0 %v2672
        %v2745 = vpop.f32.mrb[0].mxu0
        %v2746 = vadd.f32 %v2666, %v2745
        %v2747 = vpop.f32.mrb[0].mxu0
        %2748 = vdwg.mxu0
        %v2750 = vlaneseq
        %v2751 = vshrl.u32 %v2750, 7
        %v2752 = vsub.s32 0, %v2751
        %v2753 = vrot.slane %v2656, %v2752
        %v2755 = vmul.f32 %v2753, %v2741
        %v2756 = vmul.f32 %v2753, %v2746
        %v2757 = vadd.f32 %v825, %v2755
        %v2758 = vadd.f32 %v826, %v2756
        %v2759 = vld [vmem:[%s11] sm:$0x1]
        %v2760 = vld [vmem:[%s12] sm:$0x1]
        %v2761 = vsel %vm829, %v2757, 0.0
        %2762 = vadd.xlane.f32.xlu0 %v2761
        %v2763 = vpop.xlane.xlu0 %2762
        %v2764 = vsel %vm829, %v2758, 0.0
        %2765 = vadd.xlane.f32.xlu0 %v2764
        %v2766 = vpop.xlane.xlu0 %2765
        %v2767 = vmul.f32 %v2763, %v836
        %v2768 = vmul.f32 %v2766, %v836
        %v2769 = vsub.f32 %v2757, %v2767
        %v2770 = vsub.f32 %v2758, %v2768
        %v2771 = vmul.f32 %v2769, %v2769
        %v2772 = vmul.f32 %v2770, %v2770
        %v2773 = vsel %vm829, %v2771, 0.0
        %2774 = vadd.xlane.f32.xlu0 %v2773
        %v2775 = vpop.xlane.xlu0 %2774
        %v2776 = vsel %vm829, %v2772, 0.0
        %2777 = vadd.xlane.f32.xlu0 %v2776
        %v2778 = vpop.xlane.xlu0 %2777
        %v2779 = vmul.f32 %v2775, %v836
        %v2780 = vmul.f32 %v2778, %v836
        %v2781 = vadd.f32 %v2779, 1e-05
        %v2782 = vadd.f32 %v2780, 1e-05
        %v2783 = vrsqrt.pop %v2781
        %v2784 = vrsqrt.pop %v2782
        %v2785 = vmul.f32 %v2769, %v2783
        %v2786 = vmul.f32 %v2770, %v2784
        %v2788 = vlaneseq
        %v2789 = vshrl.u32 %v2788, 7
        %v2790 = vsub.s32 0, %v2789
        %v2791 = vrot.slane %v2759, %v2790
        %v2793 = vmul.f32 %v2785, %v2791
        %v2794 = vmul.f32 %v2786, %v2791
        %v2796 = vlaneseq
        %v2797 = vshrl.u32 %v2796, 7
        %v2798 = vsub.s32 0, %v2797
        %v2799 = vrot.slane %v2760, %v2798
        %v2801 = vadd.f32 %v2793, %v2799
        %v2802 = vadd.f32 %v2794, %v2799
        %v2803 = vld [vmem:[%s13] sm:$0xff]
        %v2804 = vld [vmem:[%s13 + $0x8] sm:$0xff]
        %v2805 = vld [vmem:[%s13 + $0x10] sm:$0xff]
        %v2806 = vld [vmem:[%s13 + $0x18] sm:$0xff]
        %v2807 = vld [vmem:[%s13 + $0x20] sm:$0xff]
        %v2808 = vld [vmem:[%s13 + $0x28] sm:$0xff]
        %v2809 = vld [vmem:[%s13 + $0x30] sm:$0xff]
        %v2810 = vld [vmem:[%s13 + $0x38] sm:$0xff]
        %v2811 = vld [vmem:[%s14] sm:$0x3]
        %v2813 = vlaneseq
        %v2814 = vshrl.u32 %v2813, 7
        %v2815 = vsub.s32 0, %v2814
        %v2816 = vrot.slane %v2811, %v2815
        %v2817 = vlaneseq
        %v2818 = vshrl.u32 %v2817, 7
        %v2819 = vsub.s32 1, %v2818
        %v2820 = vrot.slane %v2811, %v2819
        %v2824 = vsel %vm829, %v2801, 0
        %v2827 = vsel %vm829, %v2802, 0
        %2829 = vmatprep.subr.mxu0 %v2804
        %2830 = vmatpush1.msra.mxu0 %v2803
        %2831 = vmatprep.subr.mxu0 %v2806
        %2832 = vmatpush1.msra.mxu0 %v2805
        %2833 = vmatprep.subr.mxu0 %v2808
        %2834 = vmatpush1.msra.mxu0 %v2807
        %2835 = vmatprep.subr.mxu0 %v2810
        %2836 = vmatpush1.msra.mxu0 %v2809
        %2837 = vmatprep.subr.mxu0 0.0
        %2838 = vmatpush1.msra.mxu0 0.0
        %2839 = vmatprep.subr.mxu0 0.0
        %2840 = vmatpush1.msra.mxu0 0.0
        %2841 = vmatprep.subr.mxu0 0.0
        %2842 = vmatpush1.msra.mxu0 0.0
        %2843 = vmatprep.subr.mxu0 0.0
        %2844 = vmatpush1.msra.mxu0 0.0
        %2845 = vmatprep.subr.mxu0 0.0
        %2846 = vmatpush1.msra.mxu0 0.0
        %2847 = vmatprep.subr.mxu0 0.0
        %2848 = vmatpush1.msra.mxu0 0.0
        %2849 = vmatprep.subr.mxu0 0.0
        %2850 = vmatpush1.msra.mxu0 0.0
        %2851 = vmatprep.subr.mxu0 0.0
        %2852 = vmatpush1.msra.mxu0 0.0
        %2853 = vmatprep.subr.mxu0 0.0
        %2854 = vmatpush1.msra.mxu0 0.0
        %2855 = vmatprep.subr.mxu0 0.0
        %2856 = vmatpush1.msra.mxu0 0.0
        %2857 = vmatprep.subr.mxu0 0.0
        %2858 = vmatpush1.msra.mxu0 0.0
        %2859 = vmatprep.subr.mxu0 0.0
        %2860 = vmatpush1.msra.mxu0 0.0
        %2861 = vmatprep.subr.mxu0 0.0
        %2862 = vmatpush1.msra.mxu0 0.0
        %2863 = vmatprep.subr.mxu0 0.0
        %2864 = vmatpush1.msra.mxu0 0.0
        %2865 = vmatprep.subr.mxu0 0.0
        %2866 = vmatpush1.msra.mxu0 0.0
        %2867 = vmatprep.subr.mxu0 0.0
        %2868 = vmatpush1.msra.mxu0 0.0
        %2869 = vmatprep.subr.mxu0 0.0
        %2870 = vmatpush1.msra.mxu0 0.0
        %2871 = vmatprep.subr.mxu0 0.0
        %2872 = vmatpush1.msra.mxu0 0.0
        %2873 = vmatprep.subr.mxu0 0.0
        %2874 = vmatpush1.msra.mxu0 0.0
        %2875 = vmatprep.subr.mxu0 0.0
        %2876 = vmatpush1.msra.mxu0 0.0
        %2877 = vmatprep.subr.mxu0 0.0
        %2878 = vmatpush1.msra.mxu0 0.0
        %2879 = vmatprep.subr.mxu0 0.0
        %2880 = vmatpush1.msra.mxu0 0.0
        %2881 = vmatprep.subr.mxu0 0.0
        %2882 = vmatpush1.msra.mxu0 0.0
        %2883 = vmatprep.subr.mxu0 0.0
        %2884 = vmatpush1.msra.mxu0 0.0
        %2885 = vmatprep.subr.mxu0 0.0
        %2886 = vmatpush1.msra.mxu0 0.0
        %2887 = vmatprep.subr.mxu0 0.0
        %2888 = vmatpush1.msra.mxu0 0.0
        %2889 = vmatprep.subr.mxu0 0.0
        %2890 = vmatpush1.msra.mxu0 0.0
        %2891 = vmatprep.subr.mxu0 0.0
        %2892 = vmatpush1.msra.mxu0 0.0
        %2893 = vmatprep.mubr.f32.mxu0 0.0
        %2894 = vmatmul.mubr.f32.gmra.mrb[0].mxu0 %v2824
        %v2895 = vpop.f32.mrb[0].mxu0
        %v2896 = vadd.f32 %v2816, %v2895
        %v2897 = vpop.f32.mrb[0].mxu0
        %v2898 = vadd.f32 %v2820, %v2897
        %2899 = vmatprep.mubr.f32.mxu0 0.0
        %2900 = vmatmul.mubr.f32.gmra.mrb[0].mxu0 %v2827
        %v2901 = vpop.f32.mrb[0].mxu0
        %v2902 = vadd.f32 %v2816, %v2901
        %v2903 = vpop.f32.mrb[0].mxu0
        %v2904 = vadd.f32 %v2820, %v2903
        %2905 = vdwg.mxu0
        %v2906 = vmul.f32 %v2896, 0.5
        %v2907 = vmul.f32 %v2898, 0.5
        %v2908 = vmul.f32 %v2902, 0.5
        %v2909 = vmul.f32 %v2904, 0.5
        %v2910 = vmul.f32 %v2896, 0.70710677
        %v2911 = vmul.f32 %v2898, 0.70710677
        %v2912 = vmul.f32 %v2902, 0.70710677
        %v2913 = vmul.f32 %v2904, 0.70710677
        %v2914 = vand.u32 2147483647, %v2910
        %v2915 = vand.u32 2147483647, %v2911
        %v2916 = vand.u32 2147483647, %v2912
        %v2917 = vand.u32 2147483647, %v2913
        %v2918 = vmul.f32 %v2914, 0.3275911
        %v2919 = vmul.f32 %v2915, 0.3275911
        %v2920 = vmul.f32 %v2916, 0.3275911
        %v2921 = vmul.f32 %v2917, 0.3275911
        %v2922 = vadd.f32 %v2918, 1.0
        %v2923 = vadd.f32 %v2919, 1.0
        %v2924 = vadd.f32 %v2920, 1.0
        %v2925 = vadd.f32 %v2921, 1.0
        %v2926 = vrcp.pop %v2922
        %v2927 = vrcp.pop %v2923
        %v2928 = vrcp.pop %v2924
        %v2929 = vrcp.pop %v2925
        %v2930 = vmul.f32 %v2926, 1.0614054
        %v2931 = vmul.f32 %v2927, 1.0614054
        %v2932 = vmul.f32 %v2928, 1.0614054
        %v2933 = vmul.f32 %v2929, 1.0614054
        %v2934 = vadd.f32 %v2930, -1.4531521
        %v2935 = vadd.f32 %v2931, -1.4531521
        %v2936 = vadd.f32 %v2932, -1.4531521
        %v2937 = vadd.f32 %v2933, -1.4531521
        %v2938 = vmul.f32 %v2934, %v2926
        %v2939 = vmul.f32 %v2935, %v2927
        %v2940 = vmul.f32 %v2936, %v2928
        %v2941 = vmul.f32 %v2937, %v2929
        %v2942 = vadd.f32 %v2938, 1.4214138
        %v2943 = vadd.f32 %v2939, 1.4214138
        %v2944 = vadd.f32 %v2940, 1.4214138
        %v2945 = vadd.f32 %v2941, 1.4214138
        %v2946 = vmul.f32 %v2942, %v2926
        %v2947 = vmul.f32 %v2943, %v2927
        %v2948 = vmul.f32 %v2944, %v2928
        %v2949 = vmul.f32 %v2945, %v2929
        %v2950 = vadd.f32 %v2946, -0.28449672
        %v2951 = vadd.f32 %v2947, -0.28449672
        %v2952 = vadd.f32 %v2948, -0.28449672
        %v2953 = vadd.f32 %v2949, -0.28449672
        %v2954 = vmul.f32 %v2950, %v2926
        %v2955 = vmul.f32 %v2951, %v2927
        %v2956 = vmul.f32 %v2952, %v2928
        %v2957 = vmul.f32 %v2953, %v2929
        %v2958 = vadd.f32 %v2954, 0.2548296
        %v2959 = vadd.f32 %v2955, 0.2548296
        %v2960 = vadd.f32 %v2956, 0.2548296
        %v2961 = vadd.f32 %v2957, 0.2548296
        %v2962 = vmul.f32 %v2958, %v2926
        %v2963 = vmul.f32 %v2959, %v2927
        %v2964 = vmul.f32 %v2960, %v2928
        %v2965 = vmul.f32 %v2961, %v2929
        %v2966 = vsub.f32 0.0, %v2914
        %v2967 = vsub.f32 0.0, %v2915
        %v2968 = vsub.f32 0.0, %v2916
        %v2969 = vsub.f32 0.0, %v2917
        %v2970 = vmul.f32 %v2966, %v2914
        %v2971 = vmul.f32 %v2967, %v2915
        %v2972 = vmul.f32 %v2968, %v2916
        %v2973 = vmul.f32 %v2969, %v2917
        %v2974 = vmul.f32 %v2970, 1.442695
        %v2975 = vpow.pop %v2974
        %v2976 = vmul.f32 %v2971, 1.442695
        %v2977 = vpow.pop %v2976
        %v2978 = vmul.f32 %v2972, 1.442695
        %v2979 = vpow.pop %v2978
        %v2980 = vmul.f32 %v2973, 1.442695
        %v2981 = vpow.pop %v2980
        %v2982 = vmul.f32 %v2962, %v2975
        %v2983 = vmul.f32 %v2963, %v2977
        %v2984 = vmul.f32 %v2964, %v2979
        %v2985 = vmul.f32 %v2965, %v2981
        %v2986 = vsub.f32 1.0, %v2982
        %v2987 = vsub.f32 1.0, %v2983
        %v2988 = vsub.f32 1.0, %v2984
        %v2989 = vsub.f32 1.0, %v2985
        %vm2990 = vcmp.lt.f32.partialorder %v2910, 0.0
        %vm2991 = vcmp.lt.f32.partialorder %v2911, 0.0
        %vm2992 = vcmp.lt.f32.partialorder %v2912, 0.0
        %vm2993 = vcmp.lt.f32.partialorder %v2913, 0.0
        %v2994 = vsub.f32 0.0, %v2986
        %v2995 = vsub.f32 0.0, %v2987
        %v2996 = vsub.f32 0.0, %v2988
        %v2997 = vsub.f32 0.0, %v2989
        %v2998 = vsel %vm2990, %v2994, %v2986
        %v2999 = vsel %vm2991, %v2995, %v2987
        %v3000 = vsel %vm2992, %v2996, %v2988
        %v3001 = vsel %vm2993, %v2997, %v2989
        %v3002 = vadd.f32 %v2998, 1.0
        %v3003 = vadd.f32 %v2999, 1.0
        %v3004 = vadd.f32 %v3000, 1.0
        %v3005 = vadd.f32 %v3001, 1.0
        %v3006 = vmul.f32 %v2906, %v3002
        %v3007 = vmul.f32 %v2907, %v3003
        %v3008 = vmul.f32 %v2908, %v3004
        %v3009 = vmul.f32 %v2909, %v3005
        %v3010 = vld [vmem:[%s15] sm:$0xff]
        %v3011 = vld [vmem:[%s15 + $0x8] sm:$0xff]
        %v3012 = vld [vmem:[%s15 + $0x10] sm:$0xff]
        %v3013 = vld [vmem:[%s15 + $0x18] sm:$0xff]
        %v3014 = vld [vmem:[%s15 + $0x20] sm:$0xff]
        %v3015 = vld [vmem:[%s15 + $0x28] sm:$0xff]
        %v3016 = vld [vmem:[%s15 + $0x30] sm:$0xff]
        %v3017 = vld [vmem:[%s15 + $0x38] sm:$0xff]
        %v3018 = vld [vmem:[%s15 + $0x40] sm:$0xff]
        %v3019 = vld [vmem:[%s15 + $0x48] sm:$0xff]
        %v3020 = vld [vmem:[%s15 + $0x50] sm:$0xff]
        %v3021 = vld [vmem:[%s15 + $0x58] sm:$0xff]
        %v3022 = vld [vmem:[%s15 + $0x60] sm:$0xff]
        %v3023 = vld [vmem:[%s15 + $0x68] sm:$0xff]
        %v3024 = vld [vmem:[%s15 + $0x70] sm:$0xff]
        %v3025 = vld [vmem:[%s15 + $0x78] sm:$0xff]
        %v3026 = vld [vmem:[%s15 + $0x80] sm:$0xff]
        %v3027 = vld [vmem:[%s15 + $0x88] sm:$0xff]
        %v3028 = vld [vmem:[%s15 + $0x90] sm:$0xff]
        %v3029 = vld [vmem:[%s15 + $0x98] sm:$0xff]
        %v3030 = vld [vmem:[%s15 + $0xa0] sm:$0xff]
        %v3031 = vld [vmem:[%s15 + $0xa8] sm:$0xff]
        %v3032 = vld [vmem:[%s15 + $0xb0] sm:$0xff]
        %v3033 = vld [vmem:[%s15 + $0xb8] sm:$0xff]
        %v3034 = vld [vmem:[%s15 + $0xc0] sm:$0xff]
        %v3035 = vld [vmem:[%s15 + $0xc8] sm:$0xff]
        %v3036 = vld [vmem:[%s15 + $0xd0] sm:$0xff]
        %v3037 = vld [vmem:[%s15 + $0xd8] sm:$0xff]
        %v3038 = vld [vmem:[%s15 + $0xe0] sm:$0xff]
        %v3039 = vld [vmem:[%s15 + $0xe8] sm:$0xff]
        %v3040 = vld [vmem:[%s15 + $0xf0] sm:$0xff]
        %v3041 = vld [vmem:[%s15 + $0xf8] sm:$0xff]
        %v3042 = vld [vmem:[%s16] sm:$0x1]
        %v3044 = vlaneseq
        %v3045 = vshrl.u32 %v3044, 7
        %v3046 = vsub.s32 0, %v3045
        %v3047 = vrot.slane %v3042, %v3046
        %3049 = vmatprep.subr.mxu0 0.0
        %3050 = vmatpush1.msra.mxu0 %v3010
        %3051 = vmatprep.subr.mxu0 0.0
        %3052 = vmatpush1.msra.mxu0 %v3011
        %3053 = vmatprep.subr.mxu0 0.0
        %3054 = vmatpush1.msra.mxu0 %v3012
        %3055 = vmatprep.subr.mxu0 0.0
        %3056 = vmatpush1.msra.mxu0 %v3013
        %3057 = vmatprep.subr.mxu0 0.0
        %3058 = vmatpush1.msra.mxu0 %v3014
        %3059 = vmatprep.subr.mxu0 0.0
        %3060 = vmatpush1.msra.mxu0 %v3015
        %3061 = vmatprep.subr.mxu0 0.0
        %3062 = vmatpush1.msra.mxu0 %v3016
        %3063 = vmatprep.subr.mxu0 0.0
        %3064 = vmatpush1.msra.mxu0 %v3017
        %3065 = vmatprep.subr.mxu0 0.0
        %3066 = vmatpush1.msra.mxu0 %v3018
        %3067 = vmatprep.subr.mxu0 0.0
        %3068 = vmatpush1.msra.mxu0 %v3019
        %3069 = vmatprep.subr.mxu0 0.0
        %3070 = vmatpush1.msra.mxu0 %v3020
        %3071 = vmatprep.subr.mxu0 0.0
        %3072 = vmatpush1.msra.mxu0 %v3021
        %3073 = vmatprep.subr.mxu0 0.0
        %3074 = vmatpush1.msra.mxu0 %v3022
        %3075 = vmatprep.subr.mxu0 0.0
        %3076 = vmatpush1.msra.mxu0 %v3023
        %3077 = vmatprep.subr.mxu0 0.0
        %3078 = vmatpush1.msra.mxu0 %v3024
        %3079 = vmatprep.subr.mxu0 0.0
        %3080 = vmatpush1.msra.mxu0 %v3025
        %3081 = vmatprep.subr.mxu0 0.0
        %3082 = vmatpush1.msra.mxu0 %v3026
        %3083 = vmatprep.subr.mxu0 0.0
        %3084 = vmatpush1.msra.mxu0 %v3027
        %3085 = vmatprep.subr.mxu0 0.0
        %3086 = vmatpush1.msra.mxu0 %v3028
        %3087 = vmatprep.subr.mxu0 0.0
        %3088 = vmatpush1.msra.mxu0 %v3029
        %3089 = vmatprep.subr.mxu0 0.0
        %3090 = vmatpush1.msra.mxu0 %v3030
        %3091 = vmatprep.subr.mxu0 0.0
        %3092 = vmatpush1.msra.mxu0 %v3031
        %3093 = vmatprep.subr.mxu0 0.0
        %3094 = vmatpush1.msra.mxu0 %v3032
        %3095 = vmatprep.subr.mxu0 0.0
        %3096 = vmatpush1.msra.mxu0 %v3033
        %3097 = vmatprep.subr.mxu0 0.0
        %3098 = vmatpush1.msra.mxu0 %v3034
        %3099 = vmatprep.subr.mxu0 0.0
        %3100 = vmatpush1.msra.mxu0 %v3035
        %3101 = vmatprep.subr.mxu0 0.0
        %3102 = vmatpush1.msra.mxu0 %v3036
        %3103 = vmatprep.subr.mxu0 0.0
        %3104 = vmatpush1.msra.mxu0 %v3037
        %3105 = vmatprep.subr.mxu0 0.0
        %3106 = vmatpush1.msra.mxu0 %v3038
        %3107 = vmatprep.subr.mxu0 0.0
        %3108 = vmatpush1.msra.mxu0 %v3039
        %3109 = vmatprep.subr.mxu0 0.0
        %3110 = vmatpush1.msra.mxu0 %v3040
        %3111 = vmatprep.subr.mxu0 0.0
        %3112 = vmatpush1.msra.mxu0 %v3041
        %3113 = vmatprep.mubr.f32.mxu0 %v3007
        %3114 = vmatmul.mubr.f32.gmra.mrb[0].mxu0 %v3006
        %v3115 = vpop.f32.mrb[0].mxu0
        %v3116 = vadd.f32 %v3047, %v3115
        %v3117 = vpop.f32.mrb[0].mxu0
        %3118 = vmatprep.mubr.f32.mxu0 %v3009
        %3119 = vmatmul.mubr.f32.gmra.mrb[0].mxu0 %v3008
        %v3120 = vpop.f32.mrb[0].mxu0
        %v3121 = vadd.f32 %v3047, %v3120
        %v3122 = vpop.f32.mrb[0].mxu0
        %3123 = vdwg.mxu0
        %v3124 = vld [vmem:[%s17] sm:$0x1]
        %v3126 = vlaneseq
        %v3127 = vshrl.u32 %v3126, 7
        %v3128 = vsub.s32 0, %v3127
        %v3129 = vrot.slane %v3124, %v3128
        %v3131 = vmul.f32 %v3129, %v3116
        %v3132 = vmul.f32 %v3129, %v3121
        %v3133 = vadd.f32 %v2757, %v3131
        %v3134 = vadd.f32 %v2758, %v3132
        %3135 = vst.msk [vmem:[%s568] sm:$0xff] %vm829, %v3133
        %3136 = vst.msk [vmem:[%s568 + $0x8] sm:$0xff] %vm829, %v3134
        %s3137 = sand.u32 %s423, 1
        %s3138 = scalar_lea.sflag [#allocation3], %s3137
        %s3139 = sand.u32 %s423, 1
        %s3140 = smul.addr %s3139, 16
        %s3141 = scalar_lea.vmem [#allocation2], %s3140
        // Predicated region
        $region93: #{tpu_custom_call.1} parent=91 // pred_check
          %p3142 = pneg %p433
        $region94: #{tpu_custom_call.1} parent=91 // pred_check_branch
          %3144 = sbr.rel (%p3142) target = $region96
        $region95: #{tpu_custom_call.1} parent=91 // pred_region
          %s3146 = ssub.s32 256, 256
          %3147 = vsyncadd %s3138, %s3146
          %s3148 = smul.addr %s32, 2
          %s3149 = smul.addr %s3148, 128
          %s3150 = scalar_lea.hbm %s18, %s3149
          %s3151 = sshll.u32 %s3141, 4
          %s3152 = int_to_ptr.vmem [resolvable:$true] %s3151
          %3157 = dma.vmem_to_hbm [thread:$0]  %s3152, 256, %s3150, %s3138, 128, 128, 8
        $region96: #{tpu_custom_call.1} parent=91 // pred_fallthru
          _
      $region92: #{tpu_custom_call.1} parent=5 // pred_fallthru
        _
      %p3158 = scmp.le.s32.totalorder 2, %s27
      // Predicated region
      $region97: #{tpu_custom_call.1} parent=5 // pred_check
        %p3159 = pneg %p3158
      $region98: #{tpu_custom_call.1} parent=5 // pred_check_branch
        %3161 = sbr.rel (%p3159) target = $region100
      $region99: #{tpu_custom_call.1} parent=5 // pred_region
        %s3162 = ssub.s32 %s27, 2
        // Predicated region
        $region101: #{tpu_custom_call.1} parent=99 // pred_check
          %p3163 = pneg %p439
        $region102: #{tpu_custom_call.1} parent=99 // pred_check_branch
          %3165 = sbr.rel (%p3163) target = $region104
        $region103: #{tpu_custom_call.1} parent=99 // pred_region
          %s3166 = sand.u32 %s424, 1
          %s3167 = scalar_lea.sflag [#allocation3], %s3166
          %s3168 = sand.u32 %s424, 1
          %s3169 = smul.addr %s3168, 16
          %s3170 = scalar_lea.vmem [#allocation2], %s3169
          %3171 = dma.done %s3167, 256
        $region104: #{tpu_custom_call.1} parent=99 // pred_fallthru
          _
      $region100: #{tpu_custom_call.1} parent=5 // pred_fallthru
        _
    $region6: #{tpu_custom_call.1} parent=1 // loop_footer
      %s31 = sadd.s32 1, %s27
    $region7: #{tpu_custom_call.1} parent=1 // loop_footer_branch
      %26 = sbr.rel target = $region3
    $region8: #{tpu_custom_call.1} parent=1 // loop_exit
      _
    %3172 = vsyncpa [#allocation3], 1
    %s3173 = scalar_lea.sflag [#allocation3], 1
    %3174 = vsyncpa %s3173, 1

</llo_original>
